<compile_context>
chip_gen: v6e
topology: v6e:2x2x1
jax: 0.10.0
libtpu: 0.0.40
codegen_flags: <defaults>
</compile_context>

<pallas_src>
import functools

import numpy as np
import jax
import jax.numpy as jnp
from jax.experimental import pallas as pl
from jax.experimental.pallas import tpu as pltpu

DIM = 2
HIDDEN = 64
FUSED = 2 * HIDDEN            # s-net + t-net hidden units stacked
N_LAYERS = 6
NEG_SLOPE = 0.01              # torch.nn.LeakyReLU default
LOG_2PI = float(np.log(2.0 * np.pi))


def _leaky_relu(x):
    # max(x, a*x) == where(x>0, x, a*x) for 0 < a < 1, one fewer VALU op.
    return jnp.maximum(x, NEG_SLOPE * x)


# --------------------------------------------------------------------------
# Kernel: one batch tile, batch on lanes.
# --------------------------------------------------------------------------
def realnvp_kernel(x_ref, w1_ref, b1_ref, w2_ref, b2_ref, w3_ref, b3_ref,
                   out_ref, *, active, act_dtype):
    x = x_ref[...].astype(jnp.float32)            # [2, TN]
    z0 = x[0:1, :]                                # [1, TN]
    z1 = x[1:2, :]
    log_det = jnp.zeros_like(z0)

    # backward_p: reversed coupling layers, statically unrolled.
    for i in reversed(range(N_LAYERS)):
        j = active[i]          # component fed to the (fused) s/t nets
        k = 1 - j              # component updated by this layer
        zj = z0 if j == 0 else z1
        zk = z0 if k == 0 else z1

        w1 = w1_ref[i]                              # [128, 1] act_dtype
        b1 = b1_ref[i]
        b2 = b2_ref[i]
        w3 = w3_ref[i]                              # [128, 1] act_dtype
        b3 = b3_ref[i]                              # [2, 1]   f32

        # Linear(2,64) with a one-hot-masked input == rank-1 outer product (VPU).
        h = _leaky_relu(w1 * zj.astype(act_dtype) + b1)            # [128, TN]
        # Fused block-diagonal Linear(64,64): single bf16 K=128 MXU matmul,
        # f32 accumulation.
        acc = jnp.dot(w2_ref[i], h.astype(jnp.bfloat16),
                      preferred_element_type=jnp.float32)          # [128, TN] f32
        h2 = _leaky_relu(acc.astype(act_dtype) + b2)               # [128, TN]

        # Output heads off the MXU: broadcast-column multiply (VPU) + per-half
        # sublane reduction (XLU). Row 0..63 -> s head, 64..127 -> t head.
        hw = h2 * w3                                               # [128, TN]
        s_pre = jnp.sum(hw[:HIDDEN].astype(jnp.float32),
                        axis=0, keepdims=True) + b3[0:1]           # [1, TN] f32
        t = jnp.sum(hw[HIDDEN:].astype(jnp.float32),
                    axis=0, keepdims=True) + b3[1:2]               # [1, TN] f32
        s = jnp.tanh(s_pre)

        zk = (zk - t) * jnp.exp(-s)
        log_det = log_det - s
        if k == 0:
            z0 = zk
        else:
            z1 = zk

    # prior = MVN(0, I_2):  log p(z) = -0.5 * |z|^2 - log(2*pi)
    # TODO(synk): the optional `mask` (univariate masked prior, dim 34) branch of
    # log_prob is not implemented; forward() always calls log_prob(x, mask=None).
    prior_lp = -0.5 * (z0 * z0 + z1 * z1) - 0.5 * DIM * LOG_2PI
    out_ref[...] = (prior_lp + log_det).astype(out_ref.dtype)


# --------------------------------------------------------------------------
# Host-side weight fusion / wrapper.
# --------------------------------------------------------------------------
def _active_indices(masks):
    m = np.asarray(masks, dtype=np.float32)
    assert m.shape == (N_LAYERS, DIM)
    idx = []
    for row in m:
        assert set(np.unique(row).tolist()) <= {0.0, 1.0} and row.sum() == 1.0, (
            "masks must be one-hot binary rows (rlepose uses [[0,1],[1,0]]*3)")
        idx.append(int(np.argmax(row)))
    return tuple(idx)


def _fuse_params(active, s_params, t_params, act_dtype):
    """Fuse s/t nets per layer; weights pre-transposed for W^T @ z.

    w2 is bf16 (MXU-native); the [128,1] columns use act_dtype (bf16 on
    v6e/v7x, f32 otherwise); b3 stays f32 (feeds the final f32 s/t math).
    """
    sW1, sb1, sW2, sb2, sW3, sb3 = [jnp.asarray(a, jnp.float32) for a in s_params]
    tW1, tb1, tW2, tb2, tW3, tb3 = [jnp.asarray(a, jnp.float32) for a in t_params]
    z64 = jnp.zeros((HIDDEN, HIDDEN), jnp.float32)
    w1, b1, w2, b2, w3, b3 = [], [], [], [], [], []
    for i in range(N_LAYERS):
        j = active[i]
        k = 1 - j
        w1.append(jnp.concatenate([sW1[i, j, :], tW1[i, j, :]])[:, None])   # [128,1]
        b1.append(jnp.concatenate([sb1[i], tb1[i]])[:, None])               # [128,1]
        w2.append(jnp.block([[sW2[i].T, z64], [z64, tW2[i].T]]))            # [128,128]
        b2.append(jnp.concatenate([sb2[i], tb2[i]])[:, None])               # [128,1]
        w3.append(jnp.concatenate([sW3[i, :, k], tW3[i, :, k]])[:, None])   # [128,1]
        b3.append(jnp.stack([sb3[i, k], tb3[i, k]])[:, None])               # [2,1]
    return (jnp.stack(w1).astype(act_dtype),
            jnp.stack(b1).astype(act_dtype),
            jnp.stack(w2).astype(jnp.bfloat16),
            jnp.stack(b2).astype(act_dtype),
            jnp.stack(w3).astype(act_dtype),
            jnp.stack(b3))


def _device_kind():
    try:
        return jax.devices()[0].device_kind.lower()
    except Exception:  # pragma: no cover - e.g. no devices during tracing
        return ""


def _pick_tile(n, cap, prefer_even_steps):
    """Largest multiple-of-128 tile dividing n, <= cap.

    On dual-TC chips (v7x) prefer an even number of grid steps so both
    TensorCores get equal work; single-TC chips take the largest tile
    (grid=1 is fine: weights are resident and the x tile DMA is tiny).
    """
    cap = max(128, min(cap, n))
    cap = (cap // 128) * 128
    fallback = None
    for t in range(cap, 127, -128):
        if n % t:
            continue
        if fallback is None:
            fallback = t
        if not prefer_even_steps or (n // t) % 2 == 0:
            return t
    return fallback


def realnvp_log_prob(x, masks, s_params, t_params, *, tile_n=1024,
                     x_layout="nd", act_dtype=None, prefer_even_steps=None):
    """log_prob(x) of the rlepose RealNVP (== forward()).

    x_layout="nd": x is [N, 2] (PyTorch layout, transposed here).
    x_layout="dn": x is already [2, N] (lane-major; avoids the extra transpose).
    """
    if x_layout == "dn":
        D, N = x.shape
        x_t = jnp.asarray(x, jnp.float32)
    else:
        N, D = x.shape
        x_t = jnp.asarray(x, jnp.float32).T
    assert D == DIM
    assert N % 128 == 0, "batch size must be a multiple of 128 (pad outside)"

    kind = _device_kind()
    if prefer_even_steps is None:
        prefer_even_steps = "v7" in kind                  # dual-TC megacore
    if act_dtype is None:
        # bf16 VALU exists on v6e/v7x; keep f32 elementwise on v5e and older.
        act_dtype = jnp.bfloat16 if ("v6" in kind or "v7" in kind) else jnp.float32

    active = _active_indices(masks)
    fused = _fuse_params(active, s_params, t_params, act_dtype)
    tn = _pick_tile(N, tile_n, prefer_even_steps)

    def const_spec(arr):
        nd = arr.ndim
        return pl.BlockSpec(arr.shape, lambda i, _nd=nd: (0,) * _nd)

    in_specs = [pl.BlockSpec((DIM, tn), lambda i: (0, i))]
    in_specs += [const_spec(a) for a in fused]

    out = pl.pallas_call(
        functools.partial(realnvp_kernel, active=active, act_dtype=act_dtype),
        out_shape=jax.ShapeDtypeStruct((1, N), jnp.float32),
        grid_spec=pltpu.PrefetchScalarGridSpec(
            num_scalar_prefetch=0,
            grid=(N // tn,),
            in_specs=in_specs,
            out_specs=pl.BlockSpec((1, tn), lambda i: (0, i)),
        ),
        compiler_params=pltpu.CompilerParams(
            dimension_semantics=("parallel",)),
    )(x_t, *fused)
    return out[0]


# --------------------------------------------------------------------------
# Plain-JAX reference mirroring the PyTorch forward (= log_prob), pure f32.
# --------------------------------------------------------------------------
def _mlp(z, W1, b1, W2, b2, W3, b3, final_tanh):
    h = _leaky_relu(jnp.dot(z, W1) + b1)
    h = _leaky_relu(jnp.dot(h, W2) + b2)
    o = jnp.dot(h, W3) + b3
    if final_tanh:
        o = jnp.tanh(o)
    return o


def realnvp_log_prob_ref(x, masks, s_params, t_params):
    sW1, sb1, sW2, sb2, sW3, sb3 = s_params
    tW1, tb1, tW2, tb2, tW3, tb3 = t_params
    z = x.astype(jnp.float32)
    log_det = jnp.zeros((x.shape[0],), jnp.float32)
    for i in reversed(range(N_LAYERS)):
        m = masks[i]
        one_m = 1.0 - m
        z_ = z * m
        s = _mlp(z_, sW1[i], sb1[i], sW2[i], sb2[i], sW3[i], sb3[i], True) * one_m
        t = _mlp(z_, tW1[i], tb1[i], tW2[i], tb2[i], tW3[i], tb3[i], False) * one_m
        z = one_m * (z - t) * jnp.exp(-s) + z_
        log_det = log_det - jnp.sum(s, axis=1)
    prior_lp = -0.5 * jnp.sum(z * z, axis=1) - 0.5 * DIM * LOG_2PI
    return prior_lp + log_det


def init_net_params(key, gain=0.01):
    """Xavier-uniform weights (gain=0.01, as in RealNVP._init), small biases.

    Weights stored as [layer, in, out]; y = x @ W + b (matches torch Linear).
    """
    ks = jax.random.split(key, 6)

    def xavier(k, fan_in, fan_out):
        bound = gain * np.sqrt(6.0 / (fan_in + fan_out))
        return jax.random.uniform(k, (N_LAYERS, fan_in, fan_out),
                                  jnp.float32, -bound, bound)

    def bias(k, fan_in, fan_out):
        bound = 1.0 / np.sqrt(fan_in)
        return jax.random.uniform(k, (N_LAYERS, fan_out),
                                  jnp.float32, -bound, bound)

    W1 = xavier(ks[0], DIM, HIDDEN);    b1 = bias(ks[1], DIM, HIDDEN)
    W2 = xavier(ks[2], HIDDEN, HIDDEN); b2 = bias(ks[3], HIDDEN, HIDDEN)
    W3 = xavier(ks[4], HIDDEN, DIM);    b3 = bias(ks[5], HIDDEN, DIM)
    return (W1, b1, W2, b2, W3, b3)


if __name__ == "__main__":
    key = jax.random.PRNGKey(0)
    kx, ks, kt = jax.random.split(key, 3)

    N = 512                                        # batch of 2-D samples
    # Generate x directly in lane-major [D, N] layout so no host-side transpose
    # precedes the Pallas call.
    x_t = jax.random.normal(kx, (DIM, N), jnp.float32)

    # Alternating binary masks [[0,1],[1,0]] * 3, as in rlepose.
    masks = jnp.tile(jnp.array([[0.0, 1.0], [1.0, 0.0]], jnp.float32),
                     (N_LAYERS // 2, 1))

    s_params = init_net_params(ks)                 # s-nets (tanh head)
    t_params = init_net_params(kt)                 # t-nets (linear head)

    log_p = realnvp_log_prob(x_t, masks, s_params, t_params,
                             tile_n=1024, x_layout="dn")
    log_p = jax.block_until_ready(log_p)

    ref = realnvp_log_prob_ref(x_t.T, masks, s_params, t_params)
    assert log_p.shape == (N,)
    # bf16 matmul operands (f32 accumulation) + bf16 activations on v6e/v7x:
    # tolerance relaxed vs. the all-f32 reference (typical |err| ~1e-4).
    err = float(jnp.max(jnp.abs(log_p - ref)))
    assert jnp.allclose(log_p, ref, atol=5e-3, rtol=5e-3), f"max abs err {err}"

    print("KERNEL_OK")
</pallas_src>

<mosaic_0001>
module attributes {stable_mosaic.version = 11 : i64} {
  func.func @realnvp_kernel(%arg0: i32, %arg1: memref<2x512xf32, #tpu.memory_space<vmem>>, %arg2: memref<6x128x1xf32, #tpu.memory_space<vmem>>, %arg3: memref<6x128x1xf32, #tpu.memory_space<vmem>>, %arg4: memref<6x128x128xbf16, #tpu.memory_space<vmem>>, %arg5: memref<6x128x1xf32, #tpu.memory_space<vmem>>, %arg6: memref<6x128x1xf32, #tpu.memory_space<vmem>>, %arg7: memref<6x2x1xf32, #tpu.memory_space<vmem>>, %arg8: memref<1x512xf32, #tpu.memory_space<vmem>>) attributes {dimension_semantics = [#tpu.dimension_semantics<parallel>], iteration_bounds = array<i64: 1>, scalar_prefetch = 0 : i64, scratch_operands = 0 : i64, tpu.core_type = #tpu.core_type<tc>, window_params = [{transform_indices = @transform_0, window_bounds = array<i64: 2, 512>}, {pipeline_mode = #tpu.pipeline_mode<synchronous>, transform_indices = @transform_1, window_bounds = array<i64: 6, 128, 1>}, {pipeline_mode = #tpu.pipeline_mode<synchronous>, transform_indices = @transform_2, window_bounds = array<i64: 6, 128, 1>}, {pipeline_mode = #tpu.pipeline_mode<synchronous>, transform_indices = @transform_3, window_bounds = array<i64: 6, 128, 128>}, {pipeline_mode = #tpu.pipeline_mode<synchronous>, transform_indices = @transform_4, window_bounds = array<i64: 6, 128, 1>}, {pipeline_mode = #tpu.pipeline_mode<synchronous>, transform_indices = @transform_5, window_bounds = array<i64: 6, 128, 1>}, {pipeline_mode = #tpu.pipeline_mode<synchronous>, transform_indices = @transform_6, window_bounds = array<i64: 6, 2, 1>}, {transform_indices = @transform_7, window_bounds = array<i64: 1, 512>}]} {
    %c0 = arith.constant 0 : index
    %c0_0 = arith.constant 0 : index
    %0 = vector.load %arg1[%c0, %c0_0] : memref<2x512xf32, #tpu.memory_space<vmem>>, vector<2x512xf32>
    %1 = vector.extract_strided_slice %0 {offsets = [0, 0], sizes = [1, 512], strides = [1, 1]} : vector<2x512xf32> to vector<1x512xf32>
    %2 = vector.extract_strided_slice %0 {offsets = [1, 0], sizes = [1, 512], strides = [1, 1]} : vector<2x512xf32> to vector<1x512xf32>
    %cst = arith.constant 0.000000e+00 : f32
    %3 = vector.broadcast %cst : f32 to vector<1x512xf32>
    %c5 = arith.constant 5 : index
    %c0_1 = arith.constant 0 : index
    %c0_2 = arith.constant 0 : index
    %4 = vector.load %arg2[%c5, %c0_1, %c0_2] : memref<6x128x1xf32, #tpu.memory_space<vmem>>, vector<1x128x1xf32>
    %5 = vector.shape_cast %4 : vector<1x128x1xf32> to vector<128x1xf32>
    %c5_3 = arith.constant 5 : index
    %c0_4 = arith.constant 0 : index
    %c0_5 = arith.constant 0 : index
    %6 = vector.load %arg3[%c5_3, %c0_4, %c0_5] : memref<6x128x1xf32, #tpu.memory_space<vmem>>, vector<1x128x1xf32>
    %7 = vector.shape_cast %6 : vector<1x128x1xf32> to vector<128x1xf32>
    %c5_6 = arith.constant 5 : index
    %c0_7 = arith.constant 0 : index
    %c0_8 = arith.constant 0 : index
    %8 = vector.load %arg5[%c5_6, %c0_7, %c0_8] : memref<6x128x1xf32, #tpu.memory_space<vmem>>, vector<1x128x1xf32>
    %9 = vector.shape_cast %8 : vector<1x128x1xf32> to vector<128x1xf32>
    %c5_9 = arith.constant 5 : index
    %c0_10 = arith.constant 0 : index
    %c0_11 = arith.constant 0 : index
    %10 = vector.load %arg6[%c5_9, %c0_10, %c0_11] : memref<6x128x1xf32, #tpu.memory_space<vmem>>, vector<1x128x1xf32>
    %11 = vector.shape_cast %10 : vector<1x128x1xf32> to vector<128x1xf32>
    %c5_12 = arith.constant 5 : index
    %c0_13 = arith.constant 0 : index
    %c0_14 = arith.constant 0 : index
    %12 = vector.load %arg7[%c5_12, %c0_13, %c0_14] : memref<6x2x1xf32, #tpu.memory_space<vmem>>, vector<1x2x1xf32>
    %13 = vector.shape_cast %12 : vector<1x2x1xf32> to vector<2x1xf32>
    %14 = vector.broadcast %5 : vector<128x1xf32> to vector<128x512xf32>
    %15 = vector.broadcast %1 : vector<1x512xf32> to vector<128x512xf32>
    %16 = arith.mulf %14, %15 : vector<128x512xf32>
    %17 = vector.broadcast %7 : vector<128x1xf32> to vector<128x512xf32>
    %18 = arith.addf %16, %17 : vector<128x512xf32>
    %cst_15 = arith.constant 0.00999999977 : f32
    %19 = vector.broadcast %cst_15 : f32 to vector<128x512xf32>
    %20 = arith.mulf %19, %18 : vector<128x512xf32>
    %21 = arith.maximumf %18, %20 : vector<128x512xf32>
    %c5_16 = arith.constant 5 : index
    %c0_17 = arith.constant 0 : index
    %c0_18 = arith.constant 0 : index
    %22 = vector.load %arg4[%c5_16, %c0_17, %c0_18] : memref<6x128x128xbf16, #tpu.memory_space<vmem>>, vector<1x128x128xbf16>
    %23 = vector.shape_cast %22 : vector<1x128x128xbf16> to vector<128x128xbf16>
    %24 = arith.truncf %21 : vector<128x512xf32> to vector<128x512xbf16>
    %cst_19 = arith.constant dense<0.000000e+00> : vector<128x512xf32>
    %25 = tpu.matmul %23, %24, %cst_19 {dimension_numbers = #tpu.dot_dimension_numbers<[1], [0], [0], [1], [0, 0, 1, 1], [], []>} : vector<128x128xbf16>, vector<128x512xbf16>, vector<128x512xf32> -> vector<128x512xf32>
    %26 = vector.broadcast %9 : vector<128x1xf32> to vector<128x512xf32>
    %27 = arith.addf %25, %26 : vector<128x512xf32>
    %cst_20 = arith.constant 0.00999999977 : f32
    %28 = vector.broadcast %cst_20 : f32 to vector<128x512xf32>
    %29 = arith.mulf %28, %27 : vector<128x512xf32>
    %30 = arith.maximumf %27, %29 : vector<128x512xf32>
    %31 = vector.broadcast %11 : vector<128x1xf32> to vector<128x512xf32>
    %32 = arith.mulf %30, %31 : vector<128x512xf32>
    %33 = vector.extract_strided_slice %32 {offsets = [0, 0], sizes = [64, 512], strides = [1, 1]} : vector<128x512xf32> to vector<64x512xf32>
    %cst_21 = arith.constant dense<0.000000e+00> : vector<512xf32>
    %34 = vector.multi_reduction <add>, %33, %cst_21 [0] : vector<64x512xf32> to vector<512xf32>
    %35 = vector.shape_cast %34 : vector<512xf32> to vector<1x512xf32>
    %36 = vector.extract_strided_slice %13 {offsets = [0, 0], sizes = [1, 1], strides = [1, 1]} : vector<2x1xf32> to vector<1x1xf32>
    %37 = vector.broadcast %36 : vector<1x1xf32> to vector<1x512xf32>
    %38 = arith.addf %35, %37 : vector<1x512xf32>
    %39 = vector.extract_strided_slice %32 {offsets = [64, 0], sizes = [64, 512], strides = [1, 1]} : vector<128x512xf32> to vector<64x512xf32>
    %cst_22 = arith.constant dense<0.000000e+00> : vector<512xf32>
    %40 = vector.multi_reduction <add>, %39, %cst_22 [0] : vector<64x512xf32> to vector<512xf32>
    %41 = vector.shape_cast %40 : vector<512xf32> to vector<1x512xf32>
    %42 = vector.extract_strided_slice %13 {offsets = [1, 0], sizes = [1, 1], strides = [1, 1]} : vector<2x1xf32> to vector<1x1xf32>
    %43 = vector.broadcast %42 : vector<1x1xf32> to vector<1x512xf32>
    %44 = arith.addf %41, %43 : vector<1x512xf32>
    %45 = math.tanh %38 : vector<1x512xf32>
    %46 = arith.subf %2, %44 : vector<1x512xf32>
    %cst_23 = arith.constant 0.000000e+00 : f32
    %47 = vector.broadcast %cst_23 : f32 to vector<1x512xf32>
    %48 = arith.subf %47, %45 : vector<1x512xf32>
    %49 = math.exp %48 : vector<1x512xf32>
    %50 = arith.mulf %46, %49 : vector<1x512xf32>
    %51 = arith.subf %3, %45 : vector<1x512xf32>
    %c4 = arith.constant 4 : index
    %c0_24 = arith.constant 0 : index
    %c0_25 = arith.constant 0 : index
    %52 = vector.load %arg2[%c4, %c0_24, %c0_25] : memref<6x128x1xf32, #tpu.memory_space<vmem>>, vector<1x128x1xf32>
    %53 = vector.shape_cast %52 : vector<1x128x1xf32> to vector<128x1xf32>
    %c4_26 = arith.constant 4 : index
    %c0_27 = arith.constant 0 : index
    %c0_28 = arith.constant 0 : index
    %54 = vector.load %arg3[%c4_26, %c0_27, %c0_28] : memref<6x128x1xf32, #tpu.memory_space<vmem>>, vector<1x128x1xf32>
    %55 = vector.shape_cast %54 : vector<1x128x1xf32> to vector<128x1xf32>
    %c4_29 = arith.constant 4 : index
    %c0_30 = arith.constant 0 : index
    %c0_31 = arith.constant 0 : index
    %56 = vector.load %arg5[%c4_29, %c0_30, %c0_31] : memref<6x128x1xf32, #tpu.memory_space<vmem>>, vector<1x128x1xf32>
    %57 = vector.shape_cast %56 : vector<1x128x1xf32> to vector<128x1xf32>
    %c4_32 = arith.constant 4 : index
    %c0_33 = arith.constant 0 : index
    %c0_34 = arith.constant 0 : index
    %58 = vector.load %arg6[%c4_32, %c0_33, %c0_34] : memref<6x128x1xf32, #tpu.memory_space<vmem>>, vector<1x128x1xf32>
    %59 = vector.shape_cast %58 : vector<1x128x1xf32> to vector<128x1xf32>
    %c4_35 = arith.constant 4 : index
    %c0_36 = arith.constant 0 : index
    %c0_37 = arith.constant 0 : index
    %60 = vector.load %arg7[%c4_35, %c0_36, %c0_37] : memref<6x2x1xf32, #tpu.memory_space<vmem>>, vector<1x2x1xf32>
    %61 = vector.shape_cast %60 : vector<1x2x1xf32> to vector<2x1xf32>
    %62 = vector.broadcast %53 : vector<128x1xf32> to vector<128x512xf32>
    %63 = vector.broadcast %50 : vector<1x512xf32> to vector<128x512xf32>
    %64 = arith.mulf %62, %63 : vector<128x512xf32>
    %65 = vector.broadcast %55 : vector<128x1xf32> to vector<128x512xf32>
    %66 = arith.addf %64, %65 : vector<128x512xf32>
    %cst_38 = arith.constant 0.00999999977 : f32
    %67 = vector.broadcast %cst_38 : f32 to vector<128x512xf32>
    %68 = arith.mulf %67, %66 : vector<128x512xf32>
    %69 = arith.maximumf %66, %68 : vector<128x512xf32>
    %c4_39 = arith.constant 4 : index
    %c0_40 = arith.constant 0 : index
    %c0_41 = arith.constant 0 : index
    %70 = vector.load %arg4[%c4_39, %c0_40, %c0_41] : memref<6x128x128xbf16, #tpu.memory_space<vmem>>, vector<1x128x128xbf16>
    %71 = vector.shape_cast %70 : vector<1x128x128xbf16> to vector<128x128xbf16>
    %72 = arith.truncf %69 : vector<128x512xf32> to vector<128x512xbf16>
    %cst_42 = arith.constant dense<0.000000e+00> : vector<128x512xf32>
    %73 = tpu.matmul %71, %72, %cst_42 {dimension_numbers = #tpu.dot_dimension_numbers<[1], [0], [0], [1], [0, 0, 1, 1], [], []>} : vector<128x128xbf16>, vector<128x512xbf16>, vector<128x512xf32> -> vector<128x512xf32>
    %74 = vector.broadcast %57 : vector<128x1xf32> to vector<128x512xf32>
    %75 = arith.addf %73, %74 : vector<128x512xf32>
    %cst_43 = arith.constant 0.00999999977 : f32
    %76 = vector.broadcast %cst_43 : f32 to vector<128x512xf32>
    %77 = arith.mulf %76, %75 : vector<128x512xf32>
    %78 = arith.maximumf %75, %77 : vector<128x512xf32>
    %79 = vector.broadcast %59 : vector<128x1xf32> to vector<128x512xf32>
    %80 = arith.mulf %78, %79 : vector<128x512xf32>
    %81 = vector.extract_strided_slice %80 {offsets = [0, 0], sizes = [64, 512], strides = [1, 1]} : vector<128x512xf32> to vector<64x512xf32>
    %cst_44 = arith.constant dense<0.000000e+00> : vector<512xf32>
    %82 = vector.multi_reduction <add>, %81, %cst_44 [0] : vector<64x512xf32> to vector<512xf32>
    %83 = vector.shape_cast %82 : vector<512xf32> to vector<1x512xf32>
    %84 = vector.extract_strided_slice %61 {offsets = [0, 0], sizes = [1, 1], strides = [1, 1]} : vector<2x1xf32> to vector<1x1xf32>
    %85 = vector.broadcast %84 : vector<1x1xf32> to vector<1x512xf32>
    %86 = arith.addf %83, %85 : vector<1x512xf32>
    %87 = vector.extract_strided_slice %80 {offsets = [64, 0], sizes = [64, 512], strides = [1, 1]} : vector<128x512xf32> to vector<64x512xf32>
    %cst_45 = arith.constant dense<0.000000e+00> : vector<512xf32>
    %88 = vector.multi_reduction <add>, %87, %cst_45 [0] : vector<64x512xf32> to vector<512xf32>
    %89 = vector.shape_cast %88 : vector<512xf32> to vector<1x512xf32>
    %90 = vector.extract_strided_slice %61 {offsets = [1, 0], sizes = [1, 1], strides = [1, 1]} : vector<2x1xf32> to vector<1x1xf32>
    %91 = vector.broadcast %90 : vector<1x1xf32> to vector<1x512xf32>
    %92 = arith.addf %89, %91 : vector<1x512xf32>
    %93 = math.tanh %86 : vector<1x512xf32>
    %94 = arith.subf %1, %92 : vector<1x512xf32>
    %cst_46 = arith.constant 0.000000e+00 : f32
    %95 = vector.broadcast %cst_46 : f32 to vector<1x512xf32>
    %96 = arith.subf %95, %93 : vector<1x512xf32>
    %97 = math.exp %96 : vector<1x512xf32>
    %98 = arith.mulf %94, %97 : vector<1x512xf32>
    %99 = arith.subf %51, %93 : vector<1x512xf32>
    %c3 = arith.constant 3 : index
    %c0_47 = arith.constant 0 : index
    %c0_48 = arith.constant 0 : index
    %100 = vector.load %arg2[%c3, %c0_47, %c0_48] : memref<6x128x1xf32, #tpu.memory_space<vmem>>, vector<1x128x1xf32>
    %101 = vector.shape_cast %100 : vector<1x128x1xf32> to vector<128x1xf32>
    %c3_49 = arith.constant 3 : index
    %c0_50 = arith.constant 0 : index
    %c0_51 = arith.constant 0 : index
    %102 = vector.load %arg3[%c3_49, %c0_50, %c0_51] : memref<6x128x1xf32, #tpu.memory_space<vmem>>, vector<1x128x1xf32>
    %103 = vector.shape_cast %102 : vector<1x128x1xf32> to vector<128x1xf32>
    %c3_52 = arith.constant 3 : index
    %c0_53 = arith.constant 0 : index
    %c0_54 = arith.constant 0 : index
    %104 = vector.load %arg5[%c3_52, %c0_53, %c0_54] : memref<6x128x1xf32, #tpu.memory_space<vmem>>, vector<1x128x1xf32>
    %105 = vector.shape_cast %104 : vector<1x128x1xf32> to vector<128x1xf32>
    %c3_55 = arith.constant 3 : index
    %c0_56 = arith.constant 0 : index
    %c0_57 = arith.constant 0 : index
    %106 = vector.load %arg6[%c3_55, %c0_56, %c0_57] : memref<6x128x1xf32, #tpu.memory_space<vmem>>, vector<1x128x1xf32>
    %107 = vector.shape_cast %106 : vector<1x128x1xf32> to vector<128x1xf32>
    %c3_58 = arith.constant 3 : index
    %c0_59 = arith.constant 0 : index
    %c0_60 = arith.constant 0 : index
    %108 = vector.load %arg7[%c3_58, %c0_59, %c0_60] : memref<6x2x1xf32, #tpu.memory_space<vmem>>, vector<1x2x1xf32>
    %109 = vector.shape_cast %108 : vector<1x2x1xf32> to vector<2x1xf32>
    %110 = vector.broadcast %101 : vector<128x1xf32> to vector<128x512xf32>
    %111 = vector.broadcast %98 : vector<1x512xf32> to vector<128x512xf32>
    %112 = arith.mulf %110, %111 : vector<128x512xf32>
    %113 = vector.broadcast %103 : vector<128x1xf32> to vector<128x512xf32>
    %114 = arith.addf %112, %113 : vector<128x512xf32>
    %cst_61 = arith.constant 0.00999999977 : f32
    %115 = vector.broadcast %cst_61 : f32 to vector<128x512xf32>
    %116 = arith.mulf %115, %114 : vector<128x512xf32>
    %117 = arith.maximumf %114, %116 : vector<128x512xf32>
    %c3_62 = arith.constant 3 : index
    %c0_63 = arith.constant 0 : index
    %c0_64 = arith.constant 0 : index
    %118 = vector.load %arg4[%c3_62, %c0_63, %c0_64] : memref<6x128x128xbf16, #tpu.memory_space<vmem>>, vector<1x128x128xbf16>
    %119 = vector.shape_cast %118 : vector<1x128x128xbf16> to vector<128x128xbf16>
    %120 = arith.truncf %117 : vector<128x512xf32> to vector<128x512xbf16>
    %cst_65 = arith.constant dense<0.000000e+00> : vector<128x512xf32>
    %121 = tpu.matmul %119, %120, %cst_65 {dimension_numbers = #tpu.dot_dimension_numbers<[1], [0], [0], [1], [0, 0, 1, 1], [], []>} : vector<128x128xbf16>, vector<128x512xbf16>, vector<128x512xf32> -> vector<128x512xf32>
    %122 = vector.broadcast %105 : vector<128x1xf32> to vector<128x512xf32>
    %123 = arith.addf %121, %122 : vector<128x512xf32>
    %cst_66 = arith.constant 0.00999999977 : f32
    %124 = vector.broadcast %cst_66 : f32 to vector<128x512xf32>
    %125 = arith.mulf %124, %123 : vector<128x512xf32>
    %126 = arith.maximumf %123, %125 : vector<128x512xf32>
    %127 = vector.broadcast %107 : vector<128x1xf32> to vector<128x512xf32>
    %128 = arith.mulf %126, %127 : vector<128x512xf32>
    %129 = vector.extract_strided_slice %128 {offsets = [0, 0], sizes = [64, 512], strides = [1, 1]} : vector<128x512xf32> to vector<64x512xf32>
    %cst_67 = arith.constant dense<0.000000e+00> : vector<512xf32>
    %130 = vector.multi_reduction <add>, %129, %cst_67 [0] : vector<64x512xf32> to vector<512xf32>
    %131 = vector.shape_cast %130 : vector<512xf32> to vector<1x512xf32>
    %132 = vector.extract_strided_slice %109 {offsets = [0, 0], sizes = [1, 1], strides = [1, 1]} : vector<2x1xf32> to vector<1x1xf32>
    %133 = vector.broadcast %132 : vector<1x1xf32> to vector<1x512xf32>
    %134 = arith.addf %131, %133 : vector<1x512xf32>
    %135 = vector.extract_strided_slice %128 {offsets = [64, 0], sizes = [64, 512], strides = [1, 1]} : vector<128x512xf32> to vector<64x512xf32>
    %cst_68 = arith.constant dense<0.000000e+00> : vector<512xf32>
    %136 = vector.multi_reduction <add>, %135, %cst_68 [0] : vector<64x512xf32> to vector<512xf32>
    %137 = vector.shape_cast %136 : vector<512xf32> to vector<1x512xf32>
    %138 = vector.extract_strided_slice %109 {offsets = [1, 0], sizes = [1, 1], strides = [1, 1]} : vector<2x1xf32> to vector<1x1xf32>
    %139 = vector.broadcast %138 : vector<1x1xf32> to vector<1x512xf32>
    %140 = arith.addf %137, %139 : vector<1x512xf32>
    %141 = math.tanh %134 : vector<1x512xf32>
    %142 = arith.subf %50, %140 : vector<1x512xf32>
    %cst_69 = arith.constant 0.000000e+00 : f32
    %143 = vector.broadcast %cst_69 : f32 to vector<1x512xf32>
    %144 = arith.subf %143, %141 : vector<1x512xf32>
    %145 = math.exp %144 : vector<1x512xf32>
    %146 = arith.mulf %142, %145 : vector<1x512xf32>
    %147 = arith.subf %99, %141 : vector<1x512xf32>
    %c2 = arith.constant 2 : index
    %c0_70 = arith.constant 0 : index
    %c0_71 = arith.constant 0 : index
    %148 = vector.load %arg2[%c2, %c0_70, %c0_71] : memref<6x128x1xf32, #tpu.memory_space<vmem>>, vector<1x128x1xf32>
    %149 = vector.shape_cast %148 : vector<1x128x1xf32> to vector<128x1xf32>
    %c2_72 = arith.constant 2 : index
    %c0_73 = arith.constant 0 : index
    %c0_74 = arith.constant 0 : index
    %150 = vector.load %arg3[%c2_72, %c0_73, %c0_74] : memref<6x128x1xf32, #tpu.memory_space<vmem>>, vector<1x128x1xf32>
    %151 = vector.shape_cast %150 : vector<1x128x1xf32> to vector<128x1xf32>
    %c2_75 = arith.constant 2 : index
    %c0_76 = arith.constant 0 : index
    %c0_77 = arith.constant 0 : index
    %152 = vector.load %arg5[%c2_75, %c0_76, %c0_77] : memref<6x128x1xf32, #tpu.memory_space<vmem>>, vector<1x128x1xf32>
    %153 = vector.shape_cast %152 : vector<1x128x1xf32> to vector<128x1xf32>
    %c2_78 = arith.constant 2 : index
    %c0_79 = arith.constant 0 : index
    %c0_80 = arith.constant 0 : index
    %154 = vector.load %arg6[%c2_78, %c0_79, %c0_80] : memref<6x128x1xf32, #tpu.memory_space<vmem>>, vector<1x128x1xf32>
    %155 = vector.shape_cast %154 : vector<1x128x1xf32> to vector<128x1xf32>
    %c2_81 = arith.constant 2 : index
    %c0_82 = arith.constant 0 : index
    %c0_83 = arith.constant 0 : index
    %156 = vector.load %arg7[%c2_81, %c0_82, %c0_83] : memref<6x2x1xf32, #tpu.memory_space<vmem>>, vector<1x2x1xf32>
    %157 = vector.shape_cast %156 : vector<1x2x1xf32> to vector<2x1xf32>
    %158 = vector.broadcast %149 : vector<128x1xf32> to vector<128x512xf32>
    %159 = vector.broadcast %146 : vector<1x512xf32> to vector<128x512xf32>
    %160 = arith.mulf %158, %159 : vector<128x512xf32>
    %161 = vector.broadcast %151 : vector<128x1xf32> to vector<128x512xf32>
    %162 = arith.addf %160, %161 : vector<128x512xf32>
    %cst_84 = arith.constant 0.00999999977 : f32
    %163 = vector.broadcast %cst_84 : f32 to vector<128x512xf32>
    %164 = arith.mulf %163, %162 : vector<128x512xf32>
    %165 = arith.maximumf %162, %164 : vector<128x512xf32>
    %c2_85 = arith.constant 2 : index
    %c0_86 = arith.constant 0 : index
    %c0_87 = arith.constant 0 : index
    %166 = vector.load %arg4[%c2_85, %c0_86, %c0_87] : memref<6x128x128xbf16, #tpu.memory_space<vmem>>, vector<1x128x128xbf16>
    %167 = vector.shape_cast %166 : vector<1x128x128xbf16> to vector<128x128xbf16>
    %168 = arith.truncf %165 : vector<128x512xf32> to vector<128x512xbf16>
    %cst_88 = arith.constant dense<0.000000e+00> : vector<128x512xf32>
    %169 = tpu.matmul %167, %168, %cst_88 {dimension_numbers = #tpu.dot_dimension_numbers<[1], [0], [0], [1], [0, 0, 1, 1], [], []>} : vector<128x128xbf16>, vector<128x512xbf16>, vector<128x512xf32> -> vector<128x512xf32>
    %170 = vector.broadcast %153 : vector<128x1xf32> to vector<128x512xf32>
    %171 = arith.addf %169, %170 : vector<128x512xf32>
    %cst_89 = arith.constant 0.00999999977 : f32
    %172 = vector.broadcast %cst_89 : f32 to vector<128x512xf32>
    %173 = arith.mulf %172, %171 : vector<128x512xf32>
    %174 = arith.maximumf %171, %173 : vector<128x512xf32>
    %175 = vector.broadcast %155 : vector<128x1xf32> to vector<128x512xf32>
    %176 = arith.mulf %174, %175 : vector<128x512xf32>
    %177 = vector.extract_strided_slice %176 {offsets = [0, 0], sizes = [64, 512], strides = [1, 1]} : vector<128x512xf32> to vector<64x512xf32>
    %cst_90 = arith.constant dense<0.000000e+00> : vector<512xf32>
    %178 = vector.multi_reduction <add>, %177, %cst_90 [0] : vector<64x512xf32> to vector<512xf32>
    %179 = vector.shape_cast %178 : vector<512xf32> to vector<1x512xf32>
    %180 = vector.extract_strided_slice %157 {offsets = [0, 0], sizes = [1, 1], strides = [1, 1]} : vector<2x1xf32> to vector<1x1xf32>
    %181 = vector.broadcast %180 : vector<1x1xf32> to vector<1x512xf32>
    %182 = arith.addf %179, %181 : vector<1x512xf32>
    %183 = vector.extract_strided_slice %176 {offsets = [64, 0], sizes = [64, 512], strides = [1, 1]} : vector<128x512xf32> to vector<64x512xf32>
    %cst_91 = arith.constant dense<0.000000e+00> : vector<512xf32>
    %184 = vector.multi_reduction <add>, %183, %cst_91 [0] : vector<64x512xf32> to vector<512xf32>
    %185 = vector.shape_cast %184 : vector<512xf32> to vector<1x512xf32>
    %186 = vector.extract_strided_slice %157 {offsets = [1, 0], sizes = [1, 1], strides = [1, 1]} : vector<2x1xf32> to vector<1x1xf32>
    %187 = vector.broadcast %186 : vector<1x1xf32> to vector<1x512xf32>
    %188 = arith.addf %185, %187 : vector<1x512xf32>
    %189 = math.tanh %182 : vector<1x512xf32>
    %190 = arith.subf %98, %188 : vector<1x512xf32>
    %cst_92 = arith.constant 0.000000e+00 : f32
    %191 = vector.broadcast %cst_92 : f32 to vector<1x512xf32>
    %192 = arith.subf %191, %189 : vector<1x512xf32>
    %193 = math.exp %192 : vector<1x512xf32>
    %194 = arith.mulf %190, %193 : vector<1x512xf32>
    %195 = arith.subf %147, %189 : vector<1x512xf32>
    %c1 = arith.constant 1 : index
    %c0_93 = arith.constant 0 : index
    %c0_94 = arith.constant 0 : index
    %196 = vector.load %arg2[%c1, %c0_93, %c0_94] : memref<6x128x1xf32, #tpu.memory_space<vmem>>, vector<1x128x1xf32>
    %197 = vector.shape_cast %196 : vector<1x128x1xf32> to vector<128x1xf32>
    %c1_95 = arith.constant 1 : index
    %c0_96 = arith.constant 0 : index
    %c0_97 = arith.constant 0 : index
    %198 = vector.load %arg3[%c1_95, %c0_96, %c0_97] : memref<6x128x1xf32, #tpu.memory_space<vmem>>, vector<1x128x1xf32>
    %199 = vector.shape_cast %198 : vector<1x128x1xf32> to vector<128x1xf32>
    %c1_98 = arith.constant 1 : index
    %c0_99 = arith.constant 0 : index
    %c0_100 = arith.constant 0 : index
    %200 = vector.load %arg5[%c1_98, %c0_99, %c0_100] : memref<6x128x1xf32, #tpu.memory_space<vmem>>, vector<1x128x1xf32>
    %201 = vector.shape_cast %200 : vector<1x128x1xf32> to vector<128x1xf32>
    %c1_101 = arith.constant 1 : index
    %c0_102 = arith.constant 0 : index
    %c0_103 = arith.constant 0 : index
    %202 = vector.load %arg6[%c1_101, %c0_102, %c0_103] : memref<6x128x1xf32, #tpu.memory_space<vmem>>, vector<1x128x1xf32>
    %203 = vector.shape_cast %202 : vector<1x128x1xf32> to vector<128x1xf32>
    %c1_104 = arith.constant 1 : index
    %c0_105 = arith.constant 0 : index
    %c0_106 = arith.constant 0 : index
    %204 = vector.load %arg7[%c1_104, %c0_105, %c0_106] : memref<6x2x1xf32, #tpu.memory_space<vmem>>, vector<1x2x1xf32>
    %205 = vector.shape_cast %204 : vector<1x2x1xf32> to vector<2x1xf32>
    %206 = vector.broadcast %197 : vector<128x1xf32> to vector<128x512xf32>
    %207 = vector.broadcast %194 : vector<1x512xf32> to vector<128x512xf32>
    %208 = arith.mulf %206, %207 : vector<128x512xf32>
    %209 = vector.broadcast %199 : vector<128x1xf32> to vector<128x512xf32>
    %210 = arith.addf %208, %209 : vector<128x512xf32>
    %cst_107 = arith.constant 0.00999999977 : f32
    %211 = vector.broadcast %cst_107 : f32 to vector<128x512xf32>
    %212 = arith.mulf %211, %210 : vector<128x512xf32>
    %213 = arith.maximumf %210, %212 : vector<128x512xf32>
    %c1_108 = arith.constant 1 : index
    %c0_109 = arith.constant 0 : index
    %c0_110 = arith.constant 0 : index
    %214 = vector.load %arg4[%c1_108, %c0_109, %c0_110] : memref<6x128x128xbf16, #tpu.memory_space<vmem>>, vector<1x128x128xbf16>
    %215 = vector.shape_cast %214 : vector<1x128x128xbf16> to vector<128x128xbf16>
    %216 = arith.truncf %213 : vector<128x512xf32> to vector<128x512xbf16>
    %cst_111 = arith.constant dense<0.000000e+00> : vector<128x512xf32>
    %217 = tpu.matmul %215, %216, %cst_111 {dimension_numbers = #tpu.dot_dimension_numbers<[1], [0], [0], [1], [0, 0, 1, 1], [], []>} : vector<128x128xbf16>, vector<128x512xbf16>, vector<128x512xf32> -> vector<128x512xf32>
    %218 = vector.broadcast %201 : vector<128x1xf32> to vector<128x512xf32>
    %219 = arith.addf %217, %218 : vector<128x512xf32>
    %cst_112 = arith.constant 0.00999999977 : f32
    %220 = vector.broadcast %cst_112 : f32 to vector<128x512xf32>
    %221 = arith.mulf %220, %219 : vector<128x512xf32>
    %222 = arith.maximumf %219, %221 : vector<128x512xf32>
    %223 = vector.broadcast %203 : vector<128x1xf32> to vector<128x512xf32>
    %224 = arith.mulf %222, %223 : vector<128x512xf32>
    %225 = vector.extract_strided_slice %224 {offsets = [0, 0], sizes = [64, 512], strides = [1, 1]} : vector<128x512xf32> to vector<64x512xf32>
    %cst_113 = arith.constant dense<0.000000e+00> : vector<512xf32>
    %226 = vector.multi_reduction <add>, %225, %cst_113 [0] : vector<64x512xf32> to vector<512xf32>
    %227 = vector.shape_cast %226 : vector<512xf32> to vector<1x512xf32>
    %228 = vector.extract_strided_slice %205 {offsets = [0, 0], sizes = [1, 1], strides = [1, 1]} : vector<2x1xf32> to vector<1x1xf32>
    %229 = vector.broadcast %228 : vector<1x1xf32> to vector<1x512xf32>
    %230 = arith.addf %227, %229 : vector<1x512xf32>
    %231 = vector.extract_strided_slice %224 {offsets = [64, 0], sizes = [64, 512], strides = [1, 1]} : vector<128x512xf32> to vector<64x512xf32>
    %cst_114 = arith.constant dense<0.000000e+00> : vector<512xf32>
    %232 = vector.multi_reduction <add>, %231, %cst_114 [0] : vector<64x512xf32> to vector<512xf32>
    %233 = vector.shape_cast %232 : vector<512xf32> to vector<1x512xf32>
    %234 = vector.extract_strided_slice %205 {offsets = [1, 0], sizes = [1, 1], strides = [1, 1]} : vector<2x1xf32> to vector<1x1xf32>
    %235 = vector.broadcast %234 : vector<1x1xf32> to vector<1x512xf32>
    %236 = arith.addf %233, %235 : vector<1x512xf32>
    %237 = math.tanh %230 : vector<1x512xf32>
    %238 = arith.subf %146, %236 : vector<1x512xf32>
    %cst_115 = arith.constant 0.000000e+00 : f32
    %239 = vector.broadcast %cst_115 : f32 to vector<1x512xf32>
    %240 = arith.subf %239, %237 : vector<1x512xf32>
    %241 = math.exp %240 : vector<1x512xf32>
    %242 = arith.mulf %238, %241 : vector<1x512xf32>
    %243 = arith.subf %195, %237 : vector<1x512xf32>
    %c0_116 = arith.constant 0 : index
    %c0_117 = arith.constant 0 : index
    %c0_118 = arith.constant 0 : index
    %244 = vector.load %arg2[%c0_116, %c0_117, %c0_118] : memref<6x128x1xf32, #tpu.memory_space<vmem>>, vector<1x128x1xf32>
    %245 = vector.shape_cast %244 : vector<1x128x1xf32> to vector<128x1xf32>
    %c0_119 = arith.constant 0 : index
    %c0_120 = arith.constant 0 : index
    %c0_121 = arith.constant 0 : index
    %246 = vector.load %arg3[%c0_119, %c0_120, %c0_121] : memref<6x128x1xf32, #tpu.memory_space<vmem>>, vector<1x128x1xf32>
    %247 = vector.shape_cast %246 : vector<1x128x1xf32> to vector<128x1xf32>
    %c0_122 = arith.constant 0 : index
    %c0_123 = arith.constant 0 : index
    %c0_124 = arith.constant 0 : index
    %248 = vector.load %arg5[%c0_122, %c0_123, %c0_124] : memref<6x128x1xf32, #tpu.memory_space<vmem>>, vector<1x128x1xf32>
    %249 = vector.shape_cast %248 : vector<1x128x1xf32> to vector<128x1xf32>
    %c0_125 = arith.constant 0 : index
    %c0_126 = arith.constant 0 : index
    %c0_127 = arith.constant 0 : index
    %250 = vector.load %arg6[%c0_125, %c0_126, %c0_127] : memref<6x128x1xf32, #tpu.memory_space<vmem>>, vector<1x128x1xf32>
    %251 = vector.shape_cast %250 : vector<1x128x1xf32> to vector<128x1xf32>
    %c0_128 = arith.constant 0 : index
    %c0_129 = arith.constant 0 : index
    %c0_130 = arith.constant 0 : index
    %252 = vector.load %arg7[%c0_128, %c0_129, %c0_130] : memref<6x2x1xf32, #tpu.memory_space<vmem>>, vector<1x2x1xf32>
    %253 = vector.shape_cast %252 : vector<1x2x1xf32> to vector<2x1xf32>
    %254 = vector.broadcast %245 : vector<128x1xf32> to vector<128x512xf32>
    %255 = vector.broadcast %242 : vector<1x512xf32> to vector<128x512xf32>
    %256 = arith.mulf %254, %255 : vector<128x512xf32>
    %257 = vector.broadcast %247 : vector<128x1xf32> to vector<128x512xf32>
    %258 = arith.addf %256, %257 : vector<128x512xf32>
    %cst_131 = arith.constant 0.00999999977 : f32
    %259 = vector.broadcast %cst_131 : f32 to vector<128x512xf32>
    %260 = arith.mulf %259, %258 : vector<128x512xf32>
    %261 = arith.maximumf %258, %260 : vector<128x512xf32>
    %c0_132 = arith.constant 0 : index
    %c0_133 = arith.constant 0 : index
    %c0_134 = arith.constant 0 : index
    %262 = vector.load %arg4[%c0_132, %c0_133, %c0_134] : memref<6x128x128xbf16, #tpu.memory_space<vmem>>, vector<1x128x128xbf16>
    %263 = vector.shape_cast %262 : vector<1x128x128xbf16> to vector<128x128xbf16>
    %264 = arith.truncf %261 : vector<128x512xf32> to vector<128x512xbf16>
    %cst_135 = arith.constant dense<0.000000e+00> : vector<128x512xf32>
    %265 = tpu.matmul %263, %264, %cst_135 {dimension_numbers = #tpu.dot_dimension_numbers<[1], [0], [0], [1], [0, 0, 1, 1], [], []>} : vector<128x128xbf16>, vector<128x512xbf16>, vector<128x512xf32> -> vector<128x512xf32>
    %266 = vector.broadcast %249 : vector<128x1xf32> to vector<128x512xf32>
    %267 = arith.addf %265, %266 : vector<128x512xf32>
    %cst_136 = arith.constant 0.00999999977 : f32
    %268 = vector.broadcast %cst_136 : f32 to vector<128x512xf32>
    %269 = arith.mulf %268, %267 : vector<128x512xf32>
    %270 = arith.maximumf %267, %269 : vector<128x512xf32>
    %271 = vector.broadcast %251 : vector<128x1xf32> to vector<128x512xf32>
    %272 = arith.mulf %270, %271 : vector<128x512xf32>
    %273 = vector.extract_strided_slice %272 {offsets = [0, 0], sizes = [64, 512], strides = [1, 1]} : vector<128x512xf32> to vector<64x512xf32>
    %cst_137 = arith.constant dense<0.000000e+00> : vector<512xf32>
    %274 = vector.multi_reduction <add>, %273, %cst_137 [0] : vector<64x512xf32> to vector<512xf32>
    %275 = vector.shape_cast %274 : vector<512xf32> to vector<1x512xf32>
    %276 = vector.extract_strided_slice %253 {offsets = [0, 0], sizes = [1, 1], strides = [1, 1]} : vector<2x1xf32> to vector<1x1xf32>
    %277 = vector.broadcast %276 : vector<1x1xf32> to vector<1x512xf32>
    %278 = arith.addf %275, %277 : vector<1x512xf32>
    %279 = vector.extract_strided_slice %272 {offsets = [64, 0], sizes = [64, 512], strides = [1, 1]} : vector<128x512xf32> to vector<64x512xf32>
    %cst_138 = arith.constant dense<0.000000e+00> : vector<512xf32>
    %280 = vector.multi_reduction <add>, %279, %cst_138 [0] : vector<64x512xf32> to vector<512xf32>
    %281 = vector.shape_cast %280 : vector<512xf32> to vector<1x512xf32>
    %282 = vector.extract_strided_slice %253 {offsets = [1, 0], sizes = [1, 1], strides = [1, 1]} : vector<2x1xf32> to vector<1x1xf32>
    %283 = vector.broadcast %282 : vector<1x1xf32> to vector<1x512xf32>
    %284 = arith.addf %281, %283 : vector<1x512xf32>
    %285 = math.tanh %278 : vector<1x512xf32>
    %286 = arith.subf %194, %284 : vector<1x512xf32>
    %cst_139 = arith.constant 0.000000e+00 : f32
    %287 = vector.broadcast %cst_139 : f32 to vector<1x512xf32>
    %288 = arith.subf %287, %285 : vector<1x512xf32>
    %289 = math.exp %288 : vector<1x512xf32>
    %290 = arith.mulf %286, %289 : vector<1x512xf32>
    %291 = arith.subf %243, %285 : vector<1x512xf32>
    %292 = arith.mulf %290, %290 : vector<1x512xf32>
    %293 = arith.mulf %242, %242 : vector<1x512xf32>
    %294 = arith.addf %292, %293 : vector<1x512xf32>
    %cst_140 = arith.constant -5.000000e-01 : f32
    %295 = vector.broadcast %cst_140 : f32 to vector<1x512xf32>
    %296 = arith.mulf %295, %294 : vector<1x512xf32>
    %cst_141 = arith.constant 1.83787704 : f32
    %297 = vector.broadcast %cst_141 : f32 to vector<1x512xf32>
    %298 = arith.subf %296, %297 : vector<1x512xf32>
    %299 = arith.addf %298, %291 : vector<1x512xf32>
    %c0_142 = arith.constant 0 : index
    %c0_143 = arith.constant 0 : index
    %300 = vector.load %arg8[%c0_142, %c0_143] : memref<1x512xf32, #tpu.memory_space<vmem>>, vector<1x512xf32>
    tpu.vector_store %arg8[%c0_142, %c0_143], %299 {strides = array<i32>} : memref<1x512xf32, #tpu.memory_space<vmem>>, vector<1x512xf32>,
    return
  }
  func.func @transform_0(%arg0: i32) -> (i32, i32) {
    %c0_i32 = arith.constant 0 : i32
    %c0_i32_0 = arith.constant 0 : i32
    return %c0_i32, %arg0 : i32, i32
  }
  func.func @transform_1(%arg0: i32) -> (i32, i32, i32) {
    %c0_i32 = arith.constant 0 : i32
    %c0_i32_0 = arith.constant 0 : i32
    %c0_i32_1 = arith.constant 0 : i32
    %c0_i32_2 = arith.constant 0 : i32
    return %c0_i32, %c0_i32_0, %c0_i32_1 : i32, i32, i32
  }
  func.func @transform_2(%arg0: i32) -> (i32, i32, i32) {
    %c0_i32 = arith.constant 0 : i32
    %c0_i32_0 = arith.constant 0 : i32
    %c0_i32_1 = arith.constant 0 : i32
    %c0_i32_2 = arith.constant 0 : i32
    return %c0_i32, %c0_i32_0, %c0_i32_1 : i32, i32, i32
  }
  func.func @transform_3(%arg0: i32) -> (i32, i32, i32) {
    %c0_i32 = arith.constant 0 : i32
    %c0_i32_0 = arith.constant 0 : i32
    %c0_i32_1 = arith.constant 0 : i32
    %c0_i32_2 = arith.constant 0 : i32
    return %c0_i32, %c0_i32_0, %c0_i32_1 : i32, i32, i32
  }
  func.func @transform_4(%arg0: i32) -> (i32, i32, i32) {
    %c0_i32 = arith.constant 0 : i32
    %c0_i32_0 = arith.constant 0 : i32
    %c0_i32_1 = arith.constant 0 : i32
    %c0_i32_2 = arith.constant 0 : i32
    return %c0_i32, %c0_i32_0, %c0_i32_1 : i32, i32, i32
  }
  func.func @transform_5(%arg0: i32) -> (i32, i32, i32) {
    %c0_i32 = arith.constant 0 : i32
    %c0_i32_0 = arith.constant 0 : i32
    %c0_i32_1 = arith.constant 0 : i32
    %c0_i32_2 = arith.constant 0 : i32
    return %c0_i32, %c0_i32_0, %c0_i32_1 : i32, i32, i32
  }
  func.func @transform_6(%arg0: i32) -> (i32, i32, i32) {
    %c0_i32 = arith.constant 0 : i32
    %c0_i32_0 = arith.constant 0 : i32
    %c0_i32_1 = arith.constant 0 : i32
    %c0_i32_2 = arith.constant 0 : i32
    return %c0_i32, %c0_i32_0, %c0_i32_1 : i32, i32, i32
  }
  func.func @transform_7(%arg0: i32) -> (i32, i32) {
    %c0_i32 = arith.constant 0 : i32
    %c0_i32_0 = arith.constant 0 : i32
    return %c0_i32, %arg0 : i32, i32
  }
}

</mosaic_0001>

<llo_original>
// kernel: tpu_custom_call.1
$region0: #{tpu_custom_call.1}
  #allocation0 [shape = 'u32[]', space=smem, size = 0x4, offset = 0x4, fixed_abs, tag = 'smem constant byte address 0x4 - core index']
  #allocation1 [shape = 'u32[144,128]{1,0:T(1,128)}', space=vmem, size = 0x12000, scoped, tag = 'internal scratch']
  %s0 = inlined_call_operand.vmem [shape: f32[2,512], index: 0, kind: input, shape index: {}]
  %s1 = inlined_call_operand.vmem [shape: f32[6,128,1], index: 1, kind: input, shape index: {}]
  %s2 = inlined_call_operand.vmem [shape: f32[6,128,1], index: 2, kind: input, shape index: {}]
  %s3 = inlined_call_operand.vmem [shape: bf16[6,128,128], index: 3, kind: input, shape index: {}]
  %s4 = inlined_call_operand.vmem [shape: f32[6,128,1], index: 4, kind: input, shape index: {}]
  %s5 = inlined_call_operand.vmem [shape: f32[6,128,1], index: 5, kind: input, shape index: {}]
  %s6 = inlined_call_operand.vmem [shape: f32[6,2,1], index: 6, kind: input, shape index: {}]
  %s7 = inlined_call_operand.hbm [shape: f32[1,512], index: 7, kind: output, shape index: {}]
  %s8 = sld [smem:[#allocation0]]
  $region38: #{tpu_custom_call.1} parent=0
    _
  %s10 = ssub.s32 1, %s8
  %s11 = scalar_select 0, %s10, %s8
  $region1: #{tpu_custom_call.1} parent=0
    #allocation2 [shape = 'u8[2048]{0}', space=vmem, size = 0x800, scoped, tag = 'output window, operand 0, single buffered']
    #allocation3 [shape = 's32[1]{0}', space=sflag, size = 0x4, scoped, tag = 'scoped memory for tpu_custom_call.1']
    %12 = vsyncpa [#allocation3], 0
    // Predicated region
    $region2: #{tpu_custom_call.1} parent=1 // pred_check
      _
    $region3: #{tpu_custom_call.1} parent=1 // pred_check_branch
      %14 = sbr.rel (0) target = $region5
    $region4: #{tpu_custom_call.1} parent=1 // pred_region
      _
    $region5: #{tpu_custom_call.1} parent=1 // pred_fallthru
      _
    // Predicated region
    $region6: #{tpu_custom_call.1} parent=1 // pred_check
      _
    $region7: #{tpu_custom_call.1} parent=1 // pred_check_branch
      %16 = sbr.rel (0) target = $region9
    $region8: #{tpu_custom_call.1} parent=1 // pred_region
      _
    $region9: #{tpu_custom_call.1} parent=1 // pred_fallthru
      _
    // Predicated region
    $region10: #{tpu_custom_call.1} parent=1 // pred_check
      _
    $region11: #{tpu_custom_call.1} parent=1 // pred_check_branch
      %18 = sbr.rel (0) target = $region13
    $region12: #{tpu_custom_call.1} parent=1 // pred_region
      _
    $region13: #{tpu_custom_call.1} parent=1 // pred_fallthru
      _
    // Predicated region
    $region14: #{tpu_custom_call.1} parent=1 // pred_check
      _
    $region15: #{tpu_custom_call.1} parent=1 // pred_check_branch
      %20 = sbr.rel (0) target = $region17
    $region16: #{tpu_custom_call.1} parent=1 // pred_region
      _
    $region17: #{tpu_custom_call.1} parent=1 // pred_fallthru
      _
    // Predicated region
    $region18: #{tpu_custom_call.1} parent=1 // pred_check
      _
    $region19: #{tpu_custom_call.1} parent=1 // pred_check_branch
      %22 = sbr.rel (0) target = $region21
    $region20: #{tpu_custom_call.1} parent=1 // pred_region
      _
    $region21: #{tpu_custom_call.1} parent=1 // pred_fallthru
      _
    // Predicated region
    $region22: #{tpu_custom_call.1} parent=1 // pred_check
      _
    $region23: #{tpu_custom_call.1} parent=1 // pred_check_branch
      %24 = sbr.rel (0) target = $region25
    $region24: #{tpu_custom_call.1} parent=1 // pred_region
      _
    $region25: #{tpu_custom_call.1} parent=1 // pred_fallthru
      _
    // Predicated region
    $region26: #{tpu_custom_call.1} parent=1 // pred_check
      _
    $region27: #{tpu_custom_call.1} parent=1 // pred_check_branch
      %26 = sbr.rel (0) target = $region29
    $region28: #{tpu_custom_call.1} parent=1 // pred_region
      _
    $region29: #{tpu_custom_call.1} parent=1 // pred_fallthru
      _
    %v28 = vld [vmem:[%s0] sm:$0xff]
    %s29 = scalar_lea.vmem %s1, 640
    %v30 = vld [vmem:[%s29] sm:$0xff]
    %v31 = vld [vmem:[%s29 + $0x8] sm:$0xff]
    %v32 = vld [vmem:[%s29 + $0x10] sm:$0xff]
    %v33 = vld [vmem:[%s29 + $0x18] sm:$0xff]
    %v34 = vld [vmem:[%s29 + $0x20] sm:$0xff]
    %v35 = vld [vmem:[%s29 + $0x28] sm:$0xff]
    %v36 = vld [vmem:[%s29 + $0x30] sm:$0xff]
    %v37 = vld [vmem:[%s29 + $0x38] sm:$0xff]
    %v38 = vld [vmem:[%s29 + $0x40] sm:$0xff]
    %v39 = vld [vmem:[%s29 + $0x48] sm:$0xff]
    %v40 = vld [vmem:[%s29 + $0x50] sm:$0xff]
    %v41 = vld [vmem:[%s29 + $0x58] sm:$0xff]
    %v42 = vld [vmem:[%s29 + $0x60] sm:$0xff]
    %v43 = vld [vmem:[%s29 + $0x68] sm:$0xff]
    %v44 = vld [vmem:[%s29 + $0x70] sm:$0xff]
    %v45 = vld [vmem:[%s29 + $0x78] sm:$0xff]
    %s46 = scalar_lea.vmem %s2, 640
    %v47 = vld [vmem:[%s46] sm:$0xff]
    %v48 = vld [vmem:[%s46 + $0x8] sm:$0xff]
    %v49 = vld [vmem:[%s46 + $0x10] sm:$0xff]
    %v50 = vld [vmem:[%s46 + $0x18] sm:$0xff]
    %v51 = vld [vmem:[%s46 + $0x20] sm:$0xff]
    %v52 = vld [vmem:[%s46 + $0x28] sm:$0xff]
    %v53 = vld [vmem:[%s46 + $0x30] sm:$0xff]
    %v54 = vld [vmem:[%s46 + $0x38] sm:$0xff]
    %v55 = vld [vmem:[%s46 + $0x40] sm:$0xff]
    %v56 = vld [vmem:[%s46 + $0x48] sm:$0xff]
    %v57 = vld [vmem:[%s46 + $0x50] sm:$0xff]
    %v58 = vld [vmem:[%s46 + $0x58] sm:$0xff]
    %v59 = vld [vmem:[%s46 + $0x60] sm:$0xff]
    %v60 = vld [vmem:[%s46 + $0x68] sm:$0xff]
    %v61 = vld [vmem:[%s46 + $0x70] sm:$0xff]
    %v62 = vld [vmem:[%s46 + $0x78] sm:$0xff]
    %s63 = scalar_lea.vmem %s4, 640
    %v64 = vld [vmem:[%s63] sm:$0xff]
    %v65 = vld [vmem:[%s63 + $0x8] sm:$0xff]
    %v66 = vld [vmem:[%s63 + $0x10] sm:$0xff]
    %v67 = vld [vmem:[%s63 + $0x18] sm:$0xff]
    %v68 = vld [vmem:[%s63 + $0x20] sm:$0xff]
    %v69 = vld [vmem:[%s63 + $0x28] sm:$0xff]
    %v70 = vld [vmem:[%s63 + $0x30] sm:$0xff]
    %v71 = vld [vmem:[%s63 + $0x38] sm:$0xff]
    %v72 = vld [vmem:[%s63 + $0x40] sm:$0xff]
    %v73 = vld [vmem:[%s63 + $0x48] sm:$0xff]
    %v74 = vld [vmem:[%s63 + $0x50] sm:$0xff]
    %v75 = vld [vmem:[%s63 + $0x58] sm:$0xff]
    %v76 = vld [vmem:[%s63 + $0x60] sm:$0xff]
    %v77 = vld [vmem:[%s63 + $0x68] sm:$0xff]
    %v78 = vld [vmem:[%s63 + $0x70] sm:$0xff]
    %v79 = vld [vmem:[%s63 + $0x78] sm:$0xff]
    %s80 = scalar_lea.vmem %s5, 640
    %v81 = vld [vmem:[%s80] sm:$0xff]
    %v82 = vld [vmem:[%s80 + $0x8] sm:$0xff]
    %v83 = vld [vmem:[%s80 + $0x10] sm:$0xff]
    %v84 = vld [vmem:[%s80 + $0x18] sm:$0xff]
    %v85 = vld [vmem:[%s80 + $0x20] sm:$0xff]
    %v86 = vld [vmem:[%s80 + $0x28] sm:$0xff]
    %v87 = vld [vmem:[%s80 + $0x30] sm:$0xff]
    %v88 = vld [vmem:[%s80 + $0x38] sm:$0xff]
    %v89 = vld [vmem:[%s80 + $0x40] sm:$0xff]
    %v90 = vld [vmem:[%s80 + $0x48] sm:$0xff]
    %v91 = vld [vmem:[%s80 + $0x50] sm:$0xff]
    %v92 = vld [vmem:[%s80 + $0x58] sm:$0xff]
    %v93 = vld [vmem:[%s80 + $0x60] sm:$0xff]
    %v94 = vld [vmem:[%s80 + $0x68] sm:$0xff]
    %v95 = vld [vmem:[%s80 + $0x70] sm:$0xff]
    %v96 = vld [vmem:[%s80 + $0x78] sm:$0xff]
    %s97 = scalar_lea.vmem %s6, 10
    %v98 = vld [vmem:[%s97] sm:$0x3]
    %100 = vset.pattern.permute.xlu0 0
    %101 = vperm.xlu0 %100, %v30
    %v102 = vpop.permute.xlu0 %101
    %105 = vset.pattern.permute.xlu0 0
    %106 = vperm.xlu0 %105, %v31
    %v107 = vpop.permute.xlu0 %106
    %110 = vset.pattern.permute.xlu0 0
    %111 = vperm.xlu0 %110, %v32
    %v112 = vpop.permute.xlu0 %111
    %115 = vset.pattern.permute.xlu0 0
    %116 = vperm.xlu0 %115, %v33
    %v117 = vpop.permute.xlu0 %116
    %120 = vset.pattern.permute.xlu0 0
    %121 = vperm.xlu0 %120, %v34
    %v122 = vpop.permute.xlu0 %121
    %125 = vset.pattern.permute.xlu0 0
    %126 = vperm.xlu0 %125, %v35
    %v127 = vpop.permute.xlu0 %126
    %130 = vset.pattern.permute.xlu0 0
    %131 = vperm.xlu0 %130, %v36
    %v132 = vpop.permute.xlu0 %131
    %135 = vset.pattern.permute.xlu0 0
    %136 = vperm.xlu0 %135, %v37
    %v137 = vpop.permute.xlu0 %136
    %140 = vset.pattern.permute.xlu0 0
    %141 = vperm.xlu0 %140, %v38
    %v142 = vpop.permute.xlu0 %141
    %145 = vset.pattern.permute.xlu0 0
    %146 = vperm.xlu0 %145, %v39
    %v147 = vpop.permute.xlu0 %146
    %150 = vset.pattern.permute.xlu0 0
    %151 = vperm.xlu0 %150, %v40
    %v152 = vpop.permute.xlu0 %151
    %155 = vset.pattern.permute.xlu0 0
    %156 = vperm.xlu0 %155, %v41
    %v157 = vpop.permute.xlu0 %156
    %160 = vset.pattern.permute.xlu0 0
    %161 = vperm.xlu0 %160, %v42
    %v162 = vpop.permute.xlu0 %161
    %165 = vset.pattern.permute.xlu0 0
    %166 = vperm.xlu0 %165, %v43
    %v167 = vpop.permute.xlu0 %166
    %170 = vset.pattern.permute.xlu0 0
    %171 = vperm.xlu0 %170, %v44
    %v172 = vpop.permute.xlu0 %171
    %175 = vset.pattern.permute.xlu0 0
    %176 = vperm.xlu0 %175, %v45
    %v177 = vpop.permute.xlu0 %176
    %v180 = vlaneseq
    %v181 = vshrl.u32 %v180, 7
    %v182 = vsub.s32 0, %v181
    %v183 = vrot.slane %v28, %v182
    %v184 = vlaneseq
    %v185 = vshrl.u32 %v184, 7
    %v186 = vsub.s32 2, %v185
    %v187 = vrot.slane %v28, %v186
    %v188 = vlaneseq
    %v189 = vshrl.u32 %v188, 7
    %v190 = vsub.s32 4, %v189
    %v191 = vrot.slane %v28, %v190
    %v192 = vlaneseq
    %v193 = vshrl.u32 %v192, 7
    %v194 = vsub.s32 6, %v193
    %v195 = vrot.slane %v28, %v194
    %v200 = vlaneseq
    %v201 = vshrl.u32 %v200, 7
    %v202 = vsub.s32 0, %v201
    %v203 = vrot.slane %v183, %v202
    %v204 = vlaneseq
    %v205 = vshrl.u32 %v204, 7
    %v206 = vsub.s32 0, %v205
    %v207 = vrot.slane %v187, %v206
    %v208 = vlaneseq
    %v209 = vshrl.u32 %v208, 7
    %v210 = vsub.s32 0, %v209
    %v211 = vrot.slane %v191, %v210
    %v212 = vlaneseq
    %v213 = vshrl.u32 %v212, 7
    %v214 = vsub.s32 0, %v213
    %v215 = vrot.slane %v195, %v214
    %v216 = vmul.f32 %v102, %v203
    %v217 = vmul.f32 %v102, %v207
    %v218 = vmul.f32 %v102, %v211
    %v219 = vmul.f32 %v102, %v215
    %v220 = vmul.f32 %v107, %v203
    %v221 = vmul.f32 %v107, %v207
    %v222 = vmul.f32 %v107, %v211
    %v223 = vmul.f32 %v107, %v215
    %v224 = vmul.f32 %v112, %v203
    %v225 = vmul.f32 %v112, %v207
    %v226 = vmul.f32 %v112, %v211
    %v227 = vmul.f32 %v112, %v215
    %v228 = vmul.f32 %v117, %v203
    %v229 = vmul.f32 %v117, %v207
    %v230 = vmul.f32 %v117, %v211
    %v231 = vmul.f32 %v117, %v215
    %v232 = vmul.f32 %v122, %v203
    %v233 = vmul.f32 %v122, %v207
    %v234 = vmul.f32 %v122, %v211
    %v235 = vmul.f32 %v122, %v215
    %v236 = vmul.f32 %v127, %v203
    %v237 = vmul.f32 %v127, %v207
    %v238 = vmul.f32 %v127, %v211
    %v239 = vmul.f32 %v127, %v215
    %v240 = vmul.f32 %v132, %v203
    %v241 = vmul.f32 %v132, %v207
    %v242 = vmul.f32 %v132, %v211
    %v243 = vmul.f32 %v132, %v215
    %v244 = vmul.f32 %v137, %v203
    %v245 = vmul.f32 %v137, %v207
    %v246 = vmul.f32 %v137, %v211
    %v247 = vmul.f32 %v137, %v215
    %v248 = vmul.f32 %v142, %v203
    %v249 = vmul.f32 %v142, %v207
    %v250 = vmul.f32 %v142, %v211
    %v251 = vmul.f32 %v142, %v215
    %v252 = vmul.f32 %v147, %v203
    %v253 = vmul.f32 %v147, %v207
    %v254 = vmul.f32 %v147, %v211
    %v255 = vmul.f32 %v147, %v215
    %v256 = vmul.f32 %v152, %v203
    %v257 = vmul.f32 %v152, %v207
    %v258 = vmul.f32 %v152, %v211
    %v259 = vmul.f32 %v152, %v215
    %v260 = vmul.f32 %v157, %v203
    %v261 = vmul.f32 %v157, %v207
    %v262 = vmul.f32 %v157, %v211
    %v263 = vmul.f32 %v157, %v215
    %v264 = vmul.f32 %v162, %v203
    %v265 = vmul.f32 %v162, %v207
    %v266 = vmul.f32 %v162, %v211
    %v267 = vmul.f32 %v162, %v215
    %v268 = vmul.f32 %v167, %v203
    %v269 = vmul.f32 %v167, %v207
    %v270 = vmul.f32 %v167, %v211
    %v271 = vmul.f32 %v167, %v215
    %v272 = vmul.f32 %v172, %v203
    %v273 = vmul.f32 %v172, %v207
    %v274 = vmul.f32 %v172, %v211
    %v275 = vmul.f32 %v172, %v215
    %v276 = vmul.f32 %v177, %v203
    %v277 = vmul.f32 %v177, %v207
    %v278 = vmul.f32 %v177, %v211
    %v279 = vmul.f32 %v177, %v215
    %281 = vset.pattern.permute.xlu0 0
    %282 = vperm.xlu0 %281, %v47
    %v283 = vpop.permute.xlu0 %282
    %286 = vset.pattern.permute.xlu0 0
    %287 = vperm.xlu0 %286, %v48
    %v288 = vpop.permute.xlu0 %287
    %291 = vset.pattern.permute.xlu0 0
    %292 = vperm.xlu0 %291, %v49
    %v293 = vpop.permute.xlu0 %292
    %296 = vset.pattern.permute.xlu0 0
    %297 = vperm.xlu0 %296, %v50
    %v298 = vpop.permute.xlu0 %297
    %301 = vset.pattern.permute.xlu0 0
    %302 = vperm.xlu0 %301, %v51
    %v303 = vpop.permute.xlu0 %302
    %306 = vset.pattern.permute.xlu0 0
    %307 = vperm.xlu0 %306, %v52
    %v308 = vpop.permute.xlu0 %307
    %311 = vset.pattern.permute.xlu0 0
    %312 = vperm.xlu0 %311, %v53
    %v313 = vpop.permute.xlu0 %312
    %316 = vset.pattern.permute.xlu0 0
    %317 = vperm.xlu0 %316, %v54
    %v318 = vpop.permute.xlu0 %317
    %321 = vset.pattern.permute.xlu0 0
    %322 = vperm.xlu0 %321, %v55
    %v323 = vpop.permute.xlu0 %322
    %326 = vset.pattern.permute.xlu0 0
    %327 = vperm.xlu0 %326, %v56
    %v328 = vpop.permute.xlu0 %327
    %331 = vset.pattern.permute.xlu0 0
    %332 = vperm.xlu0 %331, %v57
    %v333 = vpop.permute.xlu0 %332
    %336 = vset.pattern.permute.xlu0 0
    %337 = vperm.xlu0 %336, %v58
    %v338 = vpop.permute.xlu0 %337
    %341 = vset.pattern.permute.xlu0 0
    %342 = vperm.xlu0 %341, %v59
    %v343 = vpop.permute.xlu0 %342
    %346 = vset.pattern.permute.xlu0 0
    %347 = vperm.xlu0 %346, %v60
    %v348 = vpop.permute.xlu0 %347
    %351 = vset.pattern.permute.xlu0 0
    %352 = vperm.xlu0 %351, %v61
    %v353 = vpop.permute.xlu0 %352
    %356 = vset.pattern.permute.xlu0 0
    %357 = vperm.xlu0 %356, %v62
    %v358 = vpop.permute.xlu0 %357
    %v360 = vadd.f32 %v216, %v283
    %v361 = vadd.f32 %v217, %v283
    %v362 = vadd.f32 %v218, %v283
    %v363 = vadd.f32 %v219, %v283
    %v364 = vadd.f32 %v220, %v288
    %v365 = vadd.f32 %v221, %v288
    %v366 = vadd.f32 %v222, %v288
    %v367 = vadd.f32 %v223, %v288
    %v368 = vadd.f32 %v224, %v293
    %v369 = vadd.f32 %v225, %v293
    %v370 = vadd.f32 %v226, %v293
    %v371 = vadd.f32 %v227, %v293
    %v372 = vadd.f32 %v228, %v298
    %v373 = vadd.f32 %v229, %v298
    %v374 = vadd.f32 %v230, %v298
    %v375 = vadd.f32 %v231, %v298
    %v376 = vadd.f32 %v232, %v303
    %v377 = vadd.f32 %v233, %v303
    %v378 = vadd.f32 %v234, %v303
    %v379 = vadd.f32 %v235, %v303
    %v380 = vadd.f32 %v236, %v308
    %v381 = vadd.f32 %v237, %v308
    %v382 = vadd.f32 %v238, %v308
    %v383 = vadd.f32 %v239, %v308
    %v384 = vadd.f32 %v240, %v313
    %v385 = vadd.f32 %v241, %v313
    %v386 = vadd.f32 %v242, %v313
    %v387 = vadd.f32 %v243, %v313
    %v388 = vadd.f32 %v244, %v318
    %v389 = vadd.f32 %v245, %v318
    %v390 = vadd.f32 %v246, %v318
    %v391 = vadd.f32 %v247, %v318
    %v392 = vadd.f32 %v248, %v323
    %v393 = vadd.f32 %v249, %v323
    %v394 = vadd.f32 %v250, %v323
    %v395 = vadd.f32 %v251, %v323
    %v396 = vadd.f32 %v252, %v328
    %v397 = vadd.f32 %v253, %v328
    %v398 = vadd.f32 %v254, %v328
    %v399 = vadd.f32 %v255, %v328
    %v400 = vadd.f32 %v256, %v333
    %v401 = vadd.f32 %v257, %v333
    %v402 = vadd.f32 %v258, %v333
    %v403 = vadd.f32 %v259, %v333
    %v404 = vadd.f32 %v260, %v338
    %v405 = vadd.f32 %v261, %v338
    %v406 = vadd.f32 %v262, %v338
    %v407 = vadd.f32 %v263, %v338
    %v408 = vadd.f32 %v264, %v343
    %v409 = vadd.f32 %v265, %v343
    %v410 = vadd.f32 %v266, %v343
    %v411 = vadd.f32 %v267, %v343
    %v412 = vadd.f32 %v268, %v348
    %v413 = vadd.f32 %v269, %v348
    %v414 = vadd.f32 %v270, %v348
    %v415 = vadd.f32 %v271, %v348
    %v416 = vadd.f32 %v272, %v353
    %v417 = vadd.f32 %v273, %v353
    %v418 = vadd.f32 %v274, %v353
    %v419 = vadd.f32 %v275, %v353
    %v420 = vadd.f32 %v276, %v358
    %v421 = vadd.f32 %v277, %v358
    %v422 = vadd.f32 %v278, %v358
    %v423 = vadd.f32 %v279, %v358
    %v424 = vmul.f32 %v360, 0.01
    %v425 = vmul.f32 %v361, 0.01
    %v426 = vmul.f32 %v362, 0.01
    %v427 = vmul.f32 %v363, 0.01
    %v428 = vmul.f32 %v364, 0.01
    %v429 = vmul.f32 %v365, 0.01
    %v430 = vmul.f32 %v366, 0.01
    %v431 = vmul.f32 %v367, 0.01
    %v432 = vmul.f32 %v368, 0.01
    %v433 = vmul.f32 %v369, 0.01
    %v434 = vmul.f32 %v370, 0.01
    %v435 = vmul.f32 %v371, 0.01
    %v436 = vmul.f32 %v372, 0.01
    %v437 = vmul.f32 %v373, 0.01
    %v438 = vmul.f32 %v374, 0.01
    %v439 = vmul.f32 %v375, 0.01
    %v440 = vmul.f32 %v376, 0.01
    %v441 = vmul.f32 %v377, 0.01
    %v442 = vmul.f32 %v378, 0.01
    %v443 = vmul.f32 %v379, 0.01
    %v444 = vmul.f32 %v380, 0.01
    %v445 = vmul.f32 %v381, 0.01
    %v446 = vmul.f32 %v382, 0.01
    %v447 = vmul.f32 %v383, 0.01
    %v448 = vmul.f32 %v384, 0.01
    %v449 = vmul.f32 %v385, 0.01
    %v450 = vmul.f32 %v386, 0.01
    %v451 = vmul.f32 %v387, 0.01
    %v452 = vmul.f32 %v388, 0.01
    %v453 = vmul.f32 %v389, 0.01
    %v454 = vmul.f32 %v390, 0.01
    %v455 = vmul.f32 %v391, 0.01
    %v456 = vmul.f32 %v392, 0.01
    %v457 = vmul.f32 %v393, 0.01
    %v458 = vmul.f32 %v394, 0.01
    %v459 = vmul.f32 %v395, 0.01
    %v460 = vmul.f32 %v396, 0.01
    %v461 = vmul.f32 %v397, 0.01
    %v462 = vmul.f32 %v398, 0.01
    %v463 = vmul.f32 %v399, 0.01
    %v464 = vmul.f32 %v400, 0.01
    %v465 = vmul.f32 %v401, 0.01
    %v466 = vmul.f32 %v402, 0.01
    %v467 = vmul.f32 %v403, 0.01
    %v468 = vmul.f32 %v404, 0.01
    %v469 = vmul.f32 %v405, 0.01
    %v470 = vmul.f32 %v406, 0.01
    %v471 = vmul.f32 %v407, 0.01
    %v472 = vmul.f32 %v408, 0.01
    %v473 = vmul.f32 %v409, 0.01
    %v474 = vmul.f32 %v410, 0.01
    %v475 = vmul.f32 %v411, 0.01
    %v476 = vmul.f32 %v412, 0.01
    %v477 = vmul.f32 %v413, 0.01
    %v478 = vmul.f32 %v414, 0.01
    %v479 = vmul.f32 %v415, 0.01
    %v480 = vmul.f32 %v416, 0.01
    %v481 = vmul.f32 %v417, 0.01
    %v482 = vmul.f32 %v418, 0.01
    %v483 = vmul.f32 %v419, 0.01
    %v484 = vmul.f32 %v420, 0.01
    %v485 = vmul.f32 %v421, 0.01
    %v486 = vmul.f32 %v422, 0.01
    %v487 = vmul.f32 %v423, 0.01
    %v488 = vmax.f32 %v360, %v424
    %v489 = vmax.f32 %v361, %v425
    %v490 = vmax.f32 %v362, %v426
    %v491 = vmax.f32 %v363, %v427
    %v492 = vmax.f32 %v364, %v428
    %v493 = vmax.f32 %v365, %v429
    %v494 = vmax.f32 %v366, %v430
    %v495 = vmax.f32 %v367, %v431
    %v496 = vmax.f32 %v368, %v432
    %v497 = vmax.f32 %v369, %v433
    %v498 = vmax.f32 %v370, %v434
    %v499 = vmax.f32 %v371, %v435
    %v500 = vmax.f32 %v372, %v436
    %v501 = vmax.f32 %v373, %v437
    %v502 = vmax.f32 %v374, %v438
    %v503 = vmax.f32 %v375, %v439
    %v504 = vmax.f32 %v376, %v440
    %v505 = vmax.f32 %v377, %v441
    %v506 = vmax.f32 %v378, %v442
    %v507 = vmax.f32 %v379, %v443
    %v508 = vmax.f32 %v380, %v444
    %v509 = vmax.f32 %v381, %v445
    %v510 = vmax.f32 %v382, %v446
    %v511 = vmax.f32 %v383, %v447
    %v512 = vmax.f32 %v384, %v448
    %v513 = vmax.f32 %v385, %v449
    %v514 = vmax.f32 %v386, %v450
    %v515 = vmax.f32 %v387, %v451
    %v516 = vmax.f32 %v388, %v452
    %v517 = vmax.f32 %v389, %v453
    %v518 = vmax.f32 %v390, %v454
    %v519 = vmax.f32 %v391, %v455
    %v520 = vmax.f32 %v392, %v456
    %v521 = vmax.f32 %v393, %v457
    %v522 = vmax.f32 %v394, %v458
    %v523 = vmax.f32 %v395, %v459
    %v524 = vmax.f32 %v396, %v460
    %v525 = vmax.f32 %v397, %v461
    %v526 = vmax.f32 %v398, %v462
    %v527 = vmax.f32 %v399, %v463
    %v528 = vmax.f32 %v400, %v464
    %v529 = vmax.f32 %v401, %v465
    %v530 = vmax.f32 %v402, %v466
    %v531 = vmax.f32 %v403, %v467
    %v532 = vmax.f32 %v404, %v468
    %v533 = vmax.f32 %v405, %v469
    %v534 = vmax.f32 %v406, %v470
    %v535 = vmax.f32 %v407, %v471
    %v536 = vmax.f32 %v408, %v472
    %v537 = vmax.f32 %v409, %v473
    %v538 = vmax.f32 %v410, %v474
    %v539 = vmax.f32 %v411, %v475
    %v540 = vmax.f32 %v412, %v476
    %v541 = vmax.f32 %v413, %v477
    %v542 = vmax.f32 %v414, %v478
    %v543 = vmax.f32 %v415, %v479
    %v544 = vmax.f32 %v416, %v480
    %v545 = vmax.f32 %v417, %v481
    %v546 = vmax.f32 %v418, %v482
    %v547 = vmax.f32 %v419, %v483
    %v548 = vmax.f32 %v420, %v484
    %v549 = vmax.f32 %v421, %v485
    %v550 = vmax.f32 %v422, %v486
    %v551 = vmax.f32 %v423, %v487
    %s552 = scalar_lea.vmem %s3, 320
    %v553 = vld [vmem:[%s552] sm:$0xf]
    %v554 = vld [vmem:[%s552 + $0x4] sm:$0xf]
    %v555 = vld [vmem:[%s552 + $0x8] sm:$0xf]
    %v556 = vld [vmem:[%s552 + $0xc] sm:$0xf]
    %v557 = vld [vmem:[%s552 + $0x10] sm:$0xf]
    %v558 = vld [vmem:[%s552 + $0x14] sm:$0xf]
    %v559 = vld [vmem:[%s552 + $0x18] sm:$0xf]
    %v560 = vld [vmem:[%s552 + $0x1c] sm:$0xf]
    %v561 = vld [vmem:[%s552 + $0x20] sm:$0xf]
    %v562 = vld [vmem:[%s552 + $0x24] sm:$0xf]
    %v563 = vld [vmem:[%s552 + $0x28] sm:$0xf]
    %v564 = vld [vmem:[%s552 + $0x2c] sm:$0xf]
    %v565 = vld [vmem:[%s552 + $0x30] sm:$0xf]
    %v566 = vld [vmem:[%s552 + $0x34] sm:$0xf]
    %v567 = vld [vmem:[%s552 + $0x38] sm:$0xf]
    %v568 = vld [vmem:[%s552 + $0x3c] sm:$0xf]
    %v569 = vpack.c.bf16 %v492, %v488
    %v570 = vpack.c.bf16 %v493, %v489
    %v571 = vpack.c.bf16 %v494, %v490
    %v572 = vpack.c.bf16 %v495, %v491
    %v573 = vpack.c.bf16 %v500, %v496
    %v574 = vpack.c.bf16 %v501, %v497
    %v575 = vpack.c.bf16 %v502, %v498
    %v576 = vpack.c.bf16 %v503, %v499
    %v577 = vpack.c.bf16 %v508, %v504
    %v578 = vpack.c.bf16 %v509, %v505
    %v579 = vpack.c.bf16 %v510, %v506
    %v580 = vpack.c.bf16 %v511, %v507
    %v581 = vpack.c.bf16 %v516, %v512
    %v582 = vpack.c.bf16 %v517, %v513
    %v583 = vpack.c.bf16 %v518, %v514
    %v584 = vpack.c.bf16 %v519, %v515
    %v585 = vpack.c.bf16 %v524, %v520
    %v586 = vpack.c.bf16 %v525, %v521
    %v587 = vpack.c.bf16 %v526, %v522
    %v588 = vpack.c.bf16 %v527, %v523
    %v589 = vpack.c.bf16 %v532, %v528
    %v590 = vpack.c.bf16 %v533, %v529
    %v591 = vpack.c.bf16 %v534, %v530
    %v592 = vpack.c.bf16 %v535, %v531
    %v593 = vpack.c.bf16 %v540, %v536
    %v594 = vpack.c.bf16 %v541, %v537
    %v595 = vpack.c.bf16 %v542, %v538
    %v596 = vpack.c.bf16 %v543, %v539
    %v597 = vpack.c.bf16 %v548, %v544
    %v598 = vpack.c.bf16 %v549, %v545
    %v599 = vpack.c.bf16 %v550, %v546
    %v600 = vpack.c.bf16 %v551, %v547
    %602 = vset.pattern.permute.xlu0 0
    %603 = vperm.xlu0 %602, %v64
    %v604 = vpop.permute.xlu0 %603
    %607 = vset.pattern.permute.xlu0 0
    %608 = vperm.xlu0 %607, %v65
    %v609 = vpop.permute.xlu0 %608
    %612 = vset.pattern.permute.xlu0 0
    %613 = vperm.xlu0 %612, %v66
    %v614 = vpop.permute.xlu0 %613
    %617 = vset.pattern.permute.xlu0 0
    %618 = vperm.xlu0 %617, %v67
    %v619 = vpop.permute.xlu0 %618
    %622 = vset.pattern.permute.xlu0 0
    %623 = vperm.xlu0 %622, %v68
    %v624 = vpop.permute.xlu0 %623
    %627 = vset.pattern.permute.xlu0 0
    %628 = vperm.xlu0 %627, %v69
    %v629 = vpop.permute.xlu0 %628
    %632 = vset.pattern.permute.xlu0 0
    %633 = vperm.xlu0 %632, %v70
    %v634 = vpop.permute.xlu0 %633
    %637 = vset.pattern.permute.xlu0 0
    %638 = vperm.xlu0 %637, %v71
    %v639 = vpop.permute.xlu0 %638
    %642 = vset.pattern.permute.xlu0 0
    %643 = vperm.xlu0 %642, %v72
    %v644 = vpop.permute.xlu0 %643
    %647 = vset.pattern.permute.xlu0 0
    %648 = vperm.xlu0 %647, %v73
    %v649 = vpop.permute.xlu0 %648
    %652 = vset.pattern.permute.xlu0 0
    %653 = vperm.xlu0 %652, %v74
    %v654 = vpop.permute.xlu0 %653
    %657 = vset.pattern.permute.xlu0 0
    %658 = vperm.xlu0 %657, %v75
    %v659 = vpop.permute.xlu0 %658
    %662 = vset.pattern.permute.xlu0 0
    %663 = vperm.xlu0 %662, %v76
    %v664 = vpop.permute.xlu0 %663
    %667 = vset.pattern.permute.xlu0 0
    %668 = vperm.xlu0 %667, %v77
    %v669 = vpop.permute.xlu0 %668
    %672 = vset.pattern.permute.xlu0 0
    %673 = vperm.xlu0 %672, %v78
    %v674 = vpop.permute.xlu0 %673
    %677 = vset.pattern.permute.xlu0 0
    %678 = vperm.xlu0 %677, %v79
    %v679 = vpop.permute.xlu0 %678
    %v697 = vunpack.c.l.b16 %v553
    %v698 = vunpack.c.l.b16 %v554
    %v699 = vunpack.c.l.b16 %v555
    %v700 = vunpack.c.l.b16 %v556
    %v701 = vunpack.c.l.b16 %v557
    %v702 = vunpack.c.l.b16 %v558
    %v703 = vunpack.c.l.b16 %v559
    %v704 = vunpack.c.l.b16 %v560
    %v705 = vunpack.c.l.b16 %v561
    %v706 = vunpack.c.l.b16 %v562
    %v707 = vunpack.c.l.b16 %v563
    %v708 = vunpack.c.l.b16 %v564
    %v709 = vunpack.c.l.b16 %v565
    %v710 = vunpack.c.l.b16 %v566
    %v711 = vunpack.c.l.b16 %v567
    %v712 = vunpack.c.l.b16 %v568
    %v713 = vpack.c.b16 %v698, %v697
    %v714 = vpack.c.b16 %v700, %v699
    %v715 = vpack.c.b16 %v702, %v701
    %v716 = vpack.c.b16 %v704, %v703
    %v717 = vpack.c.b16 %v706, %v705
    %v718 = vpack.c.b16 %v708, %v707
    %v719 = vpack.c.b16 %v710, %v709
    %v720 = vpack.c.b16 %v712, %v711
    %729 = vmatprep.subr.bf16.mxu0 %v598
    %730 = vmatpush1.bf16.msra.mxu0 %v597
    %731 = vmatprep.subr.bf16.mxu0 %v594
    %732 = vmatpush1.bf16.msra.mxu0 %v593
    %733 = vmatprep.subr.bf16.mxu0 %v590
    %734 = vmatpush1.bf16.msra.mxu0 %v589
    %735 = vmatprep.subr.bf16.mxu0 %v586
    %736 = vmatpush1.bf16.msra.mxu0 %v585
    %737 = vmatprep.subr.bf16.mxu0 %v582
    %738 = vmatpush1.bf16.msra.mxu0 %v581
    %739 = vmatprep.subr.bf16.mxu0 %v578
    %740 = vmatpush1.bf16.msra.mxu0 %v577
    %741 = vmatprep.subr.bf16.mxu0 %v574
    %742 = vmatpush1.bf16.msra.mxu0 %v573
    %743 = vmatprep.subr.bf16.mxu0 %v570
    %744 = vmatpush1.bf16.msra.mxu0 %v569
    %745 = vmatprep.subr.bf16.mxu0 0
    %746 = vmatpush2.bf16.msra.mxu0 0
    %747 = vmatprep.subr.bf16.mxu0 0
    %748 = vmatpush2.bf16.msra.mxu0 0
    %749 = vmatprep.subr.bf16.mxu0 0
    %750 = vmatpush2.bf16.msra.mxu0 0
    %751 = vmatprep.subr.bf16.mxu0 0
    %752 = vmatpush2.bf16.msra.mxu0 0
    %753 = vmatprep.subr.bf16.mxu0 0
    %754 = vmatpush2.bf16.msra.mxu0 0
    %755 = vmatprep.subr.bf16.mxu0 0
    %756 = vmatpush2.bf16.msra.mxu0 0
    %757 = vmatprep.subr.bf16.mxu0 0
    %758 = vmatpush2.bf16.msra.mxu0 0
    %759 = vmatprep.subr.bf16.mxu0 0
    %760 = vmatpush2.bf16.msra.mxu0 0
    %761 = vmatprep.mubr.bf16.mxu0 0
    %762 = vmatmul.mubr.bf16.gmra.mxu0 %v713
    %v763 = vpop.f32.mrf.mxu0
    %v764 = vadd.f32 %v604, %v763
    %v765 = vpop.f32.mrf.mxu0
    %v766 = vadd.f32 %v604, %v765
    %v767 = vpop.f32.mrf.mxu0
    %v768 = vadd.f32 %v609, %v767
    %v769 = vpop.f32.mrf.mxu0
    %v770 = vadd.f32 %v609, %v769
    %771 = vmatprep.mubr.bf16.mxu0 0
    %772 = vmatmul.mubr.bf16.gmra.mxu0 %v714
    %v773 = vpop.f32.mrf.mxu0
    %v774 = vadd.f32 %v614, %v773
    %v775 = vpop.f32.mrf.mxu0
    %v776 = vadd.f32 %v614, %v775
    %v777 = vpop.f32.mrf.mxu0
    %v778 = vadd.f32 %v619, %v777
    %v779 = vpop.f32.mrf.mxu0
    %v780 = vadd.f32 %v619, %v779
    %781 = vmatprep.mubr.bf16.mxu0 0
    %782 = vmatmul.mubr.bf16.gmra.mxu0 %v715
    %v783 = vpop.f32.mrf.mxu0
    %v784 = vadd.f32 %v624, %v783
    %v785 = vpop.f32.mrf.mxu0
    %v786 = vadd.f32 %v624, %v785
    %v787 = vpop.f32.mrf.mxu0
    %v788 = vadd.f32 %v629, %v787
    %v789 = vpop.f32.mrf.mxu0
    %v790 = vadd.f32 %v629, %v789
    %791 = vmatprep.mubr.bf16.mxu0 0
    %792 = vmatmul.mubr.bf16.gmra.mxu0 %v716
    %v793 = vpop.f32.mrf.mxu0
    %v794 = vadd.f32 %v634, %v793
    %v795 = vpop.f32.mrf.mxu0
    %v796 = vadd.f32 %v634, %v795
    %v797 = vpop.f32.mrf.mxu0
    %v798 = vadd.f32 %v639, %v797
    %v799 = vpop.f32.mrf.mxu0
    %v800 = vadd.f32 %v639, %v799
    %801 = vmatprep.mubr.bf16.mxu0 0
    %802 = vmatmul.mubr.bf16.gmra.mxu0 %v717
    %v803 = vpop.f32.mrf.mxu0
    %v804 = vadd.f32 %v644, %v803
    %v805 = vpop.f32.mrf.mxu0
    %v806 = vadd.f32 %v644, %v805
    %v807 = vpop.f32.mrf.mxu0
    %v808 = vadd.f32 %v649, %v807
    %v809 = vpop.f32.mrf.mxu0
    %v810 = vadd.f32 %v649, %v809
    %811 = vmatprep.mubr.bf16.mxu0 0
    %812 = vmatmul.mubr.bf16.gmra.mxu0 %v718
    %v813 = vpop.f32.mrf.mxu0
    %v814 = vadd.f32 %v654, %v813
    %v815 = vpop.f32.mrf.mxu0
    %v816 = vadd.f32 %v654, %v815
    %v817 = vpop.f32.mrf.mxu0
    %v818 = vadd.f32 %v659, %v817
    %v819 = vpop.f32.mrf.mxu0
    %v820 = vadd.f32 %v659, %v819
    %821 = vmatprep.mubr.bf16.mxu0 0
    %822 = vmatmul.mubr.bf16.gmra.mxu0 %v719
    %v823 = vpop.f32.mrf.mxu0
    %v824 = vadd.f32 %v664, %v823
    %v825 = vpop.f32.mrf.mxu0
    %v826 = vadd.f32 %v664, %v825
    %v827 = vpop.f32.mrf.mxu0
    %v828 = vadd.f32 %v669, %v827
    %v829 = vpop.f32.mrf.mxu0
    %v830 = vadd.f32 %v669, %v829
    %831 = vmatprep.mubr.bf16.mxu0 0
    %832 = vmatmul.mubr.bf16.gmra.mxu0 %v720
    %v833 = vpop.f32.mrf.mxu0
    %v834 = vadd.f32 %v674, %v833
    %v835 = vpop.f32.mrf.mxu0
    %v836 = vadd.f32 %v674, %v835
    %v837 = vpop.f32.mrf.mxu0
    %v838 = vadd.f32 %v679, %v837
    %v839 = vpop.f32.mrf.mxu0
    %v840 = vadd.f32 %v679, %v839
    %841 = vdwg.mxu0
    %842 = vmatprep.subr.bf16.mxu0 %v600
    %843 = vmatpush1.bf16.msra.mxu0 %v599
    %844 = vmatprep.subr.bf16.mxu0 %v596
    %845 = vmatpush1.bf16.msra.mxu0 %v595
    %846 = vmatprep.subr.bf16.mxu0 %v592
    %847 = vmatpush1.bf16.msra.mxu0 %v591
    %848 = vmatprep.subr.bf16.mxu0 %v588
    %849 = vmatpush1.bf16.msra.mxu0 %v587
    %850 = vmatprep.subr.bf16.mxu0 %v584
    %851 = vmatpush1.bf16.msra.mxu0 %v583
    %852 = vmatprep.subr.bf16.mxu0 %v580
    %853 = vmatpush1.bf16.msra.mxu0 %v579
    %854 = vmatprep.subr.bf16.mxu0 %v576
    %855 = vmatpush1.bf16.msra.mxu0 %v575
    %856 = vmatprep.subr.bf16.mxu0 %v572
    %857 = vmatpush1.bf16.msra.mxu0 %v571
    %858 = vmatprep.subr.bf16.mxu0 0
    %859 = vmatpush2.bf16.msra.mxu0 0
    %860 = vmatprep.subr.bf16.mxu0 0
    %861 = vmatpush2.bf16.msra.mxu0 0
    %862 = vmatprep.subr.bf16.mxu0 0
    %863 = vmatpush2.bf16.msra.mxu0 0
    %864 = vmatprep.subr.bf16.mxu0 0
    %865 = vmatpush2.bf16.msra.mxu0 0
    %866 = vmatprep.subr.bf16.mxu0 0
    %867 = vmatpush2.bf16.msra.mxu0 0
    %868 = vmatprep.subr.bf16.mxu0 0
    %869 = vmatpush2.bf16.msra.mxu0 0
    %870 = vmatprep.subr.bf16.mxu0 0
    %871 = vmatpush2.bf16.msra.mxu0 0
    %872 = vmatprep.subr.bf16.mxu0 0
    %873 = vmatpush2.bf16.msra.mxu0 0
    %874 = vmatprep.mubr.bf16.mxu0 0
    %875 = vmatmul.mubr.bf16.gmra.mxu0 %v713
    %v876 = vpop.f32.mrf.mxu0
    %v877 = vadd.f32 %v604, %v876
    %v878 = vpop.f32.mrf.mxu0
    %v879 = vadd.f32 %v604, %v878
    %v880 = vpop.f32.mrf.mxu0
    %v881 = vadd.f32 %v609, %v880
    %v882 = vpop.f32.mrf.mxu0
    %v883 = vadd.f32 %v609, %v882
    %884 = vmatprep.mubr.bf16.mxu0 0
    %885 = vmatmul.mubr.bf16.gmra.mxu0 %v714
    %v886 = vpop.f32.mrf.mxu0
    %v887 = vadd.f32 %v614, %v886
    %v888 = vpop.f32.mrf.mxu0
    %v889 = vadd.f32 %v614, %v888
    %v890 = vpop.f32.mrf.mxu0
    %v891 = vadd.f32 %v619, %v890
    %v892 = vpop.f32.mrf.mxu0
    %v893 = vadd.f32 %v619, %v892
    %894 = vmatprep.mubr.bf16.mxu0 0
    %895 = vmatmul.mubr.bf16.gmra.mxu0 %v715
    %v896 = vpop.f32.mrf.mxu0
    %v897 = vadd.f32 %v624, %v896
    %v898 = vpop.f32.mrf.mxu0
    %v899 = vadd.f32 %v624, %v898
    %v900 = vpop.f32.mrf.mxu0
    %v901 = vadd.f32 %v629, %v900
    %v902 = vpop.f32.mrf.mxu0
    %v903 = vadd.f32 %v629, %v902
    %904 = vmatprep.mubr.bf16.mxu0 0
    %905 = vmatmul.mubr.bf16.gmra.mxu0 %v716
    %v906 = vpop.f32.mrf.mxu0
    %v907 = vadd.f32 %v634, %v906
    %v908 = vpop.f32.mrf.mxu0
    %v909 = vadd.f32 %v634, %v908
    %v910 = vpop.f32.mrf.mxu0
    %v911 = vadd.f32 %v639, %v910
    %v912 = vpop.f32.mrf.mxu0
    %v913 = vadd.f32 %v639, %v912
    %914 = vmatprep.mubr.bf16.mxu0 0
    %915 = vmatmul.mubr.bf16.gmra.mxu0 %v717
    %v916 = vpop.f32.mrf.mxu0
    %v917 = vadd.f32 %v644, %v916
    %v918 = vpop.f32.mrf.mxu0
    %v919 = vadd.f32 %v644, %v918
    %v920 = vpop.f32.mrf.mxu0
    %v921 = vadd.f32 %v649, %v920
    %v922 = vpop.f32.mrf.mxu0
    %v923 = vadd.f32 %v649, %v922
    %924 = vmatprep.mubr.bf16.mxu0 0
    %925 = vmatmul.mubr.bf16.gmra.mxu0 %v718
    %v926 = vpop.f32.mrf.mxu0
    %v927 = vadd.f32 %v654, %v926
    %v928 = vpop.f32.mrf.mxu0
    %v929 = vadd.f32 %v654, %v928
    %v930 = vpop.f32.mrf.mxu0
    %v931 = vadd.f32 %v659, %v930
    %v932 = vpop.f32.mrf.mxu0
    %v933 = vadd.f32 %v659, %v932
    %934 = vmatprep.mubr.bf16.mxu0 0
    %935 = vmatmul.mubr.bf16.gmra.mxu0 %v719
    %v936 = vpop.f32.mrf.mxu0
    %v937 = vadd.f32 %v664, %v936
    %v938 = vpop.f32.mrf.mxu0
    %v939 = vadd.f32 %v664, %v938
    %v940 = vpop.f32.mrf.mxu0
    %v941 = vadd.f32 %v669, %v940
    %v942 = vpop.f32.mrf.mxu0
    %v943 = vadd.f32 %v669, %v942
    %944 = vmatprep.mubr.bf16.mxu0 0
    %945 = vmatmul.mubr.bf16.gmra.mxu0 %v720
    %v946 = vpop.f32.mrf.mxu0
    %v947 = vadd.f32 %v674, %v946
    %v948 = vpop.f32.mrf.mxu0
    %v949 = vadd.f32 %v674, %v948
    %v950 = vpop.f32.mrf.mxu0
    %v951 = vadd.f32 %v679, %v950
    %v952 = vpop.f32.mrf.mxu0
    %v953 = vadd.f32 %v679, %v952
    %954 = vdwg.mxu0
    %v955 = vmul.f32 %v764, 0.01
    %v956 = vmul.f32 %v766, 0.01
    %v957 = vmul.f32 %v877, 0.01
    %v958 = vmul.f32 %v879, 0.01
    %v959 = vmul.f32 %v768, 0.01
    %v960 = vmul.f32 %v770, 0.01
    %v961 = vmul.f32 %v881, 0.01
    %v962 = vmul.f32 %v883, 0.01
    %v963 = vmul.f32 %v774, 0.01
    %v964 = vmul.f32 %v776, 0.01
    %v965 = vmul.f32 %v887, 0.01
    %v966 = vmul.f32 %v889, 0.01
    %v967 = vmul.f32 %v778, 0.01
    %v968 = vmul.f32 %v780, 0.01
    %v969 = vmul.f32 %v891, 0.01
    %v970 = vmul.f32 %v893, 0.01
    %v971 = vmul.f32 %v784, 0.01
    %v972 = vmul.f32 %v786, 0.01
    %v973 = vmul.f32 %v897, 0.01
    %v974 = vmul.f32 %v899, 0.01
    %v975 = vmul.f32 %v788, 0.01
    %v976 = vmul.f32 %v790, 0.01
    %v977 = vmul.f32 %v901, 0.01
    %v978 = vmul.f32 %v903, 0.01
    %v979 = vmul.f32 %v794, 0.01
    %v980 = vmul.f32 %v796, 0.01
    %v981 = vmul.f32 %v907, 0.01
    %v982 = vmul.f32 %v909, 0.01
    %v983 = vmul.f32 %v798, 0.01
    %v984 = vmul.f32 %v800, 0.01
    %v985 = vmul.f32 %v911, 0.01
    %v986 = vmul.f32 %v913, 0.01
    %v987 = vmul.f32 %v804, 0.01
    %v988 = vmul.f32 %v806, 0.01
    %v989 = vmul.f32 %v917, 0.01
    %v990 = vmul.f32 %v919, 0.01
    %v991 = vmul.f32 %v808, 0.01
    %v992 = vmul.f32 %v810, 0.01
    %v993 = vmul.f32 %v921, 0.01
    %v994 = vmul.f32 %v923, 0.01
    %v995 = vmul.f32 %v814, 0.01
    %v996 = vmul.f32 %v816, 0.01
    %v997 = vmul.f32 %v927, 0.01
    %v998 = vmul.f32 %v929, 0.01
    %v999 = vmul.f32 %v818, 0.01
    %v1000 = vmul.f32 %v820, 0.01
    %v1001 = vmul.f32 %v931, 0.01
    %v1002 = vmul.f32 %v933, 0.01
    %v1003 = vmul.f32 %v824, 0.01
    %v1004 = vmul.f32 %v826, 0.01
    %v1005 = vmul.f32 %v937, 0.01
    %v1006 = vmul.f32 %v939, 0.01
    %v1007 = vmul.f32 %v828, 0.01
    %v1008 = vmul.f32 %v830, 0.01
    %v1009 = vmul.f32 %v941, 0.01
    %v1010 = vmul.f32 %v943, 0.01
    %v1011 = vmul.f32 %v834, 0.01
    %v1012 = vmul.f32 %v836, 0.01
    %v1013 = vmul.f32 %v947, 0.01
    %v1014 = vmul.f32 %v949, 0.01
    %v1015 = vmul.f32 %v838, 0.01
    %v1016 = vmul.f32 %v840, 0.01
    %v1017 = vmul.f32 %v951, 0.01
    %v1018 = vmul.f32 %v953, 0.01
    %v1019 = vmax.f32 %v764, %v955
    %v1020 = vmax.f32 %v766, %v956
    %v1021 = vmax.f32 %v877, %v957
    %v1022 = vmax.f32 %v879, %v958
    %v1023 = vmax.f32 %v768, %v959
    %v1024 = vmax.f32 %v770, %v960
    %v1025 = vmax.f32 %v881, %v961
    %v1026 = vmax.f32 %v883, %v962
    %v1027 = vmax.f32 %v774, %v963
    %v1028 = vmax.f32 %v776, %v964
    %v1029 = vmax.f32 %v887, %v965
    %v1030 = vmax.f32 %v889, %v966
    %v1031 = vmax.f32 %v778, %v967
    %v1032 = vmax.f32 %v780, %v968
    %v1033 = vmax.f32 %v891, %v969
    %v1034 = vmax.f32 %v893, %v970
    %v1035 = vmax.f32 %v784, %v971
    %v1036 = vmax.f32 %v786, %v972
    %v1037 = vmax.f32 %v897, %v973
    %v1038 = vmax.f32 %v899, %v974
    %v1039 = vmax.f32 %v788, %v975
    %v1040 = vmax.f32 %v790, %v976
    %v1041 = vmax.f32 %v901, %v977
    %v1042 = vmax.f32 %v903, %v978
    %v1043 = vmax.f32 %v794, %v979
    %v1044 = vmax.f32 %v796, %v980
    %v1045 = vmax.f32 %v907, %v981
    %v1046 = vmax.f32 %v909, %v982
    %v1047 = vmax.f32 %v798, %v983
    %v1048 = vmax.f32 %v800, %v984
    %v1049 = vmax.f32 %v911, %v985
    %v1050 = vmax.f32 %v913, %v986
    %v1051 = vmax.f32 %v804, %v987
    %v1052 = vmax.f32 %v806, %v988
    %v1053 = vmax.f32 %v917, %v989
    %v1054 = vmax.f32 %v919, %v990
    %v1055 = vmax.f32 %v808, %v991
    %v1056 = vmax.f32 %v810, %v992
    %v1057 = vmax.f32 %v921, %v993
    %v1058 = vmax.f32 %v923, %v994
    %v1059 = vmax.f32 %v814, %v995
    %v1060 = vmax.f32 %v816, %v996
    %v1061 = vmax.f32 %v927, %v997
    %v1062 = vmax.f32 %v929, %v998
    %v1063 = vmax.f32 %v818, %v999
    %v1064 = vmax.f32 %v820, %v1000
    %v1065 = vmax.f32 %v931, %v1001
    %v1066 = vmax.f32 %v933, %v1002
    %v1067 = vmax.f32 %v824, %v1003
    %v1068 = vmax.f32 %v826, %v1004
    %v1069 = vmax.f32 %v937, %v1005
    %v1070 = vmax.f32 %v939, %v1006
    %v1071 = vmax.f32 %v828, %v1007
    %v1072 = vmax.f32 %v830, %v1008
    %v1073 = vmax.f32 %v941, %v1009
    %v1074 = vmax.f32 %v943, %v1010
    %v1075 = vmax.f32 %v834, %v1011
    %v1076 = vmax.f32 %v836, %v1012
    %v1077 = vmax.f32 %v947, %v1013
    %v1078 = vmax.f32 %v949, %v1014
    %v1079 = vmax.f32 %v838, %v1015
    %v1080 = vmax.f32 %v840, %v1016
    %v1081 = vmax.f32 %v951, %v1017
    %v1082 = vmax.f32 %v953, %v1018
    %1084 = vset.pattern.permute.xlu0 0
    %1085 = vperm.xlu0 %1084, %v81
    %v1086 = vpop.permute.xlu0 %1085
    %1089 = vset.pattern.permute.xlu0 0
    %1090 = vperm.xlu0 %1089, %v82
    %v1091 = vpop.permute.xlu0 %1090
    %1094 = vset.pattern.permute.xlu0 0
    %1095 = vperm.xlu0 %1094, %v83
    %v1096 = vpop.permute.xlu0 %1095
    %1099 = vset.pattern.permute.xlu0 0
    %1100 = vperm.xlu0 %1099, %v84
    %v1101 = vpop.permute.xlu0 %1100
    %1104 = vset.pattern.permute.xlu0 0
    %1105 = vperm.xlu0 %1104, %v85
    %v1106 = vpop.permute.xlu0 %1105
    %1109 = vset.pattern.permute.xlu0 0
    %1110 = vperm.xlu0 %1109, %v86
    %v1111 = vpop.permute.xlu0 %1110
    %1114 = vset.pattern.permute.xlu0 0
    %1115 = vperm.xlu0 %1114, %v87
    %v1116 = vpop.permute.xlu0 %1115
    %1119 = vset.pattern.permute.xlu0 0
    %1120 = vperm.xlu0 %1119, %v88
    %v1121 = vpop.permute.xlu0 %1120
    %1124 = vset.pattern.permute.xlu0 0
    %1125 = vperm.xlu0 %1124, %v89
    %v1126 = vpop.permute.xlu0 %1125
    %1129 = vset.pattern.permute.xlu0 0
    %1130 = vperm.xlu0 %1129, %v90
    %v1131 = vpop.permute.xlu0 %1130
    %1134 = vset.pattern.permute.xlu0 0
    %1135 = vperm.xlu0 %1134, %v91
    %v1136 = vpop.permute.xlu0 %1135
    %1139 = vset.pattern.permute.xlu0 0
    %1140 = vperm.xlu0 %1139, %v92
    %v1141 = vpop.permute.xlu0 %1140
    %1144 = vset.pattern.permute.xlu0 0
    %1145 = vperm.xlu0 %1144, %v93
    %v1146 = vpop.permute.xlu0 %1145
    %1149 = vset.pattern.permute.xlu0 0
    %1150 = vperm.xlu0 %1149, %v94
    %v1151 = vpop.permute.xlu0 %1150
    %1154 = vset.pattern.permute.xlu0 0
    %1155 = vperm.xlu0 %1154, %v95
    %v1156 = vpop.permute.xlu0 %1155
    %1159 = vset.pattern.permute.xlu0 0
    %1160 = vperm.xlu0 %1159, %v96
    %v1161 = vpop.permute.xlu0 %1160
    %v1163 = vmul.f32 %v1019, %v1086
    %v1164 = vmul.f32 %v1020, %v1086
    %v1165 = vmul.f32 %v1021, %v1086
    %v1166 = vmul.f32 %v1022, %v1086
    %v1167 = vmul.f32 %v1023, %v1091
    %v1168 = vmul.f32 %v1024, %v1091
    %v1169 = vmul.f32 %v1025, %v1091
    %v1170 = vmul.f32 %v1026, %v1091
    %v1171 = vmul.f32 %v1027, %v1096
    %v1172 = vmul.f32 %v1028, %v1096
    %v1173 = vmul.f32 %v1029, %v1096
    %v1174 = vmul.f32 %v1030, %v1096
    %v1175 = vmul.f32 %v1031, %v1101
    %v1176 = vmul.f32 %v1032, %v1101
    %v1177 = vmul.f32 %v1033, %v1101
    %v1178 = vmul.f32 %v1034, %v1101
    %v1179 = vmul.f32 %v1035, %v1106
    %v1180 = vmul.f32 %v1036, %v1106
    %v1181 = vmul.f32 %v1037, %v1106
    %v1182 = vmul.f32 %v1038, %v1106
    %v1183 = vmul.f32 %v1039, %v1111
    %v1184 = vmul.f32 %v1040, %v1111
    %v1185 = vmul.f32 %v1041, %v1111
    %v1186 = vmul.f32 %v1042, %v1111
    %v1187 = vmul.f32 %v1043, %v1116
    %v1188 = vmul.f32 %v1044, %v1116
    %v1189 = vmul.f32 %v1045, %v1116
    %v1190 = vmul.f32 %v1046, %v1116
    %v1191 = vmul.f32 %v1047, %v1121
    %v1192 = vmul.f32 %v1048, %v1121
    %v1193 = vmul.f32 %v1049, %v1121
    %v1194 = vmul.f32 %v1050, %v1121
    %v1195 = vmul.f32 %v1051, %v1126
    %v1196 = vmul.f32 %v1052, %v1126
    %v1197 = vmul.f32 %v1053, %v1126
    %v1198 = vmul.f32 %v1054, %v1126
    %v1199 = vmul.f32 %v1055, %v1131
    %v1200 = vmul.f32 %v1056, %v1131
    %v1201 = vmul.f32 %v1057, %v1131
    %v1202 = vmul.f32 %v1058, %v1131
    %v1203 = vmul.f32 %v1059, %v1136
    %v1204 = vmul.f32 %v1060, %v1136
    %v1205 = vmul.f32 %v1061, %v1136
    %v1206 = vmul.f32 %v1062, %v1136
    %v1207 = vmul.f32 %v1063, %v1141
    %v1208 = vmul.f32 %v1064, %v1141
    %v1209 = vmul.f32 %v1065, %v1141
    %v1210 = vmul.f32 %v1066, %v1141
    %v1211 = vmul.f32 %v1067, %v1146
    %v1212 = vmul.f32 %v1068, %v1146
    %v1213 = vmul.f32 %v1069, %v1146
    %v1214 = vmul.f32 %v1070, %v1146
    %v1215 = vmul.f32 %v1071, %v1151
    %v1216 = vmul.f32 %v1072, %v1151
    %v1217 = vmul.f32 %v1073, %v1151
    %v1218 = vmul.f32 %v1074, %v1151
    %v1219 = vmul.f32 %v1075, %v1156
    %v1220 = vmul.f32 %v1076, %v1156
    %v1221 = vmul.f32 %v1077, %v1156
    %v1222 = vmul.f32 %v1078, %v1156
    %v1223 = vmul.f32 %v1079, %v1161
    %v1224 = vmul.f32 %v1080, %v1161
    %v1225 = vmul.f32 %v1081, %v1161
    %v1226 = vmul.f32 %v1082, %v1161
    %v1227 = vadd.f32 %v1163, %v1167
    %v1228 = vadd.f32 %v1227, %v1171
    %v1229 = vadd.f32 %v1228, %v1175
    %v1230 = vadd.f32 %v1229, %v1179
    %v1231 = vadd.f32 %v1230, %v1183
    %v1232 = vadd.f32 %v1231, %v1187
    %v1233 = vadd.f32 %v1232, %v1191
    %v1234 = vrot.slane %v1233, 4
    %v1235 = vadd.f32 %v1233, %v1234
    %v1236 = vrot.slane %v1235, 2
    %v1237 = vadd.f32 %v1235, %v1236
    %v1238 = vrot.slane %v1237, 1
    %v1239 = vadd.f32 %v1237, %v1238
    %v1240 = vadd.f32 %v1164, %v1168
    %v1241 = vadd.f32 %v1240, %v1172
    %v1242 = vadd.f32 %v1241, %v1176
    %v1243 = vadd.f32 %v1242, %v1180
    %v1244 = vadd.f32 %v1243, %v1184
    %v1245 = vadd.f32 %v1244, %v1188
    %v1246 = vadd.f32 %v1245, %v1192
    %v1247 = vrot.slane %v1246, 4
    %v1248 = vadd.f32 %v1246, %v1247
    %v1249 = vrot.slane %v1248, 2
    %v1250 = vadd.f32 %v1248, %v1249
    %v1251 = vrot.slane %v1250, 1
    %v1252 = vadd.f32 %v1250, %v1251
    %v1253 = vadd.f32 %v1165, %v1169
    %v1254 = vadd.f32 %v1253, %v1173
    %v1255 = vadd.f32 %v1254, %v1177
    %v1256 = vadd.f32 %v1255, %v1181
    %v1257 = vadd.f32 %v1256, %v1185
    %v1258 = vadd.f32 %v1257, %v1189
    %v1259 = vadd.f32 %v1258, %v1193
    %v1260 = vrot.slane %v1259, 4
    %v1261 = vadd.f32 %v1259, %v1260
    %v1262 = vrot.slane %v1261, 2
    %v1263 = vadd.f32 %v1261, %v1262
    %v1264 = vrot.slane %v1263, 1
    %v1265 = vadd.f32 %v1263, %v1264
    %v1266 = vadd.f32 %v1166, %v1170
    %v1267 = vadd.f32 %v1266, %v1174
    %v1268 = vadd.f32 %v1267, %v1178
    %v1269 = vadd.f32 %v1268, %v1182
    %v1270 = vadd.f32 %v1269, %v1186
    %v1271 = vadd.f32 %v1270, %v1190
    %v1272 = vadd.f32 %v1271, %v1194
    %v1273 = vrot.slane %v1272, 4
    %v1274 = vadd.f32 %v1272, %v1273
    %v1275 = vrot.slane %v1274, 2
    %v1276 = vadd.f32 %v1274, %v1275
    %v1277 = vrot.slane %v1276, 1
    %v1278 = vadd.f32 %v1276, %v1277
    %1280 = vset.pattern.permute.xlu0 0
    %1281 = vperm.xlu0 %1280, %v98
    %v1282 = vpop.permute.xlu0 %1281
    %v1284 = vadd.f32 %v1239, %v1282
    %v1285 = vadd.f32 %v1252, %v1282
    %v1286 = vadd.f32 %v1265, %v1282
    %v1287 = vadd.f32 %v1278, %v1282
    %v1288 = vadd.f32 %v1195, %v1199
    %v1289 = vadd.f32 %v1288, %v1203
    %v1290 = vadd.f32 %v1289, %v1207
    %v1291 = vadd.f32 %v1290, %v1211
    %v1292 = vadd.f32 %v1291, %v1215
    %v1293 = vadd.f32 %v1292, %v1219
    %v1294 = vadd.f32 %v1293, %v1223
    %v1295 = vrot.slane %v1294, 4
    %v1296 = vadd.f32 %v1294, %v1295
    %v1297 = vrot.slane %v1296, 2
    %v1298 = vadd.f32 %v1296, %v1297
    %v1299 = vrot.slane %v1298, 1
    %v1300 = vadd.f32 %v1298, %v1299
    %v1301 = vadd.f32 %v1196, %v1200
    %v1302 = vadd.f32 %v1301, %v1204
    %v1303 = vadd.f32 %v1302, %v1208
    %v1304 = vadd.f32 %v1303, %v1212
    %v1305 = vadd.f32 %v1304, %v1216
    %v1306 = vadd.f32 %v1305, %v1220
    %v1307 = vadd.f32 %v1306, %v1224
    %v1308 = vrot.slane %v1307, 4
    %v1309 = vadd.f32 %v1307, %v1308
    %v1310 = vrot.slane %v1309, 2
    %v1311 = vadd.f32 %v1309, %v1310
    %v1312 = vrot.slane %v1311, 1
    %v1313 = vadd.f32 %v1311, %v1312
    %v1314 = vadd.f32 %v1197, %v1201
    %v1315 = vadd.f32 %v1314, %v1205
    %v1316 = vadd.f32 %v1315, %v1209
    %v1317 = vadd.f32 %v1316, %v1213
    %v1318 = vadd.f32 %v1317, %v1217
    %v1319 = vadd.f32 %v1318, %v1221
    %v1320 = vadd.f32 %v1319, %v1225
    %v1321 = vrot.slane %v1320, 4
    %v1322 = vadd.f32 %v1320, %v1321
    %v1323 = vrot.slane %v1322, 2
    %v1324 = vadd.f32 %v1322, %v1323
    %v1325 = vrot.slane %v1324, 1
    %v1326 = vadd.f32 %v1324, %v1325
    %v1327 = vadd.f32 %v1198, %v1202
    %v1328 = vadd.f32 %v1327, %v1206
    %v1329 = vadd.f32 %v1328, %v1210
    %v1330 = vadd.f32 %v1329, %v1214
    %v1331 = vadd.f32 %v1330, %v1218
    %v1332 = vadd.f32 %v1331, %v1222
    %v1333 = vadd.f32 %v1332, %v1226
    %v1334 = vrot.slane %v1333, 4
    %v1335 = vadd.f32 %v1333, %v1334
    %v1336 = vrot.slane %v1335, 2
    %v1337 = vadd.f32 %v1335, %v1336
    %v1338 = vrot.slane %v1337, 1
    %v1339 = vadd.f32 %v1337, %v1338
    %v1340 = vadd.f32 %v1300, %v1282
    %v1341 = vadd.f32 %v1313, %v1282
    %v1342 = vadd.f32 %v1326, %v1282
    %v1343 = vadd.f32 %v1339, %v1282
    %v1344 = vtanh.pop %v1284
    %v1345 = vtanh.pop %v1285
    %v1346 = vtanh.pop %v1286
    %v1347 = vtanh.pop %v1287
    %v1352 = vcombine.low %v1340, %v1341
    %v1353 = vcombine.low %v1342, %v1343
    %v1355 = vunpack.c.l.s4 1983009808
    %v1356 = vunpack.c.0.s8 %v1355
    %v1357 = vlaneseq
    %v1358 = vshrl.u32 %v1357, 7
    %v1359 = vsub.s32 %v1356, %v1358
    %v1360 = vrot.slane %v1352, %v1359
    %v1362 = vunpack.c.l.s4 1983009808
    %v1363 = vunpack.c.0.s8 %v1362
    %v1364 = vlaneseq
    %v1365 = vshrl.u32 %v1364, 7
    %v1366 = vsub.s32 %v1363, %v1365
    %v1367 = vrot.slane %v1353, %v1366
    %v1368 = vcombine.low %v1360, %v1367
    %v1370 = vsub.f32 %v28, %v1368
    %v1371 = vsub.f32 0.0, %v1344
    %v1372 = vsub.f32 0.0, %v1345
    %v1373 = vsub.f32 0.0, %v1346
    %v1374 = vsub.f32 0.0, %v1347
    %v1375 = vmul.f32 %v1371, 1.442695
    %v1376 = vpow.pop %v1375
    %v1377 = vmul.f32 %v1372, 1.442695
    %v1378 = vpow.pop %v1377
    %v1379 = vmul.f32 %v1373, 1.442695
    %v1380 = vpow.pop %v1379
    %v1381 = vmul.f32 %v1374, 1.442695
    %v1382 = vpow.pop %v1381
    %v1387 = vcombine.low %v1376, %v1378
    %v1388 = vcombine.low %v1380, %v1382
    %v1390 = vunpack.c.l.s4 1983009808
    %v1391 = vunpack.c.0.s8 %v1390
    %v1392 = vlaneseq
    %v1393 = vshrl.u32 %v1392, 7
    %v1394 = vsub.s32 %v1391, %v1393
    %v1395 = vrot.slane %v1387, %v1394
    %v1397 = vunpack.c.l.s4 1983009808
    %v1398 = vunpack.c.0.s8 %v1397
    %v1399 = vlaneseq
    %v1400 = vshrl.u32 %v1399, 7
    %v1401 = vsub.s32 %v1398, %v1400
    %v1402 = vrot.slane %v1388, %v1401
    %v1403 = vcombine.low %v1395, %v1402
    %v1404 = vrot.slane %v1403, 7
    %v1406 = vmul.f32 %v1370, %v1404
    %s1407 = scalar_lea.vmem %s1, 512
    %v1408 = vld [vmem:[%s1407] sm:$0xff]
    %v1409 = vld [vmem:[%s1407 + $0x8] sm:$0xff]
    %v1410 = vld [vmem:[%s1407 + $0x10] sm:$0xff]
    %v1411 = vld [vmem:[%s1407 + $0x18] sm:$0xff]
    %v1412 = vld [vmem:[%s1407 + $0x20] sm:$0xff]
    %v1413 = vld [vmem:[%s1407 + $0x28] sm:$0xff]
    %v1414 = vld [vmem:[%s1407 + $0x30] sm:$0xff]
    %v1415 = vld [vmem:[%s1407 + $0x38] sm:$0xff]
    %v1416 = vld [vmem:[%s1407 + $0x40] sm:$0xff]
    %v1417 = vld [vmem:[%s1407 + $0x48] sm:$0xff]
    %v1418 = vld [vmem:[%s1407 + $0x50] sm:$0xff]
    %v1419 = vld [vmem:[%s1407 + $0x58] sm:$0xff]
    %v1420 = vld [vmem:[%s1407 + $0x60] sm:$0xff]
    %v1421 = vld [vmem:[%s1407 + $0x68] sm:$0xff]
    %v1422 = vld [vmem:[%s1407 + $0x70] sm:$0xff]
    %v1423 = vld [vmem:[%s1407 + $0x78] sm:$0xff]
    %s1424 = scalar_lea.vmem %s2, 512
    %v1425 = vld [vmem:[%s1424] sm:$0xff]
    %v1426 = vld [vmem:[%s1424 + $0x8] sm:$0xff]
    %v1427 = vld [vmem:[%s1424 + $0x10] sm:$0xff]
    %v1428 = vld [vmem:[%s1424 + $0x18] sm:$0xff]
    %v1429 = vld [vmem:[%s1424 + $0x20] sm:$0xff]
    %v1430 = vld [vmem:[%s1424 + $0x28] sm:$0xff]
    %v1431 = vld [vmem:[%s1424 + $0x30] sm:$0xff]
    %v1432 = vld [vmem:[%s1424 + $0x38] sm:$0xff]
    %v1433 = vld [vmem:[%s1424 + $0x40] sm:$0xff]
    %v1434 = vld [vmem:[%s1424 + $0x48] sm:$0xff]
    %v1435 = vld [vmem:[%s1424 + $0x50] sm:$0xff]
    %v1436 = vld [vmem:[%s1424 + $0x58] sm:$0xff]
    %v1437 = vld [vmem:[%s1424 + $0x60] sm:$0xff]
    %v1438 = vld [vmem:[%s1424 + $0x68] sm:$0xff]
    %v1439 = vld [vmem:[%s1424 + $0x70] sm:$0xff]
    %v1440 = vld [vmem:[%s1424 + $0x78] sm:$0xff]
    %s1441 = scalar_lea.vmem %s4, 512
    %v1442 = vld [vmem:[%s1441] sm:$0xff]
    %v1443 = vld [vmem:[%s1441 + $0x8] sm:$0xff]
    %v1444 = vld [vmem:[%s1441 + $0x10] sm:$0xff]
    %v1445 = vld [vmem:[%s1441 + $0x18] sm:$0xff]
    %v1446 = vld [vmem:[%s1441 + $0x20] sm:$0xff]
    %v1447 = vld [vmem:[%s1441 + $0x28] sm:$0xff]
    %v1448 = vld [vmem:[%s1441 + $0x30] sm:$0xff]
    %v1449 = vld [vmem:[%s1441 + $0x38] sm:$0xff]
    %v1450 = vld [vmem:[%s1441 + $0x40] sm:$0xff]
    %v1451 = vld [vmem:[%s1441 + $0x48] sm:$0xff]
    %v1452 = vld [vmem:[%s1441 + $0x50] sm:$0xff]
    %v1453 = vld [vmem:[%s1441 + $0x58] sm:$0xff]
    %v1454 = vld [vmem:[%s1441 + $0x60] sm:$0xff]
    %v1455 = vld [vmem:[%s1441 + $0x68] sm:$0xff]
    %v1456 = vld [vmem:[%s1441 + $0x70] sm:$0xff]
    %v1457 = vld [vmem:[%s1441 + $0x78] sm:$0xff]
    %s1458 = scalar_lea.vmem %s5, 512
    %v1459 = vld [vmem:[%s1458] sm:$0xff]
    %v1460 = vld [vmem:[%s1458 + $0x8] sm:$0xff]
    %v1461 = vld [vmem:[%s1458 + $0x10] sm:$0xff]
    %v1462 = vld [vmem:[%s1458 + $0x18] sm:$0xff]
    %v1463 = vld [vmem:[%s1458 + $0x20] sm:$0xff]
    %v1464 = vld [vmem:[%s1458 + $0x28] sm:$0xff]
    %v1465 = vld [vmem:[%s1458 + $0x30] sm:$0xff]
    %v1466 = vld [vmem:[%s1458 + $0x38] sm:$0xff]
    %v1467 = vld [vmem:[%s1458 + $0x40] sm:$0xff]
    %v1468 = vld [vmem:[%s1458 + $0x48] sm:$0xff]
    %v1469 = vld [vmem:[%s1458 + $0x50] sm:$0xff]
    %v1470 = vld [vmem:[%s1458 + $0x58] sm:$0xff]
    %v1471 = vld [vmem:[%s1458 + $0x60] sm:$0xff]
    %v1472 = vld [vmem:[%s1458 + $0x68] sm:$0xff]
    %v1473 = vld [vmem:[%s1458 + $0x70] sm:$0xff]
    %v1474 = vld [vmem:[%s1458 + $0x78] sm:$0xff]
    %s1475 = scalar_lea.vmem %s6, 8
    %v1476 = vld [vmem:[%s1475] sm:$0x3]
    %1478 = vset.pattern.permute.xlu0 0
    %1479 = vperm.xlu0 %1478, %v1408
    %v1480 = vpop.permute.xlu0 %1479
    %1483 = vset.pattern.permute.xlu0 0
    %1484 = vperm.xlu0 %1483, %v1409
    %v1485 = vpop.permute.xlu0 %1484
    %1488 = vset.pattern.permute.xlu0 0
    %1489 = vperm.xlu0 %1488, %v1410
    %v1490 = vpop.permute.xlu0 %1489
    %1493 = vset.pattern.permute.xlu0 0
    %1494 = vperm.xlu0 %1493, %v1411
    %v1495 = vpop.permute.xlu0 %1494
    %1498 = vset.pattern.permute.xlu0 0
    %1499 = vperm.xlu0 %1498, %v1412
    %v1500 = vpop.permute.xlu0 %1499
    %1503 = vset.pattern.permute.xlu0 0
    %1504 = vperm.xlu0 %1503, %v1413
    %v1505 = vpop.permute.xlu0 %1504
    %1508 = vset.pattern.permute.xlu0 0
    %1509 = vperm.xlu0 %1508, %v1414
    %v1510 = vpop.permute.xlu0 %1509
    %1513 = vset.pattern.permute.xlu0 0
    %1514 = vperm.xlu0 %1513, %v1415
    %v1515 = vpop.permute.xlu0 %1514
    %1518 = vset.pattern.permute.xlu0 0
    %1519 = vperm.xlu0 %1518, %v1416
    %v1520 = vpop.permute.xlu0 %1519
    %1523 = vset.pattern.permute.xlu0 0
    %1524 = vperm.xlu0 %1523, %v1417
    %v1525 = vpop.permute.xlu0 %1524
    %1528 = vset.pattern.permute.xlu0 0
    %1529 = vperm.xlu0 %1528, %v1418
    %v1530 = vpop.permute.xlu0 %1529
    %1533 = vset.pattern.permute.xlu0 0
    %1534 = vperm.xlu0 %1533, %v1419
    %v1535 = vpop.permute.xlu0 %1534
    %1538 = vset.pattern.permute.xlu0 0
    %1539 = vperm.xlu0 %1538, %v1420
    %v1540 = vpop.permute.xlu0 %1539
    %1543 = vset.pattern.permute.xlu0 0
    %1544 = vperm.xlu0 %1543, %v1421
    %v1545 = vpop.permute.xlu0 %1544
    %1548 = vset.pattern.permute.xlu0 0
    %1549 = vperm.xlu0 %1548, %v1422
    %v1550 = vpop.permute.xlu0 %1549
    %1553 = vset.pattern.permute.xlu0 0
    %1554 = vperm.xlu0 %1553, %v1423
    %v1555 = vpop.permute.xlu0 %1554
    %v1558 = vlaneseq
    %v1559 = vshrl.u32 %v1558, 7
    %v1560 = vsub.s32 1, %v1559
    %v1561 = vrot.slane %v1406, %v1560
    %v1562 = vlaneseq
    %v1563 = vshrl.u32 %v1562, 7
    %v1564 = vsub.s32 3, %v1563
    %v1565 = vrot.slane %v1406, %v1564
    %v1566 = vlaneseq
    %v1567 = vshrl.u32 %v1566, 7
    %v1568 = vsub.s32 5, %v1567
    %v1569 = vrot.slane %v1406, %v1568
    %v1570 = vlaneseq
    %v1571 = vshrl.u32 %v1570, 7
    %v1572 = vsub.s32 7, %v1571
    %v1573 = vrot.slane %v1406, %v1572
    %v1578 = vlaneseq
    %v1579 = vshrl.u32 %v1578, 7
    %v1580 = vsub.s32 1, %v1579
    %v1581 = vrot.slane %v1561, %v1580
    %v1582 = vlaneseq
    %v1583 = vshrl.u32 %v1582, 7
    %v1584 = vsub.s32 1, %v1583
    %v1585 = vrot.slane %v1565, %v1584
    %v1586 = vlaneseq
    %v1587 = vshrl.u32 %v1586, 7
    %v1588 = vsub.s32 1, %v1587
    %v1589 = vrot.slane %v1569, %v1588
    %v1590 = vlaneseq
    %v1591 = vshrl.u32 %v1590, 7
    %v1592 = vsub.s32 1, %v1591
    %v1593 = vrot.slane %v1573, %v1592
    %v1594 = vmul.f32 %v1480, %v1581
    %v1595 = vmul.f32 %v1480, %v1585
    %v1596 = vmul.f32 %v1480, %v1589
    %v1597 = vmul.f32 %v1480, %v1593
    %v1598 = vmul.f32 %v1485, %v1581
    %v1599 = vmul.f32 %v1485, %v1585
    %v1600 = vmul.f32 %v1485, %v1589
    %v1601 = vmul.f32 %v1485, %v1593
    %v1602 = vmul.f32 %v1490, %v1581
    %v1603 = vmul.f32 %v1490, %v1585
    %v1604 = vmul.f32 %v1490, %v1589
    %v1605 = vmul.f32 %v1490, %v1593
    %v1606 = vmul.f32 %v1495, %v1581
    %v1607 = vmul.f32 %v1495, %v1585
    %v1608 = vmul.f32 %v1495, %v1589
    %v1609 = vmul.f32 %v1495, %v1593
    %v1610 = vmul.f32 %v1500, %v1581
    %v1611 = vmul.f32 %v1500, %v1585
    %v1612 = vmul.f32 %v1500, %v1589
    %v1613 = vmul.f32 %v1500, %v1593
    %v1614 = vmul.f32 %v1505, %v1581
    %v1615 = vmul.f32 %v1505, %v1585
    %v1616 = vmul.f32 %v1505, %v1589
    %v1617 = vmul.f32 %v1505, %v1593
    %v1618 = vmul.f32 %v1510, %v1581
    %v1619 = vmul.f32 %v1510, %v1585
    %v1620 = vmul.f32 %v1510, %v1589
    %v1621 = vmul.f32 %v1510, %v1593
    %v1622 = vmul.f32 %v1515, %v1581
    %v1623 = vmul.f32 %v1515, %v1585
    %v1624 = vmul.f32 %v1515, %v1589
    %v1625 = vmul.f32 %v1515, %v1593
    %v1626 = vmul.f32 %v1520, %v1581
    %v1627 = vmul.f32 %v1520, %v1585
    %v1628 = vmul.f32 %v1520, %v1589
    %v1629 = vmul.f32 %v1520, %v1593
    %v1630 = vmul.f32 %v1525, %v1581
    %v1631 = vmul.f32 %v1525, %v1585
    %v1632 = vmul.f32 %v1525, %v1589
    %v1633 = vmul.f32 %v1525, %v1593
    %v1634 = vmul.f32 %v1530, %v1581
    %v1635 = vmul.f32 %v1530, %v1585
    %v1636 = vmul.f32 %v1530, %v1589
    %v1637 = vmul.f32 %v1530, %v1593
    %v1638 = vmul.f32 %v1535, %v1581
    %v1639 = vmul.f32 %v1535, %v1585
    %v1640 = vmul.f32 %v1535, %v1589
    %v1641 = vmul.f32 %v1535, %v1593
    %v1642 = vmul.f32 %v1540, %v1581
    %v1643 = vmul.f32 %v1540, %v1585
    %v1644 = vmul.f32 %v1540, %v1589
    %v1645 = vmul.f32 %v1540, %v1593
    %v1646 = vmul.f32 %v1545, %v1581
    %v1647 = vmul.f32 %v1545, %v1585
    %v1648 = vmul.f32 %v1545, %v1589
    %v1649 = vmul.f32 %v1545, %v1593
    %v1650 = vmul.f32 %v1550, %v1581
    %v1651 = vmul.f32 %v1550, %v1585
    %v1652 = vmul.f32 %v1550, %v1589
    %v1653 = vmul.f32 %v1550, %v1593
    %v1654 = vmul.f32 %v1555, %v1581
    %v1655 = vmul.f32 %v1555, %v1585
    %v1656 = vmul.f32 %v1555, %v1589
    %v1657 = vmul.f32 %v1555, %v1593
    %1659 = vset.pattern.permute.xlu0 0
    %1660 = vperm.xlu0 %1659, %v1425
    %v1661 = vpop.permute.xlu0 %1660
    %1664 = vset.pattern.permute.xlu0 0
    %1665 = vperm.xlu0 %1664, %v1426
    %v1666 = vpop.permute.xlu0 %1665
    %1669 = vset.pattern.permute.xlu0 0
    %1670 = vperm.xlu0 %1669, %v1427
    %v1671 = vpop.permute.xlu0 %1670
    %1674 = vset.pattern.permute.xlu0 0
    %1675 = vperm.xlu0 %1674, %v1428
    %v1676 = vpop.permute.xlu0 %1675
    %1679 = vset.pattern.permute.xlu0 0
    %1680 = vperm.xlu0 %1679, %v1429
    %v1681 = vpop.permute.xlu0 %1680
    %1684 = vset.pattern.permute.xlu0 0
    %1685 = vperm.xlu0 %1684, %v1430
    %v1686 = vpop.permute.xlu0 %1685
    %1689 = vset.pattern.permute.xlu0 0
    %1690 = vperm.xlu0 %1689, %v1431
    %v1691 = vpop.permute.xlu0 %1690
    %1694 = vset.pattern.permute.xlu0 0
    %1695 = vperm.xlu0 %1694, %v1432
    %v1696 = vpop.permute.xlu0 %1695
    %1699 = vset.pattern.permute.xlu0 0
    %1700 = vperm.xlu0 %1699, %v1433
    %v1701 = vpop.permute.xlu0 %1700
    %1704 = vset.pattern.permute.xlu0 0
    %1705 = vperm.xlu0 %1704, %v1434
    %v1706 = vpop.permute.xlu0 %1705
    %1709 = vset.pattern.permute.xlu0 0
    %1710 = vperm.xlu0 %1709, %v1435
    %v1711 = vpop.permute.xlu0 %1710
    %1714 = vset.pattern.permute.xlu0 0
    %1715 = vperm.xlu0 %1714, %v1436
    %v1716 = vpop.permute.xlu0 %1715
    %1719 = vset.pattern.permute.xlu0 0
    %1720 = vperm.xlu0 %1719, %v1437
    %v1721 = vpop.permute.xlu0 %1720
    %1724 = vset.pattern.permute.xlu0 0
    %1725 = vperm.xlu0 %1724, %v1438
    %v1726 = vpop.permute.xlu0 %1725
    %1729 = vset.pattern.permute.xlu0 0
    %1730 = vperm.xlu0 %1729, %v1439
    %v1731 = vpop.permute.xlu0 %1730
    %1734 = vset.pattern.permute.xlu0 0
    %1735 = vperm.xlu0 %1734, %v1440
    %v1736 = vpop.permute.xlu0 %1735
    %v1738 = vadd.f32 %v1594, %v1661
    %v1739 = vadd.f32 %v1595, %v1661
    %v1740 = vadd.f32 %v1596, %v1661
    %v1741 = vadd.f32 %v1597, %v1661
    %v1742 = vadd.f32 %v1598, %v1666
    %v1743 = vadd.f32 %v1599, %v1666
    %v1744 = vadd.f32 %v1600, %v1666
    %v1745 = vadd.f32 %v1601, %v1666
    %v1746 = vadd.f32 %v1602, %v1671
    %v1747 = vadd.f32 %v1603, %v1671
    %v1748 = vadd.f32 %v1604, %v1671
    %v1749 = vadd.f32 %v1605, %v1671
    %v1750 = vadd.f32 %v1606, %v1676
    %v1751 = vadd.f32 %v1607, %v1676
    %v1752 = vadd.f32 %v1608, %v1676
    %v1753 = vadd.f32 %v1609, %v1676
    %v1754 = vadd.f32 %v1610, %v1681
    %v1755 = vadd.f32 %v1611, %v1681
    %v1756 = vadd.f32 %v1612, %v1681
    %v1757 = vadd.f32 %v1613, %v1681
    %v1758 = vadd.f32 %v1614, %v1686
    %v1759 = vadd.f32 %v1615, %v1686
    %v1760 = vadd.f32 %v1616, %v1686
    %v1761 = vadd.f32 %v1617, %v1686
    %v1762 = vadd.f32 %v1618, %v1691
    %v1763 = vadd.f32 %v1619, %v1691
    %v1764 = vadd.f32 %v1620, %v1691
    %v1765 = vadd.f32 %v1621, %v1691
    %v1766 = vadd.f32 %v1622, %v1696
    %v1767 = vadd.f32 %v1623, %v1696
    %v1768 = vadd.f32 %v1624, %v1696
    %v1769 = vadd.f32 %v1625, %v1696
    %v1770 = vadd.f32 %v1626, %v1701
    %v1771 = vadd.f32 %v1627, %v1701
    %v1772 = vadd.f32 %v1628, %v1701
    %v1773 = vadd.f32 %v1629, %v1701
    %v1774 = vadd.f32 %v1630, %v1706
    %v1775 = vadd.f32 %v1631, %v1706
    %v1776 = vadd.f32 %v1632, %v1706
    %v1777 = vadd.f32 %v1633, %v1706
    %v1778 = vadd.f32 %v1634, %v1711
    %v1779 = vadd.f32 %v1635, %v1711
    %v1780 = vadd.f32 %v1636, %v1711
    %v1781 = vadd.f32 %v1637, %v1711
    %v1782 = vadd.f32 %v1638, %v1716
    %v1783 = vadd.f32 %v1639, %v1716
    %v1784 = vadd.f32 %v1640, %v1716
    %v1785 = vadd.f32 %v1641, %v1716
    %v1786 = vadd.f32 %v1642, %v1721
    %v1787 = vadd.f32 %v1643, %v1721
    %v1788 = vadd.f32 %v1644, %v1721
    %v1789 = vadd.f32 %v1645, %v1721
    %v1790 = vadd.f32 %v1646, %v1726
    %v1791 = vadd.f32 %v1647, %v1726
    %v1792 = vadd.f32 %v1648, %v1726
    %v1793 = vadd.f32 %v1649, %v1726
    %v1794 = vadd.f32 %v1650, %v1731
    %v1795 = vadd.f32 %v1651, %v1731
    %v1796 = vadd.f32 %v1652, %v1731
    %v1797 = vadd.f32 %v1653, %v1731
    %v1798 = vadd.f32 %v1654, %v1736
    %v1799 = vadd.f32 %v1655, %v1736
    %v1800 = vadd.f32 %v1656, %v1736
    %v1801 = vadd.f32 %v1657, %v1736
    %v1802 = vmul.f32 %v1738, 0.01
    %v1803 = vmul.f32 %v1739, 0.01
    %v1804 = vmul.f32 %v1740, 0.01
    %v1805 = vmul.f32 %v1741, 0.01
    %v1806 = vmul.f32 %v1742, 0.01
    %v1807 = vmul.f32 %v1743, 0.01
    %v1808 = vmul.f32 %v1744, 0.01
    %v1809 = vmul.f32 %v1745, 0.01
    %v1810 = vmul.f32 %v1746, 0.01
    %v1811 = vmul.f32 %v1747, 0.01
    %v1812 = vmul.f32 %v1748, 0.01
    %v1813 = vmul.f32 %v1749, 0.01
    %v1814 = vmul.f32 %v1750, 0.01
    %v1815 = vmul.f32 %v1751, 0.01
    %v1816 = vmul.f32 %v1752, 0.01
    %v1817 = vmul.f32 %v1753, 0.01
    %v1818 = vmul.f32 %v1754, 0.01
    %v1819 = vmul.f32 %v1755, 0.01
    %v1820 = vmul.f32 %v1756, 0.01
    %v1821 = vmul.f32 %v1757, 0.01
    %v1822 = vmul.f32 %v1758, 0.01
    %v1823 = vmul.f32 %v1759, 0.01
    %v1824 = vmul.f32 %v1760, 0.01
    %v1825 = vmul.f32 %v1761, 0.01
    %v1826 = vmul.f32 %v1762, 0.01
    %v1827 = vmul.f32 %v1763, 0.01
    %v1828 = vmul.f32 %v1764, 0.01
    %v1829 = vmul.f32 %v1765, 0.01
    %v1830 = vmul.f32 %v1766, 0.01
    %v1831 = vmul.f32 %v1767, 0.01
    %v1832 = vmul.f32 %v1768, 0.01
    %v1833 = vmul.f32 %v1769, 0.01
    %v1834 = vmul.f32 %v1770, 0.01
    %v1835 = vmul.f32 %v1771, 0.01
    %v1836 = vmul.f32 %v1772, 0.01
    %v1837 = vmul.f32 %v1773, 0.01
    %v1838 = vmul.f32 %v1774, 0.01
    %v1839 = vmul.f32 %v1775, 0.01
    %v1840 = vmul.f32 %v1776, 0.01
    %v1841 = vmul.f32 %v1777, 0.01
    %v1842 = vmul.f32 %v1778, 0.01
    %v1843 = vmul.f32 %v1779, 0.01
    %v1844 = vmul.f32 %v1780, 0.01
    %v1845 = vmul.f32 %v1781, 0.01
    %v1846 = vmul.f32 %v1782, 0.01
    %v1847 = vmul.f32 %v1783, 0.01
    %v1848 = vmul.f32 %v1784, 0.01
    %v1849 = vmul.f32 %v1785, 0.01
    %v1850 = vmul.f32 %v1786, 0.01
    %v1851 = vmul.f32 %v1787, 0.01
    %v1852 = vmul.f32 %v1788, 0.01
    %v1853 = vmul.f32 %v1789, 0.01
    %v1854 = vmul.f32 %v1790, 0.01
    %v1855 = vmul.f32 %v1791, 0.01
    %v1856 = vmul.f32 %v1792, 0.01
    %v1857 = vmul.f32 %v1793, 0.01
    %v1858 = vmul.f32 %v1794, 0.01
    %v1859 = vmul.f32 %v1795, 0.01
    %v1860 = vmul.f32 %v1796, 0.01
    %v1861 = vmul.f32 %v1797, 0.01
    %v1862 = vmul.f32 %v1798, 0.01
    %v1863 = vmul.f32 %v1799, 0.01
    %v1864 = vmul.f32 %v1800, 0.01
    %v1865 = vmul.f32 %v1801, 0.01
    %v1866 = vmax.f32 %v1738, %v1802
    %v1867 = vmax.f32 %v1739, %v1803
    %v1868 = vmax.f32 %v1740, %v1804
    %v1869 = vmax.f32 %v1741, %v1805
    %v1870 = vmax.f32 %v1742, %v1806
    %v1871 = vmax.f32 %v1743, %v1807
    %v1872 = vmax.f32 %v1744, %v1808
    %v1873 = vmax.f32 %v1745, %v1809
    %v1874 = vmax.f32 %v1746, %v1810
    %v1875 = vmax.f32 %v1747, %v1811
    %v1876 = vmax.f32 %v1748, %v1812
    %v1877 = vmax.f32 %v1749, %v1813
    %v1878 = vmax.f32 %v1750, %v1814
    %v1879 = vmax.f32 %v1751, %v1815
    %v1880 = vmax.f32 %v1752, %v1816
    %v1881 = vmax.f32 %v1753, %v1817
    %v1882 = vmax.f32 %v1754, %v1818
    %v1883 = vmax.f32 %v1755, %v1819
    %v1884 = vmax.f32 %v1756, %v1820
    %v1885 = vmax.f32 %v1757, %v1821
    %v1886 = vmax.f32 %v1758, %v1822
    %v1887 = vmax.f32 %v1759, %v1823
    %v1888 = vmax.f32 %v1760, %v1824
    %v1889 = vmax.f32 %v1761, %v1825
    %v1890 = vmax.f32 %v1762, %v1826
    %v1891 = vmax.f32 %v1763, %v1827
    %v1892 = vmax.f32 %v1764, %v1828
    %v1893 = vmax.f32 %v1765, %v1829
    %v1894 = vmax.f32 %v1766, %v1830
    %v1895 = vmax.f32 %v1767, %v1831
    %v1896 = vmax.f32 %v1768, %v1832
    %v1897 = vmax.f32 %v1769, %v1833
    %v1898 = vmax.f32 %v1770, %v1834
    %v1899 = vmax.f32 %v1771, %v1835
    %v1900 = vmax.f32 %v1772, %v1836
    %v1901 = vmax.f32 %v1773, %v1837
    %v1902 = vmax.f32 %v1774, %v1838
    %v1903 = vmax.f32 %v1775, %v1839
    %v1904 = vmax.f32 %v1776, %v1840
    %v1905 = vmax.f32 %v1777, %v1841
    %v1906 = vmax.f32 %v1778, %v1842
    %v1907 = vmax.f32 %v1779, %v1843
    %v1908 = vmax.f32 %v1780, %v1844
    %v1909 = vmax.f32 %v1781, %v1845
    %v1910 = vmax.f32 %v1782, %v1846
    %v1911 = vmax.f32 %v1783, %v1847
    %v1912 = vmax.f32 %v1784, %v1848
    %v1913 = vmax.f32 %v1785, %v1849
    %v1914 = vmax.f32 %v1786, %v1850
    %v1915 = vmax.f32 %v1787, %v1851
    %v1916 = vmax.f32 %v1788, %v1852
    %v1917 = vmax.f32 %v1789, %v1853
    %v1918 = vmax.f32 %v1790, %v1854
    %v1919 = vmax.f32 %v1791, %v1855
    %v1920 = vmax.f32 %v1792, %v1856
    %v1921 = vmax.f32 %v1793, %v1857
    %v1922 = vmax.f32 %v1794, %v1858
    %v1923 = vmax.f32 %v1795, %v1859
    %v1924 = vmax.f32 %v1796, %v1860
    %v1925 = vmax.f32 %v1797, %v1861
    %v1926 = vmax.f32 %v1798, %v1862
    %v1927 = vmax.f32 %v1799, %v1863
    %v1928 = vmax.f32 %v1800, %v1864
    %v1929 = vmax.f32 %v1801, %v1865
    %s1930 = scalar_lea.vmem %s3, 256
    %v1931 = vld [vmem:[%s1930] sm:$0xf]
    %v1932 = vld [vmem:[%s1930 + $0x4] sm:$0xf]
    %v1933 = vld [vmem:[%s1930 + $0x8] sm:$0xf]
    %v1934 = vld [vmem:[%s1930 + $0xc] sm:$0xf]
    %v1935 = vld [vmem:[%s1930 + $0x10] sm:$0xf]
    %v1936 = vld [vmem:[%s1930 + $0x14] sm:$0xf]
    %v1937 = vld [vmem:[%s1930 + $0x18] sm:$0xf]
    %v1938 = vld [vmem:[%s1930 + $0x1c] sm:$0xf]
    %v1939 = vld [vmem:[%s1930 + $0x20] sm:$0xf]
    %v1940 = vld [vmem:[%s1930 + $0x24] sm:$0xf]
    %v1941 = vld [vmem:[%s1930 + $0x28] sm:$0xf]
    %v1942 = vld [vmem:[%s1930 + $0x2c] sm:$0xf]
    %v1943 = vld [vmem:[%s1930 + $0x30] sm:$0xf]
    %v1944 = vld [vmem:[%s1930 + $0x34] sm:$0xf]
    %v1945 = vld [vmem:[%s1930 + $0x38] sm:$0xf]
    %v1946 = vld [vmem:[%s1930 + $0x3c] sm:$0xf]
    %v1947 = vpack.c.bf16 %v1870, %v1866
    %v1948 = vpack.c.bf16 %v1871, %v1867
    %v1949 = vpack.c.bf16 %v1872, %v1868
    %v1950 = vpack.c.bf16 %v1873, %v1869
    %v1951 = vpack.c.bf16 %v1878, %v1874
    %v1952 = vpack.c.bf16 %v1879, %v1875
    %v1953 = vpack.c.bf16 %v1880, %v1876
    %v1954 = vpack.c.bf16 %v1881, %v1877
    %v1955 = vpack.c.bf16 %v1886, %v1882
    %v1956 = vpack.c.bf16 %v1887, %v1883
    %v1957 = vpack.c.bf16 %v1888, %v1884
    %v1958 = vpack.c.bf16 %v1889, %v1885
    %v1959 = vpack.c.bf16 %v1894, %v1890
    %v1960 = vpack.c.bf16 %v1895, %v1891
    %v1961 = vpack.c.bf16 %v1896, %v1892
    %v1962 = vpack.c.bf16 %v1897, %v1893
    %v1963 = vpack.c.bf16 %v1902, %v1898
    %v1964 = vpack.c.bf16 %v1903, %v1899
    %v1965 = vpack.c.bf16 %v1904, %v1900
    %v1966 = vpack.c.bf16 %v1905, %v1901
    %v1967 = vpack.c.bf16 %v1910, %v1906
    %v1968 = vpack.c.bf16 %v1911, %v1907
    %v1969 = vpack.c.bf16 %v1912, %v1908
    %v1970 = vpack.c.bf16 %v1913, %v1909
    %v1971 = vpack.c.bf16 %v1918, %v1914
    %v1972 = vpack.c.bf16 %v1919, %v1915
    %v1973 = vpack.c.bf16 %v1920, %v1916
    %v1974 = vpack.c.bf16 %v1921, %v1917
    %v1975 = vpack.c.bf16 %v1926, %v1922
    %v1976 = vpack.c.bf16 %v1927, %v1923
    %v1977 = vpack.c.bf16 %v1928, %v1924
    %v1978 = vpack.c.bf16 %v1929, %v1925
    %1980 = vset.pattern.permute.xlu0 0
    %1981 = vperm.xlu0 %1980, %v1442
    %v1982 = vpop.permute.xlu0 %1981
    %1985 = vset.pattern.permute.xlu0 0
    %1986 = vperm.xlu0 %1985, %v1443
    %v1987 = vpop.permute.xlu0 %1986
    %1990 = vset.pattern.permute.xlu0 0
    %1991 = vperm.xlu0 %1990, %v1444
    %v1992 = vpop.permute.xlu0 %1991
    %1995 = vset.pattern.permute.xlu0 0
    %1996 = vperm.xlu0 %1995, %v1445
    %v1997 = vpop.permute.xlu0 %1996
    %2000 = vset.pattern.permute.xlu0 0
    %2001 = vperm.xlu0 %2000, %v1446
    %v2002 = vpop.permute.xlu0 %2001
    %2005 = vset.pattern.permute.xlu0 0
    %2006 = vperm.xlu0 %2005, %v1447
    %v2007 = vpop.permute.xlu0 %2006
    %2010 = vset.pattern.permute.xlu0 0
    %2011 = vperm.xlu0 %2010, %v1448
    %v2012 = vpop.permute.xlu0 %2011
    %2015 = vset.pattern.permute.xlu0 0
    %2016 = vperm.xlu0 %2015, %v1449
    %v2017 = vpop.permute.xlu0 %2016
    %2020 = vset.pattern.permute.xlu0 0
    %2021 = vperm.xlu0 %2020, %v1450
    %v2022 = vpop.permute.xlu0 %2021
    %2025 = vset.pattern.permute.xlu0 0
    %2026 = vperm.xlu0 %2025, %v1451
    %v2027 = vpop.permute.xlu0 %2026
    %2030 = vset.pattern.permute.xlu0 0
    %2031 = vperm.xlu0 %2030, %v1452
    %v2032 = vpop.permute.xlu0 %2031
    %2035 = vset.pattern.permute.xlu0 0
    %2036 = vperm.xlu0 %2035, %v1453
    %v2037 = vpop.permute.xlu0 %2036
    %2040 = vset.pattern.permute.xlu0 0
    %2041 = vperm.xlu0 %2040, %v1454
    %v2042 = vpop.permute.xlu0 %2041
    %2045 = vset.pattern.permute.xlu0 0
    %2046 = vperm.xlu0 %2045, %v1455
    %v2047 = vpop.permute.xlu0 %2046
    %2050 = vset.pattern.permute.xlu0 0
    %2051 = vperm.xlu0 %2050, %v1456
    %v2052 = vpop.permute.xlu0 %2051
    %2055 = vset.pattern.permute.xlu0 0
    %2056 = vperm.xlu0 %2055, %v1457
    %v2057 = vpop.permute.xlu0 %2056
    %v2075 = vunpack.c.l.b16 %v1931
    %v2076 = vunpack.c.l.b16 %v1932
    %v2077 = vunpack.c.l.b16 %v1933
    %v2078 = vunpack.c.l.b16 %v1934
    %v2079 = vunpack.c.l.b16 %v1935
    %v2080 = vunpack.c.l.b16 %v1936
    %v2081 = vunpack.c.l.b16 %v1937
    %v2082 = vunpack.c.l.b16 %v1938
    %v2083 = vunpack.c.l.b16 %v1939
    %v2084 = vunpack.c.l.b16 %v1940
    %v2085 = vunpack.c.l.b16 %v1941
    %v2086 = vunpack.c.l.b16 %v1942
    %v2087 = vunpack.c.l.b16 %v1943
    %v2088 = vunpack.c.l.b16 %v1944
    %v2089 = vunpack.c.l.b16 %v1945
    %v2090 = vunpack.c.l.b16 %v1946
    %v2091 = vpack.c.b16 %v2076, %v2075
    %v2092 = vpack.c.b16 %v2078, %v2077
    %v2093 = vpack.c.b16 %v2080, %v2079
    %v2094 = vpack.c.b16 %v2082, %v2081
    %v2095 = vpack.c.b16 %v2084, %v2083
    %v2096 = vpack.c.b16 %v2086, %v2085
    %v2097 = vpack.c.b16 %v2088, %v2087
    %v2098 = vpack.c.b16 %v2090, %v2089
    %2107 = vmatprep.subr.bf16.mxu0 %v1976
    %2108 = vmatpush1.bf16.msra.mxu0 %v1975
    %2109 = vmatprep.subr.bf16.mxu0 %v1972
    %2110 = vmatpush1.bf16.msra.mxu0 %v1971
    %2111 = vmatprep.subr.bf16.mxu0 %v1968
    %2112 = vmatpush1.bf16.msra.mxu0 %v1967
    %2113 = vmatprep.subr.bf16.mxu0 %v1964
    %2114 = vmatpush1.bf16.msra.mxu0 %v1963
    %2115 = vmatprep.subr.bf16.mxu0 %v1960
    %2116 = vmatpush1.bf16.msra.mxu0 %v1959
    %2117 = vmatprep.subr.bf16.mxu0 %v1956
    %2118 = vmatpush1.bf16.msra.mxu0 %v1955
    %2119 = vmatprep.subr.bf16.mxu0 %v1952
    %2120 = vmatpush1.bf16.msra.mxu0 %v1951
    %2121 = vmatprep.subr.bf16.mxu0 %v1948
    %2122 = vmatpush1.bf16.msra.mxu0 %v1947
    %2123 = vmatprep.subr.bf16.mxu0 0
    %2124 = vmatpush2.bf16.msra.mxu0 0
    %2125 = vmatprep.subr.bf16.mxu0 0
    %2126 = vmatpush2.bf16.msra.mxu0 0
    %2127 = vmatprep.subr.bf16.mxu0 0
    %2128 = vmatpush2.bf16.msra.mxu0 0
    %2129 = vmatprep.subr.bf16.mxu0 0
    %2130 = vmatpush2.bf16.msra.mxu0 0
    %2131 = vmatprep.subr.bf16.mxu0 0
    %2132 = vmatpush2.bf16.msra.mxu0 0
    %2133 = vmatprep.subr.bf16.mxu0 0
    %2134 = vmatpush2.bf16.msra.mxu0 0
    %2135 = vmatprep.subr.bf16.mxu0 0
    %2136 = vmatpush2.bf16.msra.mxu0 0
    %2137 = vmatprep.subr.bf16.mxu0 0
    %2138 = vmatpush2.bf16.msra.mxu0 0
    %2139 = vmatprep.mubr.bf16.mxu0 0
    %2140 = vmatmul.mubr.bf16.gmra.mxu0 %v2091
    %v2141 = vpop.f32.mrf.mxu0
    %v2142 = vadd.f32 %v1982, %v2141
    %v2143 = vpop.f32.mrf.mxu0
    %v2144 = vadd.f32 %v1982, %v2143
    %v2145 = vpop.f32.mrf.mxu0
    %v2146 = vadd.f32 %v1987, %v2145
    %v2147 = vpop.f32.mrf.mxu0
    %v2148 = vadd.f32 %v1987, %v2147
    %2149 = vmatprep.mubr.bf16.mxu0 0
    %2150 = vmatmul.mubr.bf16.gmra.mxu0 %v2092
    %v2151 = vpop.f32.mrf.mxu0
    %v2152 = vadd.f32 %v1992, %v2151
    %v2153 = vpop.f32.mrf.mxu0
    %v2154 = vadd.f32 %v1992, %v2153
    %v2155 = vpop.f32.mrf.mxu0
    %v2156 = vadd.f32 %v1997, %v2155
    %v2157 = vpop.f32.mrf.mxu0
    %v2158 = vadd.f32 %v1997, %v2157
    %2159 = vmatprep.mubr.bf16.mxu0 0
    %2160 = vmatmul.mubr.bf16.gmra.mxu0 %v2093
    %v2161 = vpop.f32.mrf.mxu0
    %v2162 = vadd.f32 %v2002, %v2161
    %v2163 = vpop.f32.mrf.mxu0
    %v2164 = vadd.f32 %v2002, %v2163
    %v2165 = vpop.f32.mrf.mxu0
    %v2166 = vadd.f32 %v2007, %v2165
    %v2167 = vpop.f32.mrf.mxu0
    %v2168 = vadd.f32 %v2007, %v2167
    %2169 = vmatprep.mubr.bf16.mxu0 0
    %2170 = vmatmul.mubr.bf16.gmra.mxu0 %v2094
    %v2171 = vpop.f32.mrf.mxu0
    %v2172 = vadd.f32 %v2012, %v2171
    %v2173 = vpop.f32.mrf.mxu0
    %v2174 = vadd.f32 %v2012, %v2173
    %v2175 = vpop.f32.mrf.mxu0
    %v2176 = vadd.f32 %v2017, %v2175
    %v2177 = vpop.f32.mrf.mxu0
    %v2178 = vadd.f32 %v2017, %v2177
    %2179 = vmatprep.mubr.bf16.mxu0 0
    %2180 = vmatmul.mubr.bf16.gmra.mxu0 %v2095
    %v2181 = vpop.f32.mrf.mxu0
    %v2182 = vadd.f32 %v2022, %v2181
    %v2183 = vpop.f32.mrf.mxu0
    %v2184 = vadd.f32 %v2022, %v2183
    %v2185 = vpop.f32.mrf.mxu0
    %v2186 = vadd.f32 %v2027, %v2185
    %v2187 = vpop.f32.mrf.mxu0
    %v2188 = vadd.f32 %v2027, %v2187
    %2189 = vmatprep.mubr.bf16.mxu0 0
    %2190 = vmatmul.mubr.bf16.gmra.mxu0 %v2096
    %v2191 = vpop.f32.mrf.mxu0
    %v2192 = vadd.f32 %v2032, %v2191
    %v2193 = vpop.f32.mrf.mxu0
    %v2194 = vadd.f32 %v2032, %v2193
    %v2195 = vpop.f32.mrf.mxu0
    %v2196 = vadd.f32 %v2037, %v2195
    %v2197 = vpop.f32.mrf.mxu0
    %v2198 = vadd.f32 %v2037, %v2197
    %2199 = vmatprep.mubr.bf16.mxu0 0
    %2200 = vmatmul.mubr.bf16.gmra.mxu0 %v2097
    %v2201 = vpop.f32.mrf.mxu0
    %v2202 = vadd.f32 %v2042, %v2201
    %v2203 = vpop.f32.mrf.mxu0
    %v2204 = vadd.f32 %v2042, %v2203
    %v2205 = vpop.f32.mrf.mxu0
    %v2206 = vadd.f32 %v2047, %v2205
    %v2207 = vpop.f32.mrf.mxu0
    %v2208 = vadd.f32 %v2047, %v2207
    %2209 = vmatprep.mubr.bf16.mxu0 0
    %2210 = vmatmul.mubr.bf16.gmra.mxu0 %v2098
    %v2211 = vpop.f32.mrf.mxu0
    %v2212 = vadd.f32 %v2052, %v2211
    %v2213 = vpop.f32.mrf.mxu0
    %v2214 = vadd.f32 %v2052, %v2213
    %v2215 = vpop.f32.mrf.mxu0
    %v2216 = vadd.f32 %v2057, %v2215
    %v2217 = vpop.f32.mrf.mxu0
    %v2218 = vadd.f32 %v2057, %v2217
    %2219 = vdwg.mxu0
    %2220 = vmatprep.subr.bf16.mxu0 %v1978
    %2221 = vmatpush1.bf16.msra.mxu0 %v1977
    %2222 = vmatprep.subr.bf16.mxu0 %v1974
    %2223 = vmatpush1.bf16.msra.mxu0 %v1973
    %2224 = vmatprep.subr.bf16.mxu0 %v1970
    %2225 = vmatpush1.bf16.msra.mxu0 %v1969
    %2226 = vmatprep.subr.bf16.mxu0 %v1966
    %2227 = vmatpush1.bf16.msra.mxu0 %v1965
    %2228 = vmatprep.subr.bf16.mxu0 %v1962
    %2229 = vmatpush1.bf16.msra.mxu0 %v1961
    %2230 = vmatprep.subr.bf16.mxu0 %v1958
    %2231 = vmatpush1.bf16.msra.mxu0 %v1957
    %2232 = vmatprep.subr.bf16.mxu0 %v1954
    %2233 = vmatpush1.bf16.msra.mxu0 %v1953
    %2234 = vmatprep.subr.bf16.mxu0 %v1950
    %2235 = vmatpush1.bf16.msra.mxu0 %v1949
    %2236 = vmatprep.subr.bf16.mxu0 0
    %2237 = vmatpush2.bf16.msra.mxu0 0
    %2238 = vmatprep.subr.bf16.mxu0 0
    %2239 = vmatpush2.bf16.msra.mxu0 0
    %2240 = vmatprep.subr.bf16.mxu0 0
    %2241 = vmatpush2.bf16.msra.mxu0 0
    %2242 = vmatprep.subr.bf16.mxu0 0
    %2243 = vmatpush2.bf16.msra.mxu0 0
    %2244 = vmatprep.subr.bf16.mxu0 0
    %2245 = vmatpush2.bf16.msra.mxu0 0
    %2246 = vmatprep.subr.bf16.mxu0 0
    %2247 = vmatpush2.bf16.msra.mxu0 0
    %2248 = vmatprep.subr.bf16.mxu0 0
    %2249 = vmatpush2.bf16.msra.mxu0 0
    %2250 = vmatprep.subr.bf16.mxu0 0
    %2251 = vmatpush2.bf16.msra.mxu0 0
    %2252 = vmatprep.mubr.bf16.mxu0 0
    %2253 = vmatmul.mubr.bf16.gmra.mxu0 %v2091
    %v2254 = vpop.f32.mrf.mxu0
    %v2255 = vadd.f32 %v1982, %v2254
    %v2256 = vpop.f32.mrf.mxu0
    %v2257 = vadd.f32 %v1982, %v2256
    %v2258 = vpop.f32.mrf.mxu0
    %v2259 = vadd.f32 %v1987, %v2258
    %v2260 = vpop.f32.mrf.mxu0
    %v2261 = vadd.f32 %v1987, %v2260
    %2262 = vmatprep.mubr.bf16.mxu0 0
    %2263 = vmatmul.mubr.bf16.gmra.mxu0 %v2092
    %v2264 = vpop.f32.mrf.mxu0
    %v2265 = vadd.f32 %v1992, %v2264
    %v2266 = vpop.f32.mrf.mxu0
    %v2267 = vadd.f32 %v1992, %v2266
    %v2268 = vpop.f32.mrf.mxu0
    %v2269 = vadd.f32 %v1997, %v2268
    %v2270 = vpop.f32.mrf.mxu0
    %v2271 = vadd.f32 %v1997, %v2270
    %2272 = vmatprep.mubr.bf16.mxu0 0
    %2273 = vmatmul.mubr.bf16.gmra.mxu0 %v2093
    %v2274 = vpop.f32.mrf.mxu0
    %v2275 = vadd.f32 %v2002, %v2274
    %v2276 = vpop.f32.mrf.mxu0
    %v2277 = vadd.f32 %v2002, %v2276
    %v2278 = vpop.f32.mrf.mxu0
    %v2279 = vadd.f32 %v2007, %v2278
    %v2280 = vpop.f32.mrf.mxu0
    %v2281 = vadd.f32 %v2007, %v2280
    %2282 = vmatprep.mubr.bf16.mxu0 0
    %2283 = vmatmul.mubr.bf16.gmra.mxu0 %v2094
    %v2284 = vpop.f32.mrf.mxu0
    %v2285 = vadd.f32 %v2012, %v2284
    %v2286 = vpop.f32.mrf.mxu0
    %v2287 = vadd.f32 %v2012, %v2286
    %v2288 = vpop.f32.mrf.mxu0
    %v2289 = vadd.f32 %v2017, %v2288
    %v2290 = vpop.f32.mrf.mxu0
    %v2291 = vadd.f32 %v2017, %v2290
    %2292 = vmatprep.mubr.bf16.mxu0 0
    %2293 = vmatmul.mubr.bf16.gmra.mxu0 %v2095
    %v2294 = vpop.f32.mrf.mxu0
    %v2295 = vadd.f32 %v2022, %v2294
    %v2296 = vpop.f32.mrf.mxu0
    %v2297 = vadd.f32 %v2022, %v2296
    %v2298 = vpop.f32.mrf.mxu0
    %v2299 = vadd.f32 %v2027, %v2298
    %v2300 = vpop.f32.mrf.mxu0
    %v2301 = vadd.f32 %v2027, %v2300
    %2302 = vmatprep.mubr.bf16.mxu0 0
    %2303 = vmatmul.mubr.bf16.gmra.mxu0 %v2096
    %v2304 = vpop.f32.mrf.mxu0
    %v2305 = vadd.f32 %v2032, %v2304
    %v2306 = vpop.f32.mrf.mxu0
    %v2307 = vadd.f32 %v2032, %v2306
    %v2308 = vpop.f32.mrf.mxu0
    %v2309 = vadd.f32 %v2037, %v2308
    %v2310 = vpop.f32.mrf.mxu0
    %v2311 = vadd.f32 %v2037, %v2310
    %2312 = vmatprep.mubr.bf16.mxu0 0
    %2313 = vmatmul.mubr.bf16.gmra.mxu0 %v2097
    %v2314 = vpop.f32.mrf.mxu0
    %v2315 = vadd.f32 %v2042, %v2314
    %v2316 = vpop.f32.mrf.mxu0
    %v2317 = vadd.f32 %v2042, %v2316
    %v2318 = vpop.f32.mrf.mxu0
    %v2319 = vadd.f32 %v2047, %v2318
    %v2320 = vpop.f32.mrf.mxu0
    %v2321 = vadd.f32 %v2047, %v2320
    %2322 = vmatprep.mubr.bf16.mxu0 0
    %2323 = vmatmul.mubr.bf16.gmra.mxu0 %v2098
    %v2324 = vpop.f32.mrf.mxu0
    %v2325 = vadd.f32 %v2052, %v2324
    %v2326 = vpop.f32.mrf.mxu0
    %v2327 = vadd.f32 %v2052, %v2326
    %v2328 = vpop.f32.mrf.mxu0
    %v2329 = vadd.f32 %v2057, %v2328
    %v2330 = vpop.f32.mrf.mxu0
    %v2331 = vadd.f32 %v2057, %v2330
    %2332 = vdwg.mxu0
    %v2333 = vmul.f32 %v2142, 0.01
    %v2334 = vmul.f32 %v2144, 0.01
    %v2335 = vmul.f32 %v2255, 0.01
    %v2336 = vmul.f32 %v2257, 0.01
    %v2337 = vmul.f32 %v2146, 0.01
    %v2338 = vmul.f32 %v2148, 0.01
    %v2339 = vmul.f32 %v2259, 0.01
    %v2340 = vmul.f32 %v2261, 0.01
    %v2341 = vmul.f32 %v2152, 0.01
    %v2342 = vmul.f32 %v2154, 0.01
    %v2343 = vmul.f32 %v2265, 0.01
    %v2344 = vmul.f32 %v2267, 0.01
    %v2345 = vmul.f32 %v2156, 0.01
    %v2346 = vmul.f32 %v2158, 0.01
    %v2347 = vmul.f32 %v2269, 0.01
    %v2348 = vmul.f32 %v2271, 0.01
    %v2349 = vmul.f32 %v2162, 0.01
    %v2350 = vmul.f32 %v2164, 0.01
    %v2351 = vmul.f32 %v2275, 0.01
    %v2352 = vmul.f32 %v2277, 0.01
    %v2353 = vmul.f32 %v2166, 0.01
    %v2354 = vmul.f32 %v2168, 0.01
    %v2355 = vmul.f32 %v2279, 0.01
    %v2356 = vmul.f32 %v2281, 0.01
    %v2357 = vmul.f32 %v2172, 0.01
    %v2358 = vmul.f32 %v2174, 0.01
    %v2359 = vmul.f32 %v2285, 0.01
    %v2360 = vmul.f32 %v2287, 0.01
    %v2361 = vmul.f32 %v2176, 0.01
    %v2362 = vmul.f32 %v2178, 0.01
    %v2363 = vmul.f32 %v2289, 0.01
    %v2364 = vmul.f32 %v2291, 0.01
    %v2365 = vmul.f32 %v2182, 0.01
    %v2366 = vmul.f32 %v2184, 0.01
    %v2367 = vmul.f32 %v2295, 0.01
    %v2368 = vmul.f32 %v2297, 0.01
    %v2369 = vmul.f32 %v2186, 0.01
    %v2370 = vmul.f32 %v2188, 0.01
    %v2371 = vmul.f32 %v2299, 0.01
    %v2372 = vmul.f32 %v2301, 0.01
    %v2373 = vmul.f32 %v2192, 0.01
    %v2374 = vmul.f32 %v2194, 0.01
    %v2375 = vmul.f32 %v2305, 0.01
    %v2376 = vmul.f32 %v2307, 0.01
    %v2377 = vmul.f32 %v2196, 0.01
    %v2378 = vmul.f32 %v2198, 0.01
    %v2379 = vmul.f32 %v2309, 0.01
    %v2380 = vmul.f32 %v2311, 0.01
    %v2381 = vmul.f32 %v2202, 0.01
    %v2382 = vmul.f32 %v2204, 0.01
    %v2383 = vmul.f32 %v2315, 0.01
    %v2384 = vmul.f32 %v2317, 0.01
    %v2385 = vmul.f32 %v2206, 0.01
    %v2386 = vmul.f32 %v2208, 0.01
    %v2387 = vmul.f32 %v2319, 0.01
    %v2388 = vmul.f32 %v2321, 0.01
    %v2389 = vmul.f32 %v2212, 0.01
    %v2390 = vmul.f32 %v2214, 0.01
    %v2391 = vmul.f32 %v2325, 0.01
    %v2392 = vmul.f32 %v2327, 0.01
    %v2393 = vmul.f32 %v2216, 0.01
    %v2394 = vmul.f32 %v2218, 0.01
    %v2395 = vmul.f32 %v2329, 0.01
    %v2396 = vmul.f32 %v2331, 0.01
    %v2397 = vmax.f32 %v2142, %v2333
    %v2398 = vmax.f32 %v2144, %v2334
    %v2399 = vmax.f32 %v2255, %v2335
    %v2400 = vmax.f32 %v2257, %v2336
    %v2401 = vmax.f32 %v2146, %v2337
    %v2402 = vmax.f32 %v2148, %v2338
    %v2403 = vmax.f32 %v2259, %v2339
    %v2404 = vmax.f32 %v2261, %v2340
    %v2405 = vmax.f32 %v2152, %v2341
    %v2406 = vmax.f32 %v2154, %v2342
    %v2407 = vmax.f32 %v2265, %v2343
    %v2408 = vmax.f32 %v2267, %v2344
    %v2409 = vmax.f32 %v2156, %v2345
    %v2410 = vmax.f32 %v2158, %v2346
    %v2411 = vmax.f32 %v2269, %v2347
    %v2412 = vmax.f32 %v2271, %v2348
    %v2413 = vmax.f32 %v2162, %v2349
    %v2414 = vmax.f32 %v2164, %v2350
    %v2415 = vmax.f32 %v2275, %v2351
    %v2416 = vmax.f32 %v2277, %v2352
    %v2417 = vmax.f32 %v2166, %v2353
    %v2418 = vmax.f32 %v2168, %v2354
    %v2419 = vmax.f32 %v2279, %v2355
    %v2420 = vmax.f32 %v2281, %v2356
    %v2421 = vmax.f32 %v2172, %v2357
    %v2422 = vmax.f32 %v2174, %v2358
    %v2423 = vmax.f32 %v2285, %v2359
    %v2424 = vmax.f32 %v2287, %v2360
    %v2425 = vmax.f32 %v2176, %v2361
    %v2426 = vmax.f32 %v2178, %v2362
    %v2427 = vmax.f32 %v2289, %v2363
    %v2428 = vmax.f32 %v2291, %v2364
    %v2429 = vmax.f32 %v2182, %v2365
    %v2430 = vmax.f32 %v2184, %v2366
    %v2431 = vmax.f32 %v2295, %v2367
    %v2432 = vmax.f32 %v2297, %v2368
    %v2433 = vmax.f32 %v2186, %v2369
    %v2434 = vmax.f32 %v2188, %v2370
    %v2435 = vmax.f32 %v2299, %v2371
    %v2436 = vmax.f32 %v2301, %v2372
    %v2437 = vmax.f32 %v2192, %v2373
    %v2438 = vmax.f32 %v2194, %v2374
    %v2439 = vmax.f32 %v2305, %v2375
    %v2440 = vmax.f32 %v2307, %v2376
    %v2441 = vmax.f32 %v2196, %v2377
    %v2442 = vmax.f32 %v2198, %v2378
    %v2443 = vmax.f32 %v2309, %v2379
    %v2444 = vmax.f32 %v2311, %v2380
    %v2445 = vmax.f32 %v2202, %v2381
    %v2446 = vmax.f32 %v2204, %v2382
    %v2447 = vmax.f32 %v2315, %v2383
    %v2448 = vmax.f32 %v2317, %v2384
    %v2449 = vmax.f32 %v2206, %v2385
    %v2450 = vmax.f32 %v2208, %v2386
    %v2451 = vmax.f32 %v2319, %v2387
    %v2452 = vmax.f32 %v2321, %v2388
    %v2453 = vmax.f32 %v2212, %v2389
    %v2454 = vmax.f32 %v2214, %v2390
    %v2455 = vmax.f32 %v2325, %v2391
    %v2456 = vmax.f32 %v2327, %v2392
    %v2457 = vmax.f32 %v2216, %v2393
    %v2458 = vmax.f32 %v2218, %v2394
    %v2459 = vmax.f32 %v2329, %v2395
    %v2460 = vmax.f32 %v2331, %v2396
    %2462 = vset.pattern.permute.xlu0 0
    %2463 = vperm.xlu0 %2462, %v1459
    %v2464 = vpop.permute.xlu0 %2463
    %2467 = vset.pattern.permute.xlu0 0
    %2468 = vperm.xlu0 %2467, %v1460
    %v2469 = vpop.permute.xlu0 %2468
    %2472 = vset.pattern.permute.xlu0 0
    %2473 = vperm.xlu0 %2472, %v1461
    %v2474 = vpop.permute.xlu0 %2473
    %2477 = vset.pattern.permute.xlu0 0
    %2478 = vperm.xlu0 %2477, %v1462
    %v2479 = vpop.permute.xlu0 %2478
    %2482 = vset.pattern.permute.xlu0 0
    %2483 = vperm.xlu0 %2482, %v1463
    %v2484 = vpop.permute.xlu0 %2483
    %2487 = vset.pattern.permute.xlu0 0
    %2488 = vperm.xlu0 %2487, %v1464
    %v2489 = vpop.permute.xlu0 %2488
    %2492 = vset.pattern.permute.xlu0 0
    %2493 = vperm.xlu0 %2492, %v1465
    %v2494 = vpop.permute.xlu0 %2493
    %2497 = vset.pattern.permute.xlu0 0
    %2498 = vperm.xlu0 %2497, %v1466
    %v2499 = vpop.permute.xlu0 %2498
    %2502 = vset.pattern.permute.xlu0 0
    %2503 = vperm.xlu0 %2502, %v1467
    %v2504 = vpop.permute.xlu0 %2503
    %2507 = vset.pattern.permute.xlu0 0
    %2508 = vperm.xlu0 %2507, %v1468
    %v2509 = vpop.permute.xlu0 %2508
    %2512 = vset.pattern.permute.xlu0 0
    %2513 = vperm.xlu0 %2512, %v1469
    %v2514 = vpop.permute.xlu0 %2513
    %2517 = vset.pattern.permute.xlu0 0
    %2518 = vperm.xlu0 %2517, %v1470
    %v2519 = vpop.permute.xlu0 %2518
    %2522 = vset.pattern.permute.xlu0 0
    %2523 = vperm.xlu0 %2522, %v1471
    %v2524 = vpop.permute.xlu0 %2523
    %2527 = vset.pattern.permute.xlu0 0
    %2528 = vperm.xlu0 %2527, %v1472
    %v2529 = vpop.permute.xlu0 %2528
    %2532 = vset.pattern.permute.xlu0 0
    %2533 = vperm.xlu0 %2532, %v1473
    %v2534 = vpop.permute.xlu0 %2533
    %2537 = vset.pattern.permute.xlu0 0
    %2538 = vperm.xlu0 %2537, %v1474
    %v2539 = vpop.permute.xlu0 %2538
    %v2541 = vmul.f32 %v2397, %v2464
    %v2542 = vmul.f32 %v2398, %v2464
    %v2543 = vmul.f32 %v2399, %v2464
    %v2544 = vmul.f32 %v2400, %v2464
    %v2545 = vmul.f32 %v2401, %v2469
    %v2546 = vmul.f32 %v2402, %v2469
    %v2547 = vmul.f32 %v2403, %v2469
    %v2548 = vmul.f32 %v2404, %v2469
    %v2549 = vmul.f32 %v2405, %v2474
    %v2550 = vmul.f32 %v2406, %v2474
    %v2551 = vmul.f32 %v2407, %v2474
    %v2552 = vmul.f32 %v2408, %v2474
    %v2553 = vmul.f32 %v2409, %v2479
    %v2554 = vmul.f32 %v2410, %v2479
    %v2555 = vmul.f32 %v2411, %v2479
    %v2556 = vmul.f32 %v2412, %v2479
    %v2557 = vmul.f32 %v2413, %v2484
    %v2558 = vmul.f32 %v2414, %v2484
    %v2559 = vmul.f32 %v2415, %v2484
    %v2560 = vmul.f32 %v2416, %v2484
    %v2561 = vmul.f32 %v2417, %v2489
    %v2562 = vmul.f32 %v2418, %v2489
    %v2563 = vmul.f32 %v2419, %v2489
    %v2564 = vmul.f32 %v2420, %v2489
    %v2565 = vmul.f32 %v2421, %v2494
    %v2566 = vmul.f32 %v2422, %v2494
    %v2567 = vmul.f32 %v2423, %v2494
    %v2568 = vmul.f32 %v2424, %v2494
    %v2569 = vmul.f32 %v2425, %v2499
    %v2570 = vmul.f32 %v2426, %v2499
    %v2571 = vmul.f32 %v2427, %v2499
    %v2572 = vmul.f32 %v2428, %v2499
    %v2573 = vmul.f32 %v2429, %v2504
    %v2574 = vmul.f32 %v2430, %v2504
    %v2575 = vmul.f32 %v2431, %v2504
    %v2576 = vmul.f32 %v2432, %v2504
    %v2577 = vmul.f32 %v2433, %v2509
    %v2578 = vmul.f32 %v2434, %v2509
    %v2579 = vmul.f32 %v2435, %v2509
    %v2580 = vmul.f32 %v2436, %v2509
    %v2581 = vmul.f32 %v2437, %v2514
    %v2582 = vmul.f32 %v2438, %v2514
    %v2583 = vmul.f32 %v2439, %v2514
    %v2584 = vmul.f32 %v2440, %v2514
    %v2585 = vmul.f32 %v2441, %v2519
    %v2586 = vmul.f32 %v2442, %v2519
    %v2587 = vmul.f32 %v2443, %v2519
    %v2588 = vmul.f32 %v2444, %v2519
    %v2589 = vmul.f32 %v2445, %v2524
    %v2590 = vmul.f32 %v2446, %v2524
    %v2591 = vmul.f32 %v2447, %v2524
    %v2592 = vmul.f32 %v2448, %v2524
    %v2593 = vmul.f32 %v2449, %v2529
    %v2594 = vmul.f32 %v2450, %v2529
    %v2595 = vmul.f32 %v2451, %v2529
    %v2596 = vmul.f32 %v2452, %v2529
    %v2597 = vmul.f32 %v2453, %v2534
    %v2598 = vmul.f32 %v2454, %v2534
    %v2599 = vmul.f32 %v2455, %v2534
    %v2600 = vmul.f32 %v2456, %v2534
    %v2601 = vmul.f32 %v2457, %v2539
    %v2602 = vmul.f32 %v2458, %v2539
    %v2603 = vmul.f32 %v2459, %v2539
    %v2604 = vmul.f32 %v2460, %v2539
    %v2605 = vadd.f32 %v2541, %v2545
    %v2606 = vadd.f32 %v2605, %v2549
    %v2607 = vadd.f32 %v2606, %v2553
    %v2608 = vadd.f32 %v2607, %v2557
    %v2609 = vadd.f32 %v2608, %v2561
    %v2610 = vadd.f32 %v2609, %v2565
    %v2611 = vadd.f32 %v2610, %v2569
    %v2612 = vrot.slane %v2611, 4
    %v2613 = vadd.f32 %v2611, %v2612
    %v2614 = vrot.slane %v2613, 2
    %v2615 = vadd.f32 %v2613, %v2614
    %v2616 = vrot.slane %v2615, 1
    %v2617 = vadd.f32 %v2615, %v2616
    %v2618 = vadd.f32 %v2542, %v2546
    %v2619 = vadd.f32 %v2618, %v2550
    %v2620 = vadd.f32 %v2619, %v2554
    %v2621 = vadd.f32 %v2620, %v2558
    %v2622 = vadd.f32 %v2621, %v2562
    %v2623 = vadd.f32 %v2622, %v2566
    %v2624 = vadd.f32 %v2623, %v2570
    %v2625 = vrot.slane %v2624, 4
    %v2626 = vadd.f32 %v2624, %v2625
    %v2627 = vrot.slane %v2626, 2
    %v2628 = vadd.f32 %v2626, %v2627
    %v2629 = vrot.slane %v2628, 1
    %v2630 = vadd.f32 %v2628, %v2629
    %v2631 = vadd.f32 %v2543, %v2547
    %v2632 = vadd.f32 %v2631, %v2551
    %v2633 = vadd.f32 %v2632, %v2555
    %v2634 = vadd.f32 %v2633, %v2559
    %v2635 = vadd.f32 %v2634, %v2563
    %v2636 = vadd.f32 %v2635, %v2567
    %v2637 = vadd.f32 %v2636, %v2571
    %v2638 = vrot.slane %v2637, 4
    %v2639 = vadd.f32 %v2637, %v2638
    %v2640 = vrot.slane %v2639, 2
    %v2641 = vadd.f32 %v2639, %v2640
    %v2642 = vrot.slane %v2641, 1
    %v2643 = vadd.f32 %v2641, %v2642
    %v2644 = vadd.f32 %v2544, %v2548
    %v2645 = vadd.f32 %v2644, %v2552
    %v2646 = vadd.f32 %v2645, %v2556
    %v2647 = vadd.f32 %v2646, %v2560
    %v2648 = vadd.f32 %v2647, %v2564
    %v2649 = vadd.f32 %v2648, %v2568
    %v2650 = vadd.f32 %v2649, %v2572
    %v2651 = vrot.slane %v2650, 4
    %v2652 = vadd.f32 %v2650, %v2651
    %v2653 = vrot.slane %v2652, 2
    %v2654 = vadd.f32 %v2652, %v2653
    %v2655 = vrot.slane %v2654, 1
    %v2656 = vadd.f32 %v2654, %v2655
    %2658 = vset.pattern.permute.xlu0 0
    %2659 = vperm.xlu0 %2658, %v1476
    %v2660 = vpop.permute.xlu0 %2659
    %v2662 = vadd.f32 %v2617, %v2660
    %v2663 = vadd.f32 %v2630, %v2660
    %v2664 = vadd.f32 %v2643, %v2660
    %v2665 = vadd.f32 %v2656, %v2660
    %v2666 = vadd.f32 %v2573, %v2577
    %v2667 = vadd.f32 %v2666, %v2581
    %v2668 = vadd.f32 %v2667, %v2585
    %v2669 = vadd.f32 %v2668, %v2589
    %v2670 = vadd.f32 %v2669, %v2593
    %v2671 = vadd.f32 %v2670, %v2597
    %v2672 = vadd.f32 %v2671, %v2601
    %v2673 = vrot.slane %v2672, 4
    %v2674 = vadd.f32 %v2672, %v2673
    %v2675 = vrot.slane %v2674, 2
    %v2676 = vadd.f32 %v2674, %v2675
    %v2677 = vrot.slane %v2676, 1
    %v2678 = vadd.f32 %v2676, %v2677
    %v2679 = vadd.f32 %v2574, %v2578
    %v2680 = vadd.f32 %v2679, %v2582
    %v2681 = vadd.f32 %v2680, %v2586
    %v2682 = vadd.f32 %v2681, %v2590
    %v2683 = vadd.f32 %v2682, %v2594
    %v2684 = vadd.f32 %v2683, %v2598
    %v2685 = vadd.f32 %v2684, %v2602
    %v2686 = vrot.slane %v2685, 4
    %v2687 = vadd.f32 %v2685, %v2686
    %v2688 = vrot.slane %v2687, 2
    %v2689 = vadd.f32 %v2687, %v2688
    %v2690 = vrot.slane %v2689, 1
    %v2691 = vadd.f32 %v2689, %v2690
    %v2692 = vadd.f32 %v2575, %v2579
    %v2693 = vadd.f32 %v2692, %v2583
    %v2694 = vadd.f32 %v2693, %v2587
    %v2695 = vadd.f32 %v2694, %v2591
    %v2696 = vadd.f32 %v2695, %v2595
    %v2697 = vadd.f32 %v2696, %v2599
    %v2698 = vadd.f32 %v2697, %v2603
    %v2699 = vrot.slane %v2698, 4
    %v2700 = vadd.f32 %v2698, %v2699
    %v2701 = vrot.slane %v2700, 2
    %v2702 = vadd.f32 %v2700, %v2701
    %v2703 = vrot.slane %v2702, 1
    %v2704 = vadd.f32 %v2702, %v2703
    %v2705 = vadd.f32 %v2576, %v2580
    %v2706 = vadd.f32 %v2705, %v2584
    %v2707 = vadd.f32 %v2706, %v2588
    %v2708 = vadd.f32 %v2707, %v2592
    %v2709 = vadd.f32 %v2708, %v2596
    %v2710 = vadd.f32 %v2709, %v2600
    %v2711 = vadd.f32 %v2710, %v2604
    %v2712 = vrot.slane %v2711, 4
    %v2713 = vadd.f32 %v2711, %v2712
    %v2714 = vrot.slane %v2713, 2
    %v2715 = vadd.f32 %v2713, %v2714
    %v2716 = vrot.slane %v2715, 1
    %v2717 = vadd.f32 %v2715, %v2716
    %v2718 = vadd.f32 %v2678, %v2660
    %v2719 = vadd.f32 %v2691, %v2660
    %v2720 = vadd.f32 %v2704, %v2660
    %v2721 = vadd.f32 %v2717, %v2660
    %v2722 = vtanh.pop %v2662
    %v2723 = vtanh.pop %v2663
    %v2724 = vtanh.pop %v2664
    %v2725 = vtanh.pop %v2665
    %v2730 = vcombine.low %v2718, %v2719
    %v2731 = vcombine.low %v2720, %v2721
    %v2733 = vunpack.c.l.s4 1983009808
    %v2734 = vunpack.c.0.s8 %v2733
    %v2735 = vlaneseq
    %v2736 = vshrl.u32 %v2735, 7
    %v2737 = vsub.s32 %v2734, %v2736
    %v2738 = vrot.slane %v2730, %v2737
    %v2740 = vunpack.c.l.s4 1983009808
    %v2741 = vunpack.c.0.s8 %v2740
    %v2742 = vlaneseq
    %v2743 = vshrl.u32 %v2742, 7
    %v2744 = vsub.s32 %v2741, %v2743
    %v2745 = vrot.slane %v2731, %v2744
    %v2746 = vcombine.low %v2738, %v2745
    %v2747 = vrot.slane %v2746, 7
    %v2748 = vrot.slane %v2747, 2
    %v2750 = vsub.f32 %v28, %v2748
    %v2751 = vsub.f32 0.0, %v2722
    %v2752 = vsub.f32 0.0, %v2723
    %v2753 = vsub.f32 0.0, %v2724
    %v2754 = vsub.f32 0.0, %v2725
    %v2755 = vmul.f32 %v2751, 1.442695
    %v2756 = vpow.pop %v2755
    %v2757 = vmul.f32 %v2752, 1.442695
    %v2758 = vpow.pop %v2757
    %v2759 = vmul.f32 %v2753, 1.442695
    %v2760 = vpow.pop %v2759
    %v2761 = vmul.f32 %v2754, 1.442695
    %v2762 = vpow.pop %v2761
    %v2767 = vcombine.low %v2756, %v2758
    %v2768 = vcombine.low %v2760, %v2762
    %v2770 = vunpack.c.l.s4 1983009808
    %v2771 = vunpack.c.0.s8 %v2770
    %v2772 = vlaneseq
    %v2773 = vshrl.u32 %v2772, 7
    %v2774 = vsub.s32 %v2771, %v2773
    %v2775 = vrot.slane %v2767, %v2774
    %v2777 = vunpack.c.l.s4 1983009808
    %v2778 = vunpack.c.0.s8 %v2777
    %v2779 = vlaneseq
    %v2780 = vshrl.u32 %v2779, 7
    %v2781 = vsub.s32 %v2778, %v2780
    %v2782 = vrot.slane %v2768, %v2781
    %v2783 = vcombine.low %v2775, %v2782
    %v2785 = vmul.f32 %v2750, %v2783
    %v2786 = vsub.f32 %v1371, %v2722
    %v2787 = vsub.f32 %v1372, %v2723
    %v2788 = vsub.f32 %v1373, %v2724
    %v2789 = vsub.f32 %v1374, %v2725
    %s2790 = scalar_lea.vmem %s1, 384
    %v2791 = vld [vmem:[%s2790] sm:$0xff]
    %v2792 = vld [vmem:[%s2790 + $0x8] sm:$0xff]
    %v2793 = vld [vmem:[%s2790 + $0x10] sm:$0xff]
    %v2794 = vld [vmem:[%s2790 + $0x18] sm:$0xff]
    %v2795 = vld [vmem:[%s2790 + $0x20] sm:$0xff]
    %v2796 = vld [vmem:[%s2790 + $0x28] sm:$0xff]
    %v2797 = vld [vmem:[%s2790 + $0x30] sm:$0xff]
    %v2798 = vld [vmem:[%s2790 + $0x38] sm:$0xff]
    %v2799 = vld [vmem:[%s2790 + $0x40] sm:$0xff]
    %v2800 = vld [vmem:[%s2790 + $0x48] sm:$0xff]
    %v2801 = vld [vmem:[%s2790 + $0x50] sm:$0xff]
    %v2802 = vld [vmem:[%s2790 + $0x58] sm:$0xff]
    %v2803 = vld [vmem:[%s2790 + $0x60] sm:$0xff]
    %v2804 = vld [vmem:[%s2790 + $0x68] sm:$0xff]
    %v2805 = vld [vmem:[%s2790 + $0x70] sm:$0xff]
    %v2806 = vld [vmem:[%s2790 + $0x78] sm:$0xff]
    %s2807 = scalar_lea.vmem %s2, 384
    %v2808 = vld [vmem:[%s2807] sm:$0xff]
    %v2809 = vld [vmem:[%s2807 + $0x8] sm:$0xff]
    %v2810 = vld [vmem:[%s2807 + $0x10] sm:$0xff]
    %v2811 = vld [vmem:[%s2807 + $0x18] sm:$0xff]
    %v2812 = vld [vmem:[%s2807 + $0x20] sm:$0xff]
    %v2813 = vld [vmem:[%s2807 + $0x28] sm:$0xff]
    %v2814 = vld [vmem:[%s2807 + $0x30] sm:$0xff]
    %v2815 = vld [vmem:[%s2807 + $0x38] sm:$0xff]
    %v2816 = vld [vmem:[%s2807 + $0x40] sm:$0xff]
    %v2817 = vld [vmem:[%s2807 + $0x48] sm:$0xff]
    %v2818 = vld [vmem:[%s2807 + $0x50] sm:$0xff]
    %v2819 = vld [vmem:[%s2807 + $0x58] sm:$0xff]
    %v2820 = vld [vmem:[%s2807 + $0x60] sm:$0xff]
    %v2821 = vld [vmem:[%s2807 + $0x68] sm:$0xff]
    %v2822 = vld [vmem:[%s2807 + $0x70] sm:$0xff]
    %v2823 = vld [vmem:[%s2807 + $0x78] sm:$0xff]
    %s2824 = scalar_lea.vmem %s4, 384
    %v2825 = vld [vmem:[%s2824] sm:$0xff]
    %v2826 = vld [vmem:[%s2824 + $0x8] sm:$0xff]
    %v2827 = vld [vmem:[%s2824 + $0x10] sm:$0xff]
    %v2828 = vld [vmem:[%s2824 + $0x18] sm:$0xff]
    %v2829 = vld [vmem:[%s2824 + $0x20] sm:$0xff]
    %v2830 = vld [vmem:[%s2824 + $0x28] sm:$0xff]
    %v2831 = vld [vmem:[%s2824 + $0x30] sm:$0xff]
    %v2832 = vld [vmem:[%s2824 + $0x38] sm:$0xff]
    %v2833 = vld [vmem:[%s2824 + $0x40] sm:$0xff]
    %v2834 = vld [vmem:[%s2824 + $0x48] sm:$0xff]
    %v2835 = vld [vmem:[%s2824 + $0x50] sm:$0xff]
    %v2836 = vld [vmem:[%s2824 + $0x58] sm:$0xff]
    %v2837 = vld [vmem:[%s2824 + $0x60] sm:$0xff]
    %v2838 = vld [vmem:[%s2824 + $0x68] sm:$0xff]
    %v2839 = vld [vmem:[%s2824 + $0x70] sm:$0xff]
    %v2840 = vld [vmem:[%s2824 + $0x78] sm:$0xff]
    %s2841 = scalar_lea.vmem %s5, 384
    %v2842 = vld [vmem:[%s2841] sm:$0xff]
    %v2843 = vld [vmem:[%s2841 + $0x8] sm:$0xff]
    %v2844 = vld [vmem:[%s2841 + $0x10] sm:$0xff]
    %v2845 = vld [vmem:[%s2841 + $0x18] sm:$0xff]
    %v2846 = vld [vmem:[%s2841 + $0x20] sm:$0xff]
    %v2847 = vld [vmem:[%s2841 + $0x28] sm:$0xff]
    %v2848 = vld [vmem:[%s2841 + $0x30] sm:$0xff]
    %v2849 = vld [vmem:[%s2841 + $0x38] sm:$0xff]
    %v2850 = vld [vmem:[%s2841 + $0x40] sm:$0xff]
    %v2851 = vld [vmem:[%s2841 + $0x48] sm:$0xff]
    %v2852 = vld [vmem:[%s2841 + $0x50] sm:$0xff]
    %v2853 = vld [vmem:[%s2841 + $0x58] sm:$0xff]
    %v2854 = vld [vmem:[%s2841 + $0x60] sm:$0xff]
    %v2855 = vld [vmem:[%s2841 + $0x68] sm:$0xff]
    %v2856 = vld [vmem:[%s2841 + $0x70] sm:$0xff]
    %v2857 = vld [vmem:[%s2841 + $0x78] sm:$0xff]
    %s2858 = scalar_lea.vmem %s6, 6
    %v2859 = vld [vmem:[%s2858] sm:$0x3]
    %2861 = vset.pattern.permute.xlu0 0
    %2862 = vperm.xlu0 %2861, %v2791
    %v2863 = vpop.permute.xlu0 %2862
    %2866 = vset.pattern.permute.xlu0 0
    %2867 = vperm.xlu0 %2866, %v2792
    %v2868 = vpop.permute.xlu0 %2867
    %2871 = vset.pattern.permute.xlu0 0
    %2872 = vperm.xlu0 %2871, %v2793
    %v2873 = vpop.permute.xlu0 %2872
    %2876 = vset.pattern.permute.xlu0 0
    %2877 = vperm.xlu0 %2876, %v2794
    %v2878 = vpop.permute.xlu0 %2877
    %2881 = vset.pattern.permute.xlu0 0
    %2882 = vperm.xlu0 %2881, %v2795
    %v2883 = vpop.permute.xlu0 %2882
    %2886 = vset.pattern.permute.xlu0 0
    %2887 = vperm.xlu0 %2886, %v2796
    %v2888 = vpop.permute.xlu0 %2887
    %2891 = vset.pattern.permute.xlu0 0
    %2892 = vperm.xlu0 %2891, %v2797
    %v2893 = vpop.permute.xlu0 %2892
    %2896 = vset.pattern.permute.xlu0 0
    %2897 = vperm.xlu0 %2896, %v2798
    %v2898 = vpop.permute.xlu0 %2897
    %2901 = vset.pattern.permute.xlu0 0
    %2902 = vperm.xlu0 %2901, %v2799
    %v2903 = vpop.permute.xlu0 %2902
    %2906 = vset.pattern.permute.xlu0 0
    %2907 = vperm.xlu0 %2906, %v2800
    %v2908 = vpop.permute.xlu0 %2907
    %2911 = vset.pattern.permute.xlu0 0
    %2912 = vperm.xlu0 %2911, %v2801
    %v2913 = vpop.permute.xlu0 %2912
    %2916 = vset.pattern.permute.xlu0 0
    %2917 = vperm.xlu0 %2916, %v2802
    %v2918 = vpop.permute.xlu0 %2917
    %2921 = vset.pattern.permute.xlu0 0
    %2922 = vperm.xlu0 %2921, %v2803
    %v2923 = vpop.permute.xlu0 %2922
    %2926 = vset.pattern.permute.xlu0 0
    %2927 = vperm.xlu0 %2926, %v2804
    %v2928 = vpop.permute.xlu0 %2927
    %2931 = vset.pattern.permute.xlu0 0
    %2932 = vperm.xlu0 %2931, %v2805
    %v2933 = vpop.permute.xlu0 %2932
    %2936 = vset.pattern.permute.xlu0 0
    %2937 = vperm.xlu0 %2936, %v2806
    %v2938 = vpop.permute.xlu0 %2937
    %v2941 = vlaneseq
    %v2942 = vshrl.u32 %v2941, 7
    %v2943 = vsub.s32 0, %v2942
    %v2944 = vrot.slane %v2785, %v2943
    %v2945 = vlaneseq
    %v2946 = vshrl.u32 %v2945, 7
    %v2947 = vsub.s32 2, %v2946
    %v2948 = vrot.slane %v2785, %v2947
    %v2949 = vlaneseq
    %v2950 = vshrl.u32 %v2949, 7
    %v2951 = vsub.s32 4, %v2950
    %v2952 = vrot.slane %v2785, %v2951
    %v2953 = vlaneseq
    %v2954 = vshrl.u32 %v2953, 7
    %v2955 = vsub.s32 6, %v2954
    %v2956 = vrot.slane %v2785, %v2955
    %v2961 = vlaneseq
    %v2962 = vshrl.u32 %v2961, 7
    %v2963 = vsub.s32 0, %v2962
    %v2964 = vrot.slane %v2944, %v2963
    %v2965 = vlaneseq
    %v2966 = vshrl.u32 %v2965, 7
    %v2967 = vsub.s32 0, %v2966
    %v2968 = vrot.slane %v2948, %v2967
    %v2969 = vlaneseq
    %v2970 = vshrl.u32 %v2969, 7
    %v2971 = vsub.s32 0, %v2970
    %v2972 = vrot.slane %v2952, %v2971
    %v2973 = vlaneseq
    %v2974 = vshrl.u32 %v2973, 7
    %v2975 = vsub.s32 0, %v2974
    %v2976 = vrot.slane %v2956, %v2975
    %v2977 = vmul.f32 %v2863, %v2964
    %v2978 = vmul.f32 %v2863, %v2968
    %v2979 = vmul.f32 %v2863, %v2972
    %v2980 = vmul.f32 %v2863, %v2976
    %v2981 = vmul.f32 %v2868, %v2964
    %v2982 = vmul.f32 %v2868, %v2968
    %v2983 = vmul.f32 %v2868, %v2972
    %v2984 = vmul.f32 %v2868, %v2976
    %v2985 = vmul.f32 %v2873, %v2964
    %v2986 = vmul.f32 %v2873, %v2968
    %v2987 = vmul.f32 %v2873, %v2972
    %v2988 = vmul.f32 %v2873, %v2976
    %v2989 = vmul.f32 %v2878, %v2964
    %v2990 = vmul.f32 %v2878, %v2968
    %v2991 = vmul.f32 %v2878, %v2972
    %v2992 = vmul.f32 %v2878, %v2976
    %v2993 = vmul.f32 %v2883, %v2964
    %v2994 = vmul.f32 %v2883, %v2968
    %v2995 = vmul.f32 %v2883, %v2972
    %v2996 = vmul.f32 %v2883, %v2976
    %v2997 = vmul.f32 %v2888, %v2964
    %v2998 = vmul.f32 %v2888, %v2968
    %v2999 = vmul.f32 %v2888, %v2972
    %v3000 = vmul.f32 %v2888, %v2976
    %v3001 = vmul.f32 %v2893, %v2964
    %v3002 = vmul.f32 %v2893, %v2968
    %v3003 = vmul.f32 %v2893, %v2972
    %v3004 = vmul.f32 %v2893, %v2976
    %v3005 = vmul.f32 %v2898, %v2964
    %v3006 = vmul.f32 %v2898, %v2968
    %v3007 = vmul.f32 %v2898, %v2972
    %v3008 = vmul.f32 %v2898, %v2976
    %v3009 = vmul.f32 %v2903, %v2964
    %v3010 = vmul.f32 %v2903, %v2968
    %v3011 = vmul.f32 %v2903, %v2972
    %v3012 = vmul.f32 %v2903, %v2976
    %v3013 = vmul.f32 %v2908, %v2964
    %v3014 = vmul.f32 %v2908, %v2968
    %v3015 = vmul.f32 %v2908, %v2972
    %v3016 = vmul.f32 %v2908, %v2976
    %v3017 = vmul.f32 %v2913, %v2964
    %v3018 = vmul.f32 %v2913, %v2968
    %v3019 = vmul.f32 %v2913, %v2972
    %v3020 = vmul.f32 %v2913, %v2976
    %v3021 = vmul.f32 %v2918, %v2964
    %v3022 = vmul.f32 %v2918, %v2968
    %v3023 = vmul.f32 %v2918, %v2972
    %v3024 = vmul.f32 %v2918, %v2976
    %v3025 = vmul.f32 %v2923, %v2964
    %v3026 = vmul.f32 %v2923, %v2968
    %v3027 = vmul.f32 %v2923, %v2972
    %v3028 = vmul.f32 %v2923, %v2976
    %v3029 = vmul.f32 %v2928, %v2964
    %v3030 = vmul.f32 %v2928, %v2968
    %v3031 = vmul.f32 %v2928, %v2972
    %v3032 = vmul.f32 %v2928, %v2976
    %v3033 = vmul.f32 %v2933, %v2964
    %v3034 = vmul.f32 %v2933, %v2968
    %v3035 = vmul.f32 %v2933, %v2972
    %v3036 = vmul.f32 %v2933, %v2976
    %v3037 = vmul.f32 %v2938, %v2964
    %v3038 = vmul.f32 %v2938, %v2968
    %v3039 = vmul.f32 %v2938, %v2972
    %v3040 = vmul.f32 %v2938, %v2976
    %3042 = vset.pattern.permute.xlu0 0
    %3043 = vperm.xlu0 %3042, %v2808
    %v3044 = vpop.permute.xlu0 %3043
    %3047 = vset.pattern.permute.xlu0 0
    %3048 = vperm.xlu0 %3047, %v2809
    %v3049 = vpop.permute.xlu0 %3048
    %3052 = vset.pattern.permute.xlu0 0
    %3053 = vperm.xlu0 %3052, %v2810
    %v3054 = vpop.permute.xlu0 %3053
    %3057 = vset.pattern.permute.xlu0 0
    %3058 = vperm.xlu0 %3057, %v2811
    %v3059 = vpop.permute.xlu0 %3058
    %3062 = vset.pattern.permute.xlu0 0
    %3063 = vperm.xlu0 %3062, %v2812
    %v3064 = vpop.permute.xlu0 %3063
    %3067 = vset.pattern.permute.xlu0 0
    %3068 = vperm.xlu0 %3067, %v2813
    %v3069 = vpop.permute.xlu0 %3068
    %3072 = vset.pattern.permute.xlu0 0
    %3073 = vperm.xlu0 %3072, %v2814
    %v3074 = vpop.permute.xlu0 %3073
    %3077 = vset.pattern.permute.xlu0 0
    %3078 = vperm.xlu0 %3077, %v2815
    %v3079 = vpop.permute.xlu0 %3078
    %3082 = vset.pattern.permute.xlu0 0
    %3083 = vperm.xlu0 %3082, %v2816
    %v3084 = vpop.permute.xlu0 %3083
    %3087 = vset.pattern.permute.xlu0 0
    %3088 = vperm.xlu0 %3087, %v2817
    %v3089 = vpop.permute.xlu0 %3088
    %3092 = vset.pattern.permute.xlu0 0
    %3093 = vperm.xlu0 %3092, %v2818
    %v3094 = vpop.permute.xlu0 %3093
    %3097 = vset.pattern.permute.xlu0 0
    %3098 = vperm.xlu0 %3097, %v2819
    %v3099 = vpop.permute.xlu0 %3098
    %3102 = vset.pattern.permute.xlu0 0
    %3103 = vperm.xlu0 %3102, %v2820
    %v3104 = vpop.permute.xlu0 %3103
    %3107 = vset.pattern.permute.xlu0 0
    %3108 = vperm.xlu0 %3107, %v2821
    %v3109 = vpop.permute.xlu0 %3108
    %3112 = vset.pattern.permute.xlu0 0
    %3113 = vperm.xlu0 %3112, %v2822
    %v3114 = vpop.permute.xlu0 %3113
    %3117 = vset.pattern.permute.xlu0 0
    %3118 = vperm.xlu0 %3117, %v2823
    %v3119 = vpop.permute.xlu0 %3118
    %v3121 = vadd.f32 %v2977, %v3044
    %v3122 = vadd.f32 %v2978, %v3044
    %v3123 = vadd.f32 %v2979, %v3044
    %v3124 = vadd.f32 %v2980, %v3044
    %v3125 = vadd.f32 %v2981, %v3049
    %v3126 = vadd.f32 %v2982, %v3049
    %v3127 = vadd.f32 %v2983, %v3049
    %v3128 = vadd.f32 %v2984, %v3049
    %v3129 = vadd.f32 %v2985, %v3054
    %v3130 = vadd.f32 %v2986, %v3054
    %v3131 = vadd.f32 %v2987, %v3054
    %v3132 = vadd.f32 %v2988, %v3054
    %v3133 = vadd.f32 %v2989, %v3059
    %v3134 = vadd.f32 %v2990, %v3059
    %v3135 = vadd.f32 %v2991, %v3059
    %v3136 = vadd.f32 %v2992, %v3059
    %v3137 = vadd.f32 %v2993, %v3064
    %v3138 = vadd.f32 %v2994, %v3064
    %v3139 = vadd.f32 %v2995, %v3064
    %v3140 = vadd.f32 %v2996, %v3064
    %v3141 = vadd.f32 %v2997, %v3069
    %v3142 = vadd.f32 %v2998, %v3069
    %v3143 = vadd.f32 %v2999, %v3069
    %v3144 = vadd.f32 %v3000, %v3069
    %v3145 = vadd.f32 %v3001, %v3074
    %v3146 = vadd.f32 %v3002, %v3074
    %v3147 = vadd.f32 %v3003, %v3074
    %v3148 = vadd.f32 %v3004, %v3074
    %v3149 = vadd.f32 %v3005, %v3079
    %v3150 = vadd.f32 %v3006, %v3079
    %v3151 = vadd.f32 %v3007, %v3079
    %v3152 = vadd.f32 %v3008, %v3079
    %v3153 = vadd.f32 %v3009, %v3084
    %v3154 = vadd.f32 %v3010, %v3084
    %v3155 = vadd.f32 %v3011, %v3084
    %v3156 = vadd.f32 %v3012, %v3084
    %v3157 = vadd.f32 %v3013, %v3089
    %v3158 = vadd.f32 %v3014, %v3089
    %v3159 = vadd.f32 %v3015, %v3089
    %v3160 = vadd.f32 %v3016, %v3089
    %v3161 = vadd.f32 %v3017, %v3094
    %v3162 = vadd.f32 %v3018, %v3094
    %v3163 = vadd.f32 %v3019, %v3094
    %v3164 = vadd.f32 %v3020, %v3094
    %v3165 = vadd.f32 %v3021, %v3099
    %v3166 = vadd.f32 %v3022, %v3099
    %v3167 = vadd.f32 %v3023, %v3099
    %v3168 = vadd.f32 %v3024, %v3099
    %v3169 = vadd.f32 %v3025, %v3104
    %v3170 = vadd.f32 %v3026, %v3104
    %v3171 = vadd.f32 %v3027, %v3104
    %v3172 = vadd.f32 %v3028, %v3104
    %v3173 = vadd.f32 %v3029, %v3109
    %v3174 = vadd.f32 %v3030, %v3109
    %v3175 = vadd.f32 %v3031, %v3109
    %v3176 = vadd.f32 %v3032, %v3109
    %v3177 = vadd.f32 %v3033, %v3114
    %v3178 = vadd.f32 %v3034, %v3114
    %v3179 = vadd.f32 %v3035, %v3114
    %v3180 = vadd.f32 %v3036, %v3114
    %v3181 = vadd.f32 %v3037, %v3119
    %v3182 = vadd.f32 %v3038, %v3119
    %v3183 = vadd.f32 %v3039, %v3119
    %v3184 = vadd.f32 %v3040, %v3119
    %v3185 = vmul.f32 %v3121, 0.01
    %v3186 = vmul.f32 %v3122, 0.01
    %v3187 = vmul.f32 %v3123, 0.01
    %v3188 = vmul.f32 %v3124, 0.01
    %v3189 = vmul.f32 %v3125, 0.01
    %v3190 = vmul.f32 %v3126, 0.01
    %v3191 = vmul.f32 %v3127, 0.01
    %v3192 = vmul.f32 %v3128, 0.01
    %v3193 = vmul.f32 %v3129, 0.01
    %v3194 = vmul.f32 %v3130, 0.01
    %v3195 = vmul.f32 %v3131, 0.01
    %v3196 = vmul.f32 %v3132, 0.01
    %v3197 = vmul.f32 %v3133, 0.01
    %v3198 = vmul.f32 %v3134, 0.01
    %v3199 = vmul.f32 %v3135, 0.01
    %v3200 = vmul.f32 %v3136, 0.01
    %v3201 = vmul.f32 %v3137, 0.01
    %v3202 = vmul.f32 %v3138, 0.01
    %v3203 = vmul.f32 %v3139, 0.01
    %v3204 = vmul.f32 %v3140, 0.01
    %v3205 = vmul.f32 %v3141, 0.01
    %v3206 = vmul.f32 %v3142, 0.01
    %v3207 = vmul.f32 %v3143, 0.01
    %v3208 = vmul.f32 %v3144, 0.01
    %v3209 = vmul.f32 %v3145, 0.01
    %v3210 = vmul.f32 %v3146, 0.01
    %v3211 = vmul.f32 %v3147, 0.01
    %v3212 = vmul.f32 %v3148, 0.01
    %v3213 = vmul.f32 %v3149, 0.01
    %v3214 = vmul.f32 %v3150, 0.01
    %v3215 = vmul.f32 %v3151, 0.01
    %v3216 = vmul.f32 %v3152, 0.01
    %v3217 = vmul.f32 %v3153, 0.01
    %v3218 = vmul.f32 %v3154, 0.01
    %v3219 = vmul.f32 %v3155, 0.01
    %v3220 = vmul.f32 %v3156, 0.01
    %v3221 = vmul.f32 %v3157, 0.01
    %v3222 = vmul.f32 %v3158, 0.01
    %v3223 = vmul.f32 %v3159, 0.01
    %v3224 = vmul.f32 %v3160, 0.01
    %v3225 = vmul.f32 %v3161, 0.01
    %v3226 = vmul.f32 %v3162, 0.01
    %v3227 = vmul.f32 %v3163, 0.01
    %v3228 = vmul.f32 %v3164, 0.01
    %v3229 = vmul.f32 %v3165, 0.01
    %v3230 = vmul.f32 %v3166, 0.01
    %v3231 = vmul.f32 %v3167, 0.01
    %v3232 = vmul.f32 %v3168, 0.01
    %v3233 = vmul.f32 %v3169, 0.01
    %v3234 = vmul.f32 %v3170, 0.01
    %v3235 = vmul.f32 %v3171, 0.01
    %v3236 = vmul.f32 %v3172, 0.01
    %v3237 = vmul.f32 %v3173, 0.01
    %v3238 = vmul.f32 %v3174, 0.01
    %v3239 = vmul.f32 %v3175, 0.01
    %v3240 = vmul.f32 %v3176, 0.01
    %v3241 = vmul.f32 %v3177, 0.01
    %v3242 = vmul.f32 %v3178, 0.01
    %v3243 = vmul.f32 %v3179, 0.01
    %v3244 = vmul.f32 %v3180, 0.01
    %v3245 = vmul.f32 %v3181, 0.01
    %v3246 = vmul.f32 %v3182, 0.01
    %v3247 = vmul.f32 %v3183, 0.01
    %v3248 = vmul.f32 %v3184, 0.01
    %v3249 = vmax.f32 %v3121, %v3185
    %v3250 = vmax.f32 %v3122, %v3186
    %v3251 = vmax.f32 %v3123, %v3187
    %v3252 = vmax.f32 %v3124, %v3188
    %v3253 = vmax.f32 %v3125, %v3189
    %v3254 = vmax.f32 %v3126, %v3190
    %v3255 = vmax.f32 %v3127, %v3191
    %v3256 = vmax.f32 %v3128, %v3192
    %v3257 = vmax.f32 %v3129, %v3193
    %v3258 = vmax.f32 %v3130, %v3194
    %v3259 = vmax.f32 %v3131, %v3195
    %v3260 = vmax.f32 %v3132, %v3196
    %v3261 = vmax.f32 %v3133, %v3197
    %v3262 = vmax.f32 %v3134, %v3198
    %v3263 = vmax.f32 %v3135, %v3199
    %v3264 = vmax.f32 %v3136, %v3200
    %v3265 = vmax.f32 %v3137, %v3201
    %v3266 = vmax.f32 %v3138, %v3202
    %v3267 = vmax.f32 %v3139, %v3203
    %v3268 = vmax.f32 %v3140, %v3204
    %v3269 = vmax.f32 %v3141, %v3205
    %v3270 = vmax.f32 %v3142, %v3206
    %v3271 = vmax.f32 %v3143, %v3207
    %v3272 = vmax.f32 %v3144, %v3208
    %v3273 = vmax.f32 %v3145, %v3209
    %v3274 = vmax.f32 %v3146, %v3210
    %v3275 = vmax.f32 %v3147, %v3211
    %v3276 = vmax.f32 %v3148, %v3212
    %v3277 = vmax.f32 %v3149, %v3213
    %v3278 = vmax.f32 %v3150, %v3214
    %v3279 = vmax.f32 %v3151, %v3215
    %v3280 = vmax.f32 %v3152, %v3216
    %v3281 = vmax.f32 %v3153, %v3217
    %v3282 = vmax.f32 %v3154, %v3218
    %v3283 = vmax.f32 %v3155, %v3219
    %v3284 = vmax.f32 %v3156, %v3220
    %v3285 = vmax.f32 %v3157, %v3221
    %v3286 = vmax.f32 %v3158, %v3222
    %v3287 = vmax.f32 %v3159, %v3223
    %v3288 = vmax.f32 %v3160, %v3224
    %v3289 = vmax.f32 %v3161, %v3225
    %v3290 = vmax.f32 %v3162, %v3226
    %v3291 = vmax.f32 %v3163, %v3227
    %v3292 = vmax.f32 %v3164, %v3228
    %v3293 = vmax.f32 %v3165, %v3229
    %v3294 = vmax.f32 %v3166, %v3230
    %v3295 = vmax.f32 %v3167, %v3231
    %v3296 = vmax.f32 %v3168, %v3232
    %v3297 = vmax.f32 %v3169, %v3233
    %v3298 = vmax.f32 %v3170, %v3234
    %v3299 = vmax.f32 %v3171, %v3235
    %v3300 = vmax.f32 %v3172, %v3236
    %v3301 = vmax.f32 %v3173, %v3237
    %v3302 = vmax.f32 %v3174, %v3238
    %v3303 = vmax.f32 %v3175, %v3239
    %v3304 = vmax.f32 %v3176, %v3240
    %v3305 = vmax.f32 %v3177, %v3241
    %v3306 = vmax.f32 %v3178, %v3242
    %v3307 = vmax.f32 %v3179, %v3243
    %v3308 = vmax.f32 %v3180, %v3244
    %v3309 = vmax.f32 %v3181, %v3245
    %v3310 = vmax.f32 %v3182, %v3246
    %v3311 = vmax.f32 %v3183, %v3247
    %v3312 = vmax.f32 %v3184, %v3248
    %s3313 = scalar_lea.vmem %s3, 192
    %v3314 = vld [vmem:[%s3313] sm:$0xf]
    %v3315 = vld [vmem:[%s3313 + $0x4] sm:$0xf]
    %v3316 = vld [vmem:[%s3313 + $0x8] sm:$0xf]
    %v3317 = vld [vmem:[%s3313 + $0xc] sm:$0xf]
    %v3318 = vld [vmem:[%s3313 + $0x10] sm:$0xf]
    %v3319 = vld [vmem:[%s3313 + $0x14] sm:$0xf]
    %v3320 = vld [vmem:[%s3313 + $0x18] sm:$0xf]
    %v3321 = vld [vmem:[%s3313 + $0x1c] sm:$0xf]
    %v3322 = vld [vmem:[%s3313 + $0x20] sm:$0xf]
    %v3323 = vld [vmem:[%s3313 + $0x24] sm:$0xf]
    %v3324 = vld [vmem:[%s3313 + $0x28] sm:$0xf]
    %v3325 = vld [vmem:[%s3313 + $0x2c] sm:$0xf]
    %v3326 = vld [vmem:[%s3313 + $0x30] sm:$0xf]
    %v3327 = vld [vmem:[%s3313 + $0x34] sm:$0xf]
    %v3328 = vld [vmem:[%s3313 + $0x38] sm:$0xf]
    %v3329 = vld [vmem:[%s3313 + $0x3c] sm:$0xf]
    %v3330 = vpack.c.bf16 %v3253, %v3249
    %v3331 = vpack.c.bf16 %v3254, %v3250
    %v3332 = vpack.c.bf16 %v3255, %v3251
    %v3333 = vpack.c.bf16 %v3256, %v3252
    %v3334 = vpack.c.bf16 %v3261, %v3257
    %v3335 = vpack.c.bf16 %v3262, %v3258
    %v3336 = vpack.c.bf16 %v3263, %v3259
    %v3337 = vpack.c.bf16 %v3264, %v3260
    %v3338 = vpack.c.bf16 %v3269, %v3265
    %v3339 = vpack.c.bf16 %v3270, %v3266
    %v3340 = vpack.c.bf16 %v3271, %v3267
    %v3341 = vpack.c.bf16 %v3272, %v3268
    %v3342 = vpack.c.bf16 %v3277, %v3273
    %v3343 = vpack.c.bf16 %v3278, %v3274
    %v3344 = vpack.c.bf16 %v3279, %v3275
    %v3345 = vpack.c.bf16 %v3280, %v3276
    %v3346 = vpack.c.bf16 %v3285, %v3281
    %v3347 = vpack.c.bf16 %v3286, %v3282
    %v3348 = vpack.c.bf16 %v3287, %v3283
    %v3349 = vpack.c.bf16 %v3288, %v3284
    %v3350 = vpack.c.bf16 %v3293, %v3289
    %v3351 = vpack.c.bf16 %v3294, %v3290
    %v3352 = vpack.c.bf16 %v3295, %v3291
    %v3353 = vpack.c.bf16 %v3296, %v3292
    %v3354 = vpack.c.bf16 %v3301, %v3297
    %v3355 = vpack.c.bf16 %v3302, %v3298
    %v3356 = vpack.c.bf16 %v3303, %v3299
    %v3357 = vpack.c.bf16 %v3304, %v3300
    %v3358 = vpack.c.bf16 %v3309, %v3305
    %v3359 = vpack.c.bf16 %v3310, %v3306
    %v3360 = vpack.c.bf16 %v3311, %v3307
    %v3361 = vpack.c.bf16 %v3312, %v3308
    %3363 = vset.pattern.permute.xlu0 0
    %3364 = vperm.xlu0 %3363, %v2825
    %v3365 = vpop.permute.xlu0 %3364
    %3368 = vset.pattern.permute.xlu0 0
    %3369 = vperm.xlu0 %3368, %v2826
    %v3370 = vpop.permute.xlu0 %3369
    %3373 = vset.pattern.permute.xlu0 0
    %3374 = vperm.xlu0 %3373, %v2827
    %v3375 = vpop.permute.xlu0 %3374
    %3378 = vset.pattern.permute.xlu0 0
    %3379 = vperm.xlu0 %3378, %v2828
    %v3380 = vpop.permute.xlu0 %3379
    %3383 = vset.pattern.permute.xlu0 0
    %3384 = vperm.xlu0 %3383, %v2829
    %v3385 = vpop.permute.xlu0 %3384
    %3388 = vset.pattern.permute.xlu0 0
    %3389 = vperm.xlu0 %3388, %v2830
    %v3390 = vpop.permute.xlu0 %3389
    %3393 = vset.pattern.permute.xlu0 0
    %3394 = vperm.xlu0 %3393, %v2831
    %v3395 = vpop.permute.xlu0 %3394
    %3398 = vset.pattern.permute.xlu0 0
    %3399 = vperm.xlu0 %3398, %v2832
    %v3400 = vpop.permute.xlu0 %3399
    %3403 = vset.pattern.permute.xlu0 0
    %3404 = vperm.xlu0 %3403, %v2833
    %v3405 = vpop.permute.xlu0 %3404
    %3408 = vset.pattern.permute.xlu0 0
    %3409 = vperm.xlu0 %3408, %v2834
    %v3410 = vpop.permute.xlu0 %3409
    %3413 = vset.pattern.permute.xlu0 0
    %3414 = vperm.xlu0 %3413, %v2835
    %v3415 = vpop.permute.xlu0 %3414
    %3418 = vset.pattern.permute.xlu0 0
    %3419 = vperm.xlu0 %3418, %v2836
    %v3420 = vpop.permute.xlu0 %3419
    %3423 = vset.pattern.permute.xlu0 0
    %3424 = vperm.xlu0 %3423, %v2837
    %v3425 = vpop.permute.xlu0 %3424
    %3428 = vset.pattern.permute.xlu0 0
    %3429 = vperm.xlu0 %3428, %v2838
    %v3430 = vpop.permute.xlu0 %3429
    %3433 = vset.pattern.permute.xlu0 0
    %3434 = vperm.xlu0 %3433, %v2839
    %v3435 = vpop.permute.xlu0 %3434
    %3438 = vset.pattern.permute.xlu0 0
    %3439 = vperm.xlu0 %3438, %v2840
    %v3440 = vpop.permute.xlu0 %3439
    %v3458 = vunpack.c.l.b16 %v3314
    %v3459 = vunpack.c.l.b16 %v3315
    %v3460 = vunpack.c.l.b16 %v3316
    %v3461 = vunpack.c.l.b16 %v3317
    %v3462 = vunpack.c.l.b16 %v3318
    %v3463 = vunpack.c.l.b16 %v3319
    %v3464 = vunpack.c.l.b16 %v3320
    %v3465 = vunpack.c.l.b16 %v3321
    %v3466 = vunpack.c.l.b16 %v3322
    %v3467 = vunpack.c.l.b16 %v3323
    %v3468 = vunpack.c.l.b16 %v3324
    %v3469 = vunpack.c.l.b16 %v3325
    %v3470 = vunpack.c.l.b16 %v3326
    %v3471 = vunpack.c.l.b16 %v3327
    %v3472 = vunpack.c.l.b16 %v3328
    %v3473 = vunpack.c.l.b16 %v3329
    %v3474 = vpack.c.b16 %v3459, %v3458
    %v3475 = vpack.c.b16 %v3461, %v3460
    %v3476 = vpack.c.b16 %v3463, %v3462
    %v3477 = vpack.c.b16 %v3465, %v3464
    %v3478 = vpack.c.b16 %v3467, %v3466
    %v3479 = vpack.c.b16 %v3469, %v3468
    %v3480 = vpack.c.b16 %v3471, %v3470
    %v3481 = vpack.c.b16 %v3473, %v3472
    %3490 = vmatprep.subr.bf16.mxu0 %v3359
    %3491 = vmatpush1.bf16.msra.mxu0 %v3358
    %3492 = vmatprep.subr.bf16.mxu0 %v3355
    %3493 = vmatpush1.bf16.msra.mxu0 %v3354
    %3494 = vmatprep.subr.bf16.mxu0 %v3351
    %3495 = vmatpush1.bf16.msra.mxu0 %v3350
    %3496 = vmatprep.subr.bf16.mxu0 %v3347
    %3497 = vmatpush1.bf16.msra.mxu0 %v3346
    %3498 = vmatprep.subr.bf16.mxu0 %v3343
    %3499 = vmatpush1.bf16.msra.mxu0 %v3342
    %3500 = vmatprep.subr.bf16.mxu0 %v3339
    %3501 = vmatpush1.bf16.msra.mxu0 %v3338
    %3502 = vmatprep.subr.bf16.mxu0 %v3335
    %3503 = vmatpush1.bf16.msra.mxu0 %v3334
    %3504 = vmatprep.subr.bf16.mxu0 %v3331
    %3505 = vmatpush1.bf16.msra.mxu0 %v3330
    %3506 = vmatprep.subr.bf16.mxu0 0
    %3507 = vmatpush2.bf16.msra.mxu0 0
    %3508 = vmatprep.subr.bf16.mxu0 0
    %3509 = vmatpush2.bf16.msra.mxu0 0
    %3510 = vmatprep.subr.bf16.mxu0 0
    %3511 = vmatpush2.bf16.msra.mxu0 0
    %3512 = vmatprep.subr.bf16.mxu0 0
    %3513 = vmatpush2.bf16.msra.mxu0 0
    %3514 = vmatprep.subr.bf16.mxu0 0
    %3515 = vmatpush2.bf16.msra.mxu0 0
    %3516 = vmatprep.subr.bf16.mxu0 0
    %3517 = vmatpush2.bf16.msra.mxu0 0
    %3518 = vmatprep.subr.bf16.mxu0 0
    %3519 = vmatpush2.bf16.msra.mxu0 0
    %3520 = vmatprep.subr.bf16.mxu0 0
    %3521 = vmatpush2.bf16.msra.mxu0 0
    %3522 = vmatprep.mubr.bf16.mxu0 0
    %3523 = vmatmul.mubr.bf16.gmra.mxu0 %v3474
    %v3524 = vpop.f32.mrf.mxu0
    %v3525 = vadd.f32 %v3365, %v3524
    %v3526 = vpop.f32.mrf.mxu0
    %v3527 = vadd.f32 %v3365, %v3526
    %v3528 = vpop.f32.mrf.mxu0
    %v3529 = vadd.f32 %v3370, %v3528
    %v3530 = vpop.f32.mrf.mxu0
    %v3531 = vadd.f32 %v3370, %v3530
    %3532 = vmatprep.mubr.bf16.mxu0 0
    %3533 = vmatmul.mubr.bf16.gmra.mxu0 %v3475
    %v3534 = vpop.f32.mrf.mxu0
    %v3535 = vadd.f32 %v3375, %v3534
    %v3536 = vpop.f32.mrf.mxu0
    %v3537 = vadd.f32 %v3375, %v3536
    %v3538 = vpop.f32.mrf.mxu0
    %v3539 = vadd.f32 %v3380, %v3538
    %v3540 = vpop.f32.mrf.mxu0
    %v3541 = vadd.f32 %v3380, %v3540
    %3542 = vmatprep.mubr.bf16.mxu0 0
    %3543 = vmatmul.mubr.bf16.gmra.mxu0 %v3476
    %v3544 = vpop.f32.mrf.mxu0
    %v3545 = vadd.f32 %v3385, %v3544
    %v3546 = vpop.f32.mrf.mxu0
    %v3547 = vadd.f32 %v3385, %v3546
    %v3548 = vpop.f32.mrf.mxu0
    %v3549 = vadd.f32 %v3390, %v3548
    %v3550 = vpop.f32.mrf.mxu0
    %v3551 = vadd.f32 %v3390, %v3550
    %3552 = vmatprep.mubr.bf16.mxu0 0
    %3553 = vmatmul.mubr.bf16.gmra.mxu0 %v3477
    %v3554 = vpop.f32.mrf.mxu0
    %v3555 = vadd.f32 %v3395, %v3554
    %v3556 = vpop.f32.mrf.mxu0
    %v3557 = vadd.f32 %v3395, %v3556
    %v3558 = vpop.f32.mrf.mxu0
    %v3559 = vadd.f32 %v3400, %v3558
    %v3560 = vpop.f32.mrf.mxu0
    %v3561 = vadd.f32 %v3400, %v3560
    %3562 = vmatprep.mubr.bf16.mxu0 0
    %3563 = vmatmul.mubr.bf16.gmra.mxu0 %v3478
    %v3564 = vpop.f32.mrf.mxu0
    %v3565 = vadd.f32 %v3405, %v3564
    %v3566 = vpop.f32.mrf.mxu0
    %v3567 = vadd.f32 %v3405, %v3566
    %v3568 = vpop.f32.mrf.mxu0
    %v3569 = vadd.f32 %v3410, %v3568
    %v3570 = vpop.f32.mrf.mxu0
    %v3571 = vadd.f32 %v3410, %v3570
    %3572 = vmatprep.mubr.bf16.mxu0 0
    %3573 = vmatmul.mubr.bf16.gmra.mxu0 %v3479
    %v3574 = vpop.f32.mrf.mxu0
    %v3575 = vadd.f32 %v3415, %v3574
    %v3576 = vpop.f32.mrf.mxu0
    %v3577 = vadd.f32 %v3415, %v3576
    %v3578 = vpop.f32.mrf.mxu0
    %v3579 = vadd.f32 %v3420, %v3578
    %v3580 = vpop.f32.mrf.mxu0
    %v3581 = vadd.f32 %v3420, %v3580
    %3582 = vmatprep.mubr.bf16.mxu0 0
    %3583 = vmatmul.mubr.bf16.gmra.mxu0 %v3480
    %v3584 = vpop.f32.mrf.mxu0
    %v3585 = vadd.f32 %v3425, %v3584
    %v3586 = vpop.f32.mrf.mxu0
    %v3587 = vadd.f32 %v3425, %v3586
    %v3588 = vpop.f32.mrf.mxu0
    %v3589 = vadd.f32 %v3430, %v3588
    %v3590 = vpop.f32.mrf.mxu0
    %v3591 = vadd.f32 %v3430, %v3590
    %3592 = vmatprep.mubr.bf16.mxu0 0
    %3593 = vmatmul.mubr.bf16.gmra.mxu0 %v3481
    %v3594 = vpop.f32.mrf.mxu0
    %v3595 = vadd.f32 %v3435, %v3594
    %v3596 = vpop.f32.mrf.mxu0
    %v3597 = vadd.f32 %v3435, %v3596
    %v3598 = vpop.f32.mrf.mxu0
    %v3599 = vadd.f32 %v3440, %v3598
    %v3600 = vpop.f32.mrf.mxu0
    %v3601 = vadd.f32 %v3440, %v3600
    %3602 = vdwg.mxu0
    %3603 = vmatprep.subr.bf16.mxu0 %v3361
    %3604 = vmatpush1.bf16.msra.mxu0 %v3360
    %3605 = vmatprep.subr.bf16.mxu0 %v3357
    %3606 = vmatpush1.bf16.msra.mxu0 %v3356
    %3607 = vmatprep.subr.bf16.mxu0 %v3353
    %3608 = vmatpush1.bf16.msra.mxu0 %v3352
    %3609 = vmatprep.subr.bf16.mxu0 %v3349
    %3610 = vmatpush1.bf16.msra.mxu0 %v3348
    %3611 = vmatprep.subr.bf16.mxu0 %v3345
    %3612 = vmatpush1.bf16.msra.mxu0 %v3344
    %3613 = vmatprep.subr.bf16.mxu0 %v3341
    %3614 = vmatpush1.bf16.msra.mxu0 %v3340
    %3615 = vmatprep.subr.bf16.mxu0 %v3337
    %3616 = vmatpush1.bf16.msra.mxu0 %v3336
    %3617 = vmatprep.subr.bf16.mxu0 %v3333
    %3618 = vmatpush1.bf16.msra.mxu0 %v3332
    %3619 = vmatprep.subr.bf16.mxu0 0
    %3620 = vmatpush2.bf16.msra.mxu0 0
    %3621 = vmatprep.subr.bf16.mxu0 0
    %3622 = vmatpush2.bf16.msra.mxu0 0
    %3623 = vmatprep.subr.bf16.mxu0 0
    %3624 = vmatpush2.bf16.msra.mxu0 0
    %3625 = vmatprep.subr.bf16.mxu0 0
    %3626 = vmatpush2.bf16.msra.mxu0 0
    %3627 = vmatprep.subr.bf16.mxu0 0
    %3628 = vmatpush2.bf16.msra.mxu0 0
    %3629 = vmatprep.subr.bf16.mxu0 0
    %3630 = vmatpush2.bf16.msra.mxu0 0
    %3631 = vmatprep.subr.bf16.mxu0 0
    %3632 = vmatpush2.bf16.msra.mxu0 0
    %3633 = vmatprep.subr.bf16.mxu0 0
    %3634 = vmatpush2.bf16.msra.mxu0 0
    %3635 = vmatprep.mubr.bf16.mxu0 0
    %3636 = vmatmul.mubr.bf16.gmra.mxu0 %v3474
    %v3637 = vpop.f32.mrf.mxu0
    %v3638 = vadd.f32 %v3365, %v3637
    %v3639 = vpop.f32.mrf.mxu0
    %v3640 = vadd.f32 %v3365, %v3639
    %v3641 = vpop.f32.mrf.mxu0
    %v3642 = vadd.f32 %v3370, %v3641
    %v3643 = vpop.f32.mrf.mxu0
    %v3644 = vadd.f32 %v3370, %v3643
    %3645 = vmatprep.mubr.bf16.mxu0 0
    %3646 = vmatmul.mubr.bf16.gmra.mxu0 %v3475
    %v3647 = vpop.f32.mrf.mxu0
    %v3648 = vadd.f32 %v3375, %v3647
    %v3649 = vpop.f32.mrf.mxu0
    %v3650 = vadd.f32 %v3375, %v3649
    %v3651 = vpop.f32.mrf.mxu0
    %v3652 = vadd.f32 %v3380, %v3651
    %v3653 = vpop.f32.mrf.mxu0
    %v3654 = vadd.f32 %v3380, %v3653
    %3655 = vmatprep.mubr.bf16.mxu0 0
    %3656 = vmatmul.mubr.bf16.gmra.mxu0 %v3476
    %v3657 = vpop.f32.mrf.mxu0
    %v3658 = vadd.f32 %v3385, %v3657
    %v3659 = vpop.f32.mrf.mxu0
    %v3660 = vadd.f32 %v3385, %v3659
    %v3661 = vpop.f32.mrf.mxu0
    %v3662 = vadd.f32 %v3390, %v3661
    %v3663 = vpop.f32.mrf.mxu0
    %v3664 = vadd.f32 %v3390, %v3663
    %3665 = vmatprep.mubr.bf16.mxu0 0
    %3666 = vmatmul.mubr.bf16.gmra.mxu0 %v3477
    %v3667 = vpop.f32.mrf.mxu0
    %v3668 = vadd.f32 %v3395, %v3667
    %v3669 = vpop.f32.mrf.mxu0
    %v3670 = vadd.f32 %v3395, %v3669
    %v3671 = vpop.f32.mrf.mxu0
    %v3672 = vadd.f32 %v3400, %v3671
    %v3673 = vpop.f32.mrf.mxu0
    %v3674 = vadd.f32 %v3400, %v3673
    %3675 = vmatprep.mubr.bf16.mxu0 0
    %3676 = vmatmul.mubr.bf16.gmra.mxu0 %v3478
    %v3677 = vpop.f32.mrf.mxu0
    %v3678 = vadd.f32 %v3405, %v3677
    %v3679 = vpop.f32.mrf.mxu0
    %v3680 = vadd.f32 %v3405, %v3679
    %v3681 = vpop.f32.mrf.mxu0
    %v3682 = vadd.f32 %v3410, %v3681
    %v3683 = vpop.f32.mrf.mxu0
    %v3684 = vadd.f32 %v3410, %v3683
    %3685 = vmatprep.mubr.bf16.mxu0 0
    %3686 = vmatmul.mubr.bf16.gmra.mxu0 %v3479
    %v3687 = vpop.f32.mrf.mxu0
    %v3688 = vadd.f32 %v3415, %v3687
    %v3689 = vpop.f32.mrf.mxu0
    %v3690 = vadd.f32 %v3415, %v3689
    %v3691 = vpop.f32.mrf.mxu0
    %v3692 = vadd.f32 %v3420, %v3691
    %v3693 = vpop.f32.mrf.mxu0
    %v3694 = vadd.f32 %v3420, %v3693
    %3695 = vmatprep.mubr.bf16.mxu0 0
    %3696 = vmatmul.mubr.bf16.gmra.mxu0 %v3480
    %v3697 = vpop.f32.mrf.mxu0
    %v3698 = vadd.f32 %v3425, %v3697
    %v3699 = vpop.f32.mrf.mxu0
    %v3700 = vadd.f32 %v3425, %v3699
    %v3701 = vpop.f32.mrf.mxu0
    %v3702 = vadd.f32 %v3430, %v3701
    %v3703 = vpop.f32.mrf.mxu0
    %v3704 = vadd.f32 %v3430, %v3703
    %3705 = vmatprep.mubr.bf16.mxu0 0
    %3706 = vmatmul.mubr.bf16.gmra.mxu0 %v3481
    %v3707 = vpop.f32.mrf.mxu0
    %v3708 = vadd.f32 %v3435, %v3707
    %v3709 = vpop.f32.mrf.mxu0
    %v3710 = vadd.f32 %v3435, %v3709
    %v3711 = vpop.f32.mrf.mxu0
    %v3712 = vadd.f32 %v3440, %v3711
    %v3713 = vpop.f32.mrf.mxu0
    %v3714 = vadd.f32 %v3440, %v3713
    %3715 = vdwg.mxu0
    %v3716 = vmul.f32 %v3525, 0.01
    %v3717 = vmul.f32 %v3527, 0.01
    %v3718 = vmul.f32 %v3638, 0.01
    %v3719 = vmul.f32 %v3640, 0.01
    %v3720 = vmul.f32 %v3529, 0.01
    %v3721 = vmul.f32 %v3531, 0.01
    %v3722 = vmul.f32 %v3642, 0.01
    %v3723 = vmul.f32 %v3644, 0.01
    %v3724 = vmul.f32 %v3535, 0.01
    %v3725 = vmul.f32 %v3537, 0.01
    %v3726 = vmul.f32 %v3648, 0.01
    %v3727 = vmul.f32 %v3650, 0.01
    %v3728 = vmul.f32 %v3539, 0.01
    %v3729 = vmul.f32 %v3541, 0.01
    %v3730 = vmul.f32 %v3652, 0.01
    %v3731 = vmul.f32 %v3654, 0.01
    %v3732 = vmul.f32 %v3545, 0.01
    %v3733 = vmul.f32 %v3547, 0.01
    %v3734 = vmul.f32 %v3658, 0.01
    %v3735 = vmul.f32 %v3660, 0.01
    %v3736 = vmul.f32 %v3549, 0.01
    %v3737 = vmul.f32 %v3551, 0.01
    %v3738 = vmul.f32 %v3662, 0.01
    %v3739 = vmul.f32 %v3664, 0.01
    %v3740 = vmul.f32 %v3555, 0.01
    %v3741 = vmul.f32 %v3557, 0.01
    %v3742 = vmul.f32 %v3668, 0.01
    %v3743 = vmul.f32 %v3670, 0.01
    %v3744 = vmul.f32 %v3559, 0.01
    %v3745 = vmul.f32 %v3561, 0.01
    %v3746 = vmul.f32 %v3672, 0.01
    %v3747 = vmul.f32 %v3674, 0.01
    %v3748 = vmul.f32 %v3565, 0.01
    %v3749 = vmul.f32 %v3567, 0.01
    %v3750 = vmul.f32 %v3678, 0.01
    %v3751 = vmul.f32 %v3680, 0.01
    %v3752 = vmul.f32 %v3569, 0.01
    %v3753 = vmul.f32 %v3571, 0.01
    %v3754 = vmul.f32 %v3682, 0.01
    %v3755 = vmul.f32 %v3684, 0.01
    %v3756 = vmul.f32 %v3575, 0.01
    %v3757 = vmul.f32 %v3577, 0.01
    %v3758 = vmul.f32 %v3688, 0.01
    %v3759 = vmul.f32 %v3690, 0.01
    %v3760 = vmul.f32 %v3579, 0.01
    %v3761 = vmul.f32 %v3581, 0.01
    %v3762 = vmul.f32 %v3692, 0.01
    %v3763 = vmul.f32 %v3694, 0.01
    %v3764 = vmul.f32 %v3585, 0.01
    %v3765 = vmul.f32 %v3587, 0.01
    %v3766 = vmul.f32 %v3698, 0.01
    %v3767 = vmul.f32 %v3700, 0.01
    %v3768 = vmul.f32 %v3589, 0.01
    %v3769 = vmul.f32 %v3591, 0.01
    %v3770 = vmul.f32 %v3702, 0.01
    %v3771 = vmul.f32 %v3704, 0.01
    %v3772 = vmul.f32 %v3595, 0.01
    %v3773 = vmul.f32 %v3597, 0.01
    %v3774 = vmul.f32 %v3708, 0.01
    %v3775 = vmul.f32 %v3710, 0.01
    %v3776 = vmul.f32 %v3599, 0.01
    %v3777 = vmul.f32 %v3601, 0.01
    %v3778 = vmul.f32 %v3712, 0.01
    %v3779 = vmul.f32 %v3714, 0.01
    %v3780 = vmax.f32 %v3525, %v3716
    %v3781 = vmax.f32 %v3527, %v3717
    %v3782 = vmax.f32 %v3638, %v3718
    %v3783 = vmax.f32 %v3640, %v3719
    %v3784 = vmax.f32 %v3529, %v3720
    %v3785 = vmax.f32 %v3531, %v3721
    %v3786 = vmax.f32 %v3642, %v3722
    %v3787 = vmax.f32 %v3644, %v3723
    %v3788 = vmax.f32 %v3535, %v3724
    %v3789 = vmax.f32 %v3537, %v3725
    %v3790 = vmax.f32 %v3648, %v3726
    %v3791 = vmax.f32 %v3650, %v3727
    %v3792 = vmax.f32 %v3539, %v3728
    %v3793 = vmax.f32 %v3541, %v3729
    %v3794 = vmax.f32 %v3652, %v3730
    %v3795 = vmax.f32 %v3654, %v3731
    %v3796 = vmax.f32 %v3545, %v3732
    %v3797 = vmax.f32 %v3547, %v3733
    %v3798 = vmax.f32 %v3658, %v3734
    %v3799 = vmax.f32 %v3660, %v3735
    %v3800 = vmax.f32 %v3549, %v3736
    %v3801 = vmax.f32 %v3551, %v3737
    %v3802 = vmax.f32 %v3662, %v3738
    %v3803 = vmax.f32 %v3664, %v3739
    %v3804 = vmax.f32 %v3555, %v3740
    %v3805 = vmax.f32 %v3557, %v3741
    %v3806 = vmax.f32 %v3668, %v3742
    %v3807 = vmax.f32 %v3670, %v3743
    %v3808 = vmax.f32 %v3559, %v3744
    %v3809 = vmax.f32 %v3561, %v3745
    %v3810 = vmax.f32 %v3672, %v3746
    %v3811 = vmax.f32 %v3674, %v3747
    %v3812 = vmax.f32 %v3565, %v3748
    %v3813 = vmax.f32 %v3567, %v3749
    %v3814 = vmax.f32 %v3678, %v3750
    %v3815 = vmax.f32 %v3680, %v3751
    %v3816 = vmax.f32 %v3569, %v3752
    %v3817 = vmax.f32 %v3571, %v3753
    %v3818 = vmax.f32 %v3682, %v3754
    %v3819 = vmax.f32 %v3684, %v3755
    %v3820 = vmax.f32 %v3575, %v3756
    %v3821 = vmax.f32 %v3577, %v3757
    %v3822 = vmax.f32 %v3688, %v3758
    %v3823 = vmax.f32 %v3690, %v3759
    %v3824 = vmax.f32 %v3579, %v3760
    %v3825 = vmax.f32 %v3581, %v3761
    %v3826 = vmax.f32 %v3692, %v3762
    %v3827 = vmax.f32 %v3694, %v3763
    %v3828 = vmax.f32 %v3585, %v3764
    %v3829 = vmax.f32 %v3587, %v3765
    %v3830 = vmax.f32 %v3698, %v3766
    %v3831 = vmax.f32 %v3700, %v3767
    %v3832 = vmax.f32 %v3589, %v3768
    %v3833 = vmax.f32 %v3591, %v3769
    %v3834 = vmax.f32 %v3702, %v3770
    %v3835 = vmax.f32 %v3704, %v3771
    %v3836 = vmax.f32 %v3595, %v3772
    %v3837 = vmax.f32 %v3597, %v3773
    %v3838 = vmax.f32 %v3708, %v3774
    %v3839 = vmax.f32 %v3710, %v3775
    %v3840 = vmax.f32 %v3599, %v3776
    %v3841 = vmax.f32 %v3601, %v3777
    %v3842 = vmax.f32 %v3712, %v3778
    %v3843 = vmax.f32 %v3714, %v3779
    %3845 = vset.pattern.permute.xlu0 0
    %3846 = vperm.xlu0 %3845, %v2842
    %v3847 = vpop.permute.xlu0 %3846
    %3850 = vset.pattern.permute.xlu0 0
    %3851 = vperm.xlu0 %3850, %v2843
    %v3852 = vpop.permute.xlu0 %3851
    %3855 = vset.pattern.permute.xlu0 0
    %3856 = vperm.xlu0 %3855, %v2844
    %v3857 = vpop.permute.xlu0 %3856
    %3860 = vset.pattern.permute.xlu0 0
    %3861 = vperm.xlu0 %3860, %v2845
    %v3862 = vpop.permute.xlu0 %3861
    %3865 = vset.pattern.permute.xlu0 0
    %3866 = vperm.xlu0 %3865, %v2846
    %v3867 = vpop.permute.xlu0 %3866
    %3870 = vset.pattern.permute.xlu0 0
    %3871 = vperm.xlu0 %3870, %v2847
    %v3872 = vpop.permute.xlu0 %3871
    %3875 = vset.pattern.permute.xlu0 0
    %3876 = vperm.xlu0 %3875, %v2848
    %v3877 = vpop.permute.xlu0 %3876
    %3880 = vset.pattern.permute.xlu0 0
    %3881 = vperm.xlu0 %3880, %v2849
    %v3882 = vpop.permute.xlu0 %3881
    %3885 = vset.pattern.permute.xlu0 0
    %3886 = vperm.xlu0 %3885, %v2850
    %v3887 = vpop.permute.xlu0 %3886
    %3890 = vset.pattern.permute.xlu0 0
    %3891 = vperm.xlu0 %3890, %v2851
    %v3892 = vpop.permute.xlu0 %3891
    %3895 = vset.pattern.permute.xlu0 0
    %3896 = vperm.xlu0 %3895, %v2852
    %v3897 = vpop.permute.xlu0 %3896
    %3900 = vset.pattern.permute.xlu0 0
    %3901 = vperm.xlu0 %3900, %v2853
    %v3902 = vpop.permute.xlu0 %3901
    %3905 = vset.pattern.permute.xlu0 0
    %3906 = vperm.xlu0 %3905, %v2854
    %v3907 = vpop.permute.xlu0 %3906
    %3910 = vset.pattern.permute.xlu0 0
    %3911 = vperm.xlu0 %3910, %v2855
    %v3912 = vpop.permute.xlu0 %3911
    %3915 = vset.pattern.permute.xlu0 0
    %3916 = vperm.xlu0 %3915, %v2856
    %v3917 = vpop.permute.xlu0 %3916
    %3920 = vset.pattern.permute.xlu0 0
    %3921 = vperm.xlu0 %3920, %v2857
    %v3922 = vpop.permute.xlu0 %3921
    %v3924 = vmul.f32 %v3780, %v3847
    %v3925 = vmul.f32 %v3781, %v3847
    %v3926 = vmul.f32 %v3782, %v3847
    %v3927 = vmul.f32 %v3783, %v3847
    %v3928 = vmul.f32 %v3784, %v3852
    %v3929 = vmul.f32 %v3785, %v3852
    %v3930 = vmul.f32 %v3786, %v3852
    %v3931 = vmul.f32 %v3787, %v3852
    %v3932 = vmul.f32 %v3788, %v3857
    %v3933 = vmul.f32 %v3789, %v3857
    %v3934 = vmul.f32 %v3790, %v3857
    %v3935 = vmul.f32 %v3791, %v3857
    %v3936 = vmul.f32 %v3792, %v3862
    %v3937 = vmul.f32 %v3793, %v3862
    %v3938 = vmul.f32 %v3794, %v3862
    %v3939 = vmul.f32 %v3795, %v3862
    %v3940 = vmul.f32 %v3796, %v3867
    %v3941 = vmul.f32 %v3797, %v3867
    %v3942 = vmul.f32 %v3798, %v3867
    %v3943 = vmul.f32 %v3799, %v3867
    %v3944 = vmul.f32 %v3800, %v3872
    %v3945 = vmul.f32 %v3801, %v3872
    %v3946 = vmul.f32 %v3802, %v3872
    %v3947 = vmul.f32 %v3803, %v3872
    %v3948 = vmul.f32 %v3804, %v3877
    %v3949 = vmul.f32 %v3805, %v3877
    %v3950 = vmul.f32 %v3806, %v3877
    %v3951 = vmul.f32 %v3807, %v3877
    %v3952 = vmul.f32 %v3808, %v3882
    %v3953 = vmul.f32 %v3809, %v3882
    %v3954 = vmul.f32 %v3810, %v3882
    %v3955 = vmul.f32 %v3811, %v3882
    %v3956 = vmul.f32 %v3812, %v3887
    %v3957 = vmul.f32 %v3813, %v3887
    %v3958 = vmul.f32 %v3814, %v3887
    %v3959 = vmul.f32 %v3815, %v3887
    %v3960 = vmul.f32 %v3816, %v3892
    %v3961 = vmul.f32 %v3817, %v3892
    %v3962 = vmul.f32 %v3818, %v3892
    %v3963 = vmul.f32 %v3819, %v3892
    %v3964 = vmul.f32 %v3820, %v3897
    %v3965 = vmul.f32 %v3821, %v3897
    %v3966 = vmul.f32 %v3822, %v3897
    %v3967 = vmul.f32 %v3823, %v3897
    %v3968 = vmul.f32 %v3824, %v3902
    %v3969 = vmul.f32 %v3825, %v3902
    %v3970 = vmul.f32 %v3826, %v3902
    %v3971 = vmul.f32 %v3827, %v3902
    %v3972 = vmul.f32 %v3828, %v3907
    %v3973 = vmul.f32 %v3829, %v3907
    %v3974 = vmul.f32 %v3830, %v3907
    %v3975 = vmul.f32 %v3831, %v3907
    %v3976 = vmul.f32 %v3832, %v3912
    %v3977 = vmul.f32 %v3833, %v3912
    %v3978 = vmul.f32 %v3834, %v3912
    %v3979 = vmul.f32 %v3835, %v3912
    %v3980 = vmul.f32 %v3836, %v3917
    %v3981 = vmul.f32 %v3837, %v3917
    %v3982 = vmul.f32 %v3838, %v3917
    %v3983 = vmul.f32 %v3839, %v3917
    %v3984 = vmul.f32 %v3840, %v3922
    %v3985 = vmul.f32 %v3841, %v3922
    %v3986 = vmul.f32 %v3842, %v3922
    %v3987 = vmul.f32 %v3843, %v3922
    %v3988 = vadd.f32 %v3924, %v3928
    %v3989 = vadd.f32 %v3988, %v3932
    %v3990 = vadd.f32 %v3989, %v3936
    %v3991 = vadd.f32 %v3990, %v3940
    %v3992 = vadd.f32 %v3991, %v3944
    %v3993 = vadd.f32 %v3992, %v3948
    %v3994 = vadd.f32 %v3993, %v3952
    %v3995 = vrot.slane %v3994, 4
    %v3996 = vadd.f32 %v3994, %v3995
    %v3997 = vrot.slane %v3996, 2
    %v3998 = vadd.f32 %v3996, %v3997
    %v3999 = vrot.slane %v3998, 1
    %v4000 = vadd.f32 %v3998, %v3999
    %v4001 = vadd.f32 %v3925, %v3929
    %v4002 = vadd.f32 %v4001, %v3933
    %v4003 = vadd.f32 %v4002, %v3937
    %v4004 = vadd.f32 %v4003, %v3941
    %v4005 = vadd.f32 %v4004, %v3945
    %v4006 = vadd.f32 %v4005, %v3949
    %v4007 = vadd.f32 %v4006, %v3953
    %v4008 = vrot.slane %v4007, 4
    %v4009 = vadd.f32 %v4007, %v4008
    %v4010 = vrot.slane %v4009, 2
    %v4011 = vadd.f32 %v4009, %v4010
    %v4012 = vrot.slane %v4011, 1
    %v4013 = vadd.f32 %v4011, %v4012
    %v4014 = vadd.f32 %v3926, %v3930
    %v4015 = vadd.f32 %v4014, %v3934
    %v4016 = vadd.f32 %v4015, %v3938
    %v4017 = vadd.f32 %v4016, %v3942
    %v4018 = vadd.f32 %v4017, %v3946
    %v4019 = vadd.f32 %v4018, %v3950
    %v4020 = vadd.f32 %v4019, %v3954
    %v4021 = vrot.slane %v4020, 4
    %v4022 = vadd.f32 %v4020, %v4021
    %v4023 = vrot.slane %v4022, 2
    %v4024 = vadd.f32 %v4022, %v4023
    %v4025 = vrot.slane %v4024, 1
    %v4026 = vadd.f32 %v4024, %v4025
    %v4027 = vadd.f32 %v3927, %v3931
    %v4028 = vadd.f32 %v4027, %v3935
    %v4029 = vadd.f32 %v4028, %v3939
    %v4030 = vadd.f32 %v4029, %v3943
    %v4031 = vadd.f32 %v4030, %v3947
    %v4032 = vadd.f32 %v4031, %v3951
    %v4033 = vadd.f32 %v4032, %v3955
    %v4034 = vrot.slane %v4033, 4
    %v4035 = vadd.f32 %v4033, %v4034
    %v4036 = vrot.slane %v4035, 2
    %v4037 = vadd.f32 %v4035, %v4036
    %v4038 = vrot.slane %v4037, 1
    %v4039 = vadd.f32 %v4037, %v4038
    %4041 = vset.pattern.permute.xlu0 0
    %4042 = vperm.xlu0 %4041, %v2859
    %v4043 = vpop.permute.xlu0 %4042
    %v4045 = vadd.f32 %v4000, %v4043
    %v4046 = vadd.f32 %v4013, %v4043
    %v4047 = vadd.f32 %v4026, %v4043
    %v4048 = vadd.f32 %v4039, %v4043
    %v4049 = vadd.f32 %v3956, %v3960
    %v4050 = vadd.f32 %v4049, %v3964
    %v4051 = vadd.f32 %v4050, %v3968
    %v4052 = vadd.f32 %v4051, %v3972
    %v4053 = vadd.f32 %v4052, %v3976
    %v4054 = vadd.f32 %v4053, %v3980
    %v4055 = vadd.f32 %v4054, %v3984
    %v4056 = vrot.slane %v4055, 4
    %v4057 = vadd.f32 %v4055, %v4056
    %v4058 = vrot.slane %v4057, 2
    %v4059 = vadd.f32 %v4057, %v4058
    %v4060 = vrot.slane %v4059, 1
    %v4061 = vadd.f32 %v4059, %v4060
    %v4062 = vadd.f32 %v3957, %v3961
    %v4063 = vadd.f32 %v4062, %v3965
    %v4064 = vadd.f32 %v4063, %v3969
    %v4065 = vadd.f32 %v4064, %v3973
    %v4066 = vadd.f32 %v4065, %v3977
    %v4067 = vadd.f32 %v4066, %v3981
    %v4068 = vadd.f32 %v4067, %v3985
    %v4069 = vrot.slane %v4068, 4
    %v4070 = vadd.f32 %v4068, %v4069
    %v4071 = vrot.slane %v4070, 2
    %v4072 = vadd.f32 %v4070, %v4071
    %v4073 = vrot.slane %v4072, 1
    %v4074 = vadd.f32 %v4072, %v4073
    %v4075 = vadd.f32 %v3958, %v3962
    %v4076 = vadd.f32 %v4075, %v3966
    %v4077 = vadd.f32 %v4076, %v3970
    %v4078 = vadd.f32 %v4077, %v3974
    %v4079 = vadd.f32 %v4078, %v3978
    %v4080 = vadd.f32 %v4079, %v3982
    %v4081 = vadd.f32 %v4080, %v3986
    %v4082 = vrot.slane %v4081, 4
    %v4083 = vadd.f32 %v4081, %v4082
    %v4084 = vrot.slane %v4083, 2
    %v4085 = vadd.f32 %v4083, %v4084
    %v4086 = vrot.slane %v4085, 1
    %v4087 = vadd.f32 %v4085, %v4086
    %v4088 = vadd.f32 %v3959, %v3963
    %v4089 = vadd.f32 %v4088, %v3967
    %v4090 = vadd.f32 %v4089, %v3971
    %v4091 = vadd.f32 %v4090, %v3975
    %v4092 = vadd.f32 %v4091, %v3979
    %v4093 = vadd.f32 %v4092, %v3983
    %v4094 = vadd.f32 %v4093, %v3987
    %v4095 = vrot.slane %v4094, 4
    %v4096 = vadd.f32 %v4094, %v4095
    %v4097 = vrot.slane %v4096, 2
    %v4098 = vadd.f32 %v4096, %v4097
    %v4099 = vrot.slane %v4098, 1
    %v4100 = vadd.f32 %v4098, %v4099
    %v4101 = vadd.f32 %v4061, %v4043
    %v4102 = vadd.f32 %v4074, %v4043
    %v4103 = vadd.f32 %v4087, %v4043
    %v4104 = vadd.f32 %v4100, %v4043
    %v4105 = vtanh.pop %v4045
    %v4106 = vtanh.pop %v4046
    %v4107 = vtanh.pop %v4047
    %v4108 = vtanh.pop %v4048
    %v4113 = vcombine.low %v4101, %v4102
    %v4114 = vcombine.low %v4103, %v4104
    %v4116 = vunpack.c.l.s4 1983009808
    %v4117 = vunpack.c.0.s8 %v4116
    %v4118 = vlaneseq
    %v4119 = vshrl.u32 %v4118, 7
    %v4120 = vsub.s32 %v4117, %v4119
    %v4121 = vrot.slane %v4113, %v4120
    %v4123 = vunpack.c.l.s4 1983009808
    %v4124 = vunpack.c.0.s8 %v4123
    %v4125 = vlaneseq
    %v4126 = vshrl.u32 %v4125, 7
    %v4127 = vsub.s32 %v4124, %v4126
    %v4128 = vrot.slane %v4114, %v4127
    %v4129 = vcombine.low %v4121, %v4128
    %v4131 = vsub.f32 %v1406, %v4129
    %v4132 = vsub.f32 0.0, %v4105
    %v4133 = vsub.f32 0.0, %v4106
    %v4134 = vsub.f32 0.0, %v4107
    %v4135 = vsub.f32 0.0, %v4108
    %v4136 = vmul.f32 %v4132, 1.442695
    %v4137 = vpow.pop %v4136
    %v4138 = vmul.f32 %v4133, 1.442695
    %v4139 = vpow.pop %v4138
    %v4140 = vmul.f32 %v4134, 1.442695
    %v4141 = vpow.pop %v4140
    %v4142 = vmul.f32 %v4135, 1.442695
    %v4143 = vpow.pop %v4142
    %v4148 = vcombine.low %v4137, %v4139
    %v4149 = vcombine.low %v4141, %v4143
    %v4151 = vunpack.c.l.s4 1983009808
    %v4152 = vunpack.c.0.s8 %v4151
    %v4153 = vlaneseq
    %v4154 = vshrl.u32 %v4153, 7
    %v4155 = vsub.s32 %v4152, %v4154
    %v4156 = vrot.slane %v4148, %v4155
    %v4158 = vunpack.c.l.s4 1983009808
    %v4159 = vunpack.c.0.s8 %v4158
    %v4160 = vlaneseq
    %v4161 = vshrl.u32 %v4160, 7
    %v4162 = vsub.s32 %v4159, %v4161
    %v4163 = vrot.slane %v4149, %v4162
    %v4164 = vcombine.low %v4156, %v4163
    %v4165 = vrot.slane %v4164, 7
    %v4167 = vmul.f32 %v4131, %v4165
    %v4168 = vsub.f32 %v2786, %v4105
    %v4169 = vsub.f32 %v2787, %v4106
    %v4170 = vsub.f32 %v2788, %v4107
    %v4171 = vsub.f32 %v2789, %v4108
    %s4172 = scalar_lea.vmem %s1, 256
    %v4173 = vld [vmem:[%s4172] sm:$0xff]
    %v4174 = vld [vmem:[%s4172 + $0x8] sm:$0xff]
    %v4175 = vld [vmem:[%s4172 + $0x10] sm:$0xff]
    %v4176 = vld [vmem:[%s4172 + $0x18] sm:$0xff]
    %v4177 = vld [vmem:[%s4172 + $0x20] sm:$0xff]
    %v4178 = vld [vmem:[%s4172 + $0x28] sm:$0xff]
    %v4179 = vld [vmem:[%s4172 + $0x30] sm:$0xff]
    %v4180 = vld [vmem:[%s4172 + $0x38] sm:$0xff]
    %v4181 = vld [vmem:[%s4172 + $0x40] sm:$0xff]
    %v4182 = vld [vmem:[%s4172 + $0x48] sm:$0xff]
    %v4183 = vld [vmem:[%s4172 + $0x50] sm:$0xff]
    %v4184 = vld [vmem:[%s4172 + $0x58] sm:$0xff]
    %v4185 = vld [vmem:[%s4172 + $0x60] sm:$0xff]
    %v4186 = vld [vmem:[%s4172 + $0x68] sm:$0xff]
    %v4187 = vld [vmem:[%s4172 + $0x70] sm:$0xff]
    %v4188 = vld [vmem:[%s4172 + $0x78] sm:$0xff]
    %s4189 = scalar_lea.vmem %s2, 256
    %v4190 = vld [vmem:[%s4189] sm:$0xff]
    %v4191 = vld [vmem:[%s4189 + $0x8] sm:$0xff]
    %v4192 = vld [vmem:[%s4189 + $0x10] sm:$0xff]
    %v4193 = vld [vmem:[%s4189 + $0x18] sm:$0xff]
    %v4194 = vld [vmem:[%s4189 + $0x20] sm:$0xff]
    %v4195 = vld [vmem:[%s4189 + $0x28] sm:$0xff]
    %v4196 = vld [vmem:[%s4189 + $0x30] sm:$0xff]
    %v4197 = vld [vmem:[%s4189 + $0x38] sm:$0xff]
    %v4198 = vld [vmem:[%s4189 + $0x40] sm:$0xff]
    %v4199 = vld [vmem:[%s4189 + $0x48] sm:$0xff]
    %v4200 = vld [vmem:[%s4189 + $0x50] sm:$0xff]
    %v4201 = vld [vmem:[%s4189 + $0x58] sm:$0xff]
    %v4202 = vld [vmem:[%s4189 + $0x60] sm:$0xff]
    %v4203 = vld [vmem:[%s4189 + $0x68] sm:$0xff]
    %v4204 = vld [vmem:[%s4189 + $0x70] sm:$0xff]
    %v4205 = vld [vmem:[%s4189 + $0x78] sm:$0xff]
    %s4206 = scalar_lea.vmem %s4, 256
    %v4207 = vld [vmem:[%s4206] sm:$0xff]
    %v4208 = vld [vmem:[%s4206 + $0x8] sm:$0xff]
    %v4209 = vld [vmem:[%s4206 + $0x10] sm:$0xff]
    %v4210 = vld [vmem:[%s4206 + $0x18] sm:$0xff]
    %v4211 = vld [vmem:[%s4206 + $0x20] sm:$0xff]
    %v4212 = vld [vmem:[%s4206 + $0x28] sm:$0xff]
    %v4213 = vld [vmem:[%s4206 + $0x30] sm:$0xff]
    %v4214 = vld [vmem:[%s4206 + $0x38] sm:$0xff]
    %v4215 = vld [vmem:[%s4206 + $0x40] sm:$0xff]
    %v4216 = vld [vmem:[%s4206 + $0x48] sm:$0xff]
    %v4217 = vld [vmem:[%s4206 + $0x50] sm:$0xff]
    %v4218 = vld [vmem:[%s4206 + $0x58] sm:$0xff]
    %v4219 = vld [vmem:[%s4206 + $0x60] sm:$0xff]
    %v4220 = vld [vmem:[%s4206 + $0x68] sm:$0xff]
    %v4221 = vld [vmem:[%s4206 + $0x70] sm:$0xff]
    %v4222 = vld [vmem:[%s4206 + $0x78] sm:$0xff]
    %s4223 = scalar_lea.vmem %s5, 256
    %v4224 = vld [vmem:[%s4223] sm:$0xff]
    %v4225 = vld [vmem:[%s4223 + $0x8] sm:$0xff]
    %v4226 = vld [vmem:[%s4223 + $0x10] sm:$0xff]
    %v4227 = vld [vmem:[%s4223 + $0x18] sm:$0xff]
    %v4228 = vld [vmem:[%s4223 + $0x20] sm:$0xff]
    %v4229 = vld [vmem:[%s4223 + $0x28] sm:$0xff]
    %v4230 = vld [vmem:[%s4223 + $0x30] sm:$0xff]
    %v4231 = vld [vmem:[%s4223 + $0x38] sm:$0xff]
    %v4232 = vld [vmem:[%s4223 + $0x40] sm:$0xff]
    %v4233 = vld [vmem:[%s4223 + $0x48] sm:$0xff]
    %v4234 = vld [vmem:[%s4223 + $0x50] sm:$0xff]
    %v4235 = vld [vmem:[%s4223 + $0x58] sm:$0xff]
    %v4236 = vld [vmem:[%s4223 + $0x60] sm:$0xff]
    %v4237 = vld [vmem:[%s4223 + $0x68] sm:$0xff]
    %v4238 = vld [vmem:[%s4223 + $0x70] sm:$0xff]
    %v4239 = vld [vmem:[%s4223 + $0x78] sm:$0xff]
    %s4240 = scalar_lea.vmem %s6, 4
    %v4241 = vld [vmem:[%s4240] sm:$0x3]
    %4243 = vset.pattern.permute.xlu0 0
    %4244 = vperm.xlu0 %4243, %v4173
    %v4245 = vpop.permute.xlu0 %4244
    %4248 = vset.pattern.permute.xlu0 0
    %4249 = vperm.xlu0 %4248, %v4174
    %v4250 = vpop.permute.xlu0 %4249
    %4253 = vset.pattern.permute.xlu0 0
    %4254 = vperm.xlu0 %4253, %v4175
    %v4255 = vpop.permute.xlu0 %4254
    %4258 = vset.pattern.permute.xlu0 0
    %4259 = vperm.xlu0 %4258, %v4176
    %v4260 = vpop.permute.xlu0 %4259
    %4263 = vset.pattern.permute.xlu0 0
    %4264 = vperm.xlu0 %4263, %v4177
    %v4265 = vpop.permute.xlu0 %4264
    %4268 = vset.pattern.permute.xlu0 0
    %4269 = vperm.xlu0 %4268, %v4178
    %v4270 = vpop.permute.xlu0 %4269
    %4273 = vset.pattern.permute.xlu0 0
    %4274 = vperm.xlu0 %4273, %v4179
    %v4275 = vpop.permute.xlu0 %4274
    %4278 = vset.pattern.permute.xlu0 0
    %4279 = vperm.xlu0 %4278, %v4180
    %v4280 = vpop.permute.xlu0 %4279
    %4283 = vset.pattern.permute.xlu0 0
    %4284 = vperm.xlu0 %4283, %v4181
    %v4285 = vpop.permute.xlu0 %4284
    %4288 = vset.pattern.permute.xlu0 0
    %4289 = vperm.xlu0 %4288, %v4182
    %v4290 = vpop.permute.xlu0 %4289
    %4293 = vset.pattern.permute.xlu0 0
    %4294 = vperm.xlu0 %4293, %v4183
    %v4295 = vpop.permute.xlu0 %4294
    %4298 = vset.pattern.permute.xlu0 0
    %4299 = vperm.xlu0 %4298, %v4184
    %v4300 = vpop.permute.xlu0 %4299
    %4303 = vset.pattern.permute.xlu0 0
    %4304 = vperm.xlu0 %4303, %v4185
    %v4305 = vpop.permute.xlu0 %4304
    %4308 = vset.pattern.permute.xlu0 0
    %4309 = vperm.xlu0 %4308, %v4186
    %v4310 = vpop.permute.xlu0 %4309
    %4313 = vset.pattern.permute.xlu0 0
    %4314 = vperm.xlu0 %4313, %v4187
    %v4315 = vpop.permute.xlu0 %4314
    %4318 = vset.pattern.permute.xlu0 0
    %4319 = vperm.xlu0 %4318, %v4188
    %v4320 = vpop.permute.xlu0 %4319
    %v4323 = vlaneseq
    %v4324 = vshrl.u32 %v4323, 7
    %v4325 = vsub.s32 1, %v4324
    %v4326 = vrot.slane %v4167, %v4325
    %v4327 = vlaneseq
    %v4328 = vshrl.u32 %v4327, 7
    %v4329 = vsub.s32 3, %v4328
    %v4330 = vrot.slane %v4167, %v4329
    %v4331 = vlaneseq
    %v4332 = vshrl.u32 %v4331, 7
    %v4333 = vsub.s32 5, %v4332
    %v4334 = vrot.slane %v4167, %v4333
    %v4335 = vlaneseq
    %v4336 = vshrl.u32 %v4335, 7
    %v4337 = vsub.s32 7, %v4336
    %v4338 = vrot.slane %v4167, %v4337
    %v4343 = vlaneseq
    %v4344 = vshrl.u32 %v4343, 7
    %v4345 = vsub.s32 1, %v4344
    %v4346 = vrot.slane %v4326, %v4345
    %v4347 = vlaneseq
    %v4348 = vshrl.u32 %v4347, 7
    %v4349 = vsub.s32 1, %v4348
    %v4350 = vrot.slane %v4330, %v4349
    %v4351 = vlaneseq
    %v4352 = vshrl.u32 %v4351, 7
    %v4353 = vsub.s32 1, %v4352
    %v4354 = vrot.slane %v4334, %v4353
    %v4355 = vlaneseq
    %v4356 = vshrl.u32 %v4355, 7
    %v4357 = vsub.s32 1, %v4356
    %v4358 = vrot.slane %v4338, %v4357
    %v4359 = vmul.f32 %v4245, %v4346
    %v4360 = vmul.f32 %v4245, %v4350
    %v4361 = vmul.f32 %v4245, %v4354
    %v4362 = vmul.f32 %v4245, %v4358
    %v4363 = vmul.f32 %v4250, %v4346
    %v4364 = vmul.f32 %v4250, %v4350
    %v4365 = vmul.f32 %v4250, %v4354
    %v4366 = vmul.f32 %v4250, %v4358
    %v4367 = vmul.f32 %v4255, %v4346
    %v4368 = vmul.f32 %v4255, %v4350
    %v4369 = vmul.f32 %v4255, %v4354
    %v4370 = vmul.f32 %v4255, %v4358
    %v4371 = vmul.f32 %v4260, %v4346
    %v4372 = vmul.f32 %v4260, %v4350
    %v4373 = vmul.f32 %v4260, %v4354
    %v4374 = vmul.f32 %v4260, %v4358
    %v4375 = vmul.f32 %v4265, %v4346
    %v4376 = vmul.f32 %v4265, %v4350
    %v4377 = vmul.f32 %v4265, %v4354
    %v4378 = vmul.f32 %v4265, %v4358
    %v4379 = vmul.f32 %v4270, %v4346
    %v4380 = vmul.f32 %v4270, %v4350
    %v4381 = vmul.f32 %v4270, %v4354
    %v4382 = vmul.f32 %v4270, %v4358
    %v4383 = vmul.f32 %v4275, %v4346
    %v4384 = vmul.f32 %v4275, %v4350
    %v4385 = vmul.f32 %v4275, %v4354
    %v4386 = vmul.f32 %v4275, %v4358
    %v4387 = vmul.f32 %v4280, %v4346
    %v4388 = vmul.f32 %v4280, %v4350
    %v4389 = vmul.f32 %v4280, %v4354
    %v4390 = vmul.f32 %v4280, %v4358
    %v4391 = vmul.f32 %v4285, %v4346
    %v4392 = vmul.f32 %v4285, %v4350
    %v4393 = vmul.f32 %v4285, %v4354
    %v4394 = vmul.f32 %v4285, %v4358
    %v4395 = vmul.f32 %v4290, %v4346
    %v4396 = vmul.f32 %v4290, %v4350
    %v4397 = vmul.f32 %v4290, %v4354
    %v4398 = vmul.f32 %v4290, %v4358
    %v4399 = vmul.f32 %v4295, %v4346
    %v4400 = vmul.f32 %v4295, %v4350
    %v4401 = vmul.f32 %v4295, %v4354
    %v4402 = vmul.f32 %v4295, %v4358
    %v4403 = vmul.f32 %v4300, %v4346
    %v4404 = vmul.f32 %v4300, %v4350
    %v4405 = vmul.f32 %v4300, %v4354
    %v4406 = vmul.f32 %v4300, %v4358
    %v4407 = vmul.f32 %v4305, %v4346
    %v4408 = vmul.f32 %v4305, %v4350
    %v4409 = vmul.f32 %v4305, %v4354
    %v4410 = vmul.f32 %v4305, %v4358
    %v4411 = vmul.f32 %v4310, %v4346
    %v4412 = vmul.f32 %v4310, %v4350
    %v4413 = vmul.f32 %v4310, %v4354
    %v4414 = vmul.f32 %v4310, %v4358
    %v4415 = vmul.f32 %v4315, %v4346
    %v4416 = vmul.f32 %v4315, %v4350
    %v4417 = vmul.f32 %v4315, %v4354
    %v4418 = vmul.f32 %v4315, %v4358
    %v4419 = vmul.f32 %v4320, %v4346
    %v4420 = vmul.f32 %v4320, %v4350
    %v4421 = vmul.f32 %v4320, %v4354
    %v4422 = vmul.f32 %v4320, %v4358
    %4424 = vset.pattern.permute.xlu0 0
    %4425 = vperm.xlu0 %4424, %v4190
    %v4426 = vpop.permute.xlu0 %4425
    %4429 = vset.pattern.permute.xlu0 0
    %4430 = vperm.xlu0 %4429, %v4191
    %v4431 = vpop.permute.xlu0 %4430
    %4434 = vset.pattern.permute.xlu0 0
    %4435 = vperm.xlu0 %4434, %v4192
    %v4436 = vpop.permute.xlu0 %4435
    %4439 = vset.pattern.permute.xlu0 0
    %4440 = vperm.xlu0 %4439, %v4193
    %v4441 = vpop.permute.xlu0 %4440
    %4444 = vset.pattern.permute.xlu0 0
    %4445 = vperm.xlu0 %4444, %v4194
    %v4446 = vpop.permute.xlu0 %4445
    %4449 = vset.pattern.permute.xlu0 0
    %4450 = vperm.xlu0 %4449, %v4195
    %v4451 = vpop.permute.xlu0 %4450
    %4454 = vset.pattern.permute.xlu0 0
    %4455 = vperm.xlu0 %4454, %v4196
    %v4456 = vpop.permute.xlu0 %4455
    %4459 = vset.pattern.permute.xlu0 0
    %4460 = vperm.xlu0 %4459, %v4197
    %v4461 = vpop.permute.xlu0 %4460
    %4464 = vset.pattern.permute.xlu0 0
    %4465 = vperm.xlu0 %4464, %v4198
    %v4466 = vpop.permute.xlu0 %4465
    %4469 = vset.pattern.permute.xlu0 0
    %4470 = vperm.xlu0 %4469, %v4199
    %v4471 = vpop.permute.xlu0 %4470
    %4474 = vset.pattern.permute.xlu0 0
    %4475 = vperm.xlu0 %4474, %v4200
    %v4476 = vpop.permute.xlu0 %4475
    %4479 = vset.pattern.permute.xlu0 0
    %4480 = vperm.xlu0 %4479, %v4201
    %v4481 = vpop.permute.xlu0 %4480
    %4484 = vset.pattern.permute.xlu0 0
    %4485 = vperm.xlu0 %4484, %v4202
    %v4486 = vpop.permute.xlu0 %4485
    %4489 = vset.pattern.permute.xlu0 0
    %4490 = vperm.xlu0 %4489, %v4203
    %v4491 = vpop.permute.xlu0 %4490
    %4494 = vset.pattern.permute.xlu0 0
    %4495 = vperm.xlu0 %4494, %v4204
    %v4496 = vpop.permute.xlu0 %4495
    %4499 = vset.pattern.permute.xlu0 0
    %4500 = vperm.xlu0 %4499, %v4205
    %v4501 = vpop.permute.xlu0 %4500
    %v4503 = vadd.f32 %v4359, %v4426
    %v4504 = vadd.f32 %v4360, %v4426
    %v4505 = vadd.f32 %v4361, %v4426
    %v4506 = vadd.f32 %v4362, %v4426
    %v4507 = vadd.f32 %v4363, %v4431
    %v4508 = vadd.f32 %v4364, %v4431
    %v4509 = vadd.f32 %v4365, %v4431
    %v4510 = vadd.f32 %v4366, %v4431
    %v4511 = vadd.f32 %v4367, %v4436
    %v4512 = vadd.f32 %v4368, %v4436
    %v4513 = vadd.f32 %v4369, %v4436
    %v4514 = vadd.f32 %v4370, %v4436
    %v4515 = vadd.f32 %v4371, %v4441
    %v4516 = vadd.f32 %v4372, %v4441
    %v4517 = vadd.f32 %v4373, %v4441
    %v4518 = vadd.f32 %v4374, %v4441
    %v4519 = vadd.f32 %v4375, %v4446
    %v4520 = vadd.f32 %v4376, %v4446
    %v4521 = vadd.f32 %v4377, %v4446
    %v4522 = vadd.f32 %v4378, %v4446
    %v4523 = vadd.f32 %v4379, %v4451
    %v4524 = vadd.f32 %v4380, %v4451
    %v4525 = vadd.f32 %v4381, %v4451
    %v4526 = vadd.f32 %v4382, %v4451
    %v4527 = vadd.f32 %v4383, %v4456
    %v4528 = vadd.f32 %v4384, %v4456
    %v4529 = vadd.f32 %v4385, %v4456
    %v4530 = vadd.f32 %v4386, %v4456
    %v4531 = vadd.f32 %v4387, %v4461
    %v4532 = vadd.f32 %v4388, %v4461
    %v4533 = vadd.f32 %v4389, %v4461
    %v4534 = vadd.f32 %v4390, %v4461
    %v4535 = vadd.f32 %v4391, %v4466
    %v4536 = vadd.f32 %v4392, %v4466
    %v4537 = vadd.f32 %v4393, %v4466
    %v4538 = vadd.f32 %v4394, %v4466
    %v4539 = vadd.f32 %v4395, %v4471
    %v4540 = vadd.f32 %v4396, %v4471
    %v4541 = vadd.f32 %v4397, %v4471
    %v4542 = vadd.f32 %v4398, %v4471
    %v4543 = vadd.f32 %v4399, %v4476
    %v4544 = vadd.f32 %v4400, %v4476
    %v4545 = vadd.f32 %v4401, %v4476
    %v4546 = vadd.f32 %v4402, %v4476
    %v4547 = vadd.f32 %v4403, %v4481
    %v4548 = vadd.f32 %v4404, %v4481
    %v4549 = vadd.f32 %v4405, %v4481
    %v4550 = vadd.f32 %v4406, %v4481
    %v4551 = vadd.f32 %v4407, %v4486
    %v4552 = vadd.f32 %v4408, %v4486
    %v4553 = vadd.f32 %v4409, %v4486
    %v4554 = vadd.f32 %v4410, %v4486
    %v4555 = vadd.f32 %v4411, %v4491
    %v4556 = vadd.f32 %v4412, %v4491
    %v4557 = vadd.f32 %v4413, %v4491
    %v4558 = vadd.f32 %v4414, %v4491
    %v4559 = vadd.f32 %v4415, %v4496
    %v4560 = vadd.f32 %v4416, %v4496
    %v4561 = vadd.f32 %v4417, %v4496
    %v4562 = vadd.f32 %v4418, %v4496
    %v4563 = vadd.f32 %v4419, %v4501
    %v4564 = vadd.f32 %v4420, %v4501
    %v4565 = vadd.f32 %v4421, %v4501
    %v4566 = vadd.f32 %v4422, %v4501
    %v4567 = vmul.f32 %v4503, 0.01
    %v4568 = vmul.f32 %v4504, 0.01
    %v4569 = vmul.f32 %v4505, 0.01
    %v4570 = vmul.f32 %v4506, 0.01
    %v4571 = vmul.f32 %v4507, 0.01
    %v4572 = vmul.f32 %v4508, 0.01
    %v4573 = vmul.f32 %v4509, 0.01
    %v4574 = vmul.f32 %v4510, 0.01
    %v4575 = vmul.f32 %v4511, 0.01
    %v4576 = vmul.f32 %v4512, 0.01
    %v4577 = vmul.f32 %v4513, 0.01
    %v4578 = vmul.f32 %v4514, 0.01
    %v4579 = vmul.f32 %v4515, 0.01
    %v4580 = vmul.f32 %v4516, 0.01
    %v4581 = vmul.f32 %v4517, 0.01
    %v4582 = vmul.f32 %v4518, 0.01
    %v4583 = vmul.f32 %v4519, 0.01
    %v4584 = vmul.f32 %v4520, 0.01
    %v4585 = vmul.f32 %v4521, 0.01
    %v4586 = vmul.f32 %v4522, 0.01
    %v4587 = vmul.f32 %v4523, 0.01
    %v4588 = vmul.f32 %v4524, 0.01
    %v4589 = vmul.f32 %v4525, 0.01
    %v4590 = vmul.f32 %v4526, 0.01
    %v4591 = vmul.f32 %v4527, 0.01
    %v4592 = vmul.f32 %v4528, 0.01
    %v4593 = vmul.f32 %v4529, 0.01
    %v4594 = vmul.f32 %v4530, 0.01
    %v4595 = vmul.f32 %v4531, 0.01
    %v4596 = vmul.f32 %v4532, 0.01
    %v4597 = vmul.f32 %v4533, 0.01
    %v4598 = vmul.f32 %v4534, 0.01
    %v4599 = vmul.f32 %v4535, 0.01
    %v4600 = vmul.f32 %v4536, 0.01
    %v4601 = vmul.f32 %v4537, 0.01
    %v4602 = vmul.f32 %v4538, 0.01
    %v4603 = vmul.f32 %v4539, 0.01
    %v4604 = vmul.f32 %v4540, 0.01
    %v4605 = vmul.f32 %v4541, 0.01
    %v4606 = vmul.f32 %v4542, 0.01
    %v4607 = vmul.f32 %v4543, 0.01
    %v4608 = vmul.f32 %v4544, 0.01
    %v4609 = vmul.f32 %v4545, 0.01
    %v4610 = vmul.f32 %v4546, 0.01
    %v4611 = vmul.f32 %v4547, 0.01
    %v4612 = vmul.f32 %v4548, 0.01
    %v4613 = vmul.f32 %v4549, 0.01
    %v4614 = vmul.f32 %v4550, 0.01
    %v4615 = vmul.f32 %v4551, 0.01
    %v4616 = vmul.f32 %v4552, 0.01
    %v4617 = vmul.f32 %v4553, 0.01
    %v4618 = vmul.f32 %v4554, 0.01
    %v4619 = vmul.f32 %v4555, 0.01
    %v4620 = vmul.f32 %v4556, 0.01
    %v4621 = vmul.f32 %v4557, 0.01
    %v4622 = vmul.f32 %v4558, 0.01
    %v4623 = vmul.f32 %v4559, 0.01
    %v4624 = vmul.f32 %v4560, 0.01
    %v4625 = vmul.f32 %v4561, 0.01
    %v4626 = vmul.f32 %v4562, 0.01
    %v4627 = vmul.f32 %v4563, 0.01
    %v4628 = vmul.f32 %v4564, 0.01
    %v4629 = vmul.f32 %v4565, 0.01
    %v4630 = vmul.f32 %v4566, 0.01
    %v4631 = vmax.f32 %v4503, %v4567
    %v4632 = vmax.f32 %v4504, %v4568
    %v4633 = vmax.f32 %v4505, %v4569
    %v4634 = vmax.f32 %v4506, %v4570
    %v4635 = vmax.f32 %v4507, %v4571
    %v4636 = vmax.f32 %v4508, %v4572
    %v4637 = vmax.f32 %v4509, %v4573
    %v4638 = vmax.f32 %v4510, %v4574
    %v4639 = vmax.f32 %v4511, %v4575
    %v4640 = vmax.f32 %v4512, %v4576
    %v4641 = vmax.f32 %v4513, %v4577
    %v4642 = vmax.f32 %v4514, %v4578
    %v4643 = vmax.f32 %v4515, %v4579
    %v4644 = vmax.f32 %v4516, %v4580
    %v4645 = vmax.f32 %v4517, %v4581
    %v4646 = vmax.f32 %v4518, %v4582
    %v4647 = vmax.f32 %v4519, %v4583
    %v4648 = vmax.f32 %v4520, %v4584
    %v4649 = vmax.f32 %v4521, %v4585
    %v4650 = vmax.f32 %v4522, %v4586
    %v4651 = vmax.f32 %v4523, %v4587
    %v4652 = vmax.f32 %v4524, %v4588
    %v4653 = vmax.f32 %v4525, %v4589
    %v4654 = vmax.f32 %v4526, %v4590
    %v4655 = vmax.f32 %v4527, %v4591
    %v4656 = vmax.f32 %v4528, %v4592
    %v4657 = vmax.f32 %v4529, %v4593
    %v4658 = vmax.f32 %v4530, %v4594
    %v4659 = vmax.f32 %v4531, %v4595
    %v4660 = vmax.f32 %v4532, %v4596
    %v4661 = vmax.f32 %v4533, %v4597
    %v4662 = vmax.f32 %v4534, %v4598
    %v4663 = vmax.f32 %v4535, %v4599
    %v4664 = vmax.f32 %v4536, %v4600
    %v4665 = vmax.f32 %v4537, %v4601
    %v4666 = vmax.f32 %v4538, %v4602
    %v4667 = vmax.f32 %v4539, %v4603
    %v4668 = vmax.f32 %v4540, %v4604
    %v4669 = vmax.f32 %v4541, %v4605
    %v4670 = vmax.f32 %v4542, %v4606
    %v4671 = vmax.f32 %v4543, %v4607
    %v4672 = vmax.f32 %v4544, %v4608
    %v4673 = vmax.f32 %v4545, %v4609
    %v4674 = vmax.f32 %v4546, %v4610
    %v4675 = vmax.f32 %v4547, %v4611
    %v4676 = vmax.f32 %v4548, %v4612
    %v4677 = vmax.f32 %v4549, %v4613
    %v4678 = vmax.f32 %v4550, %v4614
    %v4679 = vmax.f32 %v4551, %v4615
    %v4680 = vmax.f32 %v4552, %v4616
    %v4681 = vmax.f32 %v4553, %v4617
    %v4682 = vmax.f32 %v4554, %v4618
    %v4683 = vmax.f32 %v4555, %v4619
    %v4684 = vmax.f32 %v4556, %v4620
    %v4685 = vmax.f32 %v4557, %v4621
    %v4686 = vmax.f32 %v4558, %v4622
    %v4687 = vmax.f32 %v4559, %v4623
    %v4688 = vmax.f32 %v4560, %v4624
    %v4689 = vmax.f32 %v4561, %v4625
    %v4690 = vmax.f32 %v4562, %v4626
    %v4691 = vmax.f32 %v4563, %v4627
    %v4692 = vmax.f32 %v4564, %v4628
    %v4693 = vmax.f32 %v4565, %v4629
    %v4694 = vmax.f32 %v4566, %v4630
    %s4695 = scalar_lea.vmem %s3, 128
    %v4696 = vld [vmem:[%s4695] sm:$0xf]
    %v4697 = vld [vmem:[%s4695 + $0x4] sm:$0xf]
    %v4698 = vld [vmem:[%s4695 + $0x8] sm:$0xf]
    %v4699 = vld [vmem:[%s4695 + $0xc] sm:$0xf]
    %v4700 = vld [vmem:[%s4695 + $0x10] sm:$0xf]
    %v4701 = vld [vmem:[%s4695 + $0x14] sm:$0xf]
    %v4702 = vld [vmem:[%s4695 + $0x18] sm:$0xf]
    %v4703 = vld [vmem:[%s4695 + $0x1c] sm:$0xf]
    %v4704 = vld [vmem:[%s4695 + $0x20] sm:$0xf]
    %v4705 = vld [vmem:[%s4695 + $0x24] sm:$0xf]
    %v4706 = vld [vmem:[%s4695 + $0x28] sm:$0xf]
    %v4707 = vld [vmem:[%s4695 + $0x2c] sm:$0xf]
    %v4708 = vld [vmem:[%s4695 + $0x30] sm:$0xf]
    %v4709 = vld [vmem:[%s4695 + $0x34] sm:$0xf]
    %v4710 = vld [vmem:[%s4695 + $0x38] sm:$0xf]
    %v4711 = vld [vmem:[%s4695 + $0x3c] sm:$0xf]
    %v4712 = vpack.c.bf16 %v4635, %v4631
    %v4713 = vpack.c.bf16 %v4636, %v4632
    %v4714 = vpack.c.bf16 %v4637, %v4633
    %v4715 = vpack.c.bf16 %v4638, %v4634
    %v4716 = vpack.c.bf16 %v4643, %v4639
    %v4717 = vpack.c.bf16 %v4644, %v4640
    %v4718 = vpack.c.bf16 %v4645, %v4641
    %v4719 = vpack.c.bf16 %v4646, %v4642
    %v4720 = vpack.c.bf16 %v4651, %v4647
    %v4721 = vpack.c.bf16 %v4652, %v4648
    %v4722 = vpack.c.bf16 %v4653, %v4649
    %v4723 = vpack.c.bf16 %v4654, %v4650
    %v4724 = vpack.c.bf16 %v4659, %v4655
    %v4725 = vpack.c.bf16 %v4660, %v4656
    %v4726 = vpack.c.bf16 %v4661, %v4657
    %v4727 = vpack.c.bf16 %v4662, %v4658
    %v4728 = vpack.c.bf16 %v4667, %v4663
    %v4729 = vpack.c.bf16 %v4668, %v4664
    %v4730 = vpack.c.bf16 %v4669, %v4665
    %v4731 = vpack.c.bf16 %v4670, %v4666
    %v4732 = vpack.c.bf16 %v4675, %v4671
    %v4733 = vpack.c.bf16 %v4676, %v4672
    %v4734 = vpack.c.bf16 %v4677, %v4673
    %v4735 = vpack.c.bf16 %v4678, %v4674
    %v4736 = vpack.c.bf16 %v4683, %v4679
    %v4737 = vpack.c.bf16 %v4684, %v4680
    %v4738 = vpack.c.bf16 %v4685, %v4681
    %v4739 = vpack.c.bf16 %v4686, %v4682
    %v4740 = vpack.c.bf16 %v4691, %v4687
    %v4741 = vpack.c.bf16 %v4692, %v4688
    %v4742 = vpack.c.bf16 %v4693, %v4689
    %v4743 = vpack.c.bf16 %v4694, %v4690
    %4745 = vset.pattern.permute.xlu0 0
    %4746 = vperm.xlu0 %4745, %v4207
    %v4747 = vpop.permute.xlu0 %4746
    %4750 = vset.pattern.permute.xlu0 0
    %4751 = vperm.xlu0 %4750, %v4208
    %v4752 = vpop.permute.xlu0 %4751
    %4755 = vset.pattern.permute.xlu0 0
    %4756 = vperm.xlu0 %4755, %v4209
    %v4757 = vpop.permute.xlu0 %4756
    %4760 = vset.pattern.permute.xlu0 0
    %4761 = vperm.xlu0 %4760, %v4210
    %v4762 = vpop.permute.xlu0 %4761
    %4765 = vset.pattern.permute.xlu0 0
    %4766 = vperm.xlu0 %4765, %v4211
    %v4767 = vpop.permute.xlu0 %4766
    %4770 = vset.pattern.permute.xlu0 0
    %4771 = vperm.xlu0 %4770, %v4212
    %v4772 = vpop.permute.xlu0 %4771
    %4775 = vset.pattern.permute.xlu0 0
    %4776 = vperm.xlu0 %4775, %v4213
    %v4777 = vpop.permute.xlu0 %4776
    %4780 = vset.pattern.permute.xlu0 0
    %4781 = vperm.xlu0 %4780, %v4214
    %v4782 = vpop.permute.xlu0 %4781
    %4785 = vset.pattern.permute.xlu0 0
    %4786 = vperm.xlu0 %4785, %v4215
    %v4787 = vpop.permute.xlu0 %4786
    %4790 = vset.pattern.permute.xlu0 0
    %4791 = vperm.xlu0 %4790, %v4216
    %v4792 = vpop.permute.xlu0 %4791
    %4795 = vset.pattern.permute.xlu0 0
    %4796 = vperm.xlu0 %4795, %v4217
    %v4797 = vpop.permute.xlu0 %4796
    %4800 = vset.pattern.permute.xlu0 0
    %4801 = vperm.xlu0 %4800, %v4218
    %v4802 = vpop.permute.xlu0 %4801
    %4805 = vset.pattern.permute.xlu0 0
    %4806 = vperm.xlu0 %4805, %v4219
    %v4807 = vpop.permute.xlu0 %4806
    %4810 = vset.pattern.permute.xlu0 0
    %4811 = vperm.xlu0 %4810, %v4220
    %v4812 = vpop.permute.xlu0 %4811
    %4815 = vset.pattern.permute.xlu0 0
    %4816 = vperm.xlu0 %4815, %v4221
    %v4817 = vpop.permute.xlu0 %4816
    %4820 = vset.pattern.permute.xlu0 0
    %4821 = vperm.xlu0 %4820, %v4222
    %v4822 = vpop.permute.xlu0 %4821
    %v4840 = vunpack.c.l.b16 %v4696
    %v4841 = vunpack.c.l.b16 %v4697
    %v4842 = vunpack.c.l.b16 %v4698
    %v4843 = vunpack.c.l.b16 %v4699
    %v4844 = vunpack.c.l.b16 %v4700
    %v4845 = vunpack.c.l.b16 %v4701
    %v4846 = vunpack.c.l.b16 %v4702
    %v4847 = vunpack.c.l.b16 %v4703
    %v4848 = vunpack.c.l.b16 %v4704
    %v4849 = vunpack.c.l.b16 %v4705
    %v4850 = vunpack.c.l.b16 %v4706
    %v4851 = vunpack.c.l.b16 %v4707
    %v4852 = vunpack.c.l.b16 %v4708
    %v4853 = vunpack.c.l.b16 %v4709
    %v4854 = vunpack.c.l.b16 %v4710
    %v4855 = vunpack.c.l.b16 %v4711
    %v4856 = vpack.c.b16 %v4841, %v4840
    %v4857 = vpack.c.b16 %v4843, %v4842
    %v4858 = vpack.c.b16 %v4845, %v4844
    %v4859 = vpack.c.b16 %v4847, %v4846
    %v4860 = vpack.c.b16 %v4849, %v4848
    %v4861 = vpack.c.b16 %v4851, %v4850
    %v4862 = vpack.c.b16 %v4853, %v4852
    %v4863 = vpack.c.b16 %v4855, %v4854
    %4872 = vmatprep.subr.bf16.mxu0 %v4741
    %4873 = vmatpush1.bf16.msra.mxu0 %v4740
    %4874 = vmatprep.subr.bf16.mxu0 %v4737
    %4875 = vmatpush1.bf16.msra.mxu0 %v4736
    %4876 = vmatprep.subr.bf16.mxu0 %v4733
    %4877 = vmatpush1.bf16.msra.mxu0 %v4732
    %4878 = vmatprep.subr.bf16.mxu0 %v4729
    %4879 = vmatpush1.bf16.msra.mxu0 %v4728
    %4880 = vmatprep.subr.bf16.mxu0 %v4725
    %4881 = vmatpush1.bf16.msra.mxu0 %v4724
    %4882 = vmatprep.subr.bf16.mxu0 %v4721
    %4883 = vmatpush1.bf16.msra.mxu0 %v4720
    %4884 = vmatprep.subr.bf16.mxu0 %v4717
    %4885 = vmatpush1.bf16.msra.mxu0 %v4716
    %4886 = vmatprep.subr.bf16.mxu0 %v4713
    %4887 = vmatpush1.bf16.msra.mxu0 %v4712
    %4888 = vmatprep.subr.bf16.mxu0 0
    %4889 = vmatpush2.bf16.msra.mxu0 0
    %4890 = vmatprep.subr.bf16.mxu0 0
    %4891 = vmatpush2.bf16.msra.mxu0 0
    %4892 = vmatprep.subr.bf16.mxu0 0
    %4893 = vmatpush2.bf16.msra.mxu0 0
    %4894 = vmatprep.subr.bf16.mxu0 0
    %4895 = vmatpush2.bf16.msra.mxu0 0
    %4896 = vmatprep.subr.bf16.mxu0 0
    %4897 = vmatpush2.bf16.msra.mxu0 0
    %4898 = vmatprep.subr.bf16.mxu0 0
    %4899 = vmatpush2.bf16.msra.mxu0 0
    %4900 = vmatprep.subr.bf16.mxu0 0
    %4901 = vmatpush2.bf16.msra.mxu0 0
    %4902 = vmatprep.subr.bf16.mxu0 0
    %4903 = vmatpush2.bf16.msra.mxu0 0
    %4904 = vmatprep.mubr.bf16.mxu0 0
    %4905 = vmatmul.mubr.bf16.gmra.mxu0 %v4856
    %v4906 = vpop.f32.mrf.mxu0
    %v4907 = vadd.f32 %v4747, %v4906
    %v4908 = vpop.f32.mrf.mxu0
    %v4909 = vadd.f32 %v4747, %v4908
    %v4910 = vpop.f32.mrf.mxu0
    %v4911 = vadd.f32 %v4752, %v4910
    %v4912 = vpop.f32.mrf.mxu0
    %v4913 = vadd.f32 %v4752, %v4912
    %4914 = vmatprep.mubr.bf16.mxu0 0
    %4915 = vmatmul.mubr.bf16.gmra.mxu0 %v4857
    %v4916 = vpop.f32.mrf.mxu0
    %v4917 = vadd.f32 %v4757, %v4916
    %v4918 = vpop.f32.mrf.mxu0
    %v4919 = vadd.f32 %v4757, %v4918
    %v4920 = vpop.f32.mrf.mxu0
    %v4921 = vadd.f32 %v4762, %v4920
    %v4922 = vpop.f32.mrf.mxu0
    %v4923 = vadd.f32 %v4762, %v4922
    %4924 = vmatprep.mubr.bf16.mxu0 0
    %4925 = vmatmul.mubr.bf16.gmra.mxu0 %v4858
    %v4926 = vpop.f32.mrf.mxu0
    %v4927 = vadd.f32 %v4767, %v4926
    %v4928 = vpop.f32.mrf.mxu0
    %v4929 = vadd.f32 %v4767, %v4928
    %v4930 = vpop.f32.mrf.mxu0
    %v4931 = vadd.f32 %v4772, %v4930
    %v4932 = vpop.f32.mrf.mxu0
    %v4933 = vadd.f32 %v4772, %v4932
    %4934 = vmatprep.mubr.bf16.mxu0 0
    %4935 = vmatmul.mubr.bf16.gmra.mxu0 %v4859
    %v4936 = vpop.f32.mrf.mxu0
    %v4937 = vadd.f32 %v4777, %v4936
    %v4938 = vpop.f32.mrf.mxu0
    %v4939 = vadd.f32 %v4777, %v4938
    %v4940 = vpop.f32.mrf.mxu0
    %v4941 = vadd.f32 %v4782, %v4940
    %v4942 = vpop.f32.mrf.mxu0
    %v4943 = vadd.f32 %v4782, %v4942
    %4944 = vmatprep.mubr.bf16.mxu0 0
    %4945 = vmatmul.mubr.bf16.gmra.mxu0 %v4860
    %v4946 = vpop.f32.mrf.mxu0
    %v4947 = vadd.f32 %v4787, %v4946
    %v4948 = vpop.f32.mrf.mxu0
    %v4949 = vadd.f32 %v4787, %v4948
    %v4950 = vpop.f32.mrf.mxu0
    %v4951 = vadd.f32 %v4792, %v4950
    %v4952 = vpop.f32.mrf.mxu0
    %v4953 = vadd.f32 %v4792, %v4952
    %4954 = vmatprep.mubr.bf16.mxu0 0
    %4955 = vmatmul.mubr.bf16.gmra.mxu0 %v4861
    %v4956 = vpop.f32.mrf.mxu0
    %v4957 = vadd.f32 %v4797, %v4956
    %v4958 = vpop.f32.mrf.mxu0
    %v4959 = vadd.f32 %v4797, %v4958
    %v4960 = vpop.f32.mrf.mxu0
    %v4961 = vadd.f32 %v4802, %v4960
    %v4962 = vpop.f32.mrf.mxu0
    %v4963 = vadd.f32 %v4802, %v4962
    %4964 = vmatprep.mubr.bf16.mxu0 0
    %4965 = vmatmul.mubr.bf16.gmra.mxu0 %v4862
    %v4966 = vpop.f32.mrf.mxu0
    %v4967 = vadd.f32 %v4807, %v4966
    %v4968 = vpop.f32.mrf.mxu0
    %v4969 = vadd.f32 %v4807, %v4968
    %v4970 = vpop.f32.mrf.mxu0
    %v4971 = vadd.f32 %v4812, %v4970
    %v4972 = vpop.f32.mrf.mxu0
    %v4973 = vadd.f32 %v4812, %v4972
    %4974 = vmatprep.mubr.bf16.mxu0 0
    %4975 = vmatmul.mubr.bf16.gmra.mxu0 %v4863
    %v4976 = vpop.f32.mrf.mxu0
    %v4977 = vadd.f32 %v4817, %v4976
    %v4978 = vpop.f32.mrf.mxu0
    %v4979 = vadd.f32 %v4817, %v4978
    %v4980 = vpop.f32.mrf.mxu0
    %v4981 = vadd.f32 %v4822, %v4980
    %v4982 = vpop.f32.mrf.mxu0
    %v4983 = vadd.f32 %v4822, %v4982
    %4984 = vdwg.mxu0
    %4985 = vmatprep.subr.bf16.mxu0 %v4743
    %4986 = vmatpush1.bf16.msra.mxu0 %v4742
    %4987 = vmatprep.subr.bf16.mxu0 %v4739
    %4988 = vmatpush1.bf16.msra.mxu0 %v4738
    %4989 = vmatprep.subr.bf16.mxu0 %v4735
    %4990 = vmatpush1.bf16.msra.mxu0 %v4734
    %4991 = vmatprep.subr.bf16.mxu0 %v4731
    %4992 = vmatpush1.bf16.msra.mxu0 %v4730
    %4993 = vmatprep.subr.bf16.mxu0 %v4727
    %4994 = vmatpush1.bf16.msra.mxu0 %v4726
    %4995 = vmatprep.subr.bf16.mxu0 %v4723
    %4996 = vmatpush1.bf16.msra.mxu0 %v4722
    %4997 = vmatprep.subr.bf16.mxu0 %v4719
    %4998 = vmatpush1.bf16.msra.mxu0 %v4718
    %4999 = vmatprep.subr.bf16.mxu0 %v4715
    %5000 = vmatpush1.bf16.msra.mxu0 %v4714
    %5001 = vmatprep.subr.bf16.mxu0 0
    %5002 = vmatpush2.bf16.msra.mxu0 0
    %5003 = vmatprep.subr.bf16.mxu0 0
    %5004 = vmatpush2.bf16.msra.mxu0 0
    %5005 = vmatprep.subr.bf16.mxu0 0
    %5006 = vmatpush2.bf16.msra.mxu0 0
    %5007 = vmatprep.subr.bf16.mxu0 0
    %5008 = vmatpush2.bf16.msra.mxu0 0
    %5009 = vmatprep.subr.bf16.mxu0 0
    %5010 = vmatpush2.bf16.msra.mxu0 0
    %5011 = vmatprep.subr.bf16.mxu0 0
    %5012 = vmatpush2.bf16.msra.mxu0 0
    %5013 = vmatprep.subr.bf16.mxu0 0
    %5014 = vmatpush2.bf16.msra.mxu0 0
    %5015 = vmatprep.subr.bf16.mxu0 0
    %5016 = vmatpush2.bf16.msra.mxu0 0
    %5017 = vmatprep.mubr.bf16.mxu0 0
    %5018 = vmatmul.mubr.bf16.gmra.mxu0 %v4856
    %v5019 = vpop.f32.mrf.mxu0
    %v5020 = vadd.f32 %v4747, %v5019
    %v5021 = vpop.f32.mrf.mxu0
    %v5022 = vadd.f32 %v4747, %v5021
    %v5023 = vpop.f32.mrf.mxu0
    %v5024 = vadd.f32 %v4752, %v5023
    %v5025 = vpop.f32.mrf.mxu0
    %v5026 = vadd.f32 %v4752, %v5025
    %5027 = vmatprep.mubr.bf16.mxu0 0
    %5028 = vmatmul.mubr.bf16.gmra.mxu0 %v4857
    %v5029 = vpop.f32.mrf.mxu0
    %v5030 = vadd.f32 %v4757, %v5029
    %v5031 = vpop.f32.mrf.mxu0
    %v5032 = vadd.f32 %v4757, %v5031
    %v5033 = vpop.f32.mrf.mxu0
    %v5034 = vadd.f32 %v4762, %v5033
    %v5035 = vpop.f32.mrf.mxu0
    %v5036 = vadd.f32 %v4762, %v5035
    %5037 = vmatprep.mubr.bf16.mxu0 0
    %5038 = vmatmul.mubr.bf16.gmra.mxu0 %v4858
    %v5039 = vpop.f32.mrf.mxu0
    %v5040 = vadd.f32 %v4767, %v5039
    %v5041 = vpop.f32.mrf.mxu0
    %v5042 = vadd.f32 %v4767, %v5041
    %v5043 = vpop.f32.mrf.mxu0
    %v5044 = vadd.f32 %v4772, %v5043
    %v5045 = vpop.f32.mrf.mxu0
    %v5046 = vadd.f32 %v4772, %v5045
    %5047 = vmatprep.mubr.bf16.mxu0 0
    %5048 = vmatmul.mubr.bf16.gmra.mxu0 %v4859
    %v5049 = vpop.f32.mrf.mxu0
    %v5050 = vadd.f32 %v4777, %v5049
    %v5051 = vpop.f32.mrf.mxu0
    %v5052 = vadd.f32 %v4777, %v5051
    %v5053 = vpop.f32.mrf.mxu0
    %v5054 = vadd.f32 %v4782, %v5053
    %v5055 = vpop.f32.mrf.mxu0
    %v5056 = vadd.f32 %v4782, %v5055
    %5057 = vmatprep.mubr.bf16.mxu0 0
    %5058 = vmatmul.mubr.bf16.gmra.mxu0 %v4860
    %v5059 = vpop.f32.mrf.mxu0
    %v5060 = vadd.f32 %v4787, %v5059
    %v5061 = vpop.f32.mrf.mxu0
    %v5062 = vadd.f32 %v4787, %v5061
    %v5063 = vpop.f32.mrf.mxu0
    %v5064 = vadd.f32 %v4792, %v5063
    %v5065 = vpop.f32.mrf.mxu0
    %v5066 = vadd.f32 %v4792, %v5065
    %5067 = vmatprep.mubr.bf16.mxu0 0
    %5068 = vmatmul.mubr.bf16.gmra.mxu0 %v4861
    %v5069 = vpop.f32.mrf.mxu0
    %v5070 = vadd.f32 %v4797, %v5069
    %v5071 = vpop.f32.mrf.mxu0
    %v5072 = vadd.f32 %v4797, %v5071
    %v5073 = vpop.f32.mrf.mxu0
    %v5074 = vadd.f32 %v4802, %v5073
    %v5075 = vpop.f32.mrf.mxu0
    %v5076 = vadd.f32 %v4802, %v5075
    %5077 = vmatprep.mubr.bf16.mxu0 0
    %5078 = vmatmul.mubr.bf16.gmra.mxu0 %v4862
    %v5079 = vpop.f32.mrf.mxu0
    %v5080 = vadd.f32 %v4807, %v5079
    %v5081 = vpop.f32.mrf.mxu0
    %v5082 = vadd.f32 %v4807, %v5081
    %v5083 = vpop.f32.mrf.mxu0
    %v5084 = vadd.f32 %v4812, %v5083
    %v5085 = vpop.f32.mrf.mxu0
    %v5086 = vadd.f32 %v4812, %v5085
    %5087 = vmatprep.mubr.bf16.mxu0 0
    %5088 = vmatmul.mubr.bf16.gmra.mxu0 %v4863
    %v5089 = vpop.f32.mrf.mxu0
    %v5090 = vadd.f32 %v4817, %v5089
    %v5091 = vpop.f32.mrf.mxu0
    %v5092 = vadd.f32 %v4817, %v5091
    %v5093 = vpop.f32.mrf.mxu0
    %v5094 = vadd.f32 %v4822, %v5093
    %v5095 = vpop.f32.mrf.mxu0
    %v5096 = vadd.f32 %v4822, %v5095
    %5097 = vdwg.mxu0
    %v5098 = vmul.f32 %v4907, 0.01
    %v5099 = vmul.f32 %v4909, 0.01
    %v5100 = vmul.f32 %v5020, 0.01
    %v5101 = vmul.f32 %v5022, 0.01
    %v5102 = vmul.f32 %v4911, 0.01
    %v5103 = vmul.f32 %v4913, 0.01
    %v5104 = vmul.f32 %v5024, 0.01
    %v5105 = vmul.f32 %v5026, 0.01
    %v5106 = vmul.f32 %v4917, 0.01
    %v5107 = vmul.f32 %v4919, 0.01
    %v5108 = vmul.f32 %v5030, 0.01
    %v5109 = vmul.f32 %v5032, 0.01
    %v5110 = vmul.f32 %v4921, 0.01
    %v5111 = vmul.f32 %v4923, 0.01
    %v5112 = vmul.f32 %v5034, 0.01
    %v5113 = vmul.f32 %v5036, 0.01
    %v5114 = vmul.f32 %v4927, 0.01
    %v5115 = vmul.f32 %v4929, 0.01
    %v5116 = vmul.f32 %v5040, 0.01
    %v5117 = vmul.f32 %v5042, 0.01
    %v5118 = vmul.f32 %v4931, 0.01
    %v5119 = vmul.f32 %v4933, 0.01
    %v5120 = vmul.f32 %v5044, 0.01
    %v5121 = vmul.f32 %v5046, 0.01
    %v5122 = vmul.f32 %v4937, 0.01
    %v5123 = vmul.f32 %v4939, 0.01
    %v5124 = vmul.f32 %v5050, 0.01
    %v5125 = vmul.f32 %v5052, 0.01
    %v5126 = vmul.f32 %v4941, 0.01
    %v5127 = vmul.f32 %v4943, 0.01
    %v5128 = vmul.f32 %v5054, 0.01
    %v5129 = vmul.f32 %v5056, 0.01
    %v5130 = vmul.f32 %v4947, 0.01
    %v5131 = vmul.f32 %v4949, 0.01
    %v5132 = vmul.f32 %v5060, 0.01
    %v5133 = vmul.f32 %v5062, 0.01
    %v5134 = vmul.f32 %v4951, 0.01
    %v5135 = vmul.f32 %v4953, 0.01
    %v5136 = vmul.f32 %v5064, 0.01
    %v5137 = vmul.f32 %v5066, 0.01
    %v5138 = vmul.f32 %v4957, 0.01
    %v5139 = vmul.f32 %v4959, 0.01
    %v5140 = vmul.f32 %v5070, 0.01
    %v5141 = vmul.f32 %v5072, 0.01
    %v5142 = vmul.f32 %v4961, 0.01
    %v5143 = vmul.f32 %v4963, 0.01
    %v5144 = vmul.f32 %v5074, 0.01
    %v5145 = vmul.f32 %v5076, 0.01
    %v5146 = vmul.f32 %v4967, 0.01
    %v5147 = vmul.f32 %v4969, 0.01
    %v5148 = vmul.f32 %v5080, 0.01
    %v5149 = vmul.f32 %v5082, 0.01
    %v5150 = vmul.f32 %v4971, 0.01
    %v5151 = vmul.f32 %v4973, 0.01
    %v5152 = vmul.f32 %v5084, 0.01
    %v5153 = vmul.f32 %v5086, 0.01
    %v5154 = vmul.f32 %v4977, 0.01
    %v5155 = vmul.f32 %v4979, 0.01
    %v5156 = vmul.f32 %v5090, 0.01
    %v5157 = vmul.f32 %v5092, 0.01
    %v5158 = vmul.f32 %v4981, 0.01
    %v5159 = vmul.f32 %v4983, 0.01
    %v5160 = vmul.f32 %v5094, 0.01
    %v5161 = vmul.f32 %v5096, 0.01
    %v5162 = vmax.f32 %v4907, %v5098
    %v5163 = vmax.f32 %v4909, %v5099
    %v5164 = vmax.f32 %v5020, %v5100
    %v5165 = vmax.f32 %v5022, %v5101
    %v5166 = vmax.f32 %v4911, %v5102
    %v5167 = vmax.f32 %v4913, %v5103
    %v5168 = vmax.f32 %v5024, %v5104
    %v5169 = vmax.f32 %v5026, %v5105
    %v5170 = vmax.f32 %v4917, %v5106
    %v5171 = vmax.f32 %v4919, %v5107
    %v5172 = vmax.f32 %v5030, %v5108
    %v5173 = vmax.f32 %v5032, %v5109
    %v5174 = vmax.f32 %v4921, %v5110
    %v5175 = vmax.f32 %v4923, %v5111
    %v5176 = vmax.f32 %v5034, %v5112
    %v5177 = vmax.f32 %v5036, %v5113
    %v5178 = vmax.f32 %v4927, %v5114
    %v5179 = vmax.f32 %v4929, %v5115
    %v5180 = vmax.f32 %v5040, %v5116
    %v5181 = vmax.f32 %v5042, %v5117
    %v5182 = vmax.f32 %v4931, %v5118
    %v5183 = vmax.f32 %v4933, %v5119
    %v5184 = vmax.f32 %v5044, %v5120
    %v5185 = vmax.f32 %v5046, %v5121
    %v5186 = vmax.f32 %v4937, %v5122
    %v5187 = vmax.f32 %v4939, %v5123
    %v5188 = vmax.f32 %v5050, %v5124
    %v5189 = vmax.f32 %v5052, %v5125
    %v5190 = vmax.f32 %v4941, %v5126
    %v5191 = vmax.f32 %v4943, %v5127
    %v5192 = vmax.f32 %v5054, %v5128
    %v5193 = vmax.f32 %v5056, %v5129
    %v5194 = vmax.f32 %v4947, %v5130
    %v5195 = vmax.f32 %v4949, %v5131
    %v5196 = vmax.f32 %v5060, %v5132
    %v5197 = vmax.f32 %v5062, %v5133
    %v5198 = vmax.f32 %v4951, %v5134
    %v5199 = vmax.f32 %v4953, %v5135
    %v5200 = vmax.f32 %v5064, %v5136
    %v5201 = vmax.f32 %v5066, %v5137
    %v5202 = vmax.f32 %v4957, %v5138
    %v5203 = vmax.f32 %v4959, %v5139
    %v5204 = vmax.f32 %v5070, %v5140
    %v5205 = vmax.f32 %v5072, %v5141
    %v5206 = vmax.f32 %v4961, %v5142
    %v5207 = vmax.f32 %v4963, %v5143
    %v5208 = vmax.f32 %v5074, %v5144
    %v5209 = vmax.f32 %v5076, %v5145
    %v5210 = vmax.f32 %v4967, %v5146
    %v5211 = vmax.f32 %v4969, %v5147
    %v5212 = vmax.f32 %v5080, %v5148
    %v5213 = vmax.f32 %v5082, %v5149
    %v5214 = vmax.f32 %v4971, %v5150
    %v5215 = vmax.f32 %v4973, %v5151
    %v5216 = vmax.f32 %v5084, %v5152
    %v5217 = vmax.f32 %v5086, %v5153
    %v5218 = vmax.f32 %v4977, %v5154
    %v5219 = vmax.f32 %v4979, %v5155
    %v5220 = vmax.f32 %v5090, %v5156
    %v5221 = vmax.f32 %v5092, %v5157
    %v5222 = vmax.f32 %v4981, %v5158
    %v5223 = vmax.f32 %v4983, %v5159
    %v5224 = vmax.f32 %v5094, %v5160
    %v5225 = vmax.f32 %v5096, %v5161
    %5227 = vset.pattern.permute.xlu0 0
    %5228 = vperm.xlu0 %5227, %v4224
    %v5229 = vpop.permute.xlu0 %5228
    %5232 = vset.pattern.permute.xlu0 0
    %5233 = vperm.xlu0 %5232, %v4225
    %v5234 = vpop.permute.xlu0 %5233
    %5237 = vset.pattern.permute.xlu0 0
    %5238 = vperm.xlu0 %5237, %v4226
    %v5239 = vpop.permute.xlu0 %5238
    %5242 = vset.pattern.permute.xlu0 0
    %5243 = vperm.xlu0 %5242, %v4227
    %v5244 = vpop.permute.xlu0 %5243
    %5247 = vset.pattern.permute.xlu0 0
    %5248 = vperm.xlu0 %5247, %v4228
    %v5249 = vpop.permute.xlu0 %5248
    %5252 = vset.pattern.permute.xlu0 0
    %5253 = vperm.xlu0 %5252, %v4229
    %v5254 = vpop.permute.xlu0 %5253
    %5257 = vset.pattern.permute.xlu0 0
    %5258 = vperm.xlu0 %5257, %v4230
    %v5259 = vpop.permute.xlu0 %5258
    %5262 = vset.pattern.permute.xlu0 0
    %5263 = vperm.xlu0 %5262, %v4231
    %v5264 = vpop.permute.xlu0 %5263
    %5267 = vset.pattern.permute.xlu0 0
    %5268 = vperm.xlu0 %5267, %v4232
    %v5269 = vpop.permute.xlu0 %5268
    %5272 = vset.pattern.permute.xlu0 0
    %5273 = vperm.xlu0 %5272, %v4233
    %v5274 = vpop.permute.xlu0 %5273
    %5277 = vset.pattern.permute.xlu0 0
    %5278 = vperm.xlu0 %5277, %v4234
    %v5279 = vpop.permute.xlu0 %5278
    %5282 = vset.pattern.permute.xlu0 0
    %5283 = vperm.xlu0 %5282, %v4235
    %v5284 = vpop.permute.xlu0 %5283
    %5287 = vset.pattern.permute.xlu0 0
    %5288 = vperm.xlu0 %5287, %v4236
    %v5289 = vpop.permute.xlu0 %5288
    %5292 = vset.pattern.permute.xlu0 0
    %5293 = vperm.xlu0 %5292, %v4237
    %v5294 = vpop.permute.xlu0 %5293
    %5297 = vset.pattern.permute.xlu0 0
    %5298 = vperm.xlu0 %5297, %v4238
    %v5299 = vpop.permute.xlu0 %5298
    %5302 = vset.pattern.permute.xlu0 0
    %5303 = vperm.xlu0 %5302, %v4239
    %v5304 = vpop.permute.xlu0 %5303
    %v5306 = vmul.f32 %v5162, %v5229
    %v5307 = vmul.f32 %v5163, %v5229
    %v5308 = vmul.f32 %v5164, %v5229
    %v5309 = vmul.f32 %v5165, %v5229
    %v5310 = vmul.f32 %v5166, %v5234
    %v5311 = vmul.f32 %v5167, %v5234
    %v5312 = vmul.f32 %v5168, %v5234
    %v5313 = vmul.f32 %v5169, %v5234
    %v5314 = vmul.f32 %v5170, %v5239
    %v5315 = vmul.f32 %v5171, %v5239
    %v5316 = vmul.f32 %v5172, %v5239
    %v5317 = vmul.f32 %v5173, %v5239
    %v5318 = vmul.f32 %v5174, %v5244
    %v5319 = vmul.f32 %v5175, %v5244
    %v5320 = vmul.f32 %v5176, %v5244
    %v5321 = vmul.f32 %v5177, %v5244
    %v5322 = vmul.f32 %v5178, %v5249
    %v5323 = vmul.f32 %v5179, %v5249
    %v5324 = vmul.f32 %v5180, %v5249
    %v5325 = vmul.f32 %v5181, %v5249
    %v5326 = vmul.f32 %v5182, %v5254
    %v5327 = vmul.f32 %v5183, %v5254
    %v5328 = vmul.f32 %v5184, %v5254
    %v5329 = vmul.f32 %v5185, %v5254
    %v5330 = vmul.f32 %v5186, %v5259
    %v5331 = vmul.f32 %v5187, %v5259
    %v5332 = vmul.f32 %v5188, %v5259
    %v5333 = vmul.f32 %v5189, %v5259
    %v5334 = vmul.f32 %v5190, %v5264
    %v5335 = vmul.f32 %v5191, %v5264
    %v5336 = vmul.f32 %v5192, %v5264
    %v5337 = vmul.f32 %v5193, %v5264
    %v5338 = vmul.f32 %v5194, %v5269
    %v5339 = vmul.f32 %v5195, %v5269
    %v5340 = vmul.f32 %v5196, %v5269
    %v5341 = vmul.f32 %v5197, %v5269
    %v5342 = vmul.f32 %v5198, %v5274
    %v5343 = vmul.f32 %v5199, %v5274
    %v5344 = vmul.f32 %v5200, %v5274
    %v5345 = vmul.f32 %v5201, %v5274
    %v5346 = vmul.f32 %v5202, %v5279
    %v5347 = vmul.f32 %v5203, %v5279
    %v5348 = vmul.f32 %v5204, %v5279
    %v5349 = vmul.f32 %v5205, %v5279
    %v5350 = vmul.f32 %v5206, %v5284
    %v5351 = vmul.f32 %v5207, %v5284
    %v5352 = vmul.f32 %v5208, %v5284
    %v5353 = vmul.f32 %v5209, %v5284
    %v5354 = vmul.f32 %v5210, %v5289
    %v5355 = vmul.f32 %v5211, %v5289
    %v5356 = vmul.f32 %v5212, %v5289
    %v5357 = vmul.f32 %v5213, %v5289
    %v5358 = vmul.f32 %v5214, %v5294
    %v5359 = vmul.f32 %v5215, %v5294
    %v5360 = vmul.f32 %v5216, %v5294
    %v5361 = vmul.f32 %v5217, %v5294
    %v5362 = vmul.f32 %v5218, %v5299
    %v5363 = vmul.f32 %v5219, %v5299
    %v5364 = vmul.f32 %v5220, %v5299
    %v5365 = vmul.f32 %v5221, %v5299
    %v5366 = vmul.f32 %v5222, %v5304
    %v5367 = vmul.f32 %v5223, %v5304
    %v5368 = vmul.f32 %v5224, %v5304
    %v5369 = vmul.f32 %v5225, %v5304
    %v5370 = vadd.f32 %v5306, %v5310
    %v5371 = vadd.f32 %v5370, %v5314
    %v5372 = vadd.f32 %v5371, %v5318
    %v5373 = vadd.f32 %v5372, %v5322
    %v5374 = vadd.f32 %v5373, %v5326
    %v5375 = vadd.f32 %v5374, %v5330
    %v5376 = vadd.f32 %v5375, %v5334
    %v5377 = vrot.slane %v5376, 4
    %v5378 = vadd.f32 %v5376, %v5377
    %v5379 = vrot.slane %v5378, 2
    %v5380 = vadd.f32 %v5378, %v5379
    %v5381 = vrot.slane %v5380, 1
    %v5382 = vadd.f32 %v5380, %v5381
    %v5383 = vadd.f32 %v5307, %v5311
    %v5384 = vadd.f32 %v5383, %v5315
    %v5385 = vadd.f32 %v5384, %v5319
    %v5386 = vadd.f32 %v5385, %v5323
    %v5387 = vadd.f32 %v5386, %v5327
    %v5388 = vadd.f32 %v5387, %v5331
    %v5389 = vadd.f32 %v5388, %v5335
    %v5390 = vrot.slane %v5389, 4
    %v5391 = vadd.f32 %v5389, %v5390
    %v5392 = vrot.slane %v5391, 2
    %v5393 = vadd.f32 %v5391, %v5392
    %v5394 = vrot.slane %v5393, 1
    %v5395 = vadd.f32 %v5393, %v5394
    %v5396 = vadd.f32 %v5308, %v5312
    %v5397 = vadd.f32 %v5396, %v5316
    %v5398 = vadd.f32 %v5397, %v5320
    %v5399 = vadd.f32 %v5398, %v5324
    %v5400 = vadd.f32 %v5399, %v5328
    %v5401 = vadd.f32 %v5400, %v5332
    %v5402 = vadd.f32 %v5401, %v5336
    %v5403 = vrot.slane %v5402, 4
    %v5404 = vadd.f32 %v5402, %v5403
    %v5405 = vrot.slane %v5404, 2
    %v5406 = vadd.f32 %v5404, %v5405
    %v5407 = vrot.slane %v5406, 1
    %v5408 = vadd.f32 %v5406, %v5407
    %v5409 = vadd.f32 %v5309, %v5313
    %v5410 = vadd.f32 %v5409, %v5317
    %v5411 = vadd.f32 %v5410, %v5321
    %v5412 = vadd.f32 %v5411, %v5325
    %v5413 = vadd.f32 %v5412, %v5329
    %v5414 = vadd.f32 %v5413, %v5333
    %v5415 = vadd.f32 %v5414, %v5337
    %v5416 = vrot.slane %v5415, 4
    %v5417 = vadd.f32 %v5415, %v5416
    %v5418 = vrot.slane %v5417, 2
    %v5419 = vadd.f32 %v5417, %v5418
    %v5420 = vrot.slane %v5419, 1
    %v5421 = vadd.f32 %v5419, %v5420
    %5423 = vset.pattern.permute.xlu0 0
    %5424 = vperm.xlu0 %5423, %v4241
    %v5425 = vpop.permute.xlu0 %5424
    %v5427 = vadd.f32 %v5382, %v5425
    %v5428 = vadd.f32 %v5395, %v5425
    %v5429 = vadd.f32 %v5408, %v5425
    %v5430 = vadd.f32 %v5421, %v5425
    %v5431 = vadd.f32 %v5338, %v5342
    %v5432 = vadd.f32 %v5431, %v5346
    %v5433 = vadd.f32 %v5432, %v5350
    %v5434 = vadd.f32 %v5433, %v5354
    %v5435 = vadd.f32 %v5434, %v5358
    %v5436 = vadd.f32 %v5435, %v5362
    %v5437 = vadd.f32 %v5436, %v5366
    %v5438 = vrot.slane %v5437, 4
    %v5439 = vadd.f32 %v5437, %v5438
    %v5440 = vrot.slane %v5439, 2
    %v5441 = vadd.f32 %v5439, %v5440
    %v5442 = vrot.slane %v5441, 1
    %v5443 = vadd.f32 %v5441, %v5442
    %v5444 = vadd.f32 %v5339, %v5343
    %v5445 = vadd.f32 %v5444, %v5347
    %v5446 = vadd.f32 %v5445, %v5351
    %v5447 = vadd.f32 %v5446, %v5355
    %v5448 = vadd.f32 %v5447, %v5359
    %v5449 = vadd.f32 %v5448, %v5363
    %v5450 = vadd.f32 %v5449, %v5367
    %v5451 = vrot.slane %v5450, 4
    %v5452 = vadd.f32 %v5450, %v5451
    %v5453 = vrot.slane %v5452, 2
    %v5454 = vadd.f32 %v5452, %v5453
    %v5455 = vrot.slane %v5454, 1
    %v5456 = vadd.f32 %v5454, %v5455
    %v5457 = vadd.f32 %v5340, %v5344
    %v5458 = vadd.f32 %v5457, %v5348
    %v5459 = vadd.f32 %v5458, %v5352
    %v5460 = vadd.f32 %v5459, %v5356
    %v5461 = vadd.f32 %v5460, %v5360
    %v5462 = vadd.f32 %v5461, %v5364
    %v5463 = vadd.f32 %v5462, %v5368
    %v5464 = vrot.slane %v5463, 4
    %v5465 = vadd.f32 %v5463, %v5464
    %v5466 = vrot.slane %v5465, 2
    %v5467 = vadd.f32 %v5465, %v5466
    %v5468 = vrot.slane %v5467, 1
    %v5469 = vadd.f32 %v5467, %v5468
    %v5470 = vadd.f32 %v5341, %v5345
    %v5471 = vadd.f32 %v5470, %v5349
    %v5472 = vadd.f32 %v5471, %v5353
    %v5473 = vadd.f32 %v5472, %v5357
    %v5474 = vadd.f32 %v5473, %v5361
    %v5475 = vadd.f32 %v5474, %v5365
    %v5476 = vadd.f32 %v5475, %v5369
    %v5477 = vrot.slane %v5476, 4
    %v5478 = vadd.f32 %v5476, %v5477
    %v5479 = vrot.slane %v5478, 2
    %v5480 = vadd.f32 %v5478, %v5479
    %v5481 = vrot.slane %v5480, 1
    %v5482 = vadd.f32 %v5480, %v5481
    %v5483 = vadd.f32 %v5443, %v5425
    %v5484 = vadd.f32 %v5456, %v5425
    %v5485 = vadd.f32 %v5469, %v5425
    %v5486 = vadd.f32 %v5482, %v5425
    %v5487 = vtanh.pop %v5427
    %v5488 = vtanh.pop %v5428
    %v5489 = vtanh.pop %v5429
    %v5490 = vtanh.pop %v5430
    %v5495 = vcombine.low %v5483, %v5484
    %v5496 = vcombine.low %v5485, %v5486
    %v5498 = vunpack.c.l.s4 1983009808
    %v5499 = vunpack.c.0.s8 %v5498
    %v5500 = vlaneseq
    %v5501 = vshrl.u32 %v5500, 7
    %v5502 = vsub.s32 %v5499, %v5501
    %v5503 = vrot.slane %v5495, %v5502
    %v5505 = vunpack.c.l.s4 1983009808
    %v5506 = vunpack.c.0.s8 %v5505
    %v5507 = vlaneseq
    %v5508 = vshrl.u32 %v5507, 7
    %v5509 = vsub.s32 %v5506, %v5508
    %v5510 = vrot.slane %v5496, %v5509
    %v5511 = vcombine.low %v5503, %v5510
    %v5512 = vrot.slane %v5511, 7
    %v5513 = vrot.slane %v5512, 2
    %v5515 = vsub.f32 %v2785, %v5513
    %v5516 = vsub.f32 0.0, %v5487
    %v5517 = vsub.f32 0.0, %v5488
    %v5518 = vsub.f32 0.0, %v5489
    %v5519 = vsub.f32 0.0, %v5490
    %v5520 = vmul.f32 %v5516, 1.442695
    %v5521 = vpow.pop %v5520
    %v5522 = vmul.f32 %v5517, 1.442695
    %v5523 = vpow.pop %v5522
    %v5524 = vmul.f32 %v5518, 1.442695
    %v5525 = vpow.pop %v5524
    %v5526 = vmul.f32 %v5519, 1.442695
    %v5527 = vpow.pop %v5526
    %v5532 = vcombine.low %v5521, %v5523
    %v5533 = vcombine.low %v5525, %v5527
    %v5535 = vunpack.c.l.s4 1983009808
    %v5536 = vunpack.c.0.s8 %v5535
    %v5537 = vlaneseq
    %v5538 = vshrl.u32 %v5537, 7
    %v5539 = vsub.s32 %v5536, %v5538
    %v5540 = vrot.slane %v5532, %v5539
    %v5542 = vunpack.c.l.s4 1983009808
    %v5543 = vunpack.c.0.s8 %v5542
    %v5544 = vlaneseq
    %v5545 = vshrl.u32 %v5544, 7
    %v5546 = vsub.s32 %v5543, %v5545
    %v5547 = vrot.slane %v5533, %v5546
    %v5548 = vcombine.low %v5540, %v5547
    %v5550 = vmul.f32 %v5515, %v5548
    %v5551 = vsub.f32 %v4168, %v5487
    %v5552 = vsub.f32 %v4169, %v5488
    %v5553 = vsub.f32 %v4170, %v5489
    %v5554 = vsub.f32 %v4171, %v5490
    %s5555 = scalar_lea.vmem %s1, 128
    %v5556 = vld [vmem:[%s5555] sm:$0xff]
    %v5557 = vld [vmem:[%s5555 + $0x8] sm:$0xff]
    %v5558 = vld [vmem:[%s5555 + $0x10] sm:$0xff]
    %v5559 = vld [vmem:[%s5555 + $0x18] sm:$0xff]
    %v5560 = vld [vmem:[%s5555 + $0x20] sm:$0xff]
    %v5561 = vld [vmem:[%s5555 + $0x28] sm:$0xff]
    %v5562 = vld [vmem:[%s5555 + $0x30] sm:$0xff]
    %v5563 = vld [vmem:[%s5555 + $0x38] sm:$0xff]
    %v5564 = vld [vmem:[%s5555 + $0x40] sm:$0xff]
    %v5565 = vld [vmem:[%s5555 + $0x48] sm:$0xff]
    %v5566 = vld [vmem:[%s5555 + $0x50] sm:$0xff]
    %v5567 = vld [vmem:[%s5555 + $0x58] sm:$0xff]
    %v5568 = vld [vmem:[%s5555 + $0x60] sm:$0xff]
    %v5569 = vld [vmem:[%s5555 + $0x68] sm:$0xff]
    %v5570 = vld [vmem:[%s5555 + $0x70] sm:$0xff]
    %v5571 = vld [vmem:[%s5555 + $0x78] sm:$0xff]
    %s5572 = scalar_lea.vmem %s2, 128
    %v5573 = vld [vmem:[%s5572] sm:$0xff]
    %v5574 = vld [vmem:[%s5572 + $0x8] sm:$0xff]
    %v5575 = vld [vmem:[%s5572 + $0x10] sm:$0xff]
    %v5576 = vld [vmem:[%s5572 + $0x18] sm:$0xff]
    %v5577 = vld [vmem:[%s5572 + $0x20] sm:$0xff]
    %v5578 = vld [vmem:[%s5572 + $0x28] sm:$0xff]
    %v5579 = vld [vmem:[%s5572 + $0x30] sm:$0xff]
    %v5580 = vld [vmem:[%s5572 + $0x38] sm:$0xff]
    %v5581 = vld [vmem:[%s5572 + $0x40] sm:$0xff]
    %v5582 = vld [vmem:[%s5572 + $0x48] sm:$0xff]
    %v5583 = vld [vmem:[%s5572 + $0x50] sm:$0xff]
    %v5584 = vld [vmem:[%s5572 + $0x58] sm:$0xff]
    %v5585 = vld [vmem:[%s5572 + $0x60] sm:$0xff]
    %v5586 = vld [vmem:[%s5572 + $0x68] sm:$0xff]
    %v5587 = vld [vmem:[%s5572 + $0x70] sm:$0xff]
    %v5588 = vld [vmem:[%s5572 + $0x78] sm:$0xff]
    %s5589 = scalar_lea.vmem %s4, 128
    %v5590 = vld [vmem:[%s5589] sm:$0xff]
    %v5591 = vld [vmem:[%s5589 + $0x8] sm:$0xff]
    %v5592 = vld [vmem:[%s5589 + $0x10] sm:$0xff]
    %v5593 = vld [vmem:[%s5589 + $0x18] sm:$0xff]
    %v5594 = vld [vmem:[%s5589 + $0x20] sm:$0xff]
    %v5595 = vld [vmem:[%s5589 + $0x28] sm:$0xff]
    %v5596 = vld [vmem:[%s5589 + $0x30] sm:$0xff]
    %v5597 = vld [vmem:[%s5589 + $0x38] sm:$0xff]
    %v5598 = vld [vmem:[%s5589 + $0x40] sm:$0xff]
    %v5599 = vld [vmem:[%s5589 + $0x48] sm:$0xff]
    %v5600 = vld [vmem:[%s5589 + $0x50] sm:$0xff]
    %v5601 = vld [vmem:[%s5589 + $0x58] sm:$0xff]
    %v5602 = vld [vmem:[%s5589 + $0x60] sm:$0xff]
    %v5603 = vld [vmem:[%s5589 + $0x68] sm:$0xff]
    %v5604 = vld [vmem:[%s5589 + $0x70] sm:$0xff]
    %v5605 = vld [vmem:[%s5589 + $0x78] sm:$0xff]
    %s5606 = scalar_lea.vmem %s5, 128
    %v5607 = vld [vmem:[%s5606] sm:$0xff]
    %v5608 = vld [vmem:[%s5606 + $0x8] sm:$0xff]
    %v5609 = vld [vmem:[%s5606 + $0x10] sm:$0xff]
    %v5610 = vld [vmem:[%s5606 + $0x18] sm:$0xff]
    %v5611 = vld [vmem:[%s5606 + $0x20] sm:$0xff]
    %v5612 = vld [vmem:[%s5606 + $0x28] sm:$0xff]
    %v5613 = vld [vmem:[%s5606 + $0x30] sm:$0xff]
    %v5614 = vld [vmem:[%s5606 + $0x38] sm:$0xff]
    %v5615 = vld [vmem:[%s5606 + $0x40] sm:$0xff]
    %v5616 = vld [vmem:[%s5606 + $0x48] sm:$0xff]
    %v5617 = vld [vmem:[%s5606 + $0x50] sm:$0xff]
    %v5618 = vld [vmem:[%s5606 + $0x58] sm:$0xff]
    %v5619 = vld [vmem:[%s5606 + $0x60] sm:$0xff]
    %v5620 = vld [vmem:[%s5606 + $0x68] sm:$0xff]
    %v5621 = vld [vmem:[%s5606 + $0x70] sm:$0xff]
    %v5622 = vld [vmem:[%s5606 + $0x78] sm:$0xff]
    %s5623 = scalar_lea.vmem %s6, 2
    %v5624 = vld [vmem:[%s5623] sm:$0x3]
    %5626 = vset.pattern.permute.xlu0 0
    %5627 = vperm.xlu0 %5626, %v5556
    %v5628 = vpop.permute.xlu0 %5627
    %5631 = vset.pattern.permute.xlu0 0
    %5632 = vperm.xlu0 %5631, %v5557
    %v5633 = vpop.permute.xlu0 %5632
    %5636 = vset.pattern.permute.xlu0 0
    %5637 = vperm.xlu0 %5636, %v5558
    %v5638 = vpop.permute.xlu0 %5637
    %5641 = vset.pattern.permute.xlu0 0
    %5642 = vperm.xlu0 %5641, %v5559
    %v5643 = vpop.permute.xlu0 %5642
    %5646 = vset.pattern.permute.xlu0 0
    %5647 = vperm.xlu0 %5646, %v5560
    %v5648 = vpop.permute.xlu0 %5647
    %5651 = vset.pattern.permute.xlu0 0
    %5652 = vperm.xlu0 %5651, %v5561
    %v5653 = vpop.permute.xlu0 %5652
    %5656 = vset.pattern.permute.xlu0 0
    %5657 = vperm.xlu0 %5656, %v5562
    %v5658 = vpop.permute.xlu0 %5657
    %5661 = vset.pattern.permute.xlu0 0
    %5662 = vperm.xlu0 %5661, %v5563
    %v5663 = vpop.permute.xlu0 %5662
    %5666 = vset.pattern.permute.xlu0 0
    %5667 = vperm.xlu0 %5666, %v5564
    %v5668 = vpop.permute.xlu0 %5667
    %5671 = vset.pattern.permute.xlu0 0
    %5672 = vperm.xlu0 %5671, %v5565
    %v5673 = vpop.permute.xlu0 %5672
    %5676 = vset.pattern.permute.xlu0 0
    %5677 = vperm.xlu0 %5676, %v5566
    %v5678 = vpop.permute.xlu0 %5677
    %5681 = vset.pattern.permute.xlu0 0
    %5682 = vperm.xlu0 %5681, %v5567
    %v5683 = vpop.permute.xlu0 %5682
    %5686 = vset.pattern.permute.xlu0 0
    %5687 = vperm.xlu0 %5686, %v5568
    %v5688 = vpop.permute.xlu0 %5687
    %5691 = vset.pattern.permute.xlu0 0
    %5692 = vperm.xlu0 %5691, %v5569
    %v5693 = vpop.permute.xlu0 %5692
    %5696 = vset.pattern.permute.xlu0 0
    %5697 = vperm.xlu0 %5696, %v5570
    %v5698 = vpop.permute.xlu0 %5697
    %5701 = vset.pattern.permute.xlu0 0
    %5702 = vperm.xlu0 %5701, %v5571
    %v5703 = vpop.permute.xlu0 %5702
    %v5706 = vlaneseq
    %v5707 = vshrl.u32 %v5706, 7
    %v5708 = vsub.s32 0, %v5707
    %v5709 = vrot.slane %v5550, %v5708
    %v5710 = vlaneseq
    %v5711 = vshrl.u32 %v5710, 7
    %v5712 = vsub.s32 2, %v5711
    %v5713 = vrot.slane %v5550, %v5712
    %v5714 = vlaneseq
    %v5715 = vshrl.u32 %v5714, 7
    %v5716 = vsub.s32 4, %v5715
    %v5717 = vrot.slane %v5550, %v5716
    %v5718 = vlaneseq
    %v5719 = vshrl.u32 %v5718, 7
    %v5720 = vsub.s32 6, %v5719
    %v5721 = vrot.slane %v5550, %v5720
    %v5726 = vlaneseq
    %v5727 = vshrl.u32 %v5726, 7
    %v5728 = vsub.s32 0, %v5727
    %v5729 = vrot.slane %v5709, %v5728
    %v5730 = vlaneseq
    %v5731 = vshrl.u32 %v5730, 7
    %v5732 = vsub.s32 0, %v5731
    %v5733 = vrot.slane %v5713, %v5732
    %v5734 = vlaneseq
    %v5735 = vshrl.u32 %v5734, 7
    %v5736 = vsub.s32 0, %v5735
    %v5737 = vrot.slane %v5717, %v5736
    %v5738 = vlaneseq
    %v5739 = vshrl.u32 %v5738, 7
    %v5740 = vsub.s32 0, %v5739
    %v5741 = vrot.slane %v5721, %v5740
    %v5742 = vmul.f32 %v5628, %v5729
    %v5743 = vmul.f32 %v5628, %v5733
    %v5744 = vmul.f32 %v5628, %v5737
    %v5745 = vmul.f32 %v5628, %v5741
    %v5746 = vmul.f32 %v5633, %v5729
    %v5747 = vmul.f32 %v5633, %v5733
    %v5748 = vmul.f32 %v5633, %v5737
    %v5749 = vmul.f32 %v5633, %v5741
    %v5750 = vmul.f32 %v5638, %v5729
    %v5751 = vmul.f32 %v5638, %v5733
    %v5752 = vmul.f32 %v5638, %v5737
    %v5753 = vmul.f32 %v5638, %v5741
    %v5754 = vmul.f32 %v5643, %v5729
    %v5755 = vmul.f32 %v5643, %v5733
    %v5756 = vmul.f32 %v5643, %v5737
    %v5757 = vmul.f32 %v5643, %v5741
    %v5758 = vmul.f32 %v5648, %v5729
    %v5759 = vmul.f32 %v5648, %v5733
    %v5760 = vmul.f32 %v5648, %v5737
    %v5761 = vmul.f32 %v5648, %v5741
    %v5762 = vmul.f32 %v5653, %v5729
    %v5763 = vmul.f32 %v5653, %v5733
    %v5764 = vmul.f32 %v5653, %v5737
    %v5765 = vmul.f32 %v5653, %v5741
    %v5766 = vmul.f32 %v5658, %v5729
    %v5767 = vmul.f32 %v5658, %v5733
    %v5768 = vmul.f32 %v5658, %v5737
    %v5769 = vmul.f32 %v5658, %v5741
    %v5770 = vmul.f32 %v5663, %v5729
    %v5771 = vmul.f32 %v5663, %v5733
    %v5772 = vmul.f32 %v5663, %v5737
    %v5773 = vmul.f32 %v5663, %v5741
    %v5774 = vmul.f32 %v5668, %v5729
    %v5775 = vmul.f32 %v5668, %v5733
    %v5776 = vmul.f32 %v5668, %v5737
    %v5777 = vmul.f32 %v5668, %v5741
    %v5778 = vmul.f32 %v5673, %v5729
    %v5779 = vmul.f32 %v5673, %v5733
    %v5780 = vmul.f32 %v5673, %v5737
    %v5781 = vmul.f32 %v5673, %v5741
    %v5782 = vmul.f32 %v5678, %v5729
    %v5783 = vmul.f32 %v5678, %v5733
    %v5784 = vmul.f32 %v5678, %v5737
    %v5785 = vmul.f32 %v5678, %v5741
    %v5786 = vmul.f32 %v5683, %v5729
    %v5787 = vmul.f32 %v5683, %v5733
    %v5788 = vmul.f32 %v5683, %v5737
    %v5789 = vmul.f32 %v5683, %v5741
    %v5790 = vmul.f32 %v5688, %v5729
    %v5791 = vmul.f32 %v5688, %v5733
    %v5792 = vmul.f32 %v5688, %v5737
    %v5793 = vmul.f32 %v5688, %v5741
    %v5794 = vmul.f32 %v5693, %v5729
    %v5795 = vmul.f32 %v5693, %v5733
    %v5796 = vmul.f32 %v5693, %v5737
    %v5797 = vmul.f32 %v5693, %v5741
    %v5798 = vmul.f32 %v5698, %v5729
    %v5799 = vmul.f32 %v5698, %v5733
    %v5800 = vmul.f32 %v5698, %v5737
    %v5801 = vmul.f32 %v5698, %v5741
    %v5802 = vmul.f32 %v5703, %v5729
    %v5803 = vmul.f32 %v5703, %v5733
    %v5804 = vmul.f32 %v5703, %v5737
    %v5805 = vmul.f32 %v5703, %v5741
    %5807 = vset.pattern.permute.xlu0 0
    %5808 = vperm.xlu0 %5807, %v5573
    %v5809 = vpop.permute.xlu0 %5808
    %5812 = vset.pattern.permute.xlu0 0
    %5813 = vperm.xlu0 %5812, %v5574
    %v5814 = vpop.permute.xlu0 %5813
    %5817 = vset.pattern.permute.xlu0 0
    %5818 = vperm.xlu0 %5817, %v5575
    %v5819 = vpop.permute.xlu0 %5818
    %5822 = vset.pattern.permute.xlu0 0
    %5823 = vperm.xlu0 %5822, %v5576
    %v5824 = vpop.permute.xlu0 %5823
    %5827 = vset.pattern.permute.xlu0 0
    %5828 = vperm.xlu0 %5827, %v5577
    %v5829 = vpop.permute.xlu0 %5828
    %5832 = vset.pattern.permute.xlu0 0
    %5833 = vperm.xlu0 %5832, %v5578
    %v5834 = vpop.permute.xlu0 %5833
    %5837 = vset.pattern.permute.xlu0 0
    %5838 = vperm.xlu0 %5837, %v5579
    %v5839 = vpop.permute.xlu0 %5838
    %5842 = vset.pattern.permute.xlu0 0
    %5843 = vperm.xlu0 %5842, %v5580
    %v5844 = vpop.permute.xlu0 %5843
    %5847 = vset.pattern.permute.xlu0 0
    %5848 = vperm.xlu0 %5847, %v5581
    %v5849 = vpop.permute.xlu0 %5848
    %5852 = vset.pattern.permute.xlu0 0
    %5853 = vperm.xlu0 %5852, %v5582
    %v5854 = vpop.permute.xlu0 %5853
    %5857 = vset.pattern.permute.xlu0 0
    %5858 = vperm.xlu0 %5857, %v5583
    %v5859 = vpop.permute.xlu0 %5858
    %5862 = vset.pattern.permute.xlu0 0
    %5863 = vperm.xlu0 %5862, %v5584
    %v5864 = vpop.permute.xlu0 %5863
    %5867 = vset.pattern.permute.xlu0 0
    %5868 = vperm.xlu0 %5867, %v5585
    %v5869 = vpop.permute.xlu0 %5868
    %5872 = vset.pattern.permute.xlu0 0
    %5873 = vperm.xlu0 %5872, %v5586
    %v5874 = vpop.permute.xlu0 %5873
    %5877 = vset.pattern.permute.xlu0 0
    %5878 = vperm.xlu0 %5877, %v5587
    %v5879 = vpop.permute.xlu0 %5878
    %5882 = vset.pattern.permute.xlu0 0
    %5883 = vperm.xlu0 %5882, %v5588
    %v5884 = vpop.permute.xlu0 %5883
    %v5886 = vadd.f32 %v5742, %v5809
    %v5887 = vadd.f32 %v5743, %v5809
    %v5888 = vadd.f32 %v5744, %v5809
    %v5889 = vadd.f32 %v5745, %v5809
    %v5890 = vadd.f32 %v5746, %v5814
    %v5891 = vadd.f32 %v5747, %v5814
    %v5892 = vadd.f32 %v5748, %v5814
    %v5893 = vadd.f32 %v5749, %v5814
    %v5894 = vadd.f32 %v5750, %v5819
    %v5895 = vadd.f32 %v5751, %v5819
    %v5896 = vadd.f32 %v5752, %v5819
    %v5897 = vadd.f32 %v5753, %v5819
    %v5898 = vadd.f32 %v5754, %v5824
    %v5899 = vadd.f32 %v5755, %v5824
    %v5900 = vadd.f32 %v5756, %v5824
    %v5901 = vadd.f32 %v5757, %v5824
    %v5902 = vadd.f32 %v5758, %v5829
    %v5903 = vadd.f32 %v5759, %v5829
    %v5904 = vadd.f32 %v5760, %v5829
    %v5905 = vadd.f32 %v5761, %v5829
    %v5906 = vadd.f32 %v5762, %v5834
    %v5907 = vadd.f32 %v5763, %v5834
    %v5908 = vadd.f32 %v5764, %v5834
    %v5909 = vadd.f32 %v5765, %v5834
    %v5910 = vadd.f32 %v5766, %v5839
    %v5911 = vadd.f32 %v5767, %v5839
    %v5912 = vadd.f32 %v5768, %v5839
    %v5913 = vadd.f32 %v5769, %v5839
    %v5914 = vadd.f32 %v5770, %v5844
    %v5915 = vadd.f32 %v5771, %v5844
    %v5916 = vadd.f32 %v5772, %v5844
    %v5917 = vadd.f32 %v5773, %v5844
    %v5918 = vadd.f32 %v5774, %v5849
    %v5919 = vadd.f32 %v5775, %v5849
    %v5920 = vadd.f32 %v5776, %v5849
    %v5921 = vadd.f32 %v5777, %v5849
    %v5922 = vadd.f32 %v5778, %v5854
    %v5923 = vadd.f32 %v5779, %v5854
    %v5924 = vadd.f32 %v5780, %v5854
    %v5925 = vadd.f32 %v5781, %v5854
    %v5926 = vadd.f32 %v5782, %v5859
    %v5927 = vadd.f32 %v5783, %v5859
    %v5928 = vadd.f32 %v5784, %v5859
    %v5929 = vadd.f32 %v5785, %v5859
    %v5930 = vadd.f32 %v5786, %v5864
    %v5931 = vadd.f32 %v5787, %v5864
    %v5932 = vadd.f32 %v5788, %v5864
    %v5933 = vadd.f32 %v5789, %v5864
    %v5934 = vadd.f32 %v5790, %v5869
    %v5935 = vadd.f32 %v5791, %v5869
    %v5936 = vadd.f32 %v5792, %v5869
    %v5937 = vadd.f32 %v5793, %v5869
    %v5938 = vadd.f32 %v5794, %v5874
    %v5939 = vadd.f32 %v5795, %v5874
    %v5940 = vadd.f32 %v5796, %v5874
    %v5941 = vadd.f32 %v5797, %v5874
    %v5942 = vadd.f32 %v5798, %v5879
    %v5943 = vadd.f32 %v5799, %v5879
    %v5944 = vadd.f32 %v5800, %v5879
    %v5945 = vadd.f32 %v5801, %v5879
    %v5946 = vadd.f32 %v5802, %v5884
    %v5947 = vadd.f32 %v5803, %v5884
    %v5948 = vadd.f32 %v5804, %v5884
    %v5949 = vadd.f32 %v5805, %v5884
    %v5950 = vmul.f32 %v5886, 0.01
    %v5951 = vmul.f32 %v5887, 0.01
    %v5952 = vmul.f32 %v5888, 0.01
    %v5953 = vmul.f32 %v5889, 0.01
    %v5954 = vmul.f32 %v5890, 0.01
    %v5955 = vmul.f32 %v5891, 0.01
    %v5956 = vmul.f32 %v5892, 0.01
    %v5957 = vmul.f32 %v5893, 0.01
    %v5958 = vmul.f32 %v5894, 0.01
    %v5959 = vmul.f32 %v5895, 0.01
    %v5960 = vmul.f32 %v5896, 0.01
    %v5961 = vmul.f32 %v5897, 0.01
    %v5962 = vmul.f32 %v5898, 0.01
    %v5963 = vmul.f32 %v5899, 0.01
    %v5964 = vmul.f32 %v5900, 0.01
    %v5965 = vmul.f32 %v5901, 0.01
    %v5966 = vmul.f32 %v5902, 0.01
    %v5967 = vmul.f32 %v5903, 0.01
    %v5968 = vmul.f32 %v5904, 0.01
    %v5969 = vmul.f32 %v5905, 0.01
    %v5970 = vmul.f32 %v5906, 0.01
    %v5971 = vmul.f32 %v5907, 0.01
    %v5972 = vmul.f32 %v5908, 0.01
    %v5973 = vmul.f32 %v5909, 0.01
    %v5974 = vmul.f32 %v5910, 0.01
    %v5975 = vmul.f32 %v5911, 0.01
    %v5976 = vmul.f32 %v5912, 0.01
    %v5977 = vmul.f32 %v5913, 0.01
    %v5978 = vmul.f32 %v5914, 0.01
    %v5979 = vmul.f32 %v5915, 0.01
    %v5980 = vmul.f32 %v5916, 0.01
    %v5981 = vmul.f32 %v5917, 0.01
    %v5982 = vmul.f32 %v5918, 0.01
    %v5983 = vmul.f32 %v5919, 0.01
    %v5984 = vmul.f32 %v5920, 0.01
    %v5985 = vmul.f32 %v5921, 0.01
    %v5986 = vmul.f32 %v5922, 0.01
    %v5987 = vmul.f32 %v5923, 0.01
    %v5988 = vmul.f32 %v5924, 0.01
    %v5989 = vmul.f32 %v5925, 0.01
    %v5990 = vmul.f32 %v5926, 0.01
    %v5991 = vmul.f32 %v5927, 0.01
    %v5992 = vmul.f32 %v5928, 0.01
    %v5993 = vmul.f32 %v5929, 0.01
    %v5994 = vmul.f32 %v5930, 0.01
    %v5995 = vmul.f32 %v5931, 0.01
    %v5996 = vmul.f32 %v5932, 0.01
    %v5997 = vmul.f32 %v5933, 0.01
    %v5998 = vmul.f32 %v5934, 0.01
    %v5999 = vmul.f32 %v5935, 0.01
    %v6000 = vmul.f32 %v5936, 0.01
    %v6001 = vmul.f32 %v5937, 0.01
    %v6002 = vmul.f32 %v5938, 0.01
    %v6003 = vmul.f32 %v5939, 0.01
    %v6004 = vmul.f32 %v5940, 0.01
    %v6005 = vmul.f32 %v5941, 0.01
    %v6006 = vmul.f32 %v5942, 0.01
    %v6007 = vmul.f32 %v5943, 0.01
    %v6008 = vmul.f32 %v5944, 0.01
    %v6009 = vmul.f32 %v5945, 0.01
    %v6010 = vmul.f32 %v5946, 0.01
    %v6011 = vmul.f32 %v5947, 0.01
    %v6012 = vmul.f32 %v5948, 0.01
    %v6013 = vmul.f32 %v5949, 0.01
    %v6014 = vmax.f32 %v5886, %v5950
    %v6015 = vmax.f32 %v5887, %v5951
    %v6016 = vmax.f32 %v5888, %v5952
    %v6017 = vmax.f32 %v5889, %v5953
    %v6018 = vmax.f32 %v5890, %v5954
    %v6019 = vmax.f32 %v5891, %v5955
    %v6020 = vmax.f32 %v5892, %v5956
    %v6021 = vmax.f32 %v5893, %v5957
    %v6022 = vmax.f32 %v5894, %v5958
    %v6023 = vmax.f32 %v5895, %v5959
    %v6024 = vmax.f32 %v5896, %v5960
    %v6025 = vmax.f32 %v5897, %v5961
    %v6026 = vmax.f32 %v5898, %v5962
    %v6027 = vmax.f32 %v5899, %v5963
    %v6028 = vmax.f32 %v5900, %v5964
    %v6029 = vmax.f32 %v5901, %v5965
    %v6030 = vmax.f32 %v5902, %v5966
    %v6031 = vmax.f32 %v5903, %v5967
    %v6032 = vmax.f32 %v5904, %v5968
    %v6033 = vmax.f32 %v5905, %v5969
    %v6034 = vmax.f32 %v5906, %v5970
    %v6035 = vmax.f32 %v5907, %v5971
    %v6036 = vmax.f32 %v5908, %v5972
    %v6037 = vmax.f32 %v5909, %v5973
    %v6038 = vmax.f32 %v5910, %v5974
    %v6039 = vmax.f32 %v5911, %v5975
    %v6040 = vmax.f32 %v5912, %v5976
    %v6041 = vmax.f32 %v5913, %v5977
    %v6042 = vmax.f32 %v5914, %v5978
    %v6043 = vmax.f32 %v5915, %v5979
    %v6044 = vmax.f32 %v5916, %v5980
    %v6045 = vmax.f32 %v5917, %v5981
    %v6046 = vmax.f32 %v5918, %v5982
    %v6047 = vmax.f32 %v5919, %v5983
    %v6048 = vmax.f32 %v5920, %v5984
    %v6049 = vmax.f32 %v5921, %v5985
    %v6050 = vmax.f32 %v5922, %v5986
    %v6051 = vmax.f32 %v5923, %v5987
    %v6052 = vmax.f32 %v5924, %v5988
    %v6053 = vmax.f32 %v5925, %v5989
    %v6054 = vmax.f32 %v5926, %v5990
    %v6055 = vmax.f32 %v5927, %v5991
    %v6056 = vmax.f32 %v5928, %v5992
    %v6057 = vmax.f32 %v5929, %v5993
    %v6058 = vmax.f32 %v5930, %v5994
    %v6059 = vmax.f32 %v5931, %v5995
    %v6060 = vmax.f32 %v5932, %v5996
    %v6061 = vmax.f32 %v5933, %v5997
    %v6062 = vmax.f32 %v5934, %v5998
    %v6063 = vmax.f32 %v5935, %v5999
    %v6064 = vmax.f32 %v5936, %v6000
    %v6065 = vmax.f32 %v5937, %v6001
    %v6066 = vmax.f32 %v5938, %v6002
    %v6067 = vmax.f32 %v5939, %v6003
    %v6068 = vmax.f32 %v5940, %v6004
    %v6069 = vmax.f32 %v5941, %v6005
    %v6070 = vmax.f32 %v5942, %v6006
    %v6071 = vmax.f32 %v5943, %v6007
    %v6072 = vmax.f32 %v5944, %v6008
    %v6073 = vmax.f32 %v5945, %v6009
    %v6074 = vmax.f32 %v5946, %v6010
    %v6075 = vmax.f32 %v5947, %v6011
    %v6076 = vmax.f32 %v5948, %v6012
    %v6077 = vmax.f32 %v5949, %v6013
    %s6078 = scalar_lea.vmem %s3, 64
    %v6079 = vld [vmem:[%s6078] sm:$0xf]
    %v6080 = vld [vmem:[%s6078 + $0x4] sm:$0xf]
    %v6081 = vld [vmem:[%s6078 + $0x8] sm:$0xf]
    %v6082 = vld [vmem:[%s6078 + $0xc] sm:$0xf]
    %v6083 = vld [vmem:[%s6078 + $0x10] sm:$0xf]
    %v6084 = vld [vmem:[%s6078 + $0x14] sm:$0xf]
    %v6085 = vld [vmem:[%s6078 + $0x18] sm:$0xf]
    %v6086 = vld [vmem:[%s6078 + $0x1c] sm:$0xf]
    %v6087 = vld [vmem:[%s6078 + $0x20] sm:$0xf]
    %v6088 = vld [vmem:[%s6078 + $0x24] sm:$0xf]
    %v6089 = vld [vmem:[%s6078 + $0x28] sm:$0xf]
    %v6090 = vld [vmem:[%s6078 + $0x2c] sm:$0xf]
    %v6091 = vld [vmem:[%s6078 + $0x30] sm:$0xf]
    %v6092 = vld [vmem:[%s6078 + $0x34] sm:$0xf]
    %v6093 = vld [vmem:[%s6078 + $0x38] sm:$0xf]
    %v6094 = vld [vmem:[%s6078 + $0x3c] sm:$0xf]
    %v6095 = vpack.c.bf16 %v6018, %v6014
    %v6096 = vpack.c.bf16 %v6019, %v6015
    %v6097 = vpack.c.bf16 %v6020, %v6016
    %v6098 = vpack.c.bf16 %v6021, %v6017
    %v6099 = vpack.c.bf16 %v6026, %v6022
    %v6100 = vpack.c.bf16 %v6027, %v6023
    %v6101 = vpack.c.bf16 %v6028, %v6024
    %v6102 = vpack.c.bf16 %v6029, %v6025
    %v6103 = vpack.c.bf16 %v6034, %v6030
    %v6104 = vpack.c.bf16 %v6035, %v6031
    %v6105 = vpack.c.bf16 %v6036, %v6032
    %v6106 = vpack.c.bf16 %v6037, %v6033
    %v6107 = vpack.c.bf16 %v6042, %v6038
    %v6108 = vpack.c.bf16 %v6043, %v6039
    %v6109 = vpack.c.bf16 %v6044, %v6040
    %v6110 = vpack.c.bf16 %v6045, %v6041
    %v6111 = vpack.c.bf16 %v6050, %v6046
    %v6112 = vpack.c.bf16 %v6051, %v6047
    %v6113 = vpack.c.bf16 %v6052, %v6048
    %v6114 = vpack.c.bf16 %v6053, %v6049
    %v6115 = vpack.c.bf16 %v6058, %v6054
    %v6116 = vpack.c.bf16 %v6059, %v6055
    %v6117 = vpack.c.bf16 %v6060, %v6056
    %v6118 = vpack.c.bf16 %v6061, %v6057
    %v6119 = vpack.c.bf16 %v6066, %v6062
    %v6120 = vpack.c.bf16 %v6067, %v6063
    %v6121 = vpack.c.bf16 %v6068, %v6064
    %v6122 = vpack.c.bf16 %v6069, %v6065
    %v6123 = vpack.c.bf16 %v6074, %v6070
    %v6124 = vpack.c.bf16 %v6075, %v6071
    %v6125 = vpack.c.bf16 %v6076, %v6072
    %v6126 = vpack.c.bf16 %v6077, %v6073
    %6128 = vset.pattern.permute.xlu0 0
    %6129 = vperm.xlu0 %6128, %v5590
    %v6130 = vpop.permute.xlu0 %6129
    %6133 = vset.pattern.permute.xlu0 0
    %6134 = vperm.xlu0 %6133, %v5591
    %v6135 = vpop.permute.xlu0 %6134
    %6138 = vset.pattern.permute.xlu0 0
    %6139 = vperm.xlu0 %6138, %v5592
    %v6140 = vpop.permute.xlu0 %6139
    %6143 = vset.pattern.permute.xlu0 0
    %6144 = vperm.xlu0 %6143, %v5593
    %v6145 = vpop.permute.xlu0 %6144
    %6148 = vset.pattern.permute.xlu0 0
    %6149 = vperm.xlu0 %6148, %v5594
    %v6150 = vpop.permute.xlu0 %6149
    %6153 = vset.pattern.permute.xlu0 0
    %6154 = vperm.xlu0 %6153, %v5595
    %v6155 = vpop.permute.xlu0 %6154
    %6158 = vset.pattern.permute.xlu0 0
    %6159 = vperm.xlu0 %6158, %v5596
    %v6160 = vpop.permute.xlu0 %6159
    %6163 = vset.pattern.permute.xlu0 0
    %6164 = vperm.xlu0 %6163, %v5597
    %v6165 = vpop.permute.xlu0 %6164
    %6168 = vset.pattern.permute.xlu0 0
    %6169 = vperm.xlu0 %6168, %v5598
    %v6170 = vpop.permute.xlu0 %6169
    %6173 = vset.pattern.permute.xlu0 0
    %6174 = vperm.xlu0 %6173, %v5599
    %v6175 = vpop.permute.xlu0 %6174
    %6178 = vset.pattern.permute.xlu0 0
    %6179 = vperm.xlu0 %6178, %v5600
    %v6180 = vpop.permute.xlu0 %6179
    %6183 = vset.pattern.permute.xlu0 0
    %6184 = vperm.xlu0 %6183, %v5601
    %v6185 = vpop.permute.xlu0 %6184
    %6188 = vset.pattern.permute.xlu0 0
    %6189 = vperm.xlu0 %6188, %v5602
    %v6190 = vpop.permute.xlu0 %6189
    %6193 = vset.pattern.permute.xlu0 0
    %6194 = vperm.xlu0 %6193, %v5603
    %v6195 = vpop.permute.xlu0 %6194
    %6198 = vset.pattern.permute.xlu0 0
    %6199 = vperm.xlu0 %6198, %v5604
    %v6200 = vpop.permute.xlu0 %6199
    %6203 = vset.pattern.permute.xlu0 0
    %6204 = vperm.xlu0 %6203, %v5605
    %v6205 = vpop.permute.xlu0 %6204
    %v6223 = vunpack.c.l.b16 %v6079
    %v6224 = vunpack.c.l.b16 %v6080
    %v6225 = vunpack.c.l.b16 %v6081
    %v6226 = vunpack.c.l.b16 %v6082
    %v6227 = vunpack.c.l.b16 %v6083
    %v6228 = vunpack.c.l.b16 %v6084
    %v6229 = vunpack.c.l.b16 %v6085
    %v6230 = vunpack.c.l.b16 %v6086
    %v6231 = vunpack.c.l.b16 %v6087
    %v6232 = vunpack.c.l.b16 %v6088
    %v6233 = vunpack.c.l.b16 %v6089
    %v6234 = vunpack.c.l.b16 %v6090
    %v6235 = vunpack.c.l.b16 %v6091
    %v6236 = vunpack.c.l.b16 %v6092
    %v6237 = vunpack.c.l.b16 %v6093
    %v6238 = vunpack.c.l.b16 %v6094
    %v6239 = vpack.c.b16 %v6224, %v6223
    %v6240 = vpack.c.b16 %v6226, %v6225
    %v6241 = vpack.c.b16 %v6228, %v6227
    %v6242 = vpack.c.b16 %v6230, %v6229
    %v6243 = vpack.c.b16 %v6232, %v6231
    %v6244 = vpack.c.b16 %v6234, %v6233
    %v6245 = vpack.c.b16 %v6236, %v6235
    %v6246 = vpack.c.b16 %v6238, %v6237
    %6255 = vmatprep.subr.bf16.mxu0 %v6124
    %6256 = vmatpush1.bf16.msra.mxu0 %v6123
    %6257 = vmatprep.subr.bf16.mxu0 %v6120
    %6258 = vmatpush1.bf16.msra.mxu0 %v6119
    %6259 = vmatprep.subr.bf16.mxu0 %v6116
    %6260 = vmatpush1.bf16.msra.mxu0 %v6115
    %6261 = vmatprep.subr.bf16.mxu0 %v6112
    %6262 = vmatpush1.bf16.msra.mxu0 %v6111
    %6263 = vmatprep.subr.bf16.mxu0 %v6108
    %6264 = vmatpush1.bf16.msra.mxu0 %v6107
    %6265 = vmatprep.subr.bf16.mxu0 %v6104
    %6266 = vmatpush1.bf16.msra.mxu0 %v6103
    %6267 = vmatprep.subr.bf16.mxu0 %v6100
    %6268 = vmatpush1.bf16.msra.mxu0 %v6099
    %6269 = vmatprep.subr.bf16.mxu0 %v6096
    %6270 = vmatpush1.bf16.msra.mxu0 %v6095
    %6271 = vmatprep.subr.bf16.mxu0 0
    %6272 = vmatpush2.bf16.msra.mxu0 0
    %6273 = vmatprep.subr.bf16.mxu0 0
    %6274 = vmatpush2.bf16.msra.mxu0 0
    %6275 = vmatprep.subr.bf16.mxu0 0
    %6276 = vmatpush2.bf16.msra.mxu0 0
    %6277 = vmatprep.subr.bf16.mxu0 0
    %6278 = vmatpush2.bf16.msra.mxu0 0
    %6279 = vmatprep.subr.bf16.mxu0 0
    %6280 = vmatpush2.bf16.msra.mxu0 0
    %6281 = vmatprep.subr.bf16.mxu0 0
    %6282 = vmatpush2.bf16.msra.mxu0 0
    %6283 = vmatprep.subr.bf16.mxu0 0
    %6284 = vmatpush2.bf16.msra.mxu0 0
    %6285 = vmatprep.subr.bf16.mxu0 0
    %6286 = vmatpush2.bf16.msra.mxu0 0
    %6287 = vmatprep.mubr.bf16.mxu0 0
    %6288 = vmatmul.mubr.bf16.gmra.mxu0 %v6239
    %v6289 = vpop.f32.mrf.mxu0
    %v6290 = vadd.f32 %v6130, %v6289
    %v6291 = vpop.f32.mrf.mxu0
    %v6292 = vadd.f32 %v6130, %v6291
    %v6293 = vpop.f32.mrf.mxu0
    %v6294 = vadd.f32 %v6135, %v6293
    %v6295 = vpop.f32.mrf.mxu0
    %v6296 = vadd.f32 %v6135, %v6295
    %6297 = vmatprep.mubr.bf16.mxu0 0
    %6298 = vmatmul.mubr.bf16.gmra.mxu0 %v6240
    %v6299 = vpop.f32.mrf.mxu0
    %v6300 = vadd.f32 %v6140, %v6299
    %v6301 = vpop.f32.mrf.mxu0
    %v6302 = vadd.f32 %v6140, %v6301
    %v6303 = vpop.f32.mrf.mxu0
    %v6304 = vadd.f32 %v6145, %v6303
    %v6305 = vpop.f32.mrf.mxu0
    %v6306 = vadd.f32 %v6145, %v6305
    %6307 = vmatprep.mubr.bf16.mxu0 0
    %6308 = vmatmul.mubr.bf16.gmra.mxu0 %v6241
    %v6309 = vpop.f32.mrf.mxu0
    %v6310 = vadd.f32 %v6150, %v6309
    %v6311 = vpop.f32.mrf.mxu0
    %v6312 = vadd.f32 %v6150, %v6311
    %v6313 = vpop.f32.mrf.mxu0
    %v6314 = vadd.f32 %v6155, %v6313
    %v6315 = vpop.f32.mrf.mxu0
    %v6316 = vadd.f32 %v6155, %v6315
    %6317 = vmatprep.mubr.bf16.mxu0 0
    %6318 = vmatmul.mubr.bf16.gmra.mxu0 %v6242
    %v6319 = vpop.f32.mrf.mxu0
    %v6320 = vadd.f32 %v6160, %v6319
    %v6321 = vpop.f32.mrf.mxu0
    %v6322 = vadd.f32 %v6160, %v6321
    %v6323 = vpop.f32.mrf.mxu0
    %v6324 = vadd.f32 %v6165, %v6323
    %v6325 = vpop.f32.mrf.mxu0
    %v6326 = vadd.f32 %v6165, %v6325
    %6327 = vmatprep.mubr.bf16.mxu0 0
    %6328 = vmatmul.mubr.bf16.gmra.mxu0 %v6243
    %v6329 = vpop.f32.mrf.mxu0
    %v6330 = vadd.f32 %v6170, %v6329
    %v6331 = vpop.f32.mrf.mxu0
    %v6332 = vadd.f32 %v6170, %v6331
    %v6333 = vpop.f32.mrf.mxu0
    %v6334 = vadd.f32 %v6175, %v6333
    %v6335 = vpop.f32.mrf.mxu0
    %v6336 = vadd.f32 %v6175, %v6335
    %6337 = vmatprep.mubr.bf16.mxu0 0
    %6338 = vmatmul.mubr.bf16.gmra.mxu0 %v6244
    %v6339 = vpop.f32.mrf.mxu0
    %v6340 = vadd.f32 %v6180, %v6339
    %v6341 = vpop.f32.mrf.mxu0
    %v6342 = vadd.f32 %v6180, %v6341
    %v6343 = vpop.f32.mrf.mxu0
    %v6344 = vadd.f32 %v6185, %v6343
    %v6345 = vpop.f32.mrf.mxu0
    %v6346 = vadd.f32 %v6185, %v6345
    %6347 = vmatprep.mubr.bf16.mxu0 0
    %6348 = vmatmul.mubr.bf16.gmra.mxu0 %v6245
    %v6349 = vpop.f32.mrf.mxu0
    %v6350 = vadd.f32 %v6190, %v6349
    %v6351 = vpop.f32.mrf.mxu0
    %v6352 = vadd.f32 %v6190, %v6351
    %v6353 = vpop.f32.mrf.mxu0
    %v6354 = vadd.f32 %v6195, %v6353
    %v6355 = vpop.f32.mrf.mxu0
    %v6356 = vadd.f32 %v6195, %v6355
    %6357 = vmatprep.mubr.bf16.mxu0 0
    %6358 = vmatmul.mubr.bf16.gmra.mxu0 %v6246
    %v6359 = vpop.f32.mrf.mxu0
    %v6360 = vadd.f32 %v6200, %v6359
    %v6361 = vpop.f32.mrf.mxu0
    %v6362 = vadd.f32 %v6200, %v6361
    %v6363 = vpop.f32.mrf.mxu0
    %v6364 = vadd.f32 %v6205, %v6363
    %v6365 = vpop.f32.mrf.mxu0
    %v6366 = vadd.f32 %v6205, %v6365
    %6367 = vdwg.mxu0
    %6368 = vmatprep.subr.bf16.mxu0 %v6126
    %6369 = vmatpush1.bf16.msra.mxu0 %v6125
    %6370 = vmatprep.subr.bf16.mxu0 %v6122
    %6371 = vmatpush1.bf16.msra.mxu0 %v6121
    %6372 = vmatprep.subr.bf16.mxu0 %v6118
    %6373 = vmatpush1.bf16.msra.mxu0 %v6117
    %6374 = vmatprep.subr.bf16.mxu0 %v6114
    %6375 = vmatpush1.bf16.msra.mxu0 %v6113
    %6376 = vmatprep.subr.bf16.mxu0 %v6110
    %6377 = vmatpush1.bf16.msra.mxu0 %v6109
    %6378 = vmatprep.subr.bf16.mxu0 %v6106
    %6379 = vmatpush1.bf16.msra.mxu0 %v6105
    %6380 = vmatprep.subr.bf16.mxu0 %v6102
    %6381 = vmatpush1.bf16.msra.mxu0 %v6101
    %6382 = vmatprep.subr.bf16.mxu0 %v6098
    %6383 = vmatpush1.bf16.msra.mxu0 %v6097
    %6384 = vmatprep.subr.bf16.mxu0 0
    %6385 = vmatpush2.bf16.msra.mxu0 0
    %6386 = vmatprep.subr.bf16.mxu0 0
    %6387 = vmatpush2.bf16.msra.mxu0 0
    %6388 = vmatprep.subr.bf16.mxu0 0
    %6389 = vmatpush2.bf16.msra.mxu0 0
    %6390 = vmatprep.subr.bf16.mxu0 0
    %6391 = vmatpush2.bf16.msra.mxu0 0
    %6392 = vmatprep.subr.bf16.mxu0 0
    %6393 = vmatpush2.bf16.msra.mxu0 0
    %6394 = vmatprep.subr.bf16.mxu0 0
    %6395 = vmatpush2.bf16.msra.mxu0 0
    %6396 = vmatprep.subr.bf16.mxu0 0
    %6397 = vmatpush2.bf16.msra.mxu0 0
    %6398 = vmatprep.subr.bf16.mxu0 0
    %6399 = vmatpush2.bf16.msra.mxu0 0
    %6400 = vmatprep.mubr.bf16.mxu0 0
    %6401 = vmatmul.mubr.bf16.gmra.mxu0 %v6239
    %v6402 = vpop.f32.mrf.mxu0
    %v6403 = vadd.f32 %v6130, %v6402
    %v6404 = vpop.f32.mrf.mxu0
    %v6405 = vadd.f32 %v6130, %v6404
    %v6406 = vpop.f32.mrf.mxu0
    %v6407 = vadd.f32 %v6135, %v6406
    %v6408 = vpop.f32.mrf.mxu0
    %v6409 = vadd.f32 %v6135, %v6408
    %6410 = vmatprep.mubr.bf16.mxu0 0
    %6411 = vmatmul.mubr.bf16.gmra.mxu0 %v6240
    %v6412 = vpop.f32.mrf.mxu0
    %v6413 = vadd.f32 %v6140, %v6412
    %v6414 = vpop.f32.mrf.mxu0
    %v6415 = vadd.f32 %v6140, %v6414
    %v6416 = vpop.f32.mrf.mxu0
    %v6417 = vadd.f32 %v6145, %v6416
    %v6418 = vpop.f32.mrf.mxu0
    %v6419 = vadd.f32 %v6145, %v6418
    %6420 = vmatprep.mubr.bf16.mxu0 0
    %6421 = vmatmul.mubr.bf16.gmra.mxu0 %v6241
    %v6422 = vpop.f32.mrf.mxu0
    %v6423 = vadd.f32 %v6150, %v6422
    %v6424 = vpop.f32.mrf.mxu0
    %v6425 = vadd.f32 %v6150, %v6424
    %v6426 = vpop.f32.mrf.mxu0
    %v6427 = vadd.f32 %v6155, %v6426
    %v6428 = vpop.f32.mrf.mxu0
    %v6429 = vadd.f32 %v6155, %v6428
    %6430 = vmatprep.mubr.bf16.mxu0 0
    %6431 = vmatmul.mubr.bf16.gmra.mxu0 %v6242
    %v6432 = vpop.f32.mrf.mxu0
    %v6433 = vadd.f32 %v6160, %v6432
    %v6434 = vpop.f32.mrf.mxu0
    %v6435 = vadd.f32 %v6160, %v6434
    %v6436 = vpop.f32.mrf.mxu0
    %v6437 = vadd.f32 %v6165, %v6436
    %v6438 = vpop.f32.mrf.mxu0
    %v6439 = vadd.f32 %v6165, %v6438
    %6440 = vmatprep.mubr.bf16.mxu0 0
    %6441 = vmatmul.mubr.bf16.gmra.mxu0 %v6243
    %v6442 = vpop.f32.mrf.mxu0
    %v6443 = vadd.f32 %v6170, %v6442
    %v6444 = vpop.f32.mrf.mxu0
    %v6445 = vadd.f32 %v6170, %v6444
    %v6446 = vpop.f32.mrf.mxu0
    %v6447 = vadd.f32 %v6175, %v6446
    %v6448 = vpop.f32.mrf.mxu0
    %v6449 = vadd.f32 %v6175, %v6448
    %6450 = vmatprep.mubr.bf16.mxu0 0
    %6451 = vmatmul.mubr.bf16.gmra.mxu0 %v6244
    %v6452 = vpop.f32.mrf.mxu0
    %v6453 = vadd.f32 %v6180, %v6452
    %v6454 = vpop.f32.mrf.mxu0
    %v6455 = vadd.f32 %v6180, %v6454
    %v6456 = vpop.f32.mrf.mxu0
    %v6457 = vadd.f32 %v6185, %v6456
    %v6458 = vpop.f32.mrf.mxu0
    %v6459 = vadd.f32 %v6185, %v6458
    %6460 = vmatprep.mubr.bf16.mxu0 0
    %6461 = vmatmul.mubr.bf16.gmra.mxu0 %v6245
    %v6462 = vpop.f32.mrf.mxu0
    %v6463 = vadd.f32 %v6190, %v6462
    %v6464 = vpop.f32.mrf.mxu0
    %v6465 = vadd.f32 %v6190, %v6464
    %v6466 = vpop.f32.mrf.mxu0
    %v6467 = vadd.f32 %v6195, %v6466
    %v6468 = vpop.f32.mrf.mxu0
    %v6469 = vadd.f32 %v6195, %v6468
    %6470 = vmatprep.mubr.bf16.mxu0 0
    %6471 = vmatmul.mubr.bf16.gmra.mxu0 %v6246
    %v6472 = vpop.f32.mrf.mxu0
    %v6473 = vadd.f32 %v6200, %v6472
    %v6474 = vpop.f32.mrf.mxu0
    %v6475 = vadd.f32 %v6200, %v6474
    %v6476 = vpop.f32.mrf.mxu0
    %v6477 = vadd.f32 %v6205, %v6476
    %v6478 = vpop.f32.mrf.mxu0
    %v6479 = vadd.f32 %v6205, %v6478
    %6480 = vdwg.mxu0
    %v6481 = vmul.f32 %v6290, 0.01
    %v6482 = vmul.f32 %v6292, 0.01
    %v6483 = vmul.f32 %v6403, 0.01
    %v6484 = vmul.f32 %v6405, 0.01
    %v6485 = vmul.f32 %v6294, 0.01
    %v6486 = vmul.f32 %v6296, 0.01
    %v6487 = vmul.f32 %v6407, 0.01
    %v6488 = vmul.f32 %v6409, 0.01
    %v6489 = vmul.f32 %v6300, 0.01
    %v6490 = vmul.f32 %v6302, 0.01
    %v6491 = vmul.f32 %v6413, 0.01
    %v6492 = vmul.f32 %v6415, 0.01
    %v6493 = vmul.f32 %v6304, 0.01
    %v6494 = vmul.f32 %v6306, 0.01
    %v6495 = vmul.f32 %v6417, 0.01
    %v6496 = vmul.f32 %v6419, 0.01
    %v6497 = vmul.f32 %v6310, 0.01
    %v6498 = vmul.f32 %v6312, 0.01
    %v6499 = vmul.f32 %v6423, 0.01
    %v6500 = vmul.f32 %v6425, 0.01
    %v6501 = vmul.f32 %v6314, 0.01
    %v6502 = vmul.f32 %v6316, 0.01
    %v6503 = vmul.f32 %v6427, 0.01
    %v6504 = vmul.f32 %v6429, 0.01
    %v6505 = vmul.f32 %v6320, 0.01
    %v6506 = vmul.f32 %v6322, 0.01
    %v6507 = vmul.f32 %v6433, 0.01
    %v6508 = vmul.f32 %v6435, 0.01
    %v6509 = vmul.f32 %v6324, 0.01
    %v6510 = vmul.f32 %v6326, 0.01
    %v6511 = vmul.f32 %v6437, 0.01
    %v6512 = vmul.f32 %v6439, 0.01
    %v6513 = vmul.f32 %v6330, 0.01
    %v6514 = vmul.f32 %v6332, 0.01
    %v6515 = vmul.f32 %v6443, 0.01
    %v6516 = vmul.f32 %v6445, 0.01
    %v6517 = vmul.f32 %v6334, 0.01
    %v6518 = vmul.f32 %v6336, 0.01
    %v6519 = vmul.f32 %v6447, 0.01
    %v6520 = vmul.f32 %v6449, 0.01
    %v6521 = vmul.f32 %v6340, 0.01
    %v6522 = vmul.f32 %v6342, 0.01
    %v6523 = vmul.f32 %v6453, 0.01
    %v6524 = vmul.f32 %v6455, 0.01
    %v6525 = vmul.f32 %v6344, 0.01
    %v6526 = vmul.f32 %v6346, 0.01
    %v6527 = vmul.f32 %v6457, 0.01
    %v6528 = vmul.f32 %v6459, 0.01
    %v6529 = vmul.f32 %v6350, 0.01
    %v6530 = vmul.f32 %v6352, 0.01
    %v6531 = vmul.f32 %v6463, 0.01
    %v6532 = vmul.f32 %v6465, 0.01
    %v6533 = vmul.f32 %v6354, 0.01
    %v6534 = vmul.f32 %v6356, 0.01
    %v6535 = vmul.f32 %v6467, 0.01
    %v6536 = vmul.f32 %v6469, 0.01
    %v6537 = vmul.f32 %v6360, 0.01
    %v6538 = vmul.f32 %v6362, 0.01
    %v6539 = vmul.f32 %v6473, 0.01
    %v6540 = vmul.f32 %v6475, 0.01
    %v6541 = vmul.f32 %v6364, 0.01
    %v6542 = vmul.f32 %v6366, 0.01
    %v6543 = vmul.f32 %v6477, 0.01
    %v6544 = vmul.f32 %v6479, 0.01
    %v6545 = vmax.f32 %v6290, %v6481
    %v6546 = vmax.f32 %v6292, %v6482
    %v6547 = vmax.f32 %v6403, %v6483
    %v6548 = vmax.f32 %v6405, %v6484
    %v6549 = vmax.f32 %v6294, %v6485
    %v6550 = vmax.f32 %v6296, %v6486
    %v6551 = vmax.f32 %v6407, %v6487
    %v6552 = vmax.f32 %v6409, %v6488
    %v6553 = vmax.f32 %v6300, %v6489
    %v6554 = vmax.f32 %v6302, %v6490
    %v6555 = vmax.f32 %v6413, %v6491
    %v6556 = vmax.f32 %v6415, %v6492
    %v6557 = vmax.f32 %v6304, %v6493
    %v6558 = vmax.f32 %v6306, %v6494
    %v6559 = vmax.f32 %v6417, %v6495
    %v6560 = vmax.f32 %v6419, %v6496
    %v6561 = vmax.f32 %v6310, %v6497
    %v6562 = vmax.f32 %v6312, %v6498
    %v6563 = vmax.f32 %v6423, %v6499
    %v6564 = vmax.f32 %v6425, %v6500
    %v6565 = vmax.f32 %v6314, %v6501
    %v6566 = vmax.f32 %v6316, %v6502
    %v6567 = vmax.f32 %v6427, %v6503
    %v6568 = vmax.f32 %v6429, %v6504
    %v6569 = vmax.f32 %v6320, %v6505
    %v6570 = vmax.f32 %v6322, %v6506
    %v6571 = vmax.f32 %v6433, %v6507
    %v6572 = vmax.f32 %v6435, %v6508
    %v6573 = vmax.f32 %v6324, %v6509
    %v6574 = vmax.f32 %v6326, %v6510
    %v6575 = vmax.f32 %v6437, %v6511
    %v6576 = vmax.f32 %v6439, %v6512
    %v6577 = vmax.f32 %v6330, %v6513
    %v6578 = vmax.f32 %v6332, %v6514
    %v6579 = vmax.f32 %v6443, %v6515
    %v6580 = vmax.f32 %v6445, %v6516
    %v6581 = vmax.f32 %v6334, %v6517
    %v6582 = vmax.f32 %v6336, %v6518
    %v6583 = vmax.f32 %v6447, %v6519
    %v6584 = vmax.f32 %v6449, %v6520
    %v6585 = vmax.f32 %v6340, %v6521
    %v6586 = vmax.f32 %v6342, %v6522
    %v6587 = vmax.f32 %v6453, %v6523
    %v6588 = vmax.f32 %v6455, %v6524
    %v6589 = vmax.f32 %v6344, %v6525
    %v6590 = vmax.f32 %v6346, %v6526
    %v6591 = vmax.f32 %v6457, %v6527
    %v6592 = vmax.f32 %v6459, %v6528
    %v6593 = vmax.f32 %v6350, %v6529
    %v6594 = vmax.f32 %v6352, %v6530
    %v6595 = vmax.f32 %v6463, %v6531
    %v6596 = vmax.f32 %v6465, %v6532
    %v6597 = vmax.f32 %v6354, %v6533
    %v6598 = vmax.f32 %v6356, %v6534
    %v6599 = vmax.f32 %v6467, %v6535
    %v6600 = vmax.f32 %v6469, %v6536
    %v6601 = vmax.f32 %v6360, %v6537
    %v6602 = vmax.f32 %v6362, %v6538
    %v6603 = vmax.f32 %v6473, %v6539
    %v6604 = vmax.f32 %v6475, %v6540
    %v6605 = vmax.f32 %v6364, %v6541
    %v6606 = vmax.f32 %v6366, %v6542
    %v6607 = vmax.f32 %v6477, %v6543
    %v6608 = vmax.f32 %v6479, %v6544
    %6610 = vset.pattern.permute.xlu0 0
    %6611 = vperm.xlu0 %6610, %v5607
    %v6612 = vpop.permute.xlu0 %6611
    %6615 = vset.pattern.permute.xlu0 0
    %6616 = vperm.xlu0 %6615, %v5608
    %v6617 = vpop.permute.xlu0 %6616
    %6620 = vset.pattern.permute.xlu0 0
    %6621 = vperm.xlu0 %6620, %v5609
    %v6622 = vpop.permute.xlu0 %6621
    %6625 = vset.pattern.permute.xlu0 0
    %6626 = vperm.xlu0 %6625, %v5610
    %v6627 = vpop.permute.xlu0 %6626
    %6630 = vset.pattern.permute.xlu0 0
    %6631 = vperm.xlu0 %6630, %v5611
    %v6632 = vpop.permute.xlu0 %6631
    %6635 = vset.pattern.permute.xlu0 0
    %6636 = vperm.xlu0 %6635, %v5612
    %v6637 = vpop.permute.xlu0 %6636
    %6640 = vset.pattern.permute.xlu0 0
    %6641 = vperm.xlu0 %6640, %v5613
    %v6642 = vpop.permute.xlu0 %6641
    %6645 = vset.pattern.permute.xlu0 0
    %6646 = vperm.xlu0 %6645, %v5614
    %v6647 = vpop.permute.xlu0 %6646
    %6650 = vset.pattern.permute.xlu0 0
    %6651 = vperm.xlu0 %6650, %v5615
    %v6652 = vpop.permute.xlu0 %6651
    %6655 = vset.pattern.permute.xlu0 0
    %6656 = vperm.xlu0 %6655, %v5616
    %v6657 = vpop.permute.xlu0 %6656
    %6660 = vset.pattern.permute.xlu0 0
    %6661 = vperm.xlu0 %6660, %v5617
    %v6662 = vpop.permute.xlu0 %6661
    %6665 = vset.pattern.permute.xlu0 0
    %6666 = vperm.xlu0 %6665, %v5618
    %v6667 = vpop.permute.xlu0 %6666
    %6670 = vset.pattern.permute.xlu0 0
    %6671 = vperm.xlu0 %6670, %v5619
    %v6672 = vpop.permute.xlu0 %6671
    %6675 = vset.pattern.permute.xlu0 0
    %6676 = vperm.xlu0 %6675, %v5620
    %v6677 = vpop.permute.xlu0 %6676
    %6680 = vset.pattern.permute.xlu0 0
    %6681 = vperm.xlu0 %6680, %v5621
    %v6682 = vpop.permute.xlu0 %6681
    %6685 = vset.pattern.permute.xlu0 0
    %6686 = vperm.xlu0 %6685, %v5622
    %v6687 = vpop.permute.xlu0 %6686
    %v6689 = vmul.f32 %v6545, %v6612
    %v6690 = vmul.f32 %v6546, %v6612
    %v6691 = vmul.f32 %v6547, %v6612
    %v6692 = vmul.f32 %v6548, %v6612
    %v6693 = vmul.f32 %v6549, %v6617
    %v6694 = vmul.f32 %v6550, %v6617
    %v6695 = vmul.f32 %v6551, %v6617
    %v6696 = vmul.f32 %v6552, %v6617
    %v6697 = vmul.f32 %v6553, %v6622
    %v6698 = vmul.f32 %v6554, %v6622
    %v6699 = vmul.f32 %v6555, %v6622
    %v6700 = vmul.f32 %v6556, %v6622
    %v6701 = vmul.f32 %v6557, %v6627
    %v6702 = vmul.f32 %v6558, %v6627
    %v6703 = vmul.f32 %v6559, %v6627
    %v6704 = vmul.f32 %v6560, %v6627
    %v6705 = vmul.f32 %v6561, %v6632
    %v6706 = vmul.f32 %v6562, %v6632
    %v6707 = vmul.f32 %v6563, %v6632
    %v6708 = vmul.f32 %v6564, %v6632
    %v6709 = vmul.f32 %v6565, %v6637
    %v6710 = vmul.f32 %v6566, %v6637
    %v6711 = vmul.f32 %v6567, %v6637
    %v6712 = vmul.f32 %v6568, %v6637
    %v6713 = vmul.f32 %v6569, %v6642
    %v6714 = vmul.f32 %v6570, %v6642
    %v6715 = vmul.f32 %v6571, %v6642
    %v6716 = vmul.f32 %v6572, %v6642
    %v6717 = vmul.f32 %v6573, %v6647
    %v6718 = vmul.f32 %v6574, %v6647
    %v6719 = vmul.f32 %v6575, %v6647
    %v6720 = vmul.f32 %v6576, %v6647
    %v6721 = vmul.f32 %v6577, %v6652
    %v6722 = vmul.f32 %v6578, %v6652
    %v6723 = vmul.f32 %v6579, %v6652
    %v6724 = vmul.f32 %v6580, %v6652
    %v6725 = vmul.f32 %v6581, %v6657
    %v6726 = vmul.f32 %v6582, %v6657
    %v6727 = vmul.f32 %v6583, %v6657
    %v6728 = vmul.f32 %v6584, %v6657
    %v6729 = vmul.f32 %v6585, %v6662
    %v6730 = vmul.f32 %v6586, %v6662
    %v6731 = vmul.f32 %v6587, %v6662
    %v6732 = vmul.f32 %v6588, %v6662
    %v6733 = vmul.f32 %v6589, %v6667
    %v6734 = vmul.f32 %v6590, %v6667
    %v6735 = vmul.f32 %v6591, %v6667
    %v6736 = vmul.f32 %v6592, %v6667
    %v6737 = vmul.f32 %v6593, %v6672
    %v6738 = vmul.f32 %v6594, %v6672
    %v6739 = vmul.f32 %v6595, %v6672
    %v6740 = vmul.f32 %v6596, %v6672
    %v6741 = vmul.f32 %v6597, %v6677
    %v6742 = vmul.f32 %v6598, %v6677
    %v6743 = vmul.f32 %v6599, %v6677
    %v6744 = vmul.f32 %v6600, %v6677
    %v6745 = vmul.f32 %v6601, %v6682
    %v6746 = vmul.f32 %v6602, %v6682
    %v6747 = vmul.f32 %v6603, %v6682
    %v6748 = vmul.f32 %v6604, %v6682
    %v6749 = vmul.f32 %v6605, %v6687
    %v6750 = vmul.f32 %v6606, %v6687
    %v6751 = vmul.f32 %v6607, %v6687
    %v6752 = vmul.f32 %v6608, %v6687
    %v6753 = vadd.f32 %v6689, %v6693
    %v6754 = vadd.f32 %v6753, %v6697
    %v6755 = vadd.f32 %v6754, %v6701
    %v6756 = vadd.f32 %v6755, %v6705
    %v6757 = vadd.f32 %v6756, %v6709
    %v6758 = vadd.f32 %v6757, %v6713
    %v6759 = vadd.f32 %v6758, %v6717
    %v6760 = vrot.slane %v6759, 4
    %v6761 = vadd.f32 %v6759, %v6760
    %v6762 = vrot.slane %v6761, 2
    %v6763 = vadd.f32 %v6761, %v6762
    %v6764 = vrot.slane %v6763, 1
    %v6765 = vadd.f32 %v6763, %v6764
    %v6766 = vadd.f32 %v6690, %v6694
    %v6767 = vadd.f32 %v6766, %v6698
    %v6768 = vadd.f32 %v6767, %v6702
    %v6769 = vadd.f32 %v6768, %v6706
    %v6770 = vadd.f32 %v6769, %v6710
    %v6771 = vadd.f32 %v6770, %v6714
    %v6772 = vadd.f32 %v6771, %v6718
    %v6773 = vrot.slane %v6772, 4
    %v6774 = vadd.f32 %v6772, %v6773
    %v6775 = vrot.slane %v6774, 2
    %v6776 = vadd.f32 %v6774, %v6775
    %v6777 = vrot.slane %v6776, 1
    %v6778 = vadd.f32 %v6776, %v6777
    %v6779 = vadd.f32 %v6691, %v6695
    %v6780 = vadd.f32 %v6779, %v6699
    %v6781 = vadd.f32 %v6780, %v6703
    %v6782 = vadd.f32 %v6781, %v6707
    %v6783 = vadd.f32 %v6782, %v6711
    %v6784 = vadd.f32 %v6783, %v6715
    %v6785 = vadd.f32 %v6784, %v6719
    %v6786 = vrot.slane %v6785, 4
    %v6787 = vadd.f32 %v6785, %v6786
    %v6788 = vrot.slane %v6787, 2
    %v6789 = vadd.f32 %v6787, %v6788
    %v6790 = vrot.slane %v6789, 1
    %v6791 = vadd.f32 %v6789, %v6790
    %v6792 = vadd.f32 %v6692, %v6696
    %v6793 = vadd.f32 %v6792, %v6700
    %v6794 = vadd.f32 %v6793, %v6704
    %v6795 = vadd.f32 %v6794, %v6708
    %v6796 = vadd.f32 %v6795, %v6712
    %v6797 = vadd.f32 %v6796, %v6716
    %v6798 = vadd.f32 %v6797, %v6720
    %v6799 = vrot.slane %v6798, 4
    %v6800 = vadd.f32 %v6798, %v6799
    %v6801 = vrot.slane %v6800, 2
    %v6802 = vadd.f32 %v6800, %v6801
    %v6803 = vrot.slane %v6802, 1
    %v6804 = vadd.f32 %v6802, %v6803
    %6806 = vset.pattern.permute.xlu0 0
    %6807 = vperm.xlu0 %6806, %v5624
    %v6808 = vpop.permute.xlu0 %6807
    %v6810 = vadd.f32 %v6765, %v6808
    %v6811 = vadd.f32 %v6778, %v6808
    %v6812 = vadd.f32 %v6791, %v6808
    %v6813 = vadd.f32 %v6804, %v6808
    %v6814 = vadd.f32 %v6721, %v6725
    %v6815 = vadd.f32 %v6814, %v6729
    %v6816 = vadd.f32 %v6815, %v6733
    %v6817 = vadd.f32 %v6816, %v6737
    %v6818 = vadd.f32 %v6817, %v6741
    %v6819 = vadd.f32 %v6818, %v6745
    %v6820 = vadd.f32 %v6819, %v6749
    %v6821 = vrot.slane %v6820, 4
    %v6822 = vadd.f32 %v6820, %v6821
    %v6823 = vrot.slane %v6822, 2
    %v6824 = vadd.f32 %v6822, %v6823
    %v6825 = vrot.slane %v6824, 1
    %v6826 = vadd.f32 %v6824, %v6825
    %v6827 = vadd.f32 %v6722, %v6726
    %v6828 = vadd.f32 %v6827, %v6730
    %v6829 = vadd.f32 %v6828, %v6734
    %v6830 = vadd.f32 %v6829, %v6738
    %v6831 = vadd.f32 %v6830, %v6742
    %v6832 = vadd.f32 %v6831, %v6746
    %v6833 = vadd.f32 %v6832, %v6750
    %v6834 = vrot.slane %v6833, 4
    %v6835 = vadd.f32 %v6833, %v6834
    %v6836 = vrot.slane %v6835, 2
    %v6837 = vadd.f32 %v6835, %v6836
    %v6838 = vrot.slane %v6837, 1
    %v6839 = vadd.f32 %v6837, %v6838
    %v6840 = vadd.f32 %v6723, %v6727
    %v6841 = vadd.f32 %v6840, %v6731
    %v6842 = vadd.f32 %v6841, %v6735
    %v6843 = vadd.f32 %v6842, %v6739
    %v6844 = vadd.f32 %v6843, %v6743
    %v6845 = vadd.f32 %v6844, %v6747
    %v6846 = vadd.f32 %v6845, %v6751
    %v6847 = vrot.slane %v6846, 4
    %v6848 = vadd.f32 %v6846, %v6847
    %v6849 = vrot.slane %v6848, 2
    %v6850 = vadd.f32 %v6848, %v6849
    %v6851 = vrot.slane %v6850, 1
    %v6852 = vadd.f32 %v6850, %v6851
    %v6853 = vadd.f32 %v6724, %v6728
    %v6854 = vadd.f32 %v6853, %v6732
    %v6855 = vadd.f32 %v6854, %v6736
    %v6856 = vadd.f32 %v6855, %v6740
    %v6857 = vadd.f32 %v6856, %v6744
    %v6858 = vadd.f32 %v6857, %v6748
    %v6859 = vadd.f32 %v6858, %v6752
    %v6860 = vrot.slane %v6859, 4
    %v6861 = vadd.f32 %v6859, %v6860
    %v6862 = vrot.slane %v6861, 2
    %v6863 = vadd.f32 %v6861, %v6862
    %v6864 = vrot.slane %v6863, 1
    %v6865 = vadd.f32 %v6863, %v6864
    %v6866 = vadd.f32 %v6826, %v6808
    %v6867 = vadd.f32 %v6839, %v6808
    %v6868 = vadd.f32 %v6852, %v6808
    %v6869 = vadd.f32 %v6865, %v6808
    %v6870 = vtanh.pop %v6810
    %v6871 = vtanh.pop %v6811
    %v6872 = vtanh.pop %v6812
    %v6873 = vtanh.pop %v6813
    %v6878 = vcombine.low %v6866, %v6867
    %v6879 = vcombine.low %v6868, %v6869
    %v6881 = vunpack.c.l.s4 1983009808
    %v6882 = vunpack.c.0.s8 %v6881
    %v6883 = vlaneseq
    %v6884 = vshrl.u32 %v6883, 7
    %v6885 = vsub.s32 %v6882, %v6884
    %v6886 = vrot.slane %v6878, %v6885
    %v6888 = vunpack.c.l.s4 1983009808
    %v6889 = vunpack.c.0.s8 %v6888
    %v6890 = vlaneseq
    %v6891 = vshrl.u32 %v6890, 7
    %v6892 = vsub.s32 %v6889, %v6891
    %v6893 = vrot.slane %v6879, %v6892
    %v6894 = vcombine.low %v6886, %v6893
    %v6896 = vsub.f32 %v4167, %v6894
    %v6897 = vsub.f32 0.0, %v6870
    %v6898 = vsub.f32 0.0, %v6871
    %v6899 = vsub.f32 0.0, %v6872
    %v6900 = vsub.f32 0.0, %v6873
    %v6901 = vmul.f32 %v6897, 1.442695
    %v6902 = vpow.pop %v6901
    %v6903 = vmul.f32 %v6898, 1.442695
    %v6904 = vpow.pop %v6903
    %v6905 = vmul.f32 %v6899, 1.442695
    %v6906 = vpow.pop %v6905
    %v6907 = vmul.f32 %v6900, 1.442695
    %v6908 = vpow.pop %v6907
    %v6913 = vcombine.low %v6902, %v6904
    %v6914 = vcombine.low %v6906, %v6908
    %v6916 = vunpack.c.l.s4 1983009808
    %v6917 = vunpack.c.0.s8 %v6916
    %v6918 = vlaneseq
    %v6919 = vshrl.u32 %v6918, 7
    %v6920 = vsub.s32 %v6917, %v6919
    %v6921 = vrot.slane %v6913, %v6920
    %v6923 = vunpack.c.l.s4 1983009808
    %v6924 = vunpack.c.0.s8 %v6923
    %v6925 = vlaneseq
    %v6926 = vshrl.u32 %v6925, 7
    %v6927 = vsub.s32 %v6924, %v6926
    %v6928 = vrot.slane %v6914, %v6927
    %v6929 = vcombine.low %v6921, %v6928
    %v6930 = vrot.slane %v6929, 7
    %v6932 = vmul.f32 %v6896, %v6930
    %v6933 = vsub.f32 %v5551, %v6870
    %v6934 = vsub.f32 %v5552, %v6871
    %v6935 = vsub.f32 %v5553, %v6872
    %v6936 = vsub.f32 %v5554, %v6873
    %v6937 = vld [vmem:[%s1] sm:$0xff]
    %v6938 = vld [vmem:[%s1 + $0x8] sm:$0xff]
    %v6939 = vld [vmem:[%s1 + $0x10] sm:$0xff]
    %v6940 = vld [vmem:[%s1 + $0x18] sm:$0xff]
    %v6941 = vld [vmem:[%s1 + $0x20] sm:$0xff]
    %v6942 = vld [vmem:[%s1 + $0x28] sm:$0xff]
    %v6943 = vld [vmem:[%s1 + $0x30] sm:$0xff]
    %v6944 = vld [vmem:[%s1 + $0x38] sm:$0xff]
    %v6945 = vld [vmem:[%s1 + $0x40] sm:$0xff]
    %v6946 = vld [vmem:[%s1 + $0x48] sm:$0xff]
    %v6947 = vld [vmem:[%s1 + $0x50] sm:$0xff]
    %v6948 = vld [vmem:[%s1 + $0x58] sm:$0xff]
    %v6949 = vld [vmem:[%s1 + $0x60] sm:$0xff]
    %v6950 = vld [vmem:[%s1 + $0x68] sm:$0xff]
    %v6951 = vld [vmem:[%s1 + $0x70] sm:$0xff]
    %v6952 = vld [vmem:[%s1 + $0x78] sm:$0xff]
    %v6953 = vld [vmem:[%s2] sm:$0xff]
    %v6954 = vld [vmem:[%s2 + $0x8] sm:$0xff]
    %v6955 = vld [vmem:[%s2 + $0x10] sm:$0xff]
    %v6956 = vld [vmem:[%s2 + $0x18] sm:$0xff]
    %v6957 = vld [vmem:[%s2 + $0x20] sm:$0xff]
    %v6958 = vld [vmem:[%s2 + $0x28] sm:$0xff]
    %v6959 = vld [vmem:[%s2 + $0x30] sm:$0xff]
    %v6960 = vld [vmem:[%s2 + $0x38] sm:$0xff]
    %v6961 = vld [vmem:[%s2 + $0x40] sm:$0xff]
    %v6962 = vld [vmem:[%s2 + $0x48] sm:$0xff]
    %v6963 = vld [vmem:[%s2 + $0x50] sm:$0xff]
    %v6964 = vld [vmem:[%s2 + $0x58] sm:$0xff]
    %v6965 = vld [vmem:[%s2 + $0x60] sm:$0xff]
    %v6966 = vld [vmem:[%s2 + $0x68] sm:$0xff]
    %v6967 = vld [vmem:[%s2 + $0x70] sm:$0xff]
    %v6968 = vld [vmem:[%s2 + $0x78] sm:$0xff]
    %v6969 = vld [vmem:[%s4] sm:$0xff]
    %v6970 = vld [vmem:[%s4 + $0x8] sm:$0xff]
    %v6971 = vld [vmem:[%s4 + $0x10] sm:$0xff]
    %v6972 = vld [vmem:[%s4 + $0x18] sm:$0xff]
    %v6973 = vld [vmem:[%s4 + $0x20] sm:$0xff]
    %v6974 = vld [vmem:[%s4 + $0x28] sm:$0xff]
    %v6975 = vld [vmem:[%s4 + $0x30] sm:$0xff]
    %v6976 = vld [vmem:[%s4 + $0x38] sm:$0xff]
    %v6977 = vld [vmem:[%s4 + $0x40] sm:$0xff]
    %v6978 = vld [vmem:[%s4 + $0x48] sm:$0xff]
    %v6979 = vld [vmem:[%s4 + $0x50] sm:$0xff]
    %v6980 = vld [vmem:[%s4 + $0x58] sm:$0xff]
    %v6981 = vld [vmem:[%s4 + $0x60] sm:$0xff]
    %v6982 = vld [vmem:[%s4 + $0x68] sm:$0xff]
    %v6983 = vld [vmem:[%s4 + $0x70] sm:$0xff]
    %v6984 = vld [vmem:[%s4 + $0x78] sm:$0xff]
    %v6985 = vld [vmem:[%s5] sm:$0xff]
    %v6986 = vld [vmem:[%s5 + $0x8] sm:$0xff]
    %v6987 = vld [vmem:[%s5 + $0x10] sm:$0xff]
    %v6988 = vld [vmem:[%s5 + $0x18] sm:$0xff]
    %v6989 = vld [vmem:[%s5 + $0x20] sm:$0xff]
    %v6990 = vld [vmem:[%s5 + $0x28] sm:$0xff]
    %v6991 = vld [vmem:[%s5 + $0x30] sm:$0xff]
    %v6992 = vld [vmem:[%s5 + $0x38] sm:$0xff]
    %v6993 = vld [vmem:[%s5 + $0x40] sm:$0xff]
    %v6994 = vld [vmem:[%s5 + $0x48] sm:$0xff]
    %v6995 = vld [vmem:[%s5 + $0x50] sm:$0xff]
    %v6996 = vld [vmem:[%s5 + $0x58] sm:$0xff]
    %v6997 = vld [vmem:[%s5 + $0x60] sm:$0xff]
    %v6998 = vld [vmem:[%s5 + $0x68] sm:$0xff]
    %v6999 = vld [vmem:[%s5 + $0x70] sm:$0xff]
    %v7000 = vld [vmem:[%s5 + $0x78] sm:$0xff]
    %v7001 = vld [vmem:[%s6] sm:$0x3]
    %7003 = vset.pattern.permute.xlu0 0
    %7004 = vperm.xlu0 %7003, %v6937
    %v7005 = vpop.permute.xlu0 %7004
    %7008 = vset.pattern.permute.xlu0 0
    %7009 = vperm.xlu0 %7008, %v6938
    %v7010 = vpop.permute.xlu0 %7009
    %7013 = vset.pattern.permute.xlu0 0
    %7014 = vperm.xlu0 %7013, %v6939
    %v7015 = vpop.permute.xlu0 %7014
    %7018 = vset.pattern.permute.xlu0 0
    %7019 = vperm.xlu0 %7018, %v6940
    %v7020 = vpop.permute.xlu0 %7019
    %7023 = vset.pattern.permute.xlu0 0
    %7024 = vperm.xlu0 %7023, %v6941
    %v7025 = vpop.permute.xlu0 %7024
    %7028 = vset.pattern.permute.xlu0 0
    %7029 = vperm.xlu0 %7028, %v6942
    %v7030 = vpop.permute.xlu0 %7029
    %7033 = vset.pattern.permute.xlu0 0
    %7034 = vperm.xlu0 %7033, %v6943
    %v7035 = vpop.permute.xlu0 %7034
    %7038 = vset.pattern.permute.xlu0 0
    %7039 = vperm.xlu0 %7038, %v6944
    %v7040 = vpop.permute.xlu0 %7039
    %7043 = vset.pattern.permute.xlu0 0
    %7044 = vperm.xlu0 %7043, %v6945
    %v7045 = vpop.permute.xlu0 %7044
    %7048 = vset.pattern.permute.xlu0 0
    %7049 = vperm.xlu0 %7048, %v6946
    %v7050 = vpop.permute.xlu0 %7049
    %7053 = vset.pattern.permute.xlu0 0
    %7054 = vperm.xlu0 %7053, %v6947
    %v7055 = vpop.permute.xlu0 %7054
    %7058 = vset.pattern.permute.xlu0 0
    %7059 = vperm.xlu0 %7058, %v6948
    %v7060 = vpop.permute.xlu0 %7059
    %7063 = vset.pattern.permute.xlu0 0
    %7064 = vperm.xlu0 %7063, %v6949
    %v7065 = vpop.permute.xlu0 %7064
    %7068 = vset.pattern.permute.xlu0 0
    %7069 = vperm.xlu0 %7068, %v6950
    %v7070 = vpop.permute.xlu0 %7069
    %7073 = vset.pattern.permute.xlu0 0
    %7074 = vperm.xlu0 %7073, %v6951
    %v7075 = vpop.permute.xlu0 %7074
    %7078 = vset.pattern.permute.xlu0 0
    %7079 = vperm.xlu0 %7078, %v6952
    %v7080 = vpop.permute.xlu0 %7079
    %v7083 = vlaneseq
    %v7084 = vshrl.u32 %v7083, 7
    %v7085 = vsub.s32 1, %v7084
    %v7086 = vrot.slane %v6932, %v7085
    %v7087 = vlaneseq
    %v7088 = vshrl.u32 %v7087, 7
    %v7089 = vsub.s32 3, %v7088
    %v7090 = vrot.slane %v6932, %v7089
    %v7091 = vlaneseq
    %v7092 = vshrl.u32 %v7091, 7
    %v7093 = vsub.s32 5, %v7092
    %v7094 = vrot.slane %v6932, %v7093
    %v7095 = vlaneseq
    %v7096 = vshrl.u32 %v7095, 7
    %v7097 = vsub.s32 7, %v7096
    %v7098 = vrot.slane %v6932, %v7097
    %v7103 = vlaneseq
    %v7104 = vshrl.u32 %v7103, 7
    %v7105 = vsub.s32 1, %v7104
    %v7106 = vrot.slane %v7086, %v7105
    %v7107 = vlaneseq
    %v7108 = vshrl.u32 %v7107, 7
    %v7109 = vsub.s32 1, %v7108
    %v7110 = vrot.slane %v7090, %v7109
    %v7111 = vlaneseq
    %v7112 = vshrl.u32 %v7111, 7
    %v7113 = vsub.s32 1, %v7112
    %v7114 = vrot.slane %v7094, %v7113
    %v7115 = vlaneseq
    %v7116 = vshrl.u32 %v7115, 7
    %v7117 = vsub.s32 1, %v7116
    %v7118 = vrot.slane %v7098, %v7117
    %v7119 = vmul.f32 %v7005, %v7106
    %v7120 = vmul.f32 %v7005, %v7110
    %v7121 = vmul.f32 %v7005, %v7114
    %v7122 = vmul.f32 %v7005, %v7118
    %v7123 = vmul.f32 %v7010, %v7106
    %v7124 = vmul.f32 %v7010, %v7110
    %v7125 = vmul.f32 %v7010, %v7114
    %v7126 = vmul.f32 %v7010, %v7118
    %v7127 = vmul.f32 %v7015, %v7106
    %v7128 = vmul.f32 %v7015, %v7110
    %v7129 = vmul.f32 %v7015, %v7114
    %v7130 = vmul.f32 %v7015, %v7118
    %v7131 = vmul.f32 %v7020, %v7106
    %v7132 = vmul.f32 %v7020, %v7110
    %v7133 = vmul.f32 %v7020, %v7114
    %v7134 = vmul.f32 %v7020, %v7118
    %v7135 = vmul.f32 %v7025, %v7106
    %v7136 = vmul.f32 %v7025, %v7110
    %v7137 = vmul.f32 %v7025, %v7114
    %v7138 = vmul.f32 %v7025, %v7118
    %v7139 = vmul.f32 %v7030, %v7106
    %v7140 = vmul.f32 %v7030, %v7110
    %v7141 = vmul.f32 %v7030, %v7114
    %v7142 = vmul.f32 %v7030, %v7118
    %v7143 = vmul.f32 %v7035, %v7106
    %v7144 = vmul.f32 %v7035, %v7110
    %v7145 = vmul.f32 %v7035, %v7114
    %v7146 = vmul.f32 %v7035, %v7118
    %v7147 = vmul.f32 %v7040, %v7106
    %v7148 = vmul.f32 %v7040, %v7110
    %v7149 = vmul.f32 %v7040, %v7114
    %v7150 = vmul.f32 %v7040, %v7118
    %v7151 = vmul.f32 %v7045, %v7106
    %v7152 = vmul.f32 %v7045, %v7110
    %v7153 = vmul.f32 %v7045, %v7114
    %v7154 = vmul.f32 %v7045, %v7118
    %v7155 = vmul.f32 %v7050, %v7106
    %v7156 = vmul.f32 %v7050, %v7110
    %v7157 = vmul.f32 %v7050, %v7114
    %v7158 = vmul.f32 %v7050, %v7118
    %v7159 = vmul.f32 %v7055, %v7106
    %v7160 = vmul.f32 %v7055, %v7110
    %v7161 = vmul.f32 %v7055, %v7114
    %v7162 = vmul.f32 %v7055, %v7118
    %v7163 = vmul.f32 %v7060, %v7106
    %v7164 = vmul.f32 %v7060, %v7110
    %v7165 = vmul.f32 %v7060, %v7114
    %v7166 = vmul.f32 %v7060, %v7118
    %v7167 = vmul.f32 %v7065, %v7106
    %v7168 = vmul.f32 %v7065, %v7110
    %v7169 = vmul.f32 %v7065, %v7114
    %v7170 = vmul.f32 %v7065, %v7118
    %v7171 = vmul.f32 %v7070, %v7106
    %v7172 = vmul.f32 %v7070, %v7110
    %v7173 = vmul.f32 %v7070, %v7114
    %v7174 = vmul.f32 %v7070, %v7118
    %v7175 = vmul.f32 %v7075, %v7106
    %v7176 = vmul.f32 %v7075, %v7110
    %v7177 = vmul.f32 %v7075, %v7114
    %v7178 = vmul.f32 %v7075, %v7118
    %v7179 = vmul.f32 %v7080, %v7106
    %v7180 = vmul.f32 %v7080, %v7110
    %v7181 = vmul.f32 %v7080, %v7114
    %v7182 = vmul.f32 %v7080, %v7118
    %7184 = vset.pattern.permute.xlu0 0
    %7185 = vperm.xlu0 %7184, %v6953
    %v7186 = vpop.permute.xlu0 %7185
    %7189 = vset.pattern.permute.xlu0 0
    %7190 = vperm.xlu0 %7189, %v6954
    %v7191 = vpop.permute.xlu0 %7190
    %7194 = vset.pattern.permute.xlu0 0
    %7195 = vperm.xlu0 %7194, %v6955
    %v7196 = vpop.permute.xlu0 %7195
    %7199 = vset.pattern.permute.xlu0 0
    %7200 = vperm.xlu0 %7199, %v6956
    %v7201 = vpop.permute.xlu0 %7200
    %7204 = vset.pattern.permute.xlu0 0
    %7205 = vperm.xlu0 %7204, %v6957
    %v7206 = vpop.permute.xlu0 %7205
    %7209 = vset.pattern.permute.xlu0 0
    %7210 = vperm.xlu0 %7209, %v6958
    %v7211 = vpop.permute.xlu0 %7210
    %7214 = vset.pattern.permute.xlu0 0
    %7215 = vperm.xlu0 %7214, %v6959
    %v7216 = vpop.permute.xlu0 %7215
    %7219 = vset.pattern.permute.xlu0 0
    %7220 = vperm.xlu0 %7219, %v6960
    %v7221 = vpop.permute.xlu0 %7220
    %7224 = vset.pattern.permute.xlu0 0
    %7225 = vperm.xlu0 %7224, %v6961
    %v7226 = vpop.permute.xlu0 %7225
    %7229 = vset.pattern.permute.xlu0 0
    %7230 = vperm.xlu0 %7229, %v6962
    %v7231 = vpop.permute.xlu0 %7230
    %7234 = vset.pattern.permute.xlu0 0
    %7235 = vperm.xlu0 %7234, %v6963
    %v7236 = vpop.permute.xlu0 %7235
    %7239 = vset.pattern.permute.xlu0 0
    %7240 = vperm.xlu0 %7239, %v6964
    %v7241 = vpop.permute.xlu0 %7240
    %7244 = vset.pattern.permute.xlu0 0
    %7245 = vperm.xlu0 %7244, %v6965
    %v7246 = vpop.permute.xlu0 %7245
    %7249 = vset.pattern.permute.xlu0 0
    %7250 = vperm.xlu0 %7249, %v6966
    %v7251 = vpop.permute.xlu0 %7250
    %7254 = vset.pattern.permute.xlu0 0
    %7255 = vperm.xlu0 %7254, %v6967
    %v7256 = vpop.permute.xlu0 %7255
    %7259 = vset.pattern.permute.xlu0 0
    %7260 = vperm.xlu0 %7259, %v6968
    %v7261 = vpop.permute.xlu0 %7260
    %v7263 = vadd.f32 %v7119, %v7186
    %v7264 = vadd.f32 %v7120, %v7186
    %v7265 = vadd.f32 %v7121, %v7186
    %v7266 = vadd.f32 %v7122, %v7186
    %v7267 = vadd.f32 %v7123, %v7191
    %v7268 = vadd.f32 %v7124, %v7191
    %v7269 = vadd.f32 %v7125, %v7191
    %v7270 = vadd.f32 %v7126, %v7191
    %v7271 = vadd.f32 %v7127, %v7196
    %v7272 = vadd.f32 %v7128, %v7196
    %v7273 = vadd.f32 %v7129, %v7196
    %v7274 = vadd.f32 %v7130, %v7196
    %v7275 = vadd.f32 %v7131, %v7201
    %v7276 = vadd.f32 %v7132, %v7201
    %v7277 = vadd.f32 %v7133, %v7201
    %v7278 = vadd.f32 %v7134, %v7201
    %v7279 = vadd.f32 %v7135, %v7206
    %v7280 = vadd.f32 %v7136, %v7206
    %v7281 = vadd.f32 %v7137, %v7206
    %v7282 = vadd.f32 %v7138, %v7206
    %v7283 = vadd.f32 %v7139, %v7211
    %v7284 = vadd.f32 %v7140, %v7211
    %v7285 = vadd.f32 %v7141, %v7211
    %v7286 = vadd.f32 %v7142, %v7211
    %v7287 = vadd.f32 %v7143, %v7216
    %v7288 = vadd.f32 %v7144, %v7216
    %v7289 = vadd.f32 %v7145, %v7216
    %v7290 = vadd.f32 %v7146, %v7216
    %v7291 = vadd.f32 %v7147, %v7221
    %v7292 = vadd.f32 %v7148, %v7221
    %v7293 = vadd.f32 %v7149, %v7221
    %v7294 = vadd.f32 %v7150, %v7221
    %v7295 = vadd.f32 %v7151, %v7226
    %v7296 = vadd.f32 %v7152, %v7226
    %v7297 = vadd.f32 %v7153, %v7226
    %v7298 = vadd.f32 %v7154, %v7226
    %v7299 = vadd.f32 %v7155, %v7231
    %v7300 = vadd.f32 %v7156, %v7231
    %v7301 = vadd.f32 %v7157, %v7231
    %v7302 = vadd.f32 %v7158, %v7231
    %v7303 = vadd.f32 %v7159, %v7236
    %v7304 = vadd.f32 %v7160, %v7236
    %v7305 = vadd.f32 %v7161, %v7236
    %v7306 = vadd.f32 %v7162, %v7236
    %v7307 = vadd.f32 %v7163, %v7241
    %v7308 = vadd.f32 %v7164, %v7241
    %v7309 = vadd.f32 %v7165, %v7241
    %v7310 = vadd.f32 %v7166, %v7241
    %v7311 = vadd.f32 %v7167, %v7246
    %v7312 = vadd.f32 %v7168, %v7246
    %v7313 = vadd.f32 %v7169, %v7246
    %v7314 = vadd.f32 %v7170, %v7246
    %v7315 = vadd.f32 %v7171, %v7251
    %v7316 = vadd.f32 %v7172, %v7251
    %v7317 = vadd.f32 %v7173, %v7251
    %v7318 = vadd.f32 %v7174, %v7251
    %v7319 = vadd.f32 %v7175, %v7256
    %v7320 = vadd.f32 %v7176, %v7256
    %v7321 = vadd.f32 %v7177, %v7256
    %v7322 = vadd.f32 %v7178, %v7256
    %v7323 = vadd.f32 %v7179, %v7261
    %v7324 = vadd.f32 %v7180, %v7261
    %v7325 = vadd.f32 %v7181, %v7261
    %v7326 = vadd.f32 %v7182, %v7261
    %v7327 = vmul.f32 %v7263, 0.01
    %v7328 = vmul.f32 %v7264, 0.01
    %v7329 = vmul.f32 %v7265, 0.01
    %v7330 = vmul.f32 %v7266, 0.01
    %v7331 = vmul.f32 %v7267, 0.01
    %v7332 = vmul.f32 %v7268, 0.01
    %v7333 = vmul.f32 %v7269, 0.01
    %v7334 = vmul.f32 %v7270, 0.01
    %v7335 = vmul.f32 %v7271, 0.01
    %v7336 = vmul.f32 %v7272, 0.01
    %v7337 = vmul.f32 %v7273, 0.01
    %v7338 = vmul.f32 %v7274, 0.01
    %v7339 = vmul.f32 %v7275, 0.01
    %v7340 = vmul.f32 %v7276, 0.01
    %v7341 = vmul.f32 %v7277, 0.01
    %v7342 = vmul.f32 %v7278, 0.01
    %v7343 = vmul.f32 %v7279, 0.01
    %v7344 = vmul.f32 %v7280, 0.01
    %v7345 = vmul.f32 %v7281, 0.01
    %v7346 = vmul.f32 %v7282, 0.01
    %v7347 = vmul.f32 %v7283, 0.01
    %v7348 = vmul.f32 %v7284, 0.01
    %v7349 = vmul.f32 %v7285, 0.01
    %v7350 = vmul.f32 %v7286, 0.01
    %v7351 = vmul.f32 %v7287, 0.01
    %v7352 = vmul.f32 %v7288, 0.01
    %v7353 = vmul.f32 %v7289, 0.01
    %v7354 = vmul.f32 %v7290, 0.01
    %v7355 = vmul.f32 %v7291, 0.01
    %v7356 = vmul.f32 %v7292, 0.01
    %v7357 = vmul.f32 %v7293, 0.01
    %v7358 = vmul.f32 %v7294, 0.01
    %v7359 = vmul.f32 %v7295, 0.01
    %v7360 = vmul.f32 %v7296, 0.01
    %v7361 = vmul.f32 %v7297, 0.01
    %v7362 = vmul.f32 %v7298, 0.01
    %v7363 = vmul.f32 %v7299, 0.01
    %v7364 = vmul.f32 %v7300, 0.01
    %v7365 = vmul.f32 %v7301, 0.01
    %v7366 = vmul.f32 %v7302, 0.01
    %v7367 = vmul.f32 %v7303, 0.01
    %v7368 = vmul.f32 %v7304, 0.01
    %v7369 = vmul.f32 %v7305, 0.01
    %v7370 = vmul.f32 %v7306, 0.01
    %v7371 = vmul.f32 %v7307, 0.01
    %v7372 = vmul.f32 %v7308, 0.01
    %v7373 = vmul.f32 %v7309, 0.01
    %v7374 = vmul.f32 %v7310, 0.01
    %v7375 = vmul.f32 %v7311, 0.01
    %v7376 = vmul.f32 %v7312, 0.01
    %v7377 = vmul.f32 %v7313, 0.01
    %v7378 = vmul.f32 %v7314, 0.01
    %v7379 = vmul.f32 %v7315, 0.01
    %v7380 = vmul.f32 %v7316, 0.01
    %v7381 = vmul.f32 %v7317, 0.01
    %v7382 = vmul.f32 %v7318, 0.01
    %v7383 = vmul.f32 %v7319, 0.01
    %v7384 = vmul.f32 %v7320, 0.01
    %v7385 = vmul.f32 %v7321, 0.01
    %v7386 = vmul.f32 %v7322, 0.01
    %v7387 = vmul.f32 %v7323, 0.01
    %v7388 = vmul.f32 %v7324, 0.01
    %v7389 = vmul.f32 %v7325, 0.01
    %v7390 = vmul.f32 %v7326, 0.01
    %v7391 = vmax.f32 %v7263, %v7327
    %v7392 = vmax.f32 %v7264, %v7328
    %v7393 = vmax.f32 %v7265, %v7329
    %v7394 = vmax.f32 %v7266, %v7330
    %v7395 = vmax.f32 %v7267, %v7331
    %v7396 = vmax.f32 %v7268, %v7332
    %v7397 = vmax.f32 %v7269, %v7333
    %v7398 = vmax.f32 %v7270, %v7334
    %v7399 = vmax.f32 %v7271, %v7335
    %v7400 = vmax.f32 %v7272, %v7336
    %v7401 = vmax.f32 %v7273, %v7337
    %v7402 = vmax.f32 %v7274, %v7338
    %v7403 = vmax.f32 %v7275, %v7339
    %v7404 = vmax.f32 %v7276, %v7340
    %v7405 = vmax.f32 %v7277, %v7341
    %v7406 = vmax.f32 %v7278, %v7342
    %v7407 = vmax.f32 %v7279, %v7343
    %v7408 = vmax.f32 %v7280, %v7344
    %v7409 = vmax.f32 %v7281, %v7345
    %v7410 = vmax.f32 %v7282, %v7346
    %v7411 = vmax.f32 %v7283, %v7347
    %v7412 = vmax.f32 %v7284, %v7348
    %v7413 = vmax.f32 %v7285, %v7349
    %v7414 = vmax.f32 %v7286, %v7350
    %v7415 = vmax.f32 %v7287, %v7351
    %v7416 = vmax.f32 %v7288, %v7352
    %v7417 = vmax.f32 %v7289, %v7353
    %v7418 = vmax.f32 %v7290, %v7354
    %v7419 = vmax.f32 %v7291, %v7355
    %v7420 = vmax.f32 %v7292, %v7356
    %v7421 = vmax.f32 %v7293, %v7357
    %v7422 = vmax.f32 %v7294, %v7358
    %v7423 = vmax.f32 %v7295, %v7359
    %v7424 = vmax.f32 %v7296, %v7360
    %v7425 = vmax.f32 %v7297, %v7361
    %v7426 = vmax.f32 %v7298, %v7362
    %v7427 = vmax.f32 %v7299, %v7363
    %v7428 = vmax.f32 %v7300, %v7364
    %v7429 = vmax.f32 %v7301, %v7365
    %v7430 = vmax.f32 %v7302, %v7366
    %v7431 = vmax.f32 %v7303, %v7367
    %v7432 = vmax.f32 %v7304, %v7368
    %v7433 = vmax.f32 %v7305, %v7369
    %v7434 = vmax.f32 %v7306, %v7370
    %v7435 = vmax.f32 %v7307, %v7371
    %v7436 = vmax.f32 %v7308, %v7372
    %v7437 = vmax.f32 %v7309, %v7373
    %v7438 = vmax.f32 %v7310, %v7374
    %v7439 = vmax.f32 %v7311, %v7375
    %v7440 = vmax.f32 %v7312, %v7376
    %v7441 = vmax.f32 %v7313, %v7377
    %v7442 = vmax.f32 %v7314, %v7378
    %v7443 = vmax.f32 %v7315, %v7379
    %v7444 = vmax.f32 %v7316, %v7380
    %v7445 = vmax.f32 %v7317, %v7381
    %v7446 = vmax.f32 %v7318, %v7382
    %v7447 = vmax.f32 %v7319, %v7383
    %v7448 = vmax.f32 %v7320, %v7384
    %v7449 = vmax.f32 %v7321, %v7385
    %v7450 = vmax.f32 %v7322, %v7386
    %v7451 = vmax.f32 %v7323, %v7387
    %v7452 = vmax.f32 %v7324, %v7388
    %v7453 = vmax.f32 %v7325, %v7389
    %v7454 = vmax.f32 %v7326, %v7390
    %v7455 = vld [vmem:[%s3] sm:$0xf]
    %v7456 = vld [vmem:[%s3 + $0x4] sm:$0xf]
    %v7457 = vld [vmem:[%s3 + $0x8] sm:$0xf]
    %v7458 = vld [vmem:[%s3 + $0xc] sm:$0xf]
    %v7459 = vld [vmem:[%s3 + $0x10] sm:$0xf]
    %v7460 = vld [vmem:[%s3 + $0x14] sm:$0xf]
    %v7461 = vld [vmem:[%s3 + $0x18] sm:$0xf]
    %v7462 = vld [vmem:[%s3 + $0x1c] sm:$0xf]
    %v7463 = vld [vmem:[%s3 + $0x20] sm:$0xf]
    %v7464 = vld [vmem:[%s3 + $0x24] sm:$0xf]
    %v7465 = vld [vmem:[%s3 + $0x28] sm:$0xf]
    %v7466 = vld [vmem:[%s3 + $0x2c] sm:$0xf]
    %v7467 = vld [vmem:[%s3 + $0x30] sm:$0xf]
    %v7468 = vld [vmem:[%s3 + $0x34] sm:$0xf]
    %v7469 = vld [vmem:[%s3 + $0x38] sm:$0xf]
    %v7470 = vld [vmem:[%s3 + $0x3c] sm:$0xf]
    %v7471 = vpack.c.bf16 %v7395, %v7391
    %v7472 = vpack.c.bf16 %v7396, %v7392
    %v7473 = vpack.c.bf16 %v7397, %v7393
    %v7474 = vpack.c.bf16 %v7398, %v7394
    %v7475 = vpack.c.bf16 %v7403, %v7399
    %v7476 = vpack.c.bf16 %v7404, %v7400
    %v7477 = vpack.c.bf16 %v7405, %v7401
    %v7478 = vpack.c.bf16 %v7406, %v7402
    %v7479 = vpack.c.bf16 %v7411, %v7407
    %v7480 = vpack.c.bf16 %v7412, %v7408
    %v7481 = vpack.c.bf16 %v7413, %v7409
    %v7482 = vpack.c.bf16 %v7414, %v7410
    %v7483 = vpack.c.bf16 %v7419, %v7415
    %v7484 = vpack.c.bf16 %v7420, %v7416
    %v7485 = vpack.c.bf16 %v7421, %v7417
    %v7486 = vpack.c.bf16 %v7422, %v7418
    %v7487 = vpack.c.bf16 %v7427, %v7423
    %v7488 = vpack.c.bf16 %v7428, %v7424
    %v7489 = vpack.c.bf16 %v7429, %v7425
    %v7490 = vpack.c.bf16 %v7430, %v7426
    %v7491 = vpack.c.bf16 %v7435, %v7431
    %v7492 = vpack.c.bf16 %v7436, %v7432
    %v7493 = vpack.c.bf16 %v7437, %v7433
    %v7494 = vpack.c.bf16 %v7438, %v7434
    %v7495 = vpack.c.bf16 %v7443, %v7439
    %v7496 = vpack.c.bf16 %v7444, %v7440
    %v7497 = vpack.c.bf16 %v7445, %v7441
    %v7498 = vpack.c.bf16 %v7446, %v7442
    %v7499 = vpack.c.bf16 %v7451, %v7447
    %v7500 = vpack.c.bf16 %v7452, %v7448
    %v7501 = vpack.c.bf16 %v7453, %v7449
    %v7502 = vpack.c.bf16 %v7454, %v7450
    %7504 = vset.pattern.permute.xlu0 0
    %7505 = vperm.xlu0 %7504, %v6969
    %v7506 = vpop.permute.xlu0 %7505
    %7509 = vset.pattern.permute.xlu0 0
    %7510 = vperm.xlu0 %7509, %v6970
    %v7511 = vpop.permute.xlu0 %7510
    %7514 = vset.pattern.permute.xlu0 0
    %7515 = vperm.xlu0 %7514, %v6971
    %v7516 = vpop.permute.xlu0 %7515
    %7519 = vset.pattern.permute.xlu0 0
    %7520 = vperm.xlu0 %7519, %v6972
    %v7521 = vpop.permute.xlu0 %7520
    %7524 = vset.pattern.permute.xlu0 0
    %7525 = vperm.xlu0 %7524, %v6973
    %v7526 = vpop.permute.xlu0 %7525
    %7529 = vset.pattern.permute.xlu0 0
    %7530 = vperm.xlu0 %7529, %v6974
    %v7531 = vpop.permute.xlu0 %7530
    %7534 = vset.pattern.permute.xlu0 0
    %7535 = vperm.xlu0 %7534, %v6975
    %v7536 = vpop.permute.xlu0 %7535
    %7539 = vset.pattern.permute.xlu0 0
    %7540 = vperm.xlu0 %7539, %v6976
    %v7541 = vpop.permute.xlu0 %7540
    %7544 = vset.pattern.permute.xlu0 0
    %7545 = vperm.xlu0 %7544, %v6977
    %v7546 = vpop.permute.xlu0 %7545
    %7549 = vset.pattern.permute.xlu0 0
    %7550 = vperm.xlu0 %7549, %v6978
    %v7551 = vpop.permute.xlu0 %7550
    %7554 = vset.pattern.permute.xlu0 0
    %7555 = vperm.xlu0 %7554, %v6979
    %v7556 = vpop.permute.xlu0 %7555
    %7559 = vset.pattern.permute.xlu0 0
    %7560 = vperm.xlu0 %7559, %v6980
    %v7561 = vpop.permute.xlu0 %7560
    %7564 = vset.pattern.permute.xlu0 0
    %7565 = vperm.xlu0 %7564, %v6981
    %v7566 = vpop.permute.xlu0 %7565
    %7569 = vset.pattern.permute.xlu0 0
    %7570 = vperm.xlu0 %7569, %v6982
    %v7571 = vpop.permute.xlu0 %7570
    %7574 = vset.pattern.permute.xlu0 0
    %7575 = vperm.xlu0 %7574, %v6983
    %v7576 = vpop.permute.xlu0 %7575
    %7579 = vset.pattern.permute.xlu0 0
    %7580 = vperm.xlu0 %7579, %v6984
    %v7581 = vpop.permute.xlu0 %7580
    %v7599 = vunpack.c.l.b16 %v7455
    %v7600 = vunpack.c.l.b16 %v7456
    %v7601 = vunpack.c.l.b16 %v7457
    %v7602 = vunpack.c.l.b16 %v7458
    %v7603 = vunpack.c.l.b16 %v7459
    %v7604 = vunpack.c.l.b16 %v7460
    %v7605 = vunpack.c.l.b16 %v7461
    %v7606 = vunpack.c.l.b16 %v7462
    %v7607 = vunpack.c.l.b16 %v7463
    %v7608 = vunpack.c.l.b16 %v7464
    %v7609 = vunpack.c.l.b16 %v7465
    %v7610 = vunpack.c.l.b16 %v7466
    %v7611 = vunpack.c.l.b16 %v7467
    %v7612 = vunpack.c.l.b16 %v7468
    %v7613 = vunpack.c.l.b16 %v7469
    %v7614 = vunpack.c.l.b16 %v7470
    %v7615 = vpack.c.b16 %v7600, %v7599
    %v7616 = vpack.c.b16 %v7602, %v7601
    %v7617 = vpack.c.b16 %v7604, %v7603
    %v7618 = vpack.c.b16 %v7606, %v7605
    %v7619 = vpack.c.b16 %v7608, %v7607
    %v7620 = vpack.c.b16 %v7610, %v7609
    %v7621 = vpack.c.b16 %v7612, %v7611
    %v7622 = vpack.c.b16 %v7614, %v7613
    %7631 = vmatprep.subr.bf16.mxu0 %v7500
    %7632 = vmatpush1.bf16.msra.mxu0 %v7499
    %7633 = vmatprep.subr.bf16.mxu0 %v7496
    %7634 = vmatpush1.bf16.msra.mxu0 %v7495
    %7635 = vmatprep.subr.bf16.mxu0 %v7492
    %7636 = vmatpush1.bf16.msra.mxu0 %v7491
    %7637 = vmatprep.subr.bf16.mxu0 %v7488
    %7638 = vmatpush1.bf16.msra.mxu0 %v7487
    %7639 = vmatprep.subr.bf16.mxu0 %v7484
    %7640 = vmatpush1.bf16.msra.mxu0 %v7483
    %7641 = vmatprep.subr.bf16.mxu0 %v7480
    %7642 = vmatpush1.bf16.msra.mxu0 %v7479
    %7643 = vmatprep.subr.bf16.mxu0 %v7476
    %7644 = vmatpush1.bf16.msra.mxu0 %v7475
    %7645 = vmatprep.subr.bf16.mxu0 %v7472
    %7646 = vmatpush1.bf16.msra.mxu0 %v7471
    %7647 = vmatprep.subr.bf16.mxu0 0
    %7648 = vmatpush2.bf16.msra.mxu0 0
    %7649 = vmatprep.subr.bf16.mxu0 0
    %7650 = vmatpush2.bf16.msra.mxu0 0
    %7651 = vmatprep.subr.bf16.mxu0 0
    %7652 = vmatpush2.bf16.msra.mxu0 0
    %7653 = vmatprep.subr.bf16.mxu0 0
    %7654 = vmatpush2.bf16.msra.mxu0 0
    %7655 = vmatprep.subr.bf16.mxu0 0
    %7656 = vmatpush2.bf16.msra.mxu0 0
    %7657 = vmatprep.subr.bf16.mxu0 0
    %7658 = vmatpush2.bf16.msra.mxu0 0
    %7659 = vmatprep.subr.bf16.mxu0 0
    %7660 = vmatpush2.bf16.msra.mxu0 0
    %7661 = vmatprep.subr.bf16.mxu0 0
    %7662 = vmatpush2.bf16.msra.mxu0 0
    %7663 = vmatprep.mubr.bf16.mxu0 0
    %7664 = vmatmul.mubr.bf16.gmra.mxu0 %v7615
    %v7665 = vpop.f32.mrf.mxu0
    %v7666 = vadd.f32 %v7506, %v7665
    %v7667 = vpop.f32.mrf.mxu0
    %v7668 = vadd.f32 %v7506, %v7667
    %v7669 = vpop.f32.mrf.mxu0
    %v7670 = vadd.f32 %v7511, %v7669
    %v7671 = vpop.f32.mrf.mxu0
    %v7672 = vadd.f32 %v7511, %v7671
    %7673 = vmatprep.mubr.bf16.mxu0 0
    %7674 = vmatmul.mubr.bf16.gmra.mxu0 %v7616
    %v7675 = vpop.f32.mrf.mxu0
    %v7676 = vadd.f32 %v7516, %v7675
    %v7677 = vpop.f32.mrf.mxu0
    %v7678 = vadd.f32 %v7516, %v7677
    %v7679 = vpop.f32.mrf.mxu0
    %v7680 = vadd.f32 %v7521, %v7679
    %v7681 = vpop.f32.mrf.mxu0
    %v7682 = vadd.f32 %v7521, %v7681
    %7683 = vmatprep.mubr.bf16.mxu0 0
    %7684 = vmatmul.mubr.bf16.gmra.mxu0 %v7617
    %v7685 = vpop.f32.mrf.mxu0
    %v7686 = vadd.f32 %v7526, %v7685
    %v7687 = vpop.f32.mrf.mxu0
    %v7688 = vadd.f32 %v7526, %v7687
    %v7689 = vpop.f32.mrf.mxu0
    %v7690 = vadd.f32 %v7531, %v7689
    %v7691 = vpop.f32.mrf.mxu0
    %v7692 = vadd.f32 %v7531, %v7691
    %7693 = vmatprep.mubr.bf16.mxu0 0
    %7694 = vmatmul.mubr.bf16.gmra.mxu0 %v7618
    %v7695 = vpop.f32.mrf.mxu0
    %v7696 = vadd.f32 %v7536, %v7695
    %v7697 = vpop.f32.mrf.mxu0
    %v7698 = vadd.f32 %v7536, %v7697
    %v7699 = vpop.f32.mrf.mxu0
    %v7700 = vadd.f32 %v7541, %v7699
    %v7701 = vpop.f32.mrf.mxu0
    %v7702 = vadd.f32 %v7541, %v7701
    %7703 = vmatprep.mubr.bf16.mxu0 0
    %7704 = vmatmul.mubr.bf16.gmra.mxu0 %v7619
    %v7705 = vpop.f32.mrf.mxu0
    %v7706 = vadd.f32 %v7546, %v7705
    %v7707 = vpop.f32.mrf.mxu0
    %v7708 = vadd.f32 %v7546, %v7707
    %v7709 = vpop.f32.mrf.mxu0
    %v7710 = vadd.f32 %v7551, %v7709
    %v7711 = vpop.f32.mrf.mxu0
    %v7712 = vadd.f32 %v7551, %v7711
    %7713 = vmatprep.mubr.bf16.mxu0 0
    %7714 = vmatmul.mubr.bf16.gmra.mxu0 %v7620
    %v7715 = vpop.f32.mrf.mxu0
    %v7716 = vadd.f32 %v7556, %v7715
    %v7717 = vpop.f32.mrf.mxu0
    %v7718 = vadd.f32 %v7556, %v7717
    %v7719 = vpop.f32.mrf.mxu0
    %v7720 = vadd.f32 %v7561, %v7719
    %v7721 = vpop.f32.mrf.mxu0
    %v7722 = vadd.f32 %v7561, %v7721
    %7723 = vmatprep.mubr.bf16.mxu0 0
    %7724 = vmatmul.mubr.bf16.gmra.mxu0 %v7621
    %v7725 = vpop.f32.mrf.mxu0
    %v7726 = vadd.f32 %v7566, %v7725
    %v7727 = vpop.f32.mrf.mxu0
    %v7728 = vadd.f32 %v7566, %v7727
    %v7729 = vpop.f32.mrf.mxu0
    %v7730 = vadd.f32 %v7571, %v7729
    %v7731 = vpop.f32.mrf.mxu0
    %v7732 = vadd.f32 %v7571, %v7731
    %7733 = vmatprep.mubr.bf16.mxu0 0
    %7734 = vmatmul.mubr.bf16.gmra.mxu0 %v7622
    %v7735 = vpop.f32.mrf.mxu0
    %v7736 = vadd.f32 %v7576, %v7735
    %v7737 = vpop.f32.mrf.mxu0
    %v7738 = vadd.f32 %v7576, %v7737
    %v7739 = vpop.f32.mrf.mxu0
    %v7740 = vadd.f32 %v7581, %v7739
    %v7741 = vpop.f32.mrf.mxu0
    %v7742 = vadd.f32 %v7581, %v7741
    %7743 = vdwg.mxu0
    %7744 = vmatprep.subr.bf16.mxu0 %v7502
    %7745 = vmatpush1.bf16.msra.mxu0 %v7501
    %7746 = vmatprep.subr.bf16.mxu0 %v7498
    %7747 = vmatpush1.bf16.msra.mxu0 %v7497
    %7748 = vmatprep.subr.bf16.mxu0 %v7494
    %7749 = vmatpush1.bf16.msra.mxu0 %v7493
    %7750 = vmatprep.subr.bf16.mxu0 %v7490
    %7751 = vmatpush1.bf16.msra.mxu0 %v7489
    %7752 = vmatprep.subr.bf16.mxu0 %v7486
    %7753 = vmatpush1.bf16.msra.mxu0 %v7485
    %7754 = vmatprep.subr.bf16.mxu0 %v7482
    %7755 = vmatpush1.bf16.msra.mxu0 %v7481
    %7756 = vmatprep.subr.bf16.mxu0 %v7478
    %7757 = vmatpush1.bf16.msra.mxu0 %v7477
    %7758 = vmatprep.subr.bf16.mxu0 %v7474
    %7759 = vmatpush1.bf16.msra.mxu0 %v7473
    %7760 = vmatprep.subr.bf16.mxu0 0
    %7761 = vmatpush2.bf16.msra.mxu0 0
    %7762 = vmatprep.subr.bf16.mxu0 0
    %7763 = vmatpush2.bf16.msra.mxu0 0
    %7764 = vmatprep.subr.bf16.mxu0 0
    %7765 = vmatpush2.bf16.msra.mxu0 0
    %7766 = vmatprep.subr.bf16.mxu0 0
    %7767 = vmatpush2.bf16.msra.mxu0 0
    %7768 = vmatprep.subr.bf16.mxu0 0
    %7769 = vmatpush2.bf16.msra.mxu0 0
    %7770 = vmatprep.subr.bf16.mxu0 0
    %7771 = vmatpush2.bf16.msra.mxu0 0
    %7772 = vmatprep.subr.bf16.mxu0 0
    %7773 = vmatpush2.bf16.msra.mxu0 0
    %7774 = vmatprep.subr.bf16.mxu0 0
    %7775 = vmatpush2.bf16.msra.mxu0 0
    %7776 = vmatprep.mubr.bf16.mxu0 0
    %7777 = vmatmul.mubr.bf16.gmra.mxu0 %v7615
    %v7778 = vpop.f32.mrf.mxu0
    %v7779 = vadd.f32 %v7506, %v7778
    %v7780 = vpop.f32.mrf.mxu0
    %v7781 = vadd.f32 %v7506, %v7780
    %v7782 = vpop.f32.mrf.mxu0
    %v7783 = vadd.f32 %v7511, %v7782
    %v7784 = vpop.f32.mrf.mxu0
    %v7785 = vadd.f32 %v7511, %v7784
    %7786 = vmatprep.mubr.bf16.mxu0 0
    %7787 = vmatmul.mubr.bf16.gmra.mxu0 %v7616
    %v7788 = vpop.f32.mrf.mxu0
    %v7789 = vadd.f32 %v7516, %v7788
    %v7790 = vpop.f32.mrf.mxu0
    %v7791 = vadd.f32 %v7516, %v7790
    %v7792 = vpop.f32.mrf.mxu0
    %v7793 = vadd.f32 %v7521, %v7792
    %v7794 = vpop.f32.mrf.mxu0
    %v7795 = vadd.f32 %v7521, %v7794
    %7796 = vmatprep.mubr.bf16.mxu0 0
    %7797 = vmatmul.mubr.bf16.gmra.mxu0 %v7617
    %v7798 = vpop.f32.mrf.mxu0
    %v7799 = vadd.f32 %v7526, %v7798
    %v7800 = vpop.f32.mrf.mxu0
    %v7801 = vadd.f32 %v7526, %v7800
    %v7802 = vpop.f32.mrf.mxu0
    %v7803 = vadd.f32 %v7531, %v7802
    %v7804 = vpop.f32.mrf.mxu0
    %v7805 = vadd.f32 %v7531, %v7804
    %7806 = vmatprep.mubr.bf16.mxu0 0
    %7807 = vmatmul.mubr.bf16.gmra.mxu0 %v7618
    %v7808 = vpop.f32.mrf.mxu0
    %v7809 = vadd.f32 %v7536, %v7808
    %v7810 = vpop.f32.mrf.mxu0
    %v7811 = vadd.f32 %v7536, %v7810
    %v7812 = vpop.f32.mrf.mxu0
    %v7813 = vadd.f32 %v7541, %v7812
    %v7814 = vpop.f32.mrf.mxu0
    %v7815 = vadd.f32 %v7541, %v7814
    %7816 = vmatprep.mubr.bf16.mxu0 0
    %7817 = vmatmul.mubr.bf16.gmra.mxu0 %v7619
    %v7818 = vpop.f32.mrf.mxu0
    %v7819 = vadd.f32 %v7546, %v7818
    %v7820 = vpop.f32.mrf.mxu0
    %v7821 = vadd.f32 %v7546, %v7820
    %v7822 = vpop.f32.mrf.mxu0
    %v7823 = vadd.f32 %v7551, %v7822
    %v7824 = vpop.f32.mrf.mxu0
    %v7825 = vadd.f32 %v7551, %v7824
    %7826 = vmatprep.mubr.bf16.mxu0 0
    %7827 = vmatmul.mubr.bf16.gmra.mxu0 %v7620
    %v7828 = vpop.f32.mrf.mxu0
    %v7829 = vadd.f32 %v7556, %v7828
    %v7830 = vpop.f32.mrf.mxu0
    %v7831 = vadd.f32 %v7556, %v7830
    %v7832 = vpop.f32.mrf.mxu0
    %v7833 = vadd.f32 %v7561, %v7832
    %v7834 = vpop.f32.mrf.mxu0
    %v7835 = vadd.f32 %v7561, %v7834
    %7836 = vmatprep.mubr.bf16.mxu0 0
    %7837 = vmatmul.mubr.bf16.gmra.mxu0 %v7621
    %v7838 = vpop.f32.mrf.mxu0
    %v7839 = vadd.f32 %v7566, %v7838
    %v7840 = vpop.f32.mrf.mxu0
    %v7841 = vadd.f32 %v7566, %v7840
    %v7842 = vpop.f32.mrf.mxu0
    %v7843 = vadd.f32 %v7571, %v7842
    %v7844 = vpop.f32.mrf.mxu0
    %v7845 = vadd.f32 %v7571, %v7844
    %7846 = vmatprep.mubr.bf16.mxu0 0
    %7847 = vmatmul.mubr.bf16.gmra.mxu0 %v7622
    %v7848 = vpop.f32.mrf.mxu0
    %v7849 = vadd.f32 %v7576, %v7848
    %v7850 = vpop.f32.mrf.mxu0
    %v7851 = vadd.f32 %v7576, %v7850
    %v7852 = vpop.f32.mrf.mxu0
    %v7853 = vadd.f32 %v7581, %v7852
    %v7854 = vpop.f32.mrf.mxu0
    %v7855 = vadd.f32 %v7581, %v7854
    %7856 = vdwg.mxu0
    %v7857 = vmul.f32 %v7666, 0.01
    %v7858 = vmul.f32 %v7668, 0.01
    %v7859 = vmul.f32 %v7779, 0.01
    %v7860 = vmul.f32 %v7781, 0.01
    %v7861 = vmul.f32 %v7670, 0.01
    %v7862 = vmul.f32 %v7672, 0.01
    %v7863 = vmul.f32 %v7783, 0.01
    %v7864 = vmul.f32 %v7785, 0.01
    %v7865 = vmul.f32 %v7676, 0.01
    %v7866 = vmul.f32 %v7678, 0.01
    %v7867 = vmul.f32 %v7789, 0.01
    %v7868 = vmul.f32 %v7791, 0.01
    %v7869 = vmul.f32 %v7680, 0.01
    %v7870 = vmul.f32 %v7682, 0.01
    %v7871 = vmul.f32 %v7793, 0.01
    %v7872 = vmul.f32 %v7795, 0.01
    %v7873 = vmul.f32 %v7686, 0.01
    %v7874 = vmul.f32 %v7688, 0.01
    %v7875 = vmul.f32 %v7799, 0.01
    %v7876 = vmul.f32 %v7801, 0.01
    %v7877 = vmul.f32 %v7690, 0.01
    %v7878 = vmul.f32 %v7692, 0.01
    %v7879 = vmul.f32 %v7803, 0.01
    %v7880 = vmul.f32 %v7805, 0.01
    %v7881 = vmul.f32 %v7696, 0.01
    %v7882 = vmul.f32 %v7698, 0.01
    %v7883 = vmul.f32 %v7809, 0.01
    %v7884 = vmul.f32 %v7811, 0.01
    %v7885 = vmul.f32 %v7700, 0.01
    %v7886 = vmul.f32 %v7702, 0.01
    %v7887 = vmul.f32 %v7813, 0.01
    %v7888 = vmul.f32 %v7815, 0.01
    %v7889 = vmul.f32 %v7706, 0.01
    %v7890 = vmul.f32 %v7708, 0.01
    %v7891 = vmul.f32 %v7819, 0.01
    %v7892 = vmul.f32 %v7821, 0.01
    %v7893 = vmul.f32 %v7710, 0.01
    %v7894 = vmul.f32 %v7712, 0.01
    %v7895 = vmul.f32 %v7823, 0.01
    %v7896 = vmul.f32 %v7825, 0.01
    %v7897 = vmul.f32 %v7716, 0.01
    %v7898 = vmul.f32 %v7718, 0.01
    %v7899 = vmul.f32 %v7829, 0.01
    %v7900 = vmul.f32 %v7831, 0.01
    %v7901 = vmul.f32 %v7720, 0.01
    %v7902 = vmul.f32 %v7722, 0.01
    %v7903 = vmul.f32 %v7833, 0.01
    %v7904 = vmul.f32 %v7835, 0.01
    %v7905 = vmul.f32 %v7726, 0.01
    %v7906 = vmul.f32 %v7728, 0.01
    %v7907 = vmul.f32 %v7839, 0.01
    %v7908 = vmul.f32 %v7841, 0.01
    %v7909 = vmul.f32 %v7730, 0.01
    %v7910 = vmul.f32 %v7732, 0.01
    %v7911 = vmul.f32 %v7843, 0.01
    %v7912 = vmul.f32 %v7845, 0.01
    %v7913 = vmul.f32 %v7736, 0.01
    %v7914 = vmul.f32 %v7738, 0.01
    %v7915 = vmul.f32 %v7849, 0.01
    %v7916 = vmul.f32 %v7851, 0.01
    %v7917 = vmul.f32 %v7740, 0.01
    %v7918 = vmul.f32 %v7742, 0.01
    %v7919 = vmul.f32 %v7853, 0.01
    %v7920 = vmul.f32 %v7855, 0.01
    %v7921 = vmax.f32 %v7666, %v7857
    %v7922 = vmax.f32 %v7668, %v7858
    %v7923 = vmax.f32 %v7779, %v7859
    %v7924 = vmax.f32 %v7781, %v7860
    %v7925 = vmax.f32 %v7670, %v7861
    %v7926 = vmax.f32 %v7672, %v7862
    %v7927 = vmax.f32 %v7783, %v7863
    %v7928 = vmax.f32 %v7785, %v7864
    %v7929 = vmax.f32 %v7676, %v7865
    %v7930 = vmax.f32 %v7678, %v7866
    %v7931 = vmax.f32 %v7789, %v7867
    %v7932 = vmax.f32 %v7791, %v7868
    %v7933 = vmax.f32 %v7680, %v7869
    %v7934 = vmax.f32 %v7682, %v7870
    %v7935 = vmax.f32 %v7793, %v7871
    %v7936 = vmax.f32 %v7795, %v7872
    %v7937 = vmax.f32 %v7686, %v7873
    %v7938 = vmax.f32 %v7688, %v7874
    %v7939 = vmax.f32 %v7799, %v7875
    %v7940 = vmax.f32 %v7801, %v7876
    %v7941 = vmax.f32 %v7690, %v7877
    %v7942 = vmax.f32 %v7692, %v7878
    %v7943 = vmax.f32 %v7803, %v7879
    %v7944 = vmax.f32 %v7805, %v7880
    %v7945 = vmax.f32 %v7696, %v7881
    %v7946 = vmax.f32 %v7698, %v7882
    %v7947 = vmax.f32 %v7809, %v7883
    %v7948 = vmax.f32 %v7811, %v7884
    %v7949 = vmax.f32 %v7700, %v7885
    %v7950 = vmax.f32 %v7702, %v7886
    %v7951 = vmax.f32 %v7813, %v7887
    %v7952 = vmax.f32 %v7815, %v7888
    %v7953 = vmax.f32 %v7706, %v7889
    %v7954 = vmax.f32 %v7708, %v7890
    %v7955 = vmax.f32 %v7819, %v7891
    %v7956 = vmax.f32 %v7821, %v7892
    %v7957 = vmax.f32 %v7710, %v7893
    %v7958 = vmax.f32 %v7712, %v7894
    %v7959 = vmax.f32 %v7823, %v7895
    %v7960 = vmax.f32 %v7825, %v7896
    %v7961 = vmax.f32 %v7716, %v7897
    %v7962 = vmax.f32 %v7718, %v7898
    %v7963 = vmax.f32 %v7829, %v7899
    %v7964 = vmax.f32 %v7831, %v7900
    %v7965 = vmax.f32 %v7720, %v7901
    %v7966 = vmax.f32 %v7722, %v7902
    %v7967 = vmax.f32 %v7833, %v7903
    %v7968 = vmax.f32 %v7835, %v7904
    %v7969 = vmax.f32 %v7726, %v7905
    %v7970 = vmax.f32 %v7728, %v7906
    %v7971 = vmax.f32 %v7839, %v7907
    %v7972 = vmax.f32 %v7841, %v7908
    %v7973 = vmax.f32 %v7730, %v7909
    %v7974 = vmax.f32 %v7732, %v7910
    %v7975 = vmax.f32 %v7843, %v7911
    %v7976 = vmax.f32 %v7845, %v7912
    %v7977 = vmax.f32 %v7736, %v7913
    %v7978 = vmax.f32 %v7738, %v7914
    %v7979 = vmax.f32 %v7849, %v7915
    %v7980 = vmax.f32 %v7851, %v7916
    %v7981 = vmax.f32 %v7740, %v7917
    %v7982 = vmax.f32 %v7742, %v7918
    %v7983 = vmax.f32 %v7853, %v7919
    %v7984 = vmax.f32 %v7855, %v7920
    %7986 = vset.pattern.permute.xlu0 0
    %7987 = vperm.xlu0 %7986, %v6985
    %v7988 = vpop.permute.xlu0 %7987
    %7991 = vset.pattern.permute.xlu0 0
    %7992 = vperm.xlu0 %7991, %v6986
    %v7993 = vpop.permute.xlu0 %7992
    %7996 = vset.pattern.permute.xlu0 0
    %7997 = vperm.xlu0 %7996, %v6987
    %v7998 = vpop.permute.xlu0 %7997
    %8001 = vset.pattern.permute.xlu0 0
    %8002 = vperm.xlu0 %8001, %v6988
    %v8003 = vpop.permute.xlu0 %8002
    %8006 = vset.pattern.permute.xlu0 0
    %8007 = vperm.xlu0 %8006, %v6989
    %v8008 = vpop.permute.xlu0 %8007
    %8011 = vset.pattern.permute.xlu0 0
    %8012 = vperm.xlu0 %8011, %v6990
    %v8013 = vpop.permute.xlu0 %8012
    %8016 = vset.pattern.permute.xlu0 0
    %8017 = vperm.xlu0 %8016, %v6991
    %v8018 = vpop.permute.xlu0 %8017
    %8021 = vset.pattern.permute.xlu0 0
    %8022 = vperm.xlu0 %8021, %v6992
    %v8023 = vpop.permute.xlu0 %8022
    %8026 = vset.pattern.permute.xlu0 0
    %8027 = vperm.xlu0 %8026, %v6993
    %v8028 = vpop.permute.xlu0 %8027
    %8031 = vset.pattern.permute.xlu0 0
    %8032 = vperm.xlu0 %8031, %v6994
    %v8033 = vpop.permute.xlu0 %8032
    %8036 = vset.pattern.permute.xlu0 0
    %8037 = vperm.xlu0 %8036, %v6995
    %v8038 = vpop.permute.xlu0 %8037
    %8041 = vset.pattern.permute.xlu0 0
    %8042 = vperm.xlu0 %8041, %v6996
    %v8043 = vpop.permute.xlu0 %8042
    %8046 = vset.pattern.permute.xlu0 0
    %8047 = vperm.xlu0 %8046, %v6997
    %v8048 = vpop.permute.xlu0 %8047
    %8051 = vset.pattern.permute.xlu0 0
    %8052 = vperm.xlu0 %8051, %v6998
    %v8053 = vpop.permute.xlu0 %8052
    %8056 = vset.pattern.permute.xlu0 0
    %8057 = vperm.xlu0 %8056, %v6999
    %v8058 = vpop.permute.xlu0 %8057
    %8061 = vset.pattern.permute.xlu0 0
    %8062 = vperm.xlu0 %8061, %v7000
    %v8063 = vpop.permute.xlu0 %8062
    %v8065 = vmul.f32 %v7921, %v7988
    %v8066 = vmul.f32 %v7922, %v7988
    %v8067 = vmul.f32 %v7923, %v7988
    %v8068 = vmul.f32 %v7924, %v7988
    %v8069 = vmul.f32 %v7925, %v7993
    %v8070 = vmul.f32 %v7926, %v7993
    %v8071 = vmul.f32 %v7927, %v7993
    %v8072 = vmul.f32 %v7928, %v7993
    %v8073 = vmul.f32 %v7929, %v7998
    %v8074 = vmul.f32 %v7930, %v7998
    %v8075 = vmul.f32 %v7931, %v7998
    %v8076 = vmul.f32 %v7932, %v7998
    %v8077 = vmul.f32 %v7933, %v8003
    %v8078 = vmul.f32 %v7934, %v8003
    %v8079 = vmul.f32 %v7935, %v8003
    %v8080 = vmul.f32 %v7936, %v8003
    %v8081 = vmul.f32 %v7937, %v8008
    %v8082 = vmul.f32 %v7938, %v8008
    %v8083 = vmul.f32 %v7939, %v8008
    %v8084 = vmul.f32 %v7940, %v8008
    %v8085 = vmul.f32 %v7941, %v8013
    %v8086 = vmul.f32 %v7942, %v8013
    %v8087 = vmul.f32 %v7943, %v8013
    %v8088 = vmul.f32 %v7944, %v8013
    %v8089 = vmul.f32 %v7945, %v8018
    %v8090 = vmul.f32 %v7946, %v8018
    %v8091 = vmul.f32 %v7947, %v8018
    %v8092 = vmul.f32 %v7948, %v8018
    %v8093 = vmul.f32 %v7949, %v8023
    %v8094 = vmul.f32 %v7950, %v8023
    %v8095 = vmul.f32 %v7951, %v8023
    %v8096 = vmul.f32 %v7952, %v8023
    %v8097 = vmul.f32 %v7953, %v8028
    %v8098 = vmul.f32 %v7954, %v8028
    %v8099 = vmul.f32 %v7955, %v8028
    %v8100 = vmul.f32 %v7956, %v8028
    %v8101 = vmul.f32 %v7957, %v8033
    %v8102 = vmul.f32 %v7958, %v8033
    %v8103 = vmul.f32 %v7959, %v8033
    %v8104 = vmul.f32 %v7960, %v8033
    %v8105 = vmul.f32 %v7961, %v8038
    %v8106 = vmul.f32 %v7962, %v8038
    %v8107 = vmul.f32 %v7963, %v8038
    %v8108 = vmul.f32 %v7964, %v8038
    %v8109 = vmul.f32 %v7965, %v8043
    %v8110 = vmul.f32 %v7966, %v8043
    %v8111 = vmul.f32 %v7967, %v8043
    %v8112 = vmul.f32 %v7968, %v8043
    %v8113 = vmul.f32 %v7969, %v8048
    %v8114 = vmul.f32 %v7970, %v8048
    %v8115 = vmul.f32 %v7971, %v8048
    %v8116 = vmul.f32 %v7972, %v8048
    %v8117 = vmul.f32 %v7973, %v8053
    %v8118 = vmul.f32 %v7974, %v8053
    %v8119 = vmul.f32 %v7975, %v8053
    %v8120 = vmul.f32 %v7976, %v8053
    %v8121 = vmul.f32 %v7977, %v8058
    %v8122 = vmul.f32 %v7978, %v8058
    %v8123 = vmul.f32 %v7979, %v8058
    %v8124 = vmul.f32 %v7980, %v8058
    %v8125 = vmul.f32 %v7981, %v8063
    %v8126 = vmul.f32 %v7982, %v8063
    %v8127 = vmul.f32 %v7983, %v8063
    %v8128 = vmul.f32 %v7984, %v8063
    %v8129 = vadd.f32 %v8065, %v8069
    %v8130 = vadd.f32 %v8129, %v8073
    %v8131 = vadd.f32 %v8130, %v8077
    %v8132 = vadd.f32 %v8131, %v8081
    %v8133 = vadd.f32 %v8132, %v8085
    %v8134 = vadd.f32 %v8133, %v8089
    %v8135 = vadd.f32 %v8134, %v8093
    %v8136 = vrot.slane %v8135, 4
    %v8137 = vadd.f32 %v8135, %v8136
    %v8138 = vrot.slane %v8137, 2
    %v8139 = vadd.f32 %v8137, %v8138
    %v8140 = vrot.slane %v8139, 1
    %v8141 = vadd.f32 %v8139, %v8140
    %v8142 = vadd.f32 %v8066, %v8070
    %v8143 = vadd.f32 %v8142, %v8074
    %v8144 = vadd.f32 %v8143, %v8078
    %v8145 = vadd.f32 %v8144, %v8082
    %v8146 = vadd.f32 %v8145, %v8086
    %v8147 = vadd.f32 %v8146, %v8090
    %v8148 = vadd.f32 %v8147, %v8094
    %v8149 = vrot.slane %v8148, 4
    %v8150 = vadd.f32 %v8148, %v8149
    %v8151 = vrot.slane %v8150, 2
    %v8152 = vadd.f32 %v8150, %v8151
    %v8153 = vrot.slane %v8152, 1
    %v8154 = vadd.f32 %v8152, %v8153
    %v8155 = vadd.f32 %v8067, %v8071
    %v8156 = vadd.f32 %v8155, %v8075
    %v8157 = vadd.f32 %v8156, %v8079
    %v8158 = vadd.f32 %v8157, %v8083
    %v8159 = vadd.f32 %v8158, %v8087
    %v8160 = vadd.f32 %v8159, %v8091
    %v8161 = vadd.f32 %v8160, %v8095
    %v8162 = vrot.slane %v8161, 4
    %v8163 = vadd.f32 %v8161, %v8162
    %v8164 = vrot.slane %v8163, 2
    %v8165 = vadd.f32 %v8163, %v8164
    %v8166 = vrot.slane %v8165, 1
    %v8167 = vadd.f32 %v8165, %v8166
    %v8168 = vadd.f32 %v8068, %v8072
    %v8169 = vadd.f32 %v8168, %v8076
    %v8170 = vadd.f32 %v8169, %v8080
    %v8171 = vadd.f32 %v8170, %v8084
    %v8172 = vadd.f32 %v8171, %v8088
    %v8173 = vadd.f32 %v8172, %v8092
    %v8174 = vadd.f32 %v8173, %v8096
    %v8175 = vrot.slane %v8174, 4
    %v8176 = vadd.f32 %v8174, %v8175
    %v8177 = vrot.slane %v8176, 2
    %v8178 = vadd.f32 %v8176, %v8177
    %v8179 = vrot.slane %v8178, 1
    %v8180 = vadd.f32 %v8178, %v8179
    %8182 = vset.pattern.permute.xlu0 0
    %8183 = vperm.xlu0 %8182, %v7001
    %v8184 = vpop.permute.xlu0 %8183
    %v8186 = vadd.f32 %v8141, %v8184
    %v8187 = vadd.f32 %v8154, %v8184
    %v8188 = vadd.f32 %v8167, %v8184
    %v8189 = vadd.f32 %v8180, %v8184
    %v8190 = vadd.f32 %v8097, %v8101
    %v8191 = vadd.f32 %v8190, %v8105
    %v8192 = vadd.f32 %v8191, %v8109
    %v8193 = vadd.f32 %v8192, %v8113
    %v8194 = vadd.f32 %v8193, %v8117
    %v8195 = vadd.f32 %v8194, %v8121
    %v8196 = vadd.f32 %v8195, %v8125
    %v8197 = vrot.slane %v8196, 4
    %v8198 = vadd.f32 %v8196, %v8197
    %v8199 = vrot.slane %v8198, 2
    %v8200 = vadd.f32 %v8198, %v8199
    %v8201 = vrot.slane %v8200, 1
    %v8202 = vadd.f32 %v8200, %v8201
    %v8203 = vadd.f32 %v8098, %v8102
    %v8204 = vadd.f32 %v8203, %v8106
    %v8205 = vadd.f32 %v8204, %v8110
    %v8206 = vadd.f32 %v8205, %v8114
    %v8207 = vadd.f32 %v8206, %v8118
    %v8208 = vadd.f32 %v8207, %v8122
    %v8209 = vadd.f32 %v8208, %v8126
    %v8210 = vrot.slane %v8209, 4
    %v8211 = vadd.f32 %v8209, %v8210
    %v8212 = vrot.slane %v8211, 2
    %v8213 = vadd.f32 %v8211, %v8212
    %v8214 = vrot.slane %v8213, 1
    %v8215 = vadd.f32 %v8213, %v8214
    %v8216 = vadd.f32 %v8099, %v8103
    %v8217 = vadd.f32 %v8216, %v8107
    %v8218 = vadd.f32 %v8217, %v8111
    %v8219 = vadd.f32 %v8218, %v8115
    %v8220 = vadd.f32 %v8219, %v8119
    %v8221 = vadd.f32 %v8220, %v8123
    %v8222 = vadd.f32 %v8221, %v8127
    %v8223 = vrot.slane %v8222, 4
    %v8224 = vadd.f32 %v8222, %v8223
    %v8225 = vrot.slane %v8224, 2
    %v8226 = vadd.f32 %v8224, %v8225
    %v8227 = vrot.slane %v8226, 1
    %v8228 = vadd.f32 %v8226, %v8227
    %v8229 = vadd.f32 %v8100, %v8104
    %v8230 = vadd.f32 %v8229, %v8108
    %v8231 = vadd.f32 %v8230, %v8112
    %v8232 = vadd.f32 %v8231, %v8116
    %v8233 = vadd.f32 %v8232, %v8120
    %v8234 = vadd.f32 %v8233, %v8124
    %v8235 = vadd.f32 %v8234, %v8128
    %v8236 = vrot.slane %v8235, 4
    %v8237 = vadd.f32 %v8235, %v8236
    %v8238 = vrot.slane %v8237, 2
    %v8239 = vadd.f32 %v8237, %v8238
    %v8240 = vrot.slane %v8239, 1
    %v8241 = vadd.f32 %v8239, %v8240
    %v8242 = vadd.f32 %v8202, %v8184
    %v8243 = vadd.f32 %v8215, %v8184
    %v8244 = vadd.f32 %v8228, %v8184
    %v8245 = vadd.f32 %v8241, %v8184
    %v8246 = vtanh.pop %v8186
    %v8247 = vtanh.pop %v8187
    %v8248 = vtanh.pop %v8188
    %v8249 = vtanh.pop %v8189
    %v8254 = vcombine.low %v8242, %v8243
    %v8255 = vcombine.low %v8244, %v8245
    %v8257 = vunpack.c.l.s4 1983009808
    %v8258 = vunpack.c.0.s8 %v8257
    %v8259 = vlaneseq
    %v8260 = vshrl.u32 %v8259, 7
    %v8261 = vsub.s32 %v8258, %v8260
    %v8262 = vrot.slane %v8254, %v8261
    %v8264 = vunpack.c.l.s4 1983009808
    %v8265 = vunpack.c.0.s8 %v8264
    %v8266 = vlaneseq
    %v8267 = vshrl.u32 %v8266, 7
    %v8268 = vsub.s32 %v8265, %v8267
    %v8269 = vrot.slane %v8255, %v8268
    %v8270 = vcombine.low %v8262, %v8269
    %v8271 = vrot.slane %v8270, 7
    %v8272 = vrot.slane %v8271, 2
    %v8274 = vsub.f32 %v5550, %v8272
    %v8275 = vsub.f32 0.0, %v8246
    %v8276 = vsub.f32 0.0, %v8247
    %v8277 = vsub.f32 0.0, %v8248
    %v8278 = vsub.f32 0.0, %v8249
    %v8279 = vmul.f32 %v8275, 1.442695
    %v8280 = vpow.pop %v8279
    %v8281 = vmul.f32 %v8276, 1.442695
    %v8282 = vpow.pop %v8281
    %v8283 = vmul.f32 %v8277, 1.442695
    %v8284 = vpow.pop %v8283
    %v8285 = vmul.f32 %v8278, 1.442695
    %v8286 = vpow.pop %v8285
    %v8291 = vcombine.low %v8280, %v8282
    %v8292 = vcombine.low %v8284, %v8286
    %v8294 = vunpack.c.l.s4 1983009808
    %v8295 = vunpack.c.0.s8 %v8294
    %v8296 = vlaneseq
    %v8297 = vshrl.u32 %v8296, 7
    %v8298 = vsub.s32 %v8295, %v8297
    %v8299 = vrot.slane %v8291, %v8298
    %v8301 = vunpack.c.l.s4 1983009808
    %v8302 = vunpack.c.0.s8 %v8301
    %v8303 = vlaneseq
    %v8304 = vshrl.u32 %v8303, 7
    %v8305 = vsub.s32 %v8302, %v8304
    %v8306 = vrot.slane %v8292, %v8305
    %v8307 = vcombine.low %v8299, %v8306
    %v8309 = vmul.f32 %v8274, %v8307
    %v8310 = vsub.f32 %v6933, %v8246
    %v8311 = vsub.f32 %v6934, %v8247
    %v8312 = vsub.f32 %v6935, %v8248
    %v8313 = vsub.f32 %v6936, %v8249
    %v8314 = vmul.f32 %v8309, %v8309
    %v8315 = vmul.f32 %v6932, %v6932
    %v8317 = vrot.slane %v8315, 7
    %v8318 = vrot.slane %v8317, 2
    %v8320 = vadd.f32 %v8314, %v8318
    %v8321 = vmul.f32 %v8320, -0.5
    %v8322 = vsub.f32 %v8321, 1.837877
    %v8327 = vcombine.low %v8310, %v8311
    %v8328 = vcombine.low %v8312, %v8313
    %v8330 = vunpack.c.l.s4 1983009808
    %v8331 = vunpack.c.0.s8 %v8330
    %v8332 = vlaneseq
    %v8333 = vshrl.u32 %v8332, 7
    %v8334 = vsub.s32 %v8331, %v8333
    %v8335 = vrot.slane %v8327, %v8334
    %v8337 = vunpack.c.l.s4 1983009808
    %v8338 = vunpack.c.0.s8 %v8337
    %v8339 = vlaneseq
    %v8340 = vshrl.u32 %v8339, 7
    %v8341 = vsub.s32 %v8338, %v8340
    %v8342 = vrot.slane %v8328, %v8341
    %v8343 = vcombine.low %v8335, %v8342
    %v8345 = vadd.f32 %v8322, %v8343
    %v8348 = vunpack.c.l.s4 1966171168
    %v8349 = vunpack.c.0.s8 %v8348
    %v8350 = vlaneseq
    %v8351 = vshrl.u32 %v8350, 7
    %v8352 = vsub.s32 %v8349, %v8351
    %v8353 = vrot.slane %v8345, %v8352
    %v8355 = vlaneseq
    %vm8356 = vcmp.ge.s32.totalorder %v8355, 0
    %vm8357 = vcmp.lt.s32.totalorder %v8355, 512
    %vm8358 = vmand %vm8356, %vm8357
    %8359 = vst.msk [vmem:[#allocation2] sm:$0xf] %vm8358, %v8353
    // Predicated region
    $region30: #{tpu_custom_call.1} parent=1 // pred_check
      _
    $region31: #{tpu_custom_call.1} parent=1 // pred_check_branch
      %8361 = sbr.rel (0) target = $region33
    $region32: #{tpu_custom_call.1} parent=1 // pred_region
      %s8363 = ssub.s32 64, 64
      %8364 = vsyncadd [#allocation3], %s8363
      %s8366 = sshll.u32 [#allocation2], 4
      %s8367 = int_to_ptr.vmem [resolvable:$true] %s8366
      %8369 = dma.vmem_to_hbm [thread:$0]  %s8367, 64, %s7, [#allocation3]
    $region33: #{tpu_custom_call.1} parent=1 // pred_fallthru
      _
    // Predicated region
    $region34: #{tpu_custom_call.1} parent=1 // pred_check
      _
    $region35: #{tpu_custom_call.1} parent=1 // pred_check_branch
      %8371 = sbr.rel (0) target = $region37
    $region36: #{tpu_custom_call.1} parent=1 // pred_region
      %8372 = dma.done [#allocation3], 64
    $region37: #{tpu_custom_call.1} parent=1 // pred_fallthru
      _
    %8373 = vsyncpa [#allocation3], 1

</llo_original>
